<compile_context>
chip_gen: v6e
topology: v6e:2x2x1
jax: 0.10.0
libtpu: 0.0.40
codegen_flags: <defaults>
</compile_context>

<pallas_src>
import math
import functools

import jax
import jax.numpy as jnp
from jax import lax
from jax.experimental import pallas as pl
from jax.experimental.pallas import tpu as pltpu

EPS = 1e-5

# Per-layer kernel operand order (already pre-transposed / pre-split, see prepare_params).
LAYER_PARAM_ORDER = (
    "sa_wq", "sa_wk", "sa_wv", "sa_bq", "sa_bk", "sa_bv", "sa_wo", "sa_bo",
    "ca_wv", "ca_bv", "ca_wo", "ca_bo",
    "ln1_w", "ln1_b", "ln2_w", "ln2_b", "ln3_w", "ln3_b",
    "ff_w1", "ff_b1", "ff_w2", "ff_b2",
)
PER_LAYER = len(LAYER_PARAM_ORDER)


# --------------------------- shared math helper ---------------------------

def _layer_norm(v, w, b):
    mu = jnp.mean(v, axis=-1, keepdims=True)
    var = jnp.mean(jnp.square(v - mu), axis=-1, keepdims=True)
    return (v - mu) * lax.rsqrt(var + EPS) * w + b


# --------------------------- fused Pallas kernel ---------------------------

def fused_decoder_kernel(x_ref, mem_ref, *refs, num_layers, num_heads):
    out_ref = refs[-1]
    w = refs[:-1]
    fc_w, fc_b = w[-2], w[-1]

    x = x_ref[0]                      # (T, E)
    mem = mem_ref[0]                  # (1, E)
    T, E = x.shape
    H = num_heads
    dh = E // H
    scale = 1.0 / math.sqrt(dh)

    for layer in range(num_layers):   # static unroll: all weights VMEM-resident
        (sa_wq, sa_wk, sa_wv, sa_bq, sa_bk, sa_bv, sa_wo, sa_bo,
         ca_wv, ca_bv, ca_wo, ca_bo,
         ln1_w, ln1_b, ln2_w, ln2_b, ln3_w, ln3_b,
         ff_w1, ff_b1, ff_w2, ff_b2) = w[layer * PER_LAYER:(layer + 1) * PER_LAYER]

        # ---- self-attention: per-head weights pre-split, so no lane slicing of
        #      activations and no lane-axis concatenate; the head outputs are
        #      folded straight into the (pre-split) output projection as a sum.
        sa = jnp.zeros((T, E), jnp.float32)
        for h in range(H):                                   # static unroll, H = 4
            qh = jnp.dot(x, sa_wq[h], preferred_element_type=jnp.float32) + sa_bq[h]
            kh = jnp.dot(x, sa_wk[h], preferred_element_type=jnp.float32) + sa_bk[h]
            vh = jnp.dot(x, sa_wv[h], preferred_element_type=jnp.float32) + sa_bv[h]
            s = jnp.dot(qh, kh.T, preferred_element_type=jnp.float32) * scale
            s = s - jnp.max(s, axis=-1, keepdims=True)
            p = jnp.exp(s)
            p = p / jnp.sum(p, axis=-1, keepdims=True)
            oh = jnp.dot(p, vh, preferred_element_type=jnp.float32)        # (T, dh)
            sa = sa + jnp.dot(oh, sa_wo[h], preferred_element_type=jnp.float32)
        sa = sa + sa_bo[...]
        x = _layer_norm(x + sa, ln1_w[...], ln1_b[...])

        # ---- cross-attention with memory length 1: softmax over one key == 1,
        #      so output = out_proj(V(mem)) broadcast over T (Q/K never needed).
        v_mem = jnp.dot(mem, ca_wv[...], preferred_element_type=jnp.float32) + ca_bv[...]
        ca = jnp.dot(v_mem, ca_wo[...], preferred_element_type=jnp.float32) + ca_bo[...]
        x = _layer_norm(x + ca, ln2_w[...], ln2_b[...])

        # ---- feed-forward: linear1 -> relu -> linear2 (weights pre-transposed)
        hmid = jnp.maximum(
            jnp.dot(x, ff_w1[...], preferred_element_type=jnp.float32) + ff_b1[...], 0.0)
        ff = jnp.dot(hmid, ff_w2[...], preferred_element_type=jnp.float32) + ff_b2[...]
        x = _layer_norm(x + ff, ln3_w[...], ln3_b[...])

    # ---- final vocab projection: (T, V) store is lane-dense (V = 256)
    out_ref[0] = jnp.dot(x, fc_w[...], preferred_element_type=jnp.float32) + fc_b[...]


# --------------------------- wrapper ---------------------------

def transformer_decoder_forward(kparams, features, captions, *, num_heads, num_layers):
    B, T = captions.shape
    E = kparams["embedding"].shape[1]
    V = kparams["fc_w"].shape[1]

    # TODO(synk): data-dependent embedding gather + positional add stay in plain JAX (glue).
    x = (kparams["embedding"][captions] + kparams["pos_enc"][:, :T, :]).astype(jnp.float32)
    mem = features[:, None, :].astype(jnp.float32)                       # (B, 1, E)

    weights = []
    for lp in kparams["layers"]:
        weights.extend(lp[k] for k in LAYER_PARAM_ORDER)
    weights.extend([kparams["fc_w"], kparams["fc_b"]])

    def _full_spec(a):
        nd = a.ndim
        return pl.BlockSpec(a.shape, lambda b, _nd=nd: (0,) * _nd)        # VMEM-resident

    in_specs = ([pl.BlockSpec((1, T, E), lambda b: (b, 0, 0)),
                 pl.BlockSpec((1, 1, E), lambda b: (b, 0, 0))]
                + [_full_spec(a) for a in weights])
    out_specs = pl.BlockSpec((1, T, V), lambda b: (b, 0, 0))

    kernel = functools.partial(fused_decoder_kernel,
                               num_layers=num_layers, num_heads=num_heads)
    return pl.pallas_call(
        kernel,
        out_shape=jax.ShapeDtypeStruct((B, T, V), jnp.float32),
        grid=(B,),
        in_specs=in_specs,
        out_specs=out_specs,
        compiler_params=pltpu.CompilerParams(
            dimension_semantics=("parallel",)),   # v7x: both TensorCores take a batch row
    )(x, mem, *weights)


# --------------------------- parameter handling ---------------------------

def init_params(key, embed_size, num_heads, num_layers, vocab_size, max_len, ff_dim):
    """PyTorch-layout parameters (same shapes as the nn.Module's state_dict)."""
    keys = iter(jax.random.split(key, 64))

    def rnd(shape, scale=0.05):
        return scale * jax.random.normal(next(keys), shape, dtype=jnp.float32)

    params = {
        "embedding": rnd((vocab_size, embed_size), 1.0),                 # nn.Embedding
        "pos_enc": jnp.zeros((1, max_len, embed_size), jnp.float32),     # torch.zeros init
        "fc_w": rnd((vocab_size, embed_size)),
        "fc_b": rnd((vocab_size,)),
        "layers": [],
    }
    for _ in range(num_layers):
        params["layers"].append({
            "sa_in_w": rnd((3 * embed_size, embed_size)),
            "sa_in_b": rnd((3 * embed_size,)),
            "sa_out_w": rnd((embed_size, embed_size)),
            "sa_out_b": rnd((embed_size,)),
            "ca_in_w": rnd((3 * embed_size, embed_size)),
            "ca_in_b": rnd((3 * embed_size,)),
            "ca_out_w": rnd((embed_size, embed_size)),
            "ca_out_b": rnd((embed_size,)),
            "ln1_w": jnp.ones((embed_size,), jnp.float32),
            "ln1_b": jnp.zeros((embed_size,), jnp.float32),
            "ln2_w": jnp.ones((embed_size,), jnp.float32),
            "ln2_b": jnp.zeros((embed_size,), jnp.float32),
            "ln3_w": jnp.ones((embed_size,), jnp.float32),
            "ln3_b": jnp.zeros((embed_size,), jnp.float32),
            "ff1_w": rnd((ff_dim, embed_size)),
            "ff1_b": rnd((ff_dim,)),
            "ff2_w": rnd((embed_size, ff_dim)),
            "ff2_b": rnd((embed_size,)),
        })
    return params


def prepare_params(params, num_heads):
    """PyTorch layout -> kernel layout (done once, outside the kernel):
       weights pre-transposed to x@w form, self-attn projections pre-split per head,
       cross-attn reduced to its V + out projections (S == 1), biases as (1, dim)."""
    E = params["embedding"].shape[1]
    H = num_heads
    dh = E // H
    out = {
        "embedding": params["embedding"],
        "pos_enc": params["pos_enc"],
        "fc_w": params["fc_w"].T,                   # (E, V) lane-dense
        "fc_b": params["fc_b"].reshape(1, -1),      # (1, V)
        "layers": [],
    }
    for lp in params["layers"]:
        wq, wk, wv = jnp.split(lp["sa_in_w"], 3, axis=0)       # (E, E) each
        bq, bk, bv = jnp.split(lp["sa_in_b"], 3)
        ca_wv_full = lp["ca_in_w"][2 * E:3 * E]                # only V proj needed (S=1)
        ca_bv_full = lp["ca_in_b"][2 * E:3 * E]
        out["layers"].append({
            "sa_wq": jnp.transpose(wq.reshape(H, dh, E), (0, 2, 1)),   # (H, E, dh)
            "sa_wk": jnp.transpose(wk.reshape(H, dh, E), (0, 2, 1)),
            "sa_wv": jnp.transpose(wv.reshape(H, dh, E), (0, 2, 1)),
            "sa_bq": bq.reshape(H, 1, dh),
            "sa_bk": bk.reshape(H, 1, dh),
            "sa_bv": bv.reshape(H, 1, dh),
            "sa_wo": lp["sa_out_w"].T.reshape(H, dh, E),               # (H, dh, E)
            "sa_bo": lp["sa_out_b"].reshape(1, E),
            "ca_wv": ca_wv_full.T,                                     # (E, E)
            "ca_bv": ca_bv_full.reshape(1, E),
            "ca_wo": lp["ca_out_w"].T,                                 # (E, E)
            "ca_bo": lp["ca_out_b"].reshape(1, E),
            "ln1_w": lp["ln1_w"].reshape(1, E), "ln1_b": lp["ln1_b"].reshape(1, E),
            "ln2_w": lp["ln2_w"].reshape(1, E), "ln2_b": lp["ln2_b"].reshape(1, E),
            "ln3_w": lp["ln3_w"].reshape(1, E), "ln3_b": lp["ln3_b"].reshape(1, E),
            "ff_w1": lp["ff1_w"].T,                                    # (E, FF) lane-dense
            "ff_b1": lp["ff1_b"].reshape(1, -1),
            "ff_w2": lp["ff2_w"].T,                                    # (FF, E)
            "ff_b2": lp["ff2_b"].reshape(1, E),
        })
    return out


# --------------------------- pure-JAX reference (full MHA, no S=1 shortcut) ---------------------------

def _ref_mha(q_in, kv_in, w_in, b_in, w_out, b_out, H):
    E = q_in.shape[-1]
    dh = E // H
    Wq, Wk, Wv = w_in[:E], w_in[E:2 * E], w_in[2 * E:]
    bq, bk, bv = b_in[:E], b_in[E:2 * E], b_in[2 * E:]
    q = q_in @ Wq.T + bq
    k = kv_in @ Wk.T + bk
    v = kv_in @ Wv.T + bv
    T, S = q.shape[0], k.shape[0]
    q = q.reshape(T, H, dh).transpose(1, 0, 2)
    k = k.reshape(S, H, dh).transpose(1, 0, 2)
    v = v.reshape(S, H, dh).transpose(1, 0, 2)
    s = jnp.einsum("htd,hsd->hts", q, k) / math.sqrt(dh)
    p = jax.nn.softmax(s, axis=-1)
    o = jnp.einsum("hts,hsd->htd", p, v).transpose(1, 0, 2).reshape(T, E)
    return o @ w_out.T + b_out


def reference_forward(params, features, captions, num_heads):
    B, T = captions.shape
    x_all = params["embedding"][captions] + params["pos_enc"][:, :T, :]
    outs = []
    for b in range(B):
        x = x_all[b]
        mem = features[b][None, :]
        for lp in params["layers"]:
            sa = _ref_mha(x, x, lp["sa_in_w"], lp["sa_in_b"],
                          lp["sa_out_w"], lp["sa_out_b"], num_heads)
            x = _layer_norm(x + sa, lp["ln1_w"], lp["ln1_b"])
            ca = _ref_mha(x, mem, lp["ca_in_w"], lp["ca_in_b"],
                          lp["ca_out_w"], lp["ca_out_b"], num_heads)
            x = _layer_norm(x + ca, lp["ln2_w"], lp["ln2_b"])
            h = jax.nn.relu(x @ lp["ff1_w"].T + lp["ff1_b"])
            x = _layer_norm(x + h @ lp["ff2_w"].T + lp["ff2_b"],
                            lp["ln3_w"], lp["ln3_b"])
        outs.append(x @ params["fc_w"].T + params["fc_b"])
    return jnp.stack(outs)


# --------------------------- main ---------------------------

if __name__ == "__main__":
    embed_size = 32
    num_heads = 4
    num_layers = 2
    vocab_size = 256
    max_len = 16
    ff_dim = 2048          # nn.TransformerDecoderLayer default dim_feedforward
    B, T = 2, 8

    key = jax.random.PRNGKey(0)
    kp, kf, kc = jax.random.split(key, 3)

    params = init_params(kp, embed_size, num_heads, num_layers,
                         vocab_size, max_len, ff_dim)
    kparams = prepare_params(params, num_heads)

    features = jax.random.normal(kf, (B, embed_size), dtype=jnp.float32)
    captions = jax.random.randint(kc, (B, T), 0, vocab_size)

    fwd = jax.jit(functools.partial(transformer_decoder_forward,
                                    num_heads=num_heads, num_layers=num_layers))
    out = jax.block_until_ready(fwd(kparams, features, captions))

    assert out.shape == (B, T, vocab_size), out.shape
    assert bool(jnp.all(jnp.isfinite(out)))

    ref = reference_forward(params, features, captions, num_heads)
    max_err = float(jnp.max(jnp.abs(out - ref)))
    assert max_err < 2e-4, f"mismatch vs pure-JAX reference: {max_err}"

    print("KERNEL_OK")
</pallas_src>

<mosaic_0001>
module attributes {stable_mosaic.version = 11 : i64} {
  func.func @fused_decoder_kernel(%arg0: i32, %arg1: memref<1x8x32xf32, #tpu.memory_space<vmem>>, %arg2: memref<1x1x32xf32, #tpu.memory_space<vmem>>, %arg3: memref<4x32x8xf32, #tpu.memory_space<vmem>>, %arg4: memref<4x32x8xf32, #tpu.memory_space<vmem>>, %arg5: memref<4x32x8xf32, #tpu.memory_space<vmem>>, %arg6: memref<4x1x8xf32, #tpu.memory_space<vmem>>, %arg7: memref<4x1x8xf32, #tpu.memory_space<vmem>>, %arg8: memref<4x1x8xf32, #tpu.memory_space<vmem>>, %arg9: memref<4x8x32xf32, #tpu.memory_space<vmem>>, %arg10: memref<1x32xf32, #tpu.memory_space<vmem>>, %arg11: memref<32x32xf32, #tpu.memory_space<vmem>>, %arg12: memref<1x32xf32, #tpu.memory_space<vmem>>, %arg13: memref<32x32xf32, #tpu.memory_space<vmem>>, %arg14: memref<1x32xf32, #tpu.memory_space<vmem>>, %arg15: memref<1x32xf32, #tpu.memory_space<vmem>>, %arg16: memref<1x32xf32, #tpu.memory_space<vmem>>, %arg17: memref<1x32xf32, #tpu.memory_space<vmem>>, %arg18: memref<1x32xf32, #tpu.memory_space<vmem>>, %arg19: memref<1x32xf32, #tpu.memory_space<vmem>>, %arg20: memref<1x32xf32, #tpu.memory_space<vmem>>, %arg21: memref<32x2048xf32, #tpu.memory_space<vmem>>, %arg22: memref<1x2048xf32, #tpu.memory_space<vmem>>, %arg23: memref<2048x32xf32, #tpu.memory_space<vmem>>, %arg24: memref<1x32xf32, #tpu.memory_space<vmem>>, %arg25: memref<4x32x8xf32, #tpu.memory_space<vmem>>, %arg26: memref<4x32x8xf32, #tpu.memory_space<vmem>>, %arg27: memref<4x32x8xf32, #tpu.memory_space<vmem>>, %arg28: memref<4x1x8xf32, #tpu.memory_space<vmem>>, %arg29: memref<4x1x8xf32, #tpu.memory_space<vmem>>, %arg30: memref<4x1x8xf32, #tpu.memory_space<vmem>>, %arg31: memref<4x8x32xf32, #tpu.memory_space<vmem>>, %arg32: memref<1x32xf32, #tpu.memory_space<vmem>>, %arg33: memref<32x32xf32, #tpu.memory_space<vmem>>, %arg34: memref<1x32xf32, #tpu.memory_space<vmem>>, %arg35: memref<32x32xf32, #tpu.memory_space<vmem>>, %arg36: memref<1x32xf32, #tpu.memory_space<vmem>>, %arg37: memref<1x32xf32, #tpu.memory_space<vmem>>, %arg38: memref<1x32xf32, #tpu.memory_space<vmem>>, %arg39: memref<1x32xf32, #tpu.memory_space<vmem>>, %arg40: memref<1x32xf32, #tpu.memory_space<vmem>>, %arg41: memref<1x32xf32, #tpu.memory_space<vmem>>, %arg42: memref<1x32xf32, #tpu.memory_space<vmem>>, %arg43: memref<32x2048xf32, #tpu.memory_space<vmem>>, %arg44: memref<1x2048xf32, #tpu.memory_space<vmem>>, %arg45: memref<2048x32xf32, #tpu.memory_space<vmem>>, %arg46: memref<1x32xf32, #tpu.memory_space<vmem>>, %arg47: memref<32x256xf32, #tpu.memory_space<vmem>>, %arg48: memref<1x256xf32, #tpu.memory_space<vmem>>, %arg49: memref<1x8x256xf32, #tpu.memory_space<vmem>>) attributes {dimension_semantics = [#tpu.dimension_semantics<parallel>], iteration_bounds = array<i64: 2>, scalar_prefetch = 0 : i64, scratch_operands = 0 : i64, tpu.core_type = #tpu.core_type<tc>, window_params = [{transform_indices = @transform_0, window_bounds = array<i64: 1, 8, 32>}, {transform_indices = @transform_1, window_bounds = array<i64: 1, 1, 32>}, {pipeline_mode = #tpu.pipeline_mode<synchronous>, transform_indices = @transform_2, window_bounds = array<i64: 4, 32, 8>}, {pipeline_mode = #tpu.pipeline_mode<synchronous>, transform_indices = @transform_3, window_bounds = array<i64: 4, 32, 8>}, {pipeline_mode = #tpu.pipeline_mode<synchronous>, transform_indices = @transform_4, window_bounds = array<i64: 4, 32, 8>}, {pipeline_mode = #tpu.pipeline_mode<synchronous>, transform_indices = @transform_5, window_bounds = array<i64: 4, 1, 8>}, {pipeline_mode = #tpu.pipeline_mode<synchronous>, transform_indices = @transform_6, window_bounds = array<i64: 4, 1, 8>}, {pipeline_mode = #tpu.pipeline_mode<synchronous>, transform_indices = @transform_7, window_bounds = array<i64: 4, 1, 8>}, {pipeline_mode = #tpu.pipeline_mode<synchronous>, transform_indices = @transform_8, window_bounds = array<i64: 4, 8, 32>}, {pipeline_mode = #tpu.pipeline_mode<synchronous>, transform_indices = @transform_9, window_bounds = array<i64: 1, 32>}, {pipeline_mode = #tpu.pipeline_mode<synchronous>, transform_indices = @transform_10, window_bounds = array<i64: 32, 32>}, {pipeline_mode = #tpu.pipeline_mode<synchronous>, transform_indices = @transform_11, window_bounds = array<i64: 1, 32>}, {pipeline_mode = #tpu.pipeline_mode<synchronous>, transform_indices = @transform_12, window_bounds = array<i64: 32, 32>}, {pipeline_mode = #tpu.pipeline_mode<synchronous>, transform_indices = @transform_13, window_bounds = array<i64: 1, 32>}, {pipeline_mode = #tpu.pipeline_mode<synchronous>, transform_indices = @transform_14, window_bounds = array<i64: 1, 32>}, {pipeline_mode = #tpu.pipeline_mode<synchronous>, transform_indices = @transform_15, window_bounds = array<i64: 1, 32>}, {pipeline_mode = #tpu.pipeline_mode<synchronous>, transform_indices = @transform_16, window_bounds = array<i64: 1, 32>}, {pipeline_mode = #tpu.pipeline_mode<synchronous>, transform_indices = @transform_17, window_bounds = array<i64: 1, 32>}, {pipeline_mode = #tpu.pipeline_mode<synchronous>, transform_indices = @transform_18, window_bounds = array<i64: 1, 32>}, {pipeline_mode = #tpu.pipeline_mode<synchronous>, transform_indices = @transform_19, window_bounds = array<i64: 1, 32>}, {pipeline_mode = #tpu.pipeline_mode<synchronous>, transform_indices = @transform_20, window_bounds = array<i64: 32, 2048>}, {pipeline_mode = #tpu.pipeline_mode<synchronous>, transform_indices = @transform_21, window_bounds = array<i64: 1, 2048>}, {pipeline_mode = #tpu.pipeline_mode<synchronous>, transform_indices = @transform_22, window_bounds = array<i64: 2048, 32>}, {pipeline_mode = #tpu.pipeline_mode<synchronous>, transform_indices = @transform_23, window_bounds = array<i64: 1, 32>}, {pipeline_mode = #tpu.pipeline_mode<synchronous>, transform_indices = @transform_24, window_bounds = array<i64: 4, 32, 8>}, {pipeline_mode = #tpu.pipeline_mode<synchronous>, transform_indices = @transform_25, window_bounds = array<i64: 4, 32, 8>}, {pipeline_mode = #tpu.pipeline_mode<synchronous>, transform_indices = @transform_26, window_bounds = array<i64: 4, 32, 8>}, {pipeline_mode = #tpu.pipeline_mode<synchronous>, transform_indices = @transform_27, window_bounds = array<i64: 4, 1, 8>}, {pipeline_mode = #tpu.pipeline_mode<synchronous>, transform_indices = @transform_28, window_bounds = array<i64: 4, 1, 8>}, {pipeline_mode = #tpu.pipeline_mode<synchronous>, transform_indices = @transform_29, window_bounds = array<i64: 4, 1, 8>}, {pipeline_mode = #tpu.pipeline_mode<synchronous>, transform_indices = @transform_30, window_bounds = array<i64: 4, 8, 32>}, {pipeline_mode = #tpu.pipeline_mode<synchronous>, transform_indices = @transform_31, window_bounds = array<i64: 1, 32>}, {pipeline_mode = #tpu.pipeline_mode<synchronous>, transform_indices = @transform_32, window_bounds = array<i64: 32, 32>}, {pipeline_mode = #tpu.pipeline_mode<synchronous>, transform_indices = @transform_33, window_bounds = array<i64: 1, 32>}, {pipeline_mode = #tpu.pipeline_mode<synchronous>, transform_indices = @transform_34, window_bounds = array<i64: 32, 32>}, {pipeline_mode = #tpu.pipeline_mode<synchronous>, transform_indices = @transform_35, window_bounds = array<i64: 1, 32>}, {pipeline_mode = #tpu.pipeline_mode<synchronous>, transform_indices = @transform_36, window_bounds = array<i64: 1, 32>}, {pipeline_mode = #tpu.pipeline_mode<synchronous>, transform_indices = @transform_37, window_bounds = array<i64: 1, 32>}, {pipeline_mode = #tpu.pipeline_mode<synchronous>, transform_indices = @transform_38, window_bounds = array<i64: 1, 32>}, {pipeline_mode = #tpu.pipeline_mode<synchronous>, transform_indices = @transform_39, window_bounds = array<i64: 1, 32>}, {pipeline_mode = #tpu.pipeline_mode<synchronous>, transform_indices = @transform_40, window_bounds = array<i64: 1, 32>}, {pipeline_mode = #tpu.pipeline_mode<synchronous>, transform_indices = @transform_41, window_bounds = array<i64: 1, 32>}, {pipeline_mode = #tpu.pipeline_mode<synchronous>, transform_indices = @transform_42, window_bounds = array<i64: 32, 2048>}, {pipeline_mode = #tpu.pipeline_mode<synchronous>, transform_indices = @transform_43, window_bounds = array<i64: 1, 2048>}, {pipeline_mode = #tpu.pipeline_mode<synchronous>, transform_indices = @transform_44, window_bounds = array<i64: 2048, 32>}, {pipeline_mode = #tpu.pipeline_mode<synchronous>, transform_indices = @transform_45, window_bounds = array<i64: 1, 32>}, {pipeline_mode = #tpu.pipeline_mode<synchronous>, transform_indices = @transform_46, window_bounds = array<i64: 32, 256>}, {pipeline_mode = #tpu.pipeline_mode<synchronous>, transform_indices = @transform_47, window_bounds = array<i64: 1, 256>}, {transform_indices = @transform_48, window_bounds = array<i64: 1, 8, 256>}]} {
    %c0 = arith.constant 0 : index
    %c0_0 = arith.constant 0 : index
    %c0_1 = arith.constant 0 : index
    %0 = vector.load %arg1[%c0, %c0_0, %c0_1] : memref<1x8x32xf32, #tpu.memory_space<vmem>>, vector<1x8x32xf32>
    %1 = vector.shape_cast %0 : vector<1x8x32xf32> to vector<8x32xf32>
    %c0_2 = arith.constant 0 : index
    %c0_3 = arith.constant 0 : index
    %c0_4 = arith.constant 0 : index
    %2 = vector.load %arg2[%c0_2, %c0_3, %c0_4] : memref<1x1x32xf32, #tpu.memory_space<vmem>>, vector<1x1x32xf32>
    %3 = vector.shape_cast %2 : vector<1x1x32xf32> to vector<1x32xf32>
    %cst = arith.constant 0.000000e+00 : f32
    %4 = vector.broadcast %cst : f32 to vector<8x32xf32>
    %c0_5 = arith.constant 0 : index
    %c0_6 = arith.constant 0 : index
    %c0_7 = arith.constant 0 : index
    %5 = vector.load %arg3[%c0_5, %c0_6, %c0_7] : memref<4x32x8xf32, #tpu.memory_space<vmem>>, vector<1x32x8xf32>
    %6 = vector.shape_cast %5 : vector<1x32x8xf32> to vector<32x8xf32>
    %cst_8 = arith.constant dense<0.000000e+00> : vector<8x8xf32>
    %7 = tpu.matmul %1, %6, %cst_8 {dimension_numbers = #tpu.dot_dimension_numbers<[1], [0], [0], [1], [0, 0, 1, 1], [], []>} : vector<8x32xf32>, vector<32x8xf32>, vector<8x8xf32> -> vector<8x8xf32>
    %c0_9 = arith.constant 0 : index
    %c0_10 = arith.constant 0 : index
    %c0_11 = arith.constant 0 : index
    %8 = vector.load %arg6[%c0_9, %c0_10, %c0_11] : memref<4x1x8xf32, #tpu.memory_space<vmem>>, vector<1x1x8xf32>
    %9 = vector.shape_cast %8 : vector<1x1x8xf32> to vector<1x8xf32>
    %10 = vector.broadcast %9 : vector<1x8xf32> to vector<8x8xf32>
    %11 = arith.addf %7, %10 : vector<8x8xf32>
    %c0_12 = arith.constant 0 : index
    %c0_13 = arith.constant 0 : index
    %c0_14 = arith.constant 0 : index
    %12 = vector.load %arg4[%c0_12, %c0_13, %c0_14] : memref<4x32x8xf32, #tpu.memory_space<vmem>>, vector<1x32x8xf32>
    %13 = vector.shape_cast %12 : vector<1x32x8xf32> to vector<32x8xf32>
    %cst_15 = arith.constant dense<0.000000e+00> : vector<8x8xf32>
    %14 = tpu.matmul %1, %13, %cst_15 {dimension_numbers = #tpu.dot_dimension_numbers<[1], [0], [0], [1], [0, 0, 1, 1], [], []>} : vector<8x32xf32>, vector<32x8xf32>, vector<8x8xf32> -> vector<8x8xf32>
    %c0_16 = arith.constant 0 : index
    %c0_17 = arith.constant 0 : index
    %c0_18 = arith.constant 0 : index
    %15 = vector.load %arg7[%c0_16, %c0_17, %c0_18] : memref<4x1x8xf32, #tpu.memory_space<vmem>>, vector<1x1x8xf32>
    %16 = vector.shape_cast %15 : vector<1x1x8xf32> to vector<1x8xf32>
    %17 = vector.broadcast %16 : vector<1x8xf32> to vector<8x8xf32>
    %18 = arith.addf %14, %17 : vector<8x8xf32>
    %c0_19 = arith.constant 0 : index
    %c0_20 = arith.constant 0 : index
    %c0_21 = arith.constant 0 : index
    %19 = vector.load %arg5[%c0_19, %c0_20, %c0_21] : memref<4x32x8xf32, #tpu.memory_space<vmem>>, vector<1x32x8xf32>
    %20 = vector.shape_cast %19 : vector<1x32x8xf32> to vector<32x8xf32>
    %cst_22 = arith.constant dense<0.000000e+00> : vector<8x8xf32>
    %21 = tpu.matmul %1, %20, %cst_22 {dimension_numbers = #tpu.dot_dimension_numbers<[1], [0], [0], [1], [0, 0, 1, 1], [], []>} : vector<8x32xf32>, vector<32x8xf32>, vector<8x8xf32> -> vector<8x8xf32>
    %c0_23 = arith.constant 0 : index
    %c0_24 = arith.constant 0 : index
    %c0_25 = arith.constant 0 : index
    %22 = vector.load %arg8[%c0_23, %c0_24, %c0_25] : memref<4x1x8xf32, #tpu.memory_space<vmem>>, vector<1x1x8xf32>
    %23 = vector.shape_cast %22 : vector<1x1x8xf32> to vector<1x8xf32>
    %24 = vector.broadcast %23 : vector<1x8xf32> to vector<8x8xf32>
    %25 = arith.addf %21, %24 : vector<8x8xf32>
    %26 = tpu.transpose %18, [1, 0] : vector<8x8xf32> -> vector<8x8xf32>
    %cst_26 = arith.constant dense<0.000000e+00> : vector<8x8xf32>
    %27 = tpu.matmul %11, %26, %cst_26 {dimension_numbers = #tpu.dot_dimension_numbers<[1], [0], [0], [1], [0, 0, 1, 1], [], []>} : vector<8x8xf32>, vector<8x8xf32>, vector<8x8xf32> -> vector<8x8xf32>
    %cst_27 = arith.constant 0.353553385 : f32
    %28 = vector.broadcast %cst_27 : f32 to vector<8x8xf32>
    %29 = arith.mulf %27, %28 : vector<8x8xf32>
    %cst_28 = arith.constant dense<0xFF800000> : vector<8xf32>
    %30 = vector.multi_reduction <maximumf>, %29, %cst_28 [1] : vector<8x8xf32> to vector<8xf32>
    %31 = vector.shape_cast %30 : vector<8xf32> to vector<8x1xf32>
    %32 = vector.broadcast %31 : vector<8x1xf32> to vector<8x8xf32>
    %33 = arith.subf %29, %32 : vector<8x8xf32>
    %34 = math.exp %33 : vector<8x8xf32>
    %cst_29 = arith.constant dense<0.000000e+00> : vector<8xf32>
    %35 = vector.multi_reduction <add>, %34, %cst_29 [1] : vector<8x8xf32> to vector<8xf32>
    %36 = vector.shape_cast %35 : vector<8xf32> to vector<8x1xf32>
    %37 = vector.broadcast %36 : vector<8x1xf32> to vector<8x8xf32>
    %38 = arith.divf %34, %37 : vector<8x8xf32>
    %cst_30 = arith.constant dense<0.000000e+00> : vector<8x8xf32>
    %39 = tpu.matmul %38, %25, %cst_30 {dimension_numbers = #tpu.dot_dimension_numbers<[1], [0], [0], [1], [0, 0, 1, 1], [], []>} : vector<8x8xf32>, vector<8x8xf32>, vector<8x8xf32> -> vector<8x8xf32>
    %c0_31 = arith.constant 0 : index
    %c0_32 = arith.constant 0 : index
    %c0_33 = arith.constant 0 : index
    %40 = vector.load %arg9[%c0_31, %c0_32, %c0_33] : memref<4x8x32xf32, #tpu.memory_space<vmem>>, vector<1x8x32xf32>
    %41 = vector.shape_cast %40 : vector<1x8x32xf32> to vector<8x32xf32>
    %cst_34 = arith.constant dense<0.000000e+00> : vector<8x32xf32>
    %42 = tpu.matmul %39, %41, %cst_34 {dimension_numbers = #tpu.dot_dimension_numbers<[1], [0], [0], [1], [0, 0, 1, 1], [], []>} : vector<8x8xf32>, vector<8x32xf32>, vector<8x32xf32> -> vector<8x32xf32>
    %43 = arith.addf %4, %42 : vector<8x32xf32>
    %c1 = arith.constant 1 : index
    %c0_35 = arith.constant 0 : index
    %c0_36 = arith.constant 0 : index
    %44 = vector.load %arg3[%c1, %c0_35, %c0_36] : memref<4x32x8xf32, #tpu.memory_space<vmem>>, vector<1x32x8xf32>
    %45 = vector.shape_cast %44 : vector<1x32x8xf32> to vector<32x8xf32>
    %cst_37 = arith.constant dense<0.000000e+00> : vector<8x8xf32>
    %46 = tpu.matmul %1, %45, %cst_37 {dimension_numbers = #tpu.dot_dimension_numbers<[1], [0], [0], [1], [0, 0, 1, 1], [], []>} : vector<8x32xf32>, vector<32x8xf32>, vector<8x8xf32> -> vector<8x8xf32>
    %c1_38 = arith.constant 1 : index
    %c0_39 = arith.constant 0 : index
    %c0_40 = arith.constant 0 : index
    %47 = vector.load %arg6[%c1_38, %c0_39, %c0_40] : memref<4x1x8xf32, #tpu.memory_space<vmem>>, vector<1x1x8xf32>
    %48 = vector.shape_cast %47 : vector<1x1x8xf32> to vector<1x8xf32>
    %49 = vector.broadcast %48 : vector<1x8xf32> to vector<8x8xf32>
    %50 = arith.addf %46, %49 : vector<8x8xf32>
    %c1_41 = arith.constant 1 : index
    %c0_42 = arith.constant 0 : index
    %c0_43 = arith.constant 0 : index
    %51 = vector.load %arg4[%c1_41, %c0_42, %c0_43] : memref<4x32x8xf32, #tpu.memory_space<vmem>>, vector<1x32x8xf32>
    %52 = vector.shape_cast %51 : vector<1x32x8xf32> to vector<32x8xf32>
    %cst_44 = arith.constant dense<0.000000e+00> : vector<8x8xf32>
    %53 = tpu.matmul %1, %52, %cst_44 {dimension_numbers = #tpu.dot_dimension_numbers<[1], [0], [0], [1], [0, 0, 1, 1], [], []>} : vector<8x32xf32>, vector<32x8xf32>, vector<8x8xf32> -> vector<8x8xf32>
    %c1_45 = arith.constant 1 : index
    %c0_46 = arith.constant 0 : index
    %c0_47 = arith.constant 0 : index
    %54 = vector.load %arg7[%c1_45, %c0_46, %c0_47] : memref<4x1x8xf32, #tpu.memory_space<vmem>>, vector<1x1x8xf32>
    %55 = vector.shape_cast %54 : vector<1x1x8xf32> to vector<1x8xf32>
    %56 = vector.broadcast %55 : vector<1x8xf32> to vector<8x8xf32>
    %57 = arith.addf %53, %56 : vector<8x8xf32>
    %c1_48 = arith.constant 1 : index
    %c0_49 = arith.constant 0 : index
    %c0_50 = arith.constant 0 : index
    %58 = vector.load %arg5[%c1_48, %c0_49, %c0_50] : memref<4x32x8xf32, #tpu.memory_space<vmem>>, vector<1x32x8xf32>
    %59 = vector.shape_cast %58 : vector<1x32x8xf32> to vector<32x8xf32>
    %cst_51 = arith.constant dense<0.000000e+00> : vector<8x8xf32>
    %60 = tpu.matmul %1, %59, %cst_51 {dimension_numbers = #tpu.dot_dimension_numbers<[1], [0], [0], [1], [0, 0, 1, 1], [], []>} : vector<8x32xf32>, vector<32x8xf32>, vector<8x8xf32> -> vector<8x8xf32>
    %c1_52 = arith.constant 1 : index
    %c0_53 = arith.constant 0 : index
    %c0_54 = arith.constant 0 : index
    %61 = vector.load %arg8[%c1_52, %c0_53, %c0_54] : memref<4x1x8xf32, #tpu.memory_space<vmem>>, vector<1x1x8xf32>
    %62 = vector.shape_cast %61 : vector<1x1x8xf32> to vector<1x8xf32>
    %63 = vector.broadcast %62 : vector<1x8xf32> to vector<8x8xf32>
    %64 = arith.addf %60, %63 : vector<8x8xf32>
    %65 = tpu.transpose %57, [1, 0] : vector<8x8xf32> -> vector<8x8xf32>
    %cst_55 = arith.constant dense<0.000000e+00> : vector<8x8xf32>
    %66 = tpu.matmul %50, %65, %cst_55 {dimension_numbers = #tpu.dot_dimension_numbers<[1], [0], [0], [1], [0, 0, 1, 1], [], []>} : vector<8x8xf32>, vector<8x8xf32>, vector<8x8xf32> -> vector<8x8xf32>
    %cst_56 = arith.constant 0.353553385 : f32
    %67 = vector.broadcast %cst_56 : f32 to vector<8x8xf32>
    %68 = arith.mulf %66, %67 : vector<8x8xf32>
    %cst_57 = arith.constant dense<0xFF800000> : vector<8xf32>
    %69 = vector.multi_reduction <maximumf>, %68, %cst_57 [1] : vector<8x8xf32> to vector<8xf32>
    %70 = vector.shape_cast %69 : vector<8xf32> to vector<8x1xf32>
    %71 = vector.broadcast %70 : vector<8x1xf32> to vector<8x8xf32>
    %72 = arith.subf %68, %71 : vector<8x8xf32>
    %73 = math.exp %72 : vector<8x8xf32>
    %cst_58 = arith.constant dense<0.000000e+00> : vector<8xf32>
    %74 = vector.multi_reduction <add>, %73, %cst_58 [1] : vector<8x8xf32> to vector<8xf32>
    %75 = vector.shape_cast %74 : vector<8xf32> to vector<8x1xf32>
    %76 = vector.broadcast %75 : vector<8x1xf32> to vector<8x8xf32>
    %77 = arith.divf %73, %76 : vector<8x8xf32>
    %cst_59 = arith.constant dense<0.000000e+00> : vector<8x8xf32>
    %78 = tpu.matmul %77, %64, %cst_59 {dimension_numbers = #tpu.dot_dimension_numbers<[1], [0], [0], [1], [0, 0, 1, 1], [], []>} : vector<8x8xf32>, vector<8x8xf32>, vector<8x8xf32> -> vector<8x8xf32>
    %c1_60 = arith.constant 1 : index
    %c0_61 = arith.constant 0 : index
    %c0_62 = arith.constant 0 : index
    %79 = vector.load %arg9[%c1_60, %c0_61, %c0_62] : memref<4x8x32xf32, #tpu.memory_space<vmem>>, vector<1x8x32xf32>
    %80 = vector.shape_cast %79 : vector<1x8x32xf32> to vector<8x32xf32>
    %cst_63 = arith.constant dense<0.000000e+00> : vector<8x32xf32>
    %81 = tpu.matmul %78, %80, %cst_63 {dimension_numbers = #tpu.dot_dimension_numbers<[1], [0], [0], [1], [0, 0, 1, 1], [], []>} : vector<8x8xf32>, vector<8x32xf32>, vector<8x32xf32> -> vector<8x32xf32>
    %82 = arith.addf %43, %81 : vector<8x32xf32>
    %c2 = arith.constant 2 : index
    %c0_64 = arith.constant 0 : index
    %c0_65 = arith.constant 0 : index
    %83 = vector.load %arg3[%c2, %c0_64, %c0_65] : memref<4x32x8xf32, #tpu.memory_space<vmem>>, vector<1x32x8xf32>
    %84 = vector.shape_cast %83 : vector<1x32x8xf32> to vector<32x8xf32>
    %cst_66 = arith.constant dense<0.000000e+00> : vector<8x8xf32>
    %85 = tpu.matmul %1, %84, %cst_66 {dimension_numbers = #tpu.dot_dimension_numbers<[1], [0], [0], [1], [0, 0, 1, 1], [], []>} : vector<8x32xf32>, vector<32x8xf32>, vector<8x8xf32> -> vector<8x8xf32>
    %c2_67 = arith.constant 2 : index
    %c0_68 = arith.constant 0 : index
    %c0_69 = arith.constant 0 : index
    %86 = vector.load %arg6[%c2_67, %c0_68, %c0_69] : memref<4x1x8xf32, #tpu.memory_space<vmem>>, vector<1x1x8xf32>
    %87 = vector.shape_cast %86 : vector<1x1x8xf32> to vector<1x8xf32>
    %88 = vector.broadcast %87 : vector<1x8xf32> to vector<8x8xf32>
    %89 = arith.addf %85, %88 : vector<8x8xf32>
    %c2_70 = arith.constant 2 : index
    %c0_71 = arith.constant 0 : index
    %c0_72 = arith.constant 0 : index
    %90 = vector.load %arg4[%c2_70, %c0_71, %c0_72] : memref<4x32x8xf32, #tpu.memory_space<vmem>>, vector<1x32x8xf32>
    %91 = vector.shape_cast %90 : vector<1x32x8xf32> to vector<32x8xf32>
    %cst_73 = arith.constant dense<0.000000e+00> : vector<8x8xf32>
    %92 = tpu.matmul %1, %91, %cst_73 {dimension_numbers = #tpu.dot_dimension_numbers<[1], [0], [0], [1], [0, 0, 1, 1], [], []>} : vector<8x32xf32>, vector<32x8xf32>, vector<8x8xf32> -> vector<8x8xf32>
    %c2_74 = arith.constant 2 : index
    %c0_75 = arith.constant 0 : index
    %c0_76 = arith.constant 0 : index
    %93 = vector.load %arg7[%c2_74, %c0_75, %c0_76] : memref<4x1x8xf32, #tpu.memory_space<vmem>>, vector<1x1x8xf32>
    %94 = vector.shape_cast %93 : vector<1x1x8xf32> to vector<1x8xf32>
    %95 = vector.broadcast %94 : vector<1x8xf32> to vector<8x8xf32>
    %96 = arith.addf %92, %95 : vector<8x8xf32>
    %c2_77 = arith.constant 2 : index
    %c0_78 = arith.constant 0 : index
    %c0_79 = arith.constant 0 : index
    %97 = vector.load %arg5[%c2_77, %c0_78, %c0_79] : memref<4x32x8xf32, #tpu.memory_space<vmem>>, vector<1x32x8xf32>
    %98 = vector.shape_cast %97 : vector<1x32x8xf32> to vector<32x8xf32>
    %cst_80 = arith.constant dense<0.000000e+00> : vector<8x8xf32>
    %99 = tpu.matmul %1, %98, %cst_80 {dimension_numbers = #tpu.dot_dimension_numbers<[1], [0], [0], [1], [0, 0, 1, 1], [], []>} : vector<8x32xf32>, vector<32x8xf32>, vector<8x8xf32> -> vector<8x8xf32>
    %c2_81 = arith.constant 2 : index
    %c0_82 = arith.constant 0 : index
    %c0_83 = arith.constant 0 : index
    %100 = vector.load %arg8[%c2_81, %c0_82, %c0_83] : memref<4x1x8xf32, #tpu.memory_space<vmem>>, vector<1x1x8xf32>
    %101 = vector.shape_cast %100 : vector<1x1x8xf32> to vector<1x8xf32>
    %102 = vector.broadcast %101 : vector<1x8xf32> to vector<8x8xf32>
    %103 = arith.addf %99, %102 : vector<8x8xf32>
    %104 = tpu.transpose %96, [1, 0] : vector<8x8xf32> -> vector<8x8xf32>
    %cst_84 = arith.constant dense<0.000000e+00> : vector<8x8xf32>
    %105 = tpu.matmul %89, %104, %cst_84 {dimension_numbers = #tpu.dot_dimension_numbers<[1], [0], [0], [1], [0, 0, 1, 1], [], []>} : vector<8x8xf32>, vector<8x8xf32>, vector<8x8xf32> -> vector<8x8xf32>
    %cst_85 = arith.constant 0.353553385 : f32
    %106 = vector.broadcast %cst_85 : f32 to vector<8x8xf32>
    %107 = arith.mulf %105, %106 : vector<8x8xf32>
    %cst_86 = arith.constant dense<0xFF800000> : vector<8xf32>
    %108 = vector.multi_reduction <maximumf>, %107, %cst_86 [1] : vector<8x8xf32> to vector<8xf32>
    %109 = vector.shape_cast %108 : vector<8xf32> to vector<8x1xf32>
    %110 = vector.broadcast %109 : vector<8x1xf32> to vector<8x8xf32>
    %111 = arith.subf %107, %110 : vector<8x8xf32>
    %112 = math.exp %111 : vector<8x8xf32>
    %cst_87 = arith.constant dense<0.000000e+00> : vector<8xf32>
    %113 = vector.multi_reduction <add>, %112, %cst_87 [1] : vector<8x8xf32> to vector<8xf32>
    %114 = vector.shape_cast %113 : vector<8xf32> to vector<8x1xf32>
    %115 = vector.broadcast %114 : vector<8x1xf32> to vector<8x8xf32>
    %116 = arith.divf %112, %115 : vector<8x8xf32>
    %cst_88 = arith.constant dense<0.000000e+00> : vector<8x8xf32>
    %117 = tpu.matmul %116, %103, %cst_88 {dimension_numbers = #tpu.dot_dimension_numbers<[1], [0], [0], [1], [0, 0, 1, 1], [], []>} : vector<8x8xf32>, vector<8x8xf32>, vector<8x8xf32> -> vector<8x8xf32>
    %c2_89 = arith.constant 2 : index
    %c0_90 = arith.constant 0 : index
    %c0_91 = arith.constant 0 : index
    %118 = vector.load %arg9[%c2_89, %c0_90, %c0_91] : memref<4x8x32xf32, #tpu.memory_space<vmem>>, vector<1x8x32xf32>
    %119 = vector.shape_cast %118 : vector<1x8x32xf32> to vector<8x32xf32>
    %cst_92 = arith.constant dense<0.000000e+00> : vector<8x32xf32>
    %120 = tpu.matmul %117, %119, %cst_92 {dimension_numbers = #tpu.dot_dimension_numbers<[1], [0], [0], [1], [0, 0, 1, 1], [], []>} : vector<8x8xf32>, vector<8x32xf32>, vector<8x32xf32> -> vector<8x32xf32>
    %121 = arith.addf %82, %120 : vector<8x32xf32>
    %c3 = arith.constant 3 : index
    %c0_93 = arith.constant 0 : index
    %c0_94 = arith.constant 0 : index
    %122 = vector.load %arg3[%c3, %c0_93, %c0_94] : memref<4x32x8xf32, #tpu.memory_space<vmem>>, vector<1x32x8xf32>
    %123 = vector.shape_cast %122 : vector<1x32x8xf32> to vector<32x8xf32>
    %cst_95 = arith.constant dense<0.000000e+00> : vector<8x8xf32>
    %124 = tpu.matmul %1, %123, %cst_95 {dimension_numbers = #tpu.dot_dimension_numbers<[1], [0], [0], [1], [0, 0, 1, 1], [], []>} : vector<8x32xf32>, vector<32x8xf32>, vector<8x8xf32> -> vector<8x8xf32>
    %c3_96 = arith.constant 3 : index
    %c0_97 = arith.constant 0 : index
    %c0_98 = arith.constant 0 : index
    %125 = vector.load %arg6[%c3_96, %c0_97, %c0_98] : memref<4x1x8xf32, #tpu.memory_space<vmem>>, vector<1x1x8xf32>
    %126 = vector.shape_cast %125 : vector<1x1x8xf32> to vector<1x8xf32>
    %127 = vector.broadcast %126 : vector<1x8xf32> to vector<8x8xf32>
    %128 = arith.addf %124, %127 : vector<8x8xf32>
    %c3_99 = arith.constant 3 : index
    %c0_100 = arith.constant 0 : index
    %c0_101 = arith.constant 0 : index
    %129 = vector.load %arg4[%c3_99, %c0_100, %c0_101] : memref<4x32x8xf32, #tpu.memory_space<vmem>>, vector<1x32x8xf32>
    %130 = vector.shape_cast %129 : vector<1x32x8xf32> to vector<32x8xf32>
    %cst_102 = arith.constant dense<0.000000e+00> : vector<8x8xf32>
    %131 = tpu.matmul %1, %130, %cst_102 {dimension_numbers = #tpu.dot_dimension_numbers<[1], [0], [0], [1], [0, 0, 1, 1], [], []>} : vector<8x32xf32>, vector<32x8xf32>, vector<8x8xf32> -> vector<8x8xf32>
    %c3_103 = arith.constant 3 : index
    %c0_104 = arith.constant 0 : index
    %c0_105 = arith.constant 0 : index
    %132 = vector.load %arg7[%c3_103, %c0_104, %c0_105] : memref<4x1x8xf32, #tpu.memory_space<vmem>>, vector<1x1x8xf32>
    %133 = vector.shape_cast %132 : vector<1x1x8xf32> to vector<1x8xf32>
    %134 = vector.broadcast %133 : vector<1x8xf32> to vector<8x8xf32>
    %135 = arith.addf %131, %134 : vector<8x8xf32>
    %c3_106 = arith.constant 3 : index
    %c0_107 = arith.constant 0 : index
    %c0_108 = arith.constant 0 : index
    %136 = vector.load %arg5[%c3_106, %c0_107, %c0_108] : memref<4x32x8xf32, #tpu.memory_space<vmem>>, vector<1x32x8xf32>
    %137 = vector.shape_cast %136 : vector<1x32x8xf32> to vector<32x8xf32>
    %cst_109 = arith.constant dense<0.000000e+00> : vector<8x8xf32>
    %138 = tpu.matmul %1, %137, %cst_109 {dimension_numbers = #tpu.dot_dimension_numbers<[1], [0], [0], [1], [0, 0, 1, 1], [], []>} : vector<8x32xf32>, vector<32x8xf32>, vector<8x8xf32> -> vector<8x8xf32>
    %c3_110 = arith.constant 3 : index
    %c0_111 = arith.constant 0 : index
    %c0_112 = arith.constant 0 : index
    %139 = vector.load %arg8[%c3_110, %c0_111, %c0_112] : memref<4x1x8xf32, #tpu.memory_space<vmem>>, vector<1x1x8xf32>
    %140 = vector.shape_cast %139 : vector<1x1x8xf32> to vector<1x8xf32>
    %141 = vector.broadcast %140 : vector<1x8xf32> to vector<8x8xf32>
    %142 = arith.addf %138, %141 : vector<8x8xf32>
    %143 = tpu.transpose %135, [1, 0] : vector<8x8xf32> -> vector<8x8xf32>
    %cst_113 = arith.constant dense<0.000000e+00> : vector<8x8xf32>
    %144 = tpu.matmul %128, %143, %cst_113 {dimension_numbers = #tpu.dot_dimension_numbers<[1], [0], [0], [1], [0, 0, 1, 1], [], []>} : vector<8x8xf32>, vector<8x8xf32>, vector<8x8xf32> -> vector<8x8xf32>
    %cst_114 = arith.constant 0.353553385 : f32
    %145 = vector.broadcast %cst_114 : f32 to vector<8x8xf32>
    %146 = arith.mulf %144, %145 : vector<8x8xf32>
    %cst_115 = arith.constant dense<0xFF800000> : vector<8xf32>
    %147 = vector.multi_reduction <maximumf>, %146, %cst_115 [1] : vector<8x8xf32> to vector<8xf32>
    %148 = vector.shape_cast %147 : vector<8xf32> to vector<8x1xf32>
    %149 = vector.broadcast %148 : vector<8x1xf32> to vector<8x8xf32>
    %150 = arith.subf %146, %149 : vector<8x8xf32>
    %151 = math.exp %150 : vector<8x8xf32>
    %cst_116 = arith.constant dense<0.000000e+00> : vector<8xf32>
    %152 = vector.multi_reduction <add>, %151, %cst_116 [1] : vector<8x8xf32> to vector<8xf32>
    %153 = vector.shape_cast %152 : vector<8xf32> to vector<8x1xf32>
    %154 = vector.broadcast %153 : vector<8x1xf32> to vector<8x8xf32>
    %155 = arith.divf %151, %154 : vector<8x8xf32>
    %cst_117 = arith.constant dense<0.000000e+00> : vector<8x8xf32>
    %156 = tpu.matmul %155, %142, %cst_117 {dimension_numbers = #tpu.dot_dimension_numbers<[1], [0], [0], [1], [0, 0, 1, 1], [], []>} : vector<8x8xf32>, vector<8x8xf32>, vector<8x8xf32> -> vector<8x8xf32>
    %c3_118 = arith.constant 3 : index
    %c0_119 = arith.constant 0 : index
    %c0_120 = arith.constant 0 : index
    %157 = vector.load %arg9[%c3_118, %c0_119, %c0_120] : memref<4x8x32xf32, #tpu.memory_space<vmem>>, vector<1x8x32xf32>
    %158 = vector.shape_cast %157 : vector<1x8x32xf32> to vector<8x32xf32>
    %cst_121 = arith.constant dense<0.000000e+00> : vector<8x32xf32>
    %159 = tpu.matmul %156, %158, %cst_121 {dimension_numbers = #tpu.dot_dimension_numbers<[1], [0], [0], [1], [0, 0, 1, 1], [], []>} : vector<8x8xf32>, vector<8x32xf32>, vector<8x32xf32> -> vector<8x32xf32>
    %160 = arith.addf %121, %159 : vector<8x32xf32>
    %c0_122 = arith.constant 0 : index
    %c0_123 = arith.constant 0 : index
    %161 = vector.load %arg10[%c0_122, %c0_123] : memref<1x32xf32, #tpu.memory_space<vmem>>, vector<1x32xf32>
    %162 = vector.broadcast %161 : vector<1x32xf32> to vector<8x32xf32>
    %163 = arith.addf %160, %162 : vector<8x32xf32>
    %164 = arith.addf %1, %163 : vector<8x32xf32>
    %c0_124 = arith.constant 0 : index
    %c0_125 = arith.constant 0 : index
    %165 = vector.load %arg15[%c0_124, %c0_125] : memref<1x32xf32, #tpu.memory_space<vmem>>, vector<1x32xf32>
    %c0_126 = arith.constant 0 : index
    %c0_127 = arith.constant 0 : index
    %166 = vector.load %arg16[%c0_126, %c0_127] : memref<1x32xf32, #tpu.memory_space<vmem>>, vector<1x32xf32>
    %cst_128 = arith.constant dense<0.000000e+00> : vector<8xf32>
    %167 = vector.multi_reduction <add>, %164, %cst_128 [1] : vector<8x32xf32> to vector<8xf32>
    %168 = vector.shape_cast %167 : vector<8xf32> to vector<8x1xf32>
    %cst_129 = arith.constant 3.200000e+01 : f32
    %169 = vector.broadcast %cst_129 : f32 to vector<8x1xf32>
    %170 = arith.divf %168, %169 : vector<8x1xf32>
    %171 = vector.broadcast %170 : vector<8x1xf32> to vector<8x32xf32>
    %172 = arith.subf %164, %171 : vector<8x32xf32>
    %173 = arith.mulf %172, %172 : vector<8x32xf32>
    %cst_130 = arith.constant dense<0.000000e+00> : vector<8xf32>
    %174 = vector.multi_reduction <add>, %173, %cst_130 [1] : vector<8x32xf32> to vector<8xf32>
    %175 = vector.shape_cast %174 : vector<8xf32> to vector<8x1xf32>
    %cst_131 = arith.constant 3.200000e+01 : f32
    %176 = vector.broadcast %cst_131 : f32 to vector<8x1xf32>
    %177 = arith.divf %175, %176 : vector<8x1xf32>
    %178 = vector.broadcast %170 : vector<8x1xf32> to vector<8x32xf32>
    %179 = arith.subf %164, %178 : vector<8x32xf32>
    %cst_132 = arith.constant 9.99999974E-6 : f32
    %180 = vector.broadcast %cst_132 : f32 to vector<8x1xf32>
    %181 = arith.addf %177, %180 : vector<8x1xf32>
    %182 = math.rsqrt %181 : vector<8x1xf32>
    %183 = vector.broadcast %182 : vector<8x1xf32> to vector<8x32xf32>
    %184 = arith.mulf %179, %183 : vector<8x32xf32>
    %185 = vector.broadcast %165 : vector<1x32xf32> to vector<8x32xf32>
    %186 = arith.mulf %184, %185 : vector<8x32xf32>
    %187 = vector.broadcast %166 : vector<1x32xf32> to vector<8x32xf32>
    %188 = arith.addf %186, %187 : vector<8x32xf32>
    %c0_133 = arith.constant 0 : index
    %c0_134 = arith.constant 0 : index
    %189 = vector.load %arg11[%c0_133, %c0_134] : memref<32x32xf32, #tpu.memory_space<vmem>>, vector<32x32xf32>
    %cst_135 = arith.constant dense<0.000000e+00> : vector<1x32xf32>
    %190 = tpu.matmul %3, %189, %cst_135 {dimension_numbers = #tpu.dot_dimension_numbers<[1], [0], [0], [1], [0, 0, 1, 1], [], []>} : vector<1x32xf32>, vector<32x32xf32>, vector<1x32xf32> -> vector<1x32xf32>
    %c0_136 = arith.constant 0 : index
    %c0_137 = arith.constant 0 : index
    %191 = vector.load %arg12[%c0_136, %c0_137] : memref<1x32xf32, #tpu.memory_space<vmem>>, vector<1x32xf32>
    %192 = arith.addf %190, %191 : vector<1x32xf32>
    %c0_138 = arith.constant 0 : index
    %c0_139 = arith.constant 0 : index
    %193 = vector.load %arg13[%c0_138, %c0_139] : memref<32x32xf32, #tpu.memory_space<vmem>>, vector<32x32xf32>
    %cst_140 = arith.constant dense<0.000000e+00> : vector<1x32xf32>
    %194 = tpu.matmul %192, %193, %cst_140 {dimension_numbers = #tpu.dot_dimension_numbers<[1], [0], [0], [1], [0, 0, 1, 1], [], []>} : vector<1x32xf32>, vector<32x32xf32>, vector<1x32xf32> -> vector<1x32xf32>
    %c0_141 = arith.constant 0 : index
    %c0_142 = arith.constant 0 : index
    %195 = vector.load %arg14[%c0_141, %c0_142] : memref<1x32xf32, #tpu.memory_space<vmem>>, vector<1x32xf32>
    %196 = arith.addf %194, %195 : vector<1x32xf32>
    %197 = vector.broadcast %196 : vector<1x32xf32> to vector<8x32xf32>
    %198 = arith.addf %188, %197 : vector<8x32xf32>
    %c0_143 = arith.constant 0 : index
    %c0_144 = arith.constant 0 : index
    %199 = vector.load %arg17[%c0_143, %c0_144] : memref<1x32xf32, #tpu.memory_space<vmem>>, vector<1x32xf32>
    %c0_145 = arith.constant 0 : index
    %c0_146 = arith.constant 0 : index
    %200 = vector.load %arg18[%c0_145, %c0_146] : memref<1x32xf32, #tpu.memory_space<vmem>>, vector<1x32xf32>
    %cst_147 = arith.constant dense<0.000000e+00> : vector<8xf32>
    %201 = vector.multi_reduction <add>, %198, %cst_147 [1] : vector<8x32xf32> to vector<8xf32>
    %202 = vector.shape_cast %201 : vector<8xf32> to vector<8x1xf32>
    %cst_148 = arith.constant 3.200000e+01 : f32
    %203 = vector.broadcast %cst_148 : f32 to vector<8x1xf32>
    %204 = arith.divf %202, %203 : vector<8x1xf32>
    %205 = vector.broadcast %204 : vector<8x1xf32> to vector<8x32xf32>
    %206 = arith.subf %198, %205 : vector<8x32xf32>
    %207 = arith.mulf %206, %206 : vector<8x32xf32>
    %cst_149 = arith.constant dense<0.000000e+00> : vector<8xf32>
    %208 = vector.multi_reduction <add>, %207, %cst_149 [1] : vector<8x32xf32> to vector<8xf32>
    %209 = vector.shape_cast %208 : vector<8xf32> to vector<8x1xf32>
    %cst_150 = arith.constant 3.200000e+01 : f32
    %210 = vector.broadcast %cst_150 : f32 to vector<8x1xf32>
    %211 = arith.divf %209, %210 : vector<8x1xf32>
    %212 = vector.broadcast %204 : vector<8x1xf32> to vector<8x32xf32>
    %213 = arith.subf %198, %212 : vector<8x32xf32>
    %cst_151 = arith.constant 9.99999974E-6 : f32
    %214 = vector.broadcast %cst_151 : f32 to vector<8x1xf32>
    %215 = arith.addf %211, %214 : vector<8x1xf32>
    %216 = math.rsqrt %215 : vector<8x1xf32>
    %217 = vector.broadcast %216 : vector<8x1xf32> to vector<8x32xf32>
    %218 = arith.mulf %213, %217 : vector<8x32xf32>
    %219 = vector.broadcast %199 : vector<1x32xf32> to vector<8x32xf32>
    %220 = arith.mulf %218, %219 : vector<8x32xf32>
    %221 = vector.broadcast %200 : vector<1x32xf32> to vector<8x32xf32>
    %222 = arith.addf %220, %221 : vector<8x32xf32>
    %c0_152 = arith.constant 0 : index
    %c0_153 = arith.constant 0 : index
    %223 = vector.load %arg21[%c0_152, %c0_153] : memref<32x2048xf32, #tpu.memory_space<vmem>>, vector<32x2048xf32>
    %cst_154 = arith.constant dense<0.000000e+00> : vector<8x2048xf32>
    %224 = tpu.matmul %222, %223, %cst_154 {dimension_numbers = #tpu.dot_dimension_numbers<[1], [0], [0], [1], [0, 0, 1, 1], [], []>} : vector<8x32xf32>, vector<32x2048xf32>, vector<8x2048xf32> -> vector<8x2048xf32>
    %c0_155 = arith.constant 0 : index
    %c0_156 = arith.constant 0 : index
    %225 = vector.load %arg22[%c0_155, %c0_156] : memref<1x2048xf32, #tpu.memory_space<vmem>>, vector<1x2048xf32>
    %226 = vector.broadcast %225 : vector<1x2048xf32> to vector<8x2048xf32>
    %227 = arith.addf %224, %226 : vector<8x2048xf32>
    %cst_157 = arith.constant 0.000000e+00 : f32
    %228 = vector.broadcast %cst_157 : f32 to vector<8x2048xf32>
    %229 = arith.maximumf %227, %228 : vector<8x2048xf32>
    %c0_158 = arith.constant 0 : index
    %c0_159 = arith.constant 0 : index
    %230 = vector.load %arg23[%c0_158, %c0_159] : memref<2048x32xf32, #tpu.memory_space<vmem>>, vector<2048x32xf32>
    %cst_160 = arith.constant dense<0.000000e+00> : vector<8x32xf32>
    %231 = tpu.matmul %229, %230, %cst_160 {dimension_numbers = #tpu.dot_dimension_numbers<[1], [0], [0], [1], [0, 0, 1, 1], [], []>} : vector<8x2048xf32>, vector<2048x32xf32>, vector<8x32xf32> -> vector<8x32xf32>
    %c0_161 = arith.constant 0 : index
    %c0_162 = arith.constant 0 : index
    %232 = vector.load %arg24[%c0_161, %c0_162] : memref<1x32xf32, #tpu.memory_space<vmem>>, vector<1x32xf32>
    %233 = vector.broadcast %232 : vector<1x32xf32> to vector<8x32xf32>
    %234 = arith.addf %231, %233 : vector<8x32xf32>
    %235 = arith.addf %222, %234 : vector<8x32xf32>
    %c0_163 = arith.constant 0 : index
    %c0_164 = arith.constant 0 : index
    %236 = vector.load %arg19[%c0_163, %c0_164] : memref<1x32xf32, #tpu.memory_space<vmem>>, vector<1x32xf32>
    %c0_165 = arith.constant 0 : index
    %c0_166 = arith.constant 0 : index
    %237 = vector.load %arg20[%c0_165, %c0_166] : memref<1x32xf32, #tpu.memory_space<vmem>>, vector<1x32xf32>
    %cst_167 = arith.constant dense<0.000000e+00> : vector<8xf32>
    %238 = vector.multi_reduction <add>, %235, %cst_167 [1] : vector<8x32xf32> to vector<8xf32>
    %239 = vector.shape_cast %238 : vector<8xf32> to vector<8x1xf32>
    %cst_168 = arith.constant 3.200000e+01 : f32
    %240 = vector.broadcast %cst_168 : f32 to vector<8x1xf32>
    %241 = arith.divf %239, %240 : vector<8x1xf32>
    %242 = vector.broadcast %241 : vector<8x1xf32> to vector<8x32xf32>
    %243 = arith.subf %235, %242 : vector<8x32xf32>
    %244 = arith.mulf %243, %243 : vector<8x32xf32>
    %cst_169 = arith.constant dense<0.000000e+00> : vector<8xf32>
    %245 = vector.multi_reduction <add>, %244, %cst_169 [1] : vector<8x32xf32> to vector<8xf32>
    %246 = vector.shape_cast %245 : vector<8xf32> to vector<8x1xf32>
    %cst_170 = arith.constant 3.200000e+01 : f32
    %247 = vector.broadcast %cst_170 : f32 to vector<8x1xf32>
    %248 = arith.divf %246, %247 : vector<8x1xf32>
    %249 = vector.broadcast %241 : vector<8x1xf32> to vector<8x32xf32>
    %250 = arith.subf %235, %249 : vector<8x32xf32>
    %cst_171 = arith.constant 9.99999974E-6 : f32
    %251 = vector.broadcast %cst_171 : f32 to vector<8x1xf32>
    %252 = arith.addf %248, %251 : vector<8x1xf32>
    %253 = math.rsqrt %252 : vector<8x1xf32>
    %254 = vector.broadcast %253 : vector<8x1xf32> to vector<8x32xf32>
    %255 = arith.mulf %250, %254 : vector<8x32xf32>
    %256 = vector.broadcast %236 : vector<1x32xf32> to vector<8x32xf32>
    %257 = arith.mulf %255, %256 : vector<8x32xf32>
    %258 = vector.broadcast %237 : vector<1x32xf32> to vector<8x32xf32>
    %259 = arith.addf %257, %258 : vector<8x32xf32>
    %cst_172 = arith.constant 0.000000e+00 : f32
    %260 = vector.broadcast %cst_172 : f32 to vector<8x32xf32>
    %c0_173 = arith.constant 0 : index
    %c0_174 = arith.constant 0 : index
    %c0_175 = arith.constant 0 : index
    %261 = vector.load %arg25[%c0_173, %c0_174, %c0_175] : memref<4x32x8xf32, #tpu.memory_space<vmem>>, vector<1x32x8xf32>
    %262 = vector.shape_cast %261 : vector<1x32x8xf32> to vector<32x8xf32>
    %cst_176 = arith.constant dense<0.000000e+00> : vector<8x8xf32>
    %263 = tpu.matmul %259, %262, %cst_176 {dimension_numbers = #tpu.dot_dimension_numbers<[1], [0], [0], [1], [0, 0, 1, 1], [], []>} : vector<8x32xf32>, vector<32x8xf32>, vector<8x8xf32> -> vector<8x8xf32>
    %c0_177 = arith.constant 0 : index
    %c0_178 = arith.constant 0 : index
    %c0_179 = arith.constant 0 : index
    %264 = vector.load %arg28[%c0_177, %c0_178, %c0_179] : memref<4x1x8xf32, #tpu.memory_space<vmem>>, vector<1x1x8xf32>
    %265 = vector.shape_cast %264 : vector<1x1x8xf32> to vector<1x8xf32>
    %266 = vector.broadcast %265 : vector<1x8xf32> to vector<8x8xf32>
    %267 = arith.addf %263, %266 : vector<8x8xf32>
    %c0_180 = arith.constant 0 : index
    %c0_181 = arith.constant 0 : index
    %c0_182 = arith.constant 0 : index
    %268 = vector.load %arg26[%c0_180, %c0_181, %c0_182] : memref<4x32x8xf32, #tpu.memory_space<vmem>>, vector<1x32x8xf32>
    %269 = vector.shape_cast %268 : vector<1x32x8xf32> to vector<32x8xf32>
    %cst_183 = arith.constant dense<0.000000e+00> : vector<8x8xf32>
    %270 = tpu.matmul %259, %269, %cst_183 {dimension_numbers = #tpu.dot_dimension_numbers<[1], [0], [0], [1], [0, 0, 1, 1], [], []>} : vector<8x32xf32>, vector<32x8xf32>, vector<8x8xf32> -> vector<8x8xf32>
    %c0_184 = arith.constant 0 : index
    %c0_185 = arith.constant 0 : index
    %c0_186 = arith.constant 0 : index
    %271 = vector.load %arg29[%c0_184, %c0_185, %c0_186] : memref<4x1x8xf32, #tpu.memory_space<vmem>>, vector<1x1x8xf32>
    %272 = vector.shape_cast %271 : vector<1x1x8xf32> to vector<1x8xf32>
    %273 = vector.broadcast %272 : vector<1x8xf32> to vector<8x8xf32>
    %274 = arith.addf %270, %273 : vector<8x8xf32>
    %c0_187 = arith.constant 0 : index
    %c0_188 = arith.constant 0 : index
    %c0_189 = arith.constant 0 : index
    %275 = vector.load %arg27[%c0_187, %c0_188, %c0_189] : memref<4x32x8xf32, #tpu.memory_space<vmem>>, vector<1x32x8xf32>
    %276 = vector.shape_cast %275 : vector<1x32x8xf32> to vector<32x8xf32>
    %cst_190 = arith.constant dense<0.000000e+00> : vector<8x8xf32>
    %277 = tpu.matmul %259, %276, %cst_190 {dimension_numbers = #tpu.dot_dimension_numbers<[1], [0], [0], [1], [0, 0, 1, 1], [], []>} : vector<8x32xf32>, vector<32x8xf32>, vector<8x8xf32> -> vector<8x8xf32>
    %c0_191 = arith.constant 0 : index
    %c0_192 = arith.constant 0 : index
    %c0_193 = arith.constant 0 : index
    %278 = vector.load %arg30[%c0_191, %c0_192, %c0_193] : memref<4x1x8xf32, #tpu.memory_space<vmem>>, vector<1x1x8xf32>
    %279 = vector.shape_cast %278 : vector<1x1x8xf32> to vector<1x8xf32>
    %280 = vector.broadcast %279 : vector<1x8xf32> to vector<8x8xf32>
    %281 = arith.addf %277, %280 : vector<8x8xf32>
    %282 = tpu.transpose %274, [1, 0] : vector<8x8xf32> -> vector<8x8xf32>
    %cst_194 = arith.constant dense<0.000000e+00> : vector<8x8xf32>
    %283 = tpu.matmul %267, %282, %cst_194 {dimension_numbers = #tpu.dot_dimension_numbers<[1], [0], [0], [1], [0, 0, 1, 1], [], []>} : vector<8x8xf32>, vector<8x8xf32>, vector<8x8xf32> -> vector<8x8xf32>
    %cst_195 = arith.constant 0.353553385 : f32
    %284 = vector.broadcast %cst_195 : f32 to vector<8x8xf32>
    %285 = arith.mulf %283, %284 : vector<8x8xf32>
    %cst_196 = arith.constant dense<0xFF800000> : vector<8xf32>
    %286 = vector.multi_reduction <maximumf>, %285, %cst_196 [1] : vector<8x8xf32> to vector<8xf32>
    %287 = vector.shape_cast %286 : vector<8xf32> to vector<8x1xf32>
    %288 = vector.broadcast %287 : vector<8x1xf32> to vector<8x8xf32>
    %289 = arith.subf %285, %288 : vector<8x8xf32>
    %290 = math.exp %289 : vector<8x8xf32>
    %cst_197 = arith.constant dense<0.000000e+00> : vector<8xf32>
    %291 = vector.multi_reduction <add>, %290, %cst_197 [1] : vector<8x8xf32> to vector<8xf32>
    %292 = vector.shape_cast %291 : vector<8xf32> to vector<8x1xf32>
    %293 = vector.broadcast %292 : vector<8x1xf32> to vector<8x8xf32>
    %294 = arith.divf %290, %293 : vector<8x8xf32>
    %cst_198 = arith.constant dense<0.000000e+00> : vector<8x8xf32>
    %295 = tpu.matmul %294, %281, %cst_198 {dimension_numbers = #tpu.dot_dimension_numbers<[1], [0], [0], [1], [0, 0, 1, 1], [], []>} : vector<8x8xf32>, vector<8x8xf32>, vector<8x8xf32> -> vector<8x8xf32>
    %c0_199 = arith.constant 0 : index
    %c0_200 = arith.constant 0 : index
    %c0_201 = arith.constant 0 : index
    %296 = vector.load %arg31[%c0_199, %c0_200, %c0_201] : memref<4x8x32xf32, #tpu.memory_space<vmem>>, vector<1x8x32xf32>
    %297 = vector.shape_cast %296 : vector<1x8x32xf32> to vector<8x32xf32>
    %cst_202 = arith.constant dense<0.000000e+00> : vector<8x32xf32>
    %298 = tpu.matmul %295, %297, %cst_202 {dimension_numbers = #tpu.dot_dimension_numbers<[1], [0], [0], [1], [0, 0, 1, 1], [], []>} : vector<8x8xf32>, vector<8x32xf32>, vector<8x32xf32> -> vector<8x32xf32>
    %299 = arith.addf %260, %298 : vector<8x32xf32>
    %c1_203 = arith.constant 1 : index
    %c0_204 = arith.constant 0 : index
    %c0_205 = arith.constant 0 : index
    %300 = vector.load %arg25[%c1_203, %c0_204, %c0_205] : memref<4x32x8xf32, #tpu.memory_space<vmem>>, vector<1x32x8xf32>
    %301 = vector.shape_cast %300 : vector<1x32x8xf32> to vector<32x8xf32>
    %cst_206 = arith.constant dense<0.000000e+00> : vector<8x8xf32>
    %302 = tpu.matmul %259, %301, %cst_206 {dimension_numbers = #tpu.dot_dimension_numbers<[1], [0], [0], [1], [0, 0, 1, 1], [], []>} : vector<8x32xf32>, vector<32x8xf32>, vector<8x8xf32> -> vector<8x8xf32>
    %c1_207 = arith.constant 1 : index
    %c0_208 = arith.constant 0 : index
    %c0_209 = arith.constant 0 : index
    %303 = vector.load %arg28[%c1_207, %c0_208, %c0_209] : memref<4x1x8xf32, #tpu.memory_space<vmem>>, vector<1x1x8xf32>
    %304 = vector.shape_cast %303 : vector<1x1x8xf32> to vector<1x8xf32>
    %305 = vector.broadcast %304 : vector<1x8xf32> to vector<8x8xf32>
    %306 = arith.addf %302, %305 : vector<8x8xf32>
    %c1_210 = arith.constant 1 : index
    %c0_211 = arith.constant 0 : index
    %c0_212 = arith.constant 0 : index
    %307 = vector.load %arg26[%c1_210, %c0_211, %c0_212] : memref<4x32x8xf32, #tpu.memory_space<vmem>>, vector<1x32x8xf32>
    %308 = vector.shape_cast %307 : vector<1x32x8xf32> to vector<32x8xf32>
    %cst_213 = arith.constant dense<0.000000e+00> : vector<8x8xf32>
    %309 = tpu.matmul %259, %308, %cst_213 {dimension_numbers = #tpu.dot_dimension_numbers<[1], [0], [0], [1], [0, 0, 1, 1], [], []>} : vector<8x32xf32>, vector<32x8xf32>, vector<8x8xf32> -> vector<8x8xf32>
    %c1_214 = arith.constant 1 : index
    %c0_215 = arith.constant 0 : index
    %c0_216 = arith.constant 0 : index
    %310 = vector.load %arg29[%c1_214, %c0_215, %c0_216] : memref<4x1x8xf32, #tpu.memory_space<vmem>>, vector<1x1x8xf32>
    %311 = vector.shape_cast %310 : vector<1x1x8xf32> to vector<1x8xf32>
    %312 = vector.broadcast %311 : vector<1x8xf32> to vector<8x8xf32>
    %313 = arith.addf %309, %312 : vector<8x8xf32>
    %c1_217 = arith.constant 1 : index
    %c0_218 = arith.constant 0 : index
    %c0_219 = arith.constant 0 : index
    %314 = vector.load %arg27[%c1_217, %c0_218, %c0_219] : memref<4x32x8xf32, #tpu.memory_space<vmem>>, vector<1x32x8xf32>
    %315 = vector.shape_cast %314 : vector<1x32x8xf32> to vector<32x8xf32>
    %cst_220 = arith.constant dense<0.000000e+00> : vector<8x8xf32>
    %316 = tpu.matmul %259, %315, %cst_220 {dimension_numbers = #tpu.dot_dimension_numbers<[1], [0], [0], [1], [0, 0, 1, 1], [], []>} : vector<8x32xf32>, vector<32x8xf32>, vector<8x8xf32> -> vector<8x8xf32>
    %c1_221 = arith.constant 1 : index
    %c0_222 = arith.constant 0 : index
    %c0_223 = arith.constant 0 : index
    %317 = vector.load %arg30[%c1_221, %c0_222, %c0_223] : memref<4x1x8xf32, #tpu.memory_space<vmem>>, vector<1x1x8xf32>
    %318 = vector.shape_cast %317 : vector<1x1x8xf32> to vector<1x8xf32>
    %319 = vector.broadcast %318 : vector<1x8xf32> to vector<8x8xf32>
    %320 = arith.addf %316, %319 : vector<8x8xf32>
    %321 = tpu.transpose %313, [1, 0] : vector<8x8xf32> -> vector<8x8xf32>
    %cst_224 = arith.constant dense<0.000000e+00> : vector<8x8xf32>
    %322 = tpu.matmul %306, %321, %cst_224 {dimension_numbers = #tpu.dot_dimension_numbers<[1], [0], [0], [1], [0, 0, 1, 1], [], []>} : vector<8x8xf32>, vector<8x8xf32>, vector<8x8xf32> -> vector<8x8xf32>
    %cst_225 = arith.constant 0.353553385 : f32
    %323 = vector.broadcast %cst_225 : f32 to vector<8x8xf32>
    %324 = arith.mulf %322, %323 : vector<8x8xf32>
    %cst_226 = arith.constant dense<0xFF800000> : vector<8xf32>
    %325 = vector.multi_reduction <maximumf>, %324, %cst_226 [1] : vector<8x8xf32> to vector<8xf32>
    %326 = vector.shape_cast %325 : vector<8xf32> to vector<8x1xf32>
    %327 = vector.broadcast %326 : vector<8x1xf32> to vector<8x8xf32>
    %328 = arith.subf %324, %327 : vector<8x8xf32>
    %329 = math.exp %328 : vector<8x8xf32>
    %cst_227 = arith.constant dense<0.000000e+00> : vector<8xf32>
    %330 = vector.multi_reduction <add>, %329, %cst_227 [1] : vector<8x8xf32> to vector<8xf32>
    %331 = vector.shape_cast %330 : vector<8xf32> to vector<8x1xf32>
    %332 = vector.broadcast %331 : vector<8x1xf32> to vector<8x8xf32>
    %333 = arith.divf %329, %332 : vector<8x8xf32>
    %cst_228 = arith.constant dense<0.000000e+00> : vector<8x8xf32>
    %334 = tpu.matmul %333, %320, %cst_228 {dimension_numbers = #tpu.dot_dimension_numbers<[1], [0], [0], [1], [0, 0, 1, 1], [], []>} : vector<8x8xf32>, vector<8x8xf32>, vector<8x8xf32> -> vector<8x8xf32>
    %c1_229 = arith.constant 1 : index
    %c0_230 = arith.constant 0 : index
    %c0_231 = arith.constant 0 : index
    %335 = vector.load %arg31[%c1_229, %c0_230, %c0_231] : memref<4x8x32xf32, #tpu.memory_space<vmem>>, vector<1x8x32xf32>
    %336 = vector.shape_cast %335 : vector<1x8x32xf32> to vector<8x32xf32>
    %cst_232 = arith.constant dense<0.000000e+00> : vector<8x32xf32>
    %337 = tpu.matmul %334, %336, %cst_232 {dimension_numbers = #tpu.dot_dimension_numbers<[1], [0], [0], [1], [0, 0, 1, 1], [], []>} : vector<8x8xf32>, vector<8x32xf32>, vector<8x32xf32> -> vector<8x32xf32>
    %338 = arith.addf %299, %337 : vector<8x32xf32>
    %c2_233 = arith.constant 2 : index
    %c0_234 = arith.constant 0 : index
    %c0_235 = arith.constant 0 : index
    %339 = vector.load %arg25[%c2_233, %c0_234, %c0_235] : memref<4x32x8xf32, #tpu.memory_space<vmem>>, vector<1x32x8xf32>
    %340 = vector.shape_cast %339 : vector<1x32x8xf32> to vector<32x8xf32>
    %cst_236 = arith.constant dense<0.000000e+00> : vector<8x8xf32>
    %341 = tpu.matmul %259, %340, %cst_236 {dimension_numbers = #tpu.dot_dimension_numbers<[1], [0], [0], [1], [0, 0, 1, 1], [], []>} : vector<8x32xf32>, vector<32x8xf32>, vector<8x8xf32> -> vector<8x8xf32>
    %c2_237 = arith.constant 2 : index
    %c0_238 = arith.constant 0 : index
    %c0_239 = arith.constant 0 : index
    %342 = vector.load %arg28[%c2_237, %c0_238, %c0_239] : memref<4x1x8xf32, #tpu.memory_space<vmem>>, vector<1x1x8xf32>
    %343 = vector.shape_cast %342 : vector<1x1x8xf32> to vector<1x8xf32>
    %344 = vector.broadcast %343 : vector<1x8xf32> to vector<8x8xf32>
    %345 = arith.addf %341, %344 : vector<8x8xf32>
    %c2_240 = arith.constant 2 : index
    %c0_241 = arith.constant 0 : index
    %c0_242 = arith.constant 0 : index
    %346 = vector.load %arg26[%c2_240, %c0_241, %c0_242] : memref<4x32x8xf32, #tpu.memory_space<vmem>>, vector<1x32x8xf32>
    %347 = vector.shape_cast %346 : vector<1x32x8xf32> to vector<32x8xf32>
    %cst_243 = arith.constant dense<0.000000e+00> : vector<8x8xf32>
    %348 = tpu.matmul %259, %347, %cst_243 {dimension_numbers = #tpu.dot_dimension_numbers<[1], [0], [0], [1], [0, 0, 1, 1], [], []>} : vector<8x32xf32>, vector<32x8xf32>, vector<8x8xf32> -> vector<8x8xf32>
    %c2_244 = arith.constant 2 : index
    %c0_245 = arith.constant 0 : index
    %c0_246 = arith.constant 0 : index
    %349 = vector.load %arg29[%c2_244, %c0_245, %c0_246] : memref<4x1x8xf32, #tpu.memory_space<vmem>>, vector<1x1x8xf32>
    %350 = vector.shape_cast %349 : vector<1x1x8xf32> to vector<1x8xf32>
    %351 = vector.broadcast %350 : vector<1x8xf32> to vector<8x8xf32>
    %352 = arith.addf %348, %351 : vector<8x8xf32>
    %c2_247 = arith.constant 2 : index
    %c0_248 = arith.constant 0 : index
    %c0_249 = arith.constant 0 : index
    %353 = vector.load %arg27[%c2_247, %c0_248, %c0_249] : memref<4x32x8xf32, #tpu.memory_space<vmem>>, vector<1x32x8xf32>
    %354 = vector.shape_cast %353 : vector<1x32x8xf32> to vector<32x8xf32>
    %cst_250 = arith.constant dense<0.000000e+00> : vector<8x8xf32>
    %355 = tpu.matmul %259, %354, %cst_250 {dimension_numbers = #tpu.dot_dimension_numbers<[1], [0], [0], [1], [0, 0, 1, 1], [], []>} : vector<8x32xf32>, vector<32x8xf32>, vector<8x8xf32> -> vector<8x8xf32>
    %c2_251 = arith.constant 2 : index
    %c0_252 = arith.constant 0 : index
    %c0_253 = arith.constant 0 : index
    %356 = vector.load %arg30[%c2_251, %c0_252, %c0_253] : memref<4x1x8xf32, #tpu.memory_space<vmem>>, vector<1x1x8xf32>
    %357 = vector.shape_cast %356 : vector<1x1x8xf32> to vector<1x8xf32>
    %358 = vector.broadcast %357 : vector<1x8xf32> to vector<8x8xf32>
    %359 = arith.addf %355, %358 : vector<8x8xf32>
    %360 = tpu.transpose %352, [1, 0] : vector<8x8xf32> -> vector<8x8xf32>
    %cst_254 = arith.constant dense<0.000000e+00> : vector<8x8xf32>
    %361 = tpu.matmul %345, %360, %cst_254 {dimension_numbers = #tpu.dot_dimension_numbers<[1], [0], [0], [1], [0, 0, 1, 1], [], []>} : vector<8x8xf32>, vector<8x8xf32>, vector<8x8xf32> -> vector<8x8xf32>
    %cst_255 = arith.constant 0.353553385 : f32
    %362 = vector.broadcast %cst_255 : f32 to vector<8x8xf32>
    %363 = arith.mulf %361, %362 : vector<8x8xf32>
    %cst_256 = arith.constant dense<0xFF800000> : vector<8xf32>
    %364 = vector.multi_reduction <maximumf>, %363, %cst_256 [1] : vector<8x8xf32> to vector<8xf32>
    %365 = vector.shape_cast %364 : vector<8xf32> to vector<8x1xf32>
    %366 = vector.broadcast %365 : vector<8x1xf32> to vector<8x8xf32>
    %367 = arith.subf %363, %366 : vector<8x8xf32>
    %368 = math.exp %367 : vector<8x8xf32>
    %cst_257 = arith.constant dense<0.000000e+00> : vector<8xf32>
    %369 = vector.multi_reduction <add>, %368, %cst_257 [1] : vector<8x8xf32> to vector<8xf32>
    %370 = vector.shape_cast %369 : vector<8xf32> to vector<8x1xf32>
    %371 = vector.broadcast %370 : vector<8x1xf32> to vector<8x8xf32>
    %372 = arith.divf %368, %371 : vector<8x8xf32>
    %cst_258 = arith.constant dense<0.000000e+00> : vector<8x8xf32>
    %373 = tpu.matmul %372, %359, %cst_258 {dimension_numbers = #tpu.dot_dimension_numbers<[1], [0], [0], [1], [0, 0, 1, 1], [], []>} : vector<8x8xf32>, vector<8x8xf32>, vector<8x8xf32> -> vector<8x8xf32>
    %c2_259 = arith.constant 2 : index
    %c0_260 = arith.constant 0 : index
    %c0_261 = arith.constant 0 : index
    %374 = vector.load %arg31[%c2_259, %c0_260, %c0_261] : memref<4x8x32xf32, #tpu.memory_space<vmem>>, vector<1x8x32xf32>
    %375 = vector.shape_cast %374 : vector<1x8x32xf32> to vector<8x32xf32>
    %cst_262 = arith.constant dense<0.000000e+00> : vector<8x32xf32>
    %376 = tpu.matmul %373, %375, %cst_262 {dimension_numbers = #tpu.dot_dimension_numbers<[1], [0], [0], [1], [0, 0, 1, 1], [], []>} : vector<8x8xf32>, vector<8x32xf32>, vector<8x32xf32> -> vector<8x32xf32>
    %377 = arith.addf %338, %376 : vector<8x32xf32>
    %c3_263 = arith.constant 3 : index
    %c0_264 = arith.constant 0 : index
    %c0_265 = arith.constant 0 : index
    %378 = vector.load %arg25[%c3_263, %c0_264, %c0_265] : memref<4x32x8xf32, #tpu.memory_space<vmem>>, vector<1x32x8xf32>
    %379 = vector.shape_cast %378 : vector<1x32x8xf32> to vector<32x8xf32>
    %cst_266 = arith.constant dense<0.000000e+00> : vector<8x8xf32>
    %380 = tpu.matmul %259, %379, %cst_266 {dimension_numbers = #tpu.dot_dimension_numbers<[1], [0], [0], [1], [0, 0, 1, 1], [], []>} : vector<8x32xf32>, vector<32x8xf32>, vector<8x8xf32> -> vector<8x8xf32>
    %c3_267 = arith.constant 3 : index
    %c0_268 = arith.constant 0 : index
    %c0_269 = arith.constant 0 : index
    %381 = vector.load %arg28[%c3_267, %c0_268, %c0_269] : memref<4x1x8xf32, #tpu.memory_space<vmem>>, vector<1x1x8xf32>
    %382 = vector.shape_cast %381 : vector<1x1x8xf32> to vector<1x8xf32>
    %383 = vector.broadcast %382 : vector<1x8xf32> to vector<8x8xf32>
    %384 = arith.addf %380, %383 : vector<8x8xf32>
    %c3_270 = arith.constant 3 : index
    %c0_271 = arith.constant 0 : index
    %c0_272 = arith.constant 0 : index
    %385 = vector.load %arg26[%c3_270, %c0_271, %c0_272] : memref<4x32x8xf32, #tpu.memory_space<vmem>>, vector<1x32x8xf32>
    %386 = vector.shape_cast %385 : vector<1x32x8xf32> to vector<32x8xf32>
    %cst_273 = arith.constant dense<0.000000e+00> : vector<8x8xf32>
    %387 = tpu.matmul %259, %386, %cst_273 {dimension_numbers = #tpu.dot_dimension_numbers<[1], [0], [0], [1], [0, 0, 1, 1], [], []>} : vector<8x32xf32>, vector<32x8xf32>, vector<8x8xf32> -> vector<8x8xf32>
    %c3_274 = arith.constant 3 : index
    %c0_275 = arith.constant 0 : index
    %c0_276 = arith.constant 0 : index
    %388 = vector.load %arg29[%c3_274, %c0_275, %c0_276] : memref<4x1x8xf32, #tpu.memory_space<vmem>>, vector<1x1x8xf32>
    %389 = vector.shape_cast %388 : vector<1x1x8xf32> to vector<1x8xf32>
    %390 = vector.broadcast %389 : vector<1x8xf32> to vector<8x8xf32>
    %391 = arith.addf %387, %390 : vector<8x8xf32>
    %c3_277 = arith.constant 3 : index
    %c0_278 = arith.constant 0 : index
    %c0_279 = arith.constant 0 : index
    %392 = vector.load %arg27[%c3_277, %c0_278, %c0_279] : memref<4x32x8xf32, #tpu.memory_space<vmem>>, vector<1x32x8xf32>
    %393 = vector.shape_cast %392 : vector<1x32x8xf32> to vector<32x8xf32>
    %cst_280 = arith.constant dense<0.000000e+00> : vector<8x8xf32>
    %394 = tpu.matmul %259, %393, %cst_280 {dimension_numbers = #tpu.dot_dimension_numbers<[1], [0], [0], [1], [0, 0, 1, 1], [], []>} : vector<8x32xf32>, vector<32x8xf32>, vector<8x8xf32> -> vector<8x8xf32>
    %c3_281 = arith.constant 3 : index
    %c0_282 = arith.constant 0 : index
    %c0_283 = arith.constant 0 : index
    %395 = vector.load %arg30[%c3_281, %c0_282, %c0_283] : memref<4x1x8xf32, #tpu.memory_space<vmem>>, vector<1x1x8xf32>
    %396 = vector.shape_cast %395 : vector<1x1x8xf32> to vector<1x8xf32>
    %397 = vector.broadcast %396 : vector<1x8xf32> to vector<8x8xf32>
    %398 = arith.addf %394, %397 : vector<8x8xf32>
    %399 = tpu.transpose %391, [1, 0] : vector<8x8xf32> -> vector<8x8xf32>
    %cst_284 = arith.constant dense<0.000000e+00> : vector<8x8xf32>
    %400 = tpu.matmul %384, %399, %cst_284 {dimension_numbers = #tpu.dot_dimension_numbers<[1], [0], [0], [1], [0, 0, 1, 1], [], []>} : vector<8x8xf32>, vector<8x8xf32>, vector<8x8xf32> -> vector<8x8xf32>
    %cst_285 = arith.constant 0.353553385 : f32
    %401 = vector.broadcast %cst_285 : f32 to vector<8x8xf32>
    %402 = arith.mulf %400, %401 : vector<8x8xf32>
    %cst_286 = arith.constant dense<0xFF800000> : vector<8xf32>
    %403 = vector.multi_reduction <maximumf>, %402, %cst_286 [1] : vector<8x8xf32> to vector<8xf32>
    %404 = vector.shape_cast %403 : vector<8xf32> to vector<8x1xf32>
    %405 = vector.broadcast %404 : vector<8x1xf32> to vector<8x8xf32>
    %406 = arith.subf %402, %405 : vector<8x8xf32>
    %407 = math.exp %406 : vector<8x8xf32>
    %cst_287 = arith.constant dense<0.000000e+00> : vector<8xf32>
    %408 = vector.multi_reduction <add>, %407, %cst_287 [1] : vector<8x8xf32> to vector<8xf32>
    %409 = vector.shape_cast %408 : vector<8xf32> to vector<8x1xf32>
    %410 = vector.broadcast %409 : vector<8x1xf32> to vector<8x8xf32>
    %411 = arith.divf %407, %410 : vector<8x8xf32>
    %cst_288 = arith.constant dense<0.000000e+00> : vector<8x8xf32>
    %412 = tpu.matmul %411, %398, %cst_288 {dimension_numbers = #tpu.dot_dimension_numbers<[1], [0], [0], [1], [0, 0, 1, 1], [], []>} : vector<8x8xf32>, vector<8x8xf32>, vector<8x8xf32> -> vector<8x8xf32>
    %c3_289 = arith.constant 3 : index
    %c0_290 = arith.constant 0 : index
    %c0_291 = arith.constant 0 : index
    %413 = vector.load %arg31[%c3_289, %c0_290, %c0_291] : memref<4x8x32xf32, #tpu.memory_space<vmem>>, vector<1x8x32xf32>
    %414 = vector.shape_cast %413 : vector<1x8x32xf32> to vector<8x32xf32>
    %cst_292 = arith.constant dense<0.000000e+00> : vector<8x32xf32>
    %415 = tpu.matmul %412, %414, %cst_292 {dimension_numbers = #tpu.dot_dimension_numbers<[1], [0], [0], [1], [0, 0, 1, 1], [], []>} : vector<8x8xf32>, vector<8x32xf32>, vector<8x32xf32> -> vector<8x32xf32>
    %416 = arith.addf %377, %415 : vector<8x32xf32>
    %c0_293 = arith.constant 0 : index
    %c0_294 = arith.constant 0 : index
    %417 = vector.load %arg32[%c0_293, %c0_294] : memref<1x32xf32, #tpu.memory_space<vmem>>, vector<1x32xf32>
    %418 = vector.broadcast %417 : vector<1x32xf32> to vector<8x32xf32>
    %419 = arith.addf %416, %418 : vector<8x32xf32>
    %420 = arith.addf %259, %419 : vector<8x32xf32>
    %c0_295 = arith.constant 0 : index
    %c0_296 = arith.constant 0 : index
    %421 = vector.load %arg37[%c0_295, %c0_296] : memref<1x32xf32, #tpu.memory_space<vmem>>, vector<1x32xf32>
    %c0_297 = arith.constant 0 : index
    %c0_298 = arith.constant 0 : index
    %422 = vector.load %arg38[%c0_297, %c0_298] : memref<1x32xf32, #tpu.memory_space<vmem>>, vector<1x32xf32>
    %cst_299 = arith.constant dense<0.000000e+00> : vector<8xf32>
    %423 = vector.multi_reduction <add>, %420, %cst_299 [1] : vector<8x32xf32> to vector<8xf32>
    %424 = vector.shape_cast %423 : vector<8xf32> to vector<8x1xf32>
    %cst_300 = arith.constant 3.200000e+01 : f32
    %425 = vector.broadcast %cst_300 : f32 to vector<8x1xf32>
    %426 = arith.divf %424, %425 : vector<8x1xf32>
    %427 = vector.broadcast %426 : vector<8x1xf32> to vector<8x32xf32>
    %428 = arith.subf %420, %427 : vector<8x32xf32>
    %429 = arith.mulf %428, %428 : vector<8x32xf32>
    %cst_301 = arith.constant dense<0.000000e+00> : vector<8xf32>
    %430 = vector.multi_reduction <add>, %429, %cst_301 [1] : vector<8x32xf32> to vector<8xf32>
    %431 = vector.shape_cast %430 : vector<8xf32> to vector<8x1xf32>
    %cst_302 = arith.constant 3.200000e+01 : f32
    %432 = vector.broadcast %cst_302 : f32 to vector<8x1xf32>
    %433 = arith.divf %431, %432 : vector<8x1xf32>
    %434 = vector.broadcast %426 : vector<8x1xf32> to vector<8x32xf32>
    %435 = arith.subf %420, %434 : vector<8x32xf32>
    %cst_303 = arith.constant 9.99999974E-6 : f32
    %436 = vector.broadcast %cst_303 : f32 to vector<8x1xf32>
    %437 = arith.addf %433, %436 : vector<8x1xf32>
    %438 = math.rsqrt %437 : vector<8x1xf32>
    %439 = vector.broadcast %438 : vector<8x1xf32> to vector<8x32xf32>
    %440 = arith.mulf %435, %439 : vector<8x32xf32>
    %441 = vector.broadcast %421 : vector<1x32xf32> to vector<8x32xf32>
    %442 = arith.mulf %440, %441 : vector<8x32xf32>
    %443 = vector.broadcast %422 : vector<1x32xf32> to vector<8x32xf32>
    %444 = arith.addf %442, %443 : vector<8x32xf32>
    %c0_304 = arith.constant 0 : index
    %c0_305 = arith.constant 0 : index
    %445 = vector.load %arg33[%c0_304, %c0_305] : memref<32x32xf32, #tpu.memory_space<vmem>>, vector<32x32xf32>
    %cst_306 = arith.constant dense<0.000000e+00> : vector<1x32xf32>
    %446 = tpu.matmul %3, %445, %cst_306 {dimension_numbers = #tpu.dot_dimension_numbers<[1], [0], [0], [1], [0, 0, 1, 1], [], []>} : vector<1x32xf32>, vector<32x32xf32>, vector<1x32xf32> -> vector<1x32xf32>
    %c0_307 = arith.constant 0 : index
    %c0_308 = arith.constant 0 : index
    %447 = vector.load %arg34[%c0_307, %c0_308] : memref<1x32xf32, #tpu.memory_space<vmem>>, vector<1x32xf32>
    %448 = arith.addf %446, %447 : vector<1x32xf32>
    %c0_309 = arith.constant 0 : index
    %c0_310 = arith.constant 0 : index
    %449 = vector.load %arg35[%c0_309, %c0_310] : memref<32x32xf32, #tpu.memory_space<vmem>>, vector<32x32xf32>
    %cst_311 = arith.constant dense<0.000000e+00> : vector<1x32xf32>
    %450 = tpu.matmul %448, %449, %cst_311 {dimension_numbers = #tpu.dot_dimension_numbers<[1], [0], [0], [1], [0, 0, 1, 1], [], []>} : vector<1x32xf32>, vector<32x32xf32>, vector<1x32xf32> -> vector<1x32xf32>
    %c0_312 = arith.constant 0 : index
    %c0_313 = arith.constant 0 : index
    %451 = vector.load %arg36[%c0_312, %c0_313] : memref<1x32xf32, #tpu.memory_space<vmem>>, vector<1x32xf32>
    %452 = arith.addf %450, %451 : vector<1x32xf32>
    %453 = vector.broadcast %452 : vector<1x32xf32> to vector<8x32xf32>
    %454 = arith.addf %444, %453 : vector<8x32xf32>
    %c0_314 = arith.constant 0 : index
    %c0_315 = arith.constant 0 : index
    %455 = vector.load %arg39[%c0_314, %c0_315] : memref<1x32xf32, #tpu.memory_space<vmem>>, vector<1x32xf32>
    %c0_316 = arith.constant 0 : index
    %c0_317 = arith.constant 0 : index
    %456 = vector.load %arg40[%c0_316, %c0_317] : memref<1x32xf32, #tpu.memory_space<vmem>>, vector<1x32xf32>
    %cst_318 = arith.constant dense<0.000000e+00> : vector<8xf32>
    %457 = vector.multi_reduction <add>, %454, %cst_318 [1] : vector<8x32xf32> to vector<8xf32>
    %458 = vector.shape_cast %457 : vector<8xf32> to vector<8x1xf32>
    %cst_319 = arith.constant 3.200000e+01 : f32
    %459 = vector.broadcast %cst_319 : f32 to vector<8x1xf32>
    %460 = arith.divf %458, %459 : vector<8x1xf32>
    %461 = vector.broadcast %460 : vector<8x1xf32> to vector<8x32xf32>
    %462 = arith.subf %454, %461 : vector<8x32xf32>
    %463 = arith.mulf %462, %462 : vector<8x32xf32>
    %cst_320 = arith.constant dense<0.000000e+00> : vector<8xf32>
    %464 = vector.multi_reduction <add>, %463, %cst_320 [1] : vector<8x32xf32> to vector<8xf32>
    %465 = vector.shape_cast %464 : vector<8xf32> to vector<8x1xf32>
    %cst_321 = arith.constant 3.200000e+01 : f32
    %466 = vector.broadcast %cst_321 : f32 to vector<8x1xf32>
    %467 = arith.divf %465, %466 : vector<8x1xf32>
    %468 = vector.broadcast %460 : vector<8x1xf32> to vector<8x32xf32>
    %469 = arith.subf %454, %468 : vector<8x32xf32>
    %cst_322 = arith.constant 9.99999974E-6 : f32
    %470 = vector.broadcast %cst_322 : f32 to vector<8x1xf32>
    %471 = arith.addf %467, %470 : vector<8x1xf32>
    %472 = math.rsqrt %471 : vector<8x1xf32>
    %473 = vector.broadcast %472 : vector<8x1xf32> to vector<8x32xf32>
    %474 = arith.mulf %469, %473 : vector<8x32xf32>
    %475 = vector.broadcast %455 : vector<1x32xf32> to vector<8x32xf32>
    %476 = arith.mulf %474, %475 : vector<8x32xf32>
    %477 = vector.broadcast %456 : vector<1x32xf32> to vector<8x32xf32>
    %478 = arith.addf %476, %477 : vector<8x32xf32>
    %c0_323 = arith.constant 0 : index
    %c0_324 = arith.constant 0 : index
    %479 = vector.load %arg43[%c0_323, %c0_324] : memref<32x2048xf32, #tpu.memory_space<vmem>>, vector<32x2048xf32>
    %cst_325 = arith.constant dense<0.000000e+00> : vector<8x2048xf32>
    %480 = tpu.matmul %478, %479, %cst_325 {dimension_numbers = #tpu.dot_dimension_numbers<[1], [0], [0], [1], [0, 0, 1, 1], [], []>} : vector<8x32xf32>, vector<32x2048xf32>, vector<8x2048xf32> -> vector<8x2048xf32>
    %c0_326 = arith.constant 0 : index
    %c0_327 = arith.constant 0 : index
    %481 = vector.load %arg44[%c0_326, %c0_327] : memref<1x2048xf32, #tpu.memory_space<vmem>>, vector<1x2048xf32>
    %482 = vector.broadcast %481 : vector<1x2048xf32> to vector<8x2048xf32>
    %483 = arith.addf %480, %482 : vector<8x2048xf32>
    %cst_328 = arith.constant 0.000000e+00 : f32
    %484 = vector.broadcast %cst_328 : f32 to vector<8x2048xf32>
    %485 = arith.maximumf %483, %484 : vector<8x2048xf32>
    %c0_329 = arith.constant 0 : index
    %c0_330 = arith.constant 0 : index
    %486 = vector.load %arg45[%c0_329, %c0_330] : memref<2048x32xf32, #tpu.memory_space<vmem>>, vector<2048x32xf32>
    %cst_331 = arith.constant dense<0.000000e+00> : vector<8x32xf32>
    %487 = tpu.matmul %485, %486, %cst_331 {dimension_numbers = #tpu.dot_dimension_numbers<[1], [0], [0], [1], [0, 0, 1, 1], [], []>} : vector<8x2048xf32>, vector<2048x32xf32>, vector<8x32xf32> -> vector<8x32xf32>
    %c0_332 = arith.constant 0 : index
    %c0_333 = arith.constant 0 : index
    %488 = vector.load %arg46[%c0_332, %c0_333] : memref<1x32xf32, #tpu.memory_space<vmem>>, vector<1x32xf32>
    %489 = vector.broadcast %488 : vector<1x32xf32> to vector<8x32xf32>
    %490 = arith.addf %487, %489 : vector<8x32xf32>
    %491 = arith.addf %478, %490 : vector<8x32xf32>
    %c0_334 = arith.constant 0 : index
    %c0_335 = arith.constant 0 : index
    %492 = vector.load %arg41[%c0_334, %c0_335] : memref<1x32xf32, #tpu.memory_space<vmem>>, vector<1x32xf32>
    %c0_336 = arith.constant 0 : index
    %c0_337 = arith.constant 0 : index
    %493 = vector.load %arg42[%c0_336, %c0_337] : memref<1x32xf32, #tpu.memory_space<vmem>>, vector<1x32xf32>
    %cst_338 = arith.constant dense<0.000000e+00> : vector<8xf32>
    %494 = vector.multi_reduction <add>, %491, %cst_338 [1] : vector<8x32xf32> to vector<8xf32>
    %495 = vector.shape_cast %494 : vector<8xf32> to vector<8x1xf32>
    %cst_339 = arith.constant 3.200000e+01 : f32
    %496 = vector.broadcast %cst_339 : f32 to vector<8x1xf32>
    %497 = arith.divf %495, %496 : vector<8x1xf32>
    %498 = vector.broadcast %497 : vector<8x1xf32> to vector<8x32xf32>
    %499 = arith.subf %491, %498 : vector<8x32xf32>
    %500 = arith.mulf %499, %499 : vector<8x32xf32>
    %cst_340 = arith.constant dense<0.000000e+00> : vector<8xf32>
    %501 = vector.multi_reduction <add>, %500, %cst_340 [1] : vector<8x32xf32> to vector<8xf32>
    %502 = vector.shape_cast %501 : vector<8xf32> to vector<8x1xf32>
    %cst_341 = arith.constant 3.200000e+01 : f32
    %503 = vector.broadcast %cst_341 : f32 to vector<8x1xf32>
    %504 = arith.divf %502, %503 : vector<8x1xf32>
    %505 = vector.broadcast %497 : vector<8x1xf32> to vector<8x32xf32>
    %506 = arith.subf %491, %505 : vector<8x32xf32>
    %cst_342 = arith.constant 9.99999974E-6 : f32
    %507 = vector.broadcast %cst_342 : f32 to vector<8x1xf32>
    %508 = arith.addf %504, %507 : vector<8x1xf32>
    %509 = math.rsqrt %508 : vector<8x1xf32>
    %510 = vector.broadcast %509 : vector<8x1xf32> to vector<8x32xf32>
    %511 = arith.mulf %506, %510 : vector<8x32xf32>
    %512 = vector.broadcast %492 : vector<1x32xf32> to vector<8x32xf32>
    %513 = arith.mulf %511, %512 : vector<8x32xf32>
    %514 = vector.broadcast %493 : vector<1x32xf32> to vector<8x32xf32>
    %515 = arith.addf %513, %514 : vector<8x32xf32>
    %c0_343 = arith.constant 0 : index
    %c0_344 = arith.constant 0 : index
    %516 = vector.load %arg47[%c0_343, %c0_344] : memref<32x256xf32, #tpu.memory_space<vmem>>, vector<32x256xf32>
    %cst_345 = arith.constant dense<0.000000e+00> : vector<8x256xf32>
    %517 = tpu.matmul %515, %516, %cst_345 {dimension_numbers = #tpu.dot_dimension_numbers<[1], [0], [0], [1], [0, 0, 1, 1], [], []>} : vector<8x32xf32>, vector<32x256xf32>, vector<8x256xf32> -> vector<8x256xf32>
    %c0_346 = arith.constant 0 : index
    %c0_347 = arith.constant 0 : index
    %518 = vector.load %arg48[%c0_346, %c0_347] : memref<1x256xf32, #tpu.memory_space<vmem>>, vector<1x256xf32>
    %519 = vector.broadcast %518 : vector<1x256xf32> to vector<8x256xf32>
    %520 = arith.addf %517, %519 : vector<8x256xf32>
    %c0_348 = arith.constant 0 : index
    %c0_349 = arith.constant 0 : index
    %c0_350 = arith.constant 0 : index
    %521 = vector.load %arg49[%c0_348, %c0_349, %c0_350] : memref<1x8x256xf32, #tpu.memory_space<vmem>>, vector<1x8x256xf32>
    %522 = vector.shape_cast %521 : vector<1x8x256xf32> to vector<8x256xf32>
    %523 = vector.shape_cast %520 : vector<8x256xf32> to vector<1x8x256xf32>
    tpu.vector_store %arg49[%c0_348, %c0_349, %c0_350], %523 {strides = array<i32>} : memref<1x8x256xf32, #tpu.memory_space<vmem>>, vector<1x8x256xf32>,
    return
  }
  func.func @transform_0(%arg0: i32) -> (i32, i32, i32) {
    %c0_i32 = arith.constant 0 : i32
    %c0_i32_0 = arith.constant 0 : i32
    %c0_i32_1 = arith.constant 0 : i32
    return %arg0, %c0_i32, %c0_i32_0 : i32, i32, i32
  }
  func.func @transform_1(%arg0: i32) -> (i32, i32, i32) {
    %c0_i32 = arith.constant 0 : i32
    %c0_i32_0 = arith.constant 0 : i32
    %c0_i32_1 = arith.constant 0 : i32
    return %arg0, %c0_i32, %c0_i32_0 : i32, i32, i32
  }
  func.func @transform_2(%arg0: i32) -> (i32, i32, i32) {
    %c0_i32 = arith.constant 0 : i32
    %c0_i32_0 = arith.constant 0 : i32
    %c0_i32_1 = arith.constant 0 : i32
    %c0_i32_2 = arith.constant 0 : i32
    return %c0_i32, %c0_i32_0, %c0_i32_1 : i32, i32, i32
  }
  func.func @transform_3(%arg0: i32) -> (i32, i32, i32) {
    %c0_i32 = arith.constant 0 : i32
    %c0_i32_0 = arith.constant 0 : i32
    %c0_i32_1 = arith.constant 0 : i32
    %c0_i32_2 = arith.constant 0 : i32
    return %c0_i32, %c0_i32_0, %c0_i32_1 : i32, i32, i32
  }
  func.func @transform_4(%arg0: i32) -> (i32, i32, i32) {
    %c0_i32 = arith.constant 0 : i32
    %c0_i32_0 = arith.constant 0 : i32
    %c0_i32_1 = arith.constant 0 : i32
    %c0_i32_2 = arith.constant 0 : i32
    return %c0_i32, %c0_i32_0, %c0_i32_1 : i32, i32, i32
  }
  func.func @transform_5(%arg0: i32) -> (i32, i32, i32) {
    %c0_i32 = arith.constant 0 : i32
    %c0_i32_0 = arith.constant 0 : i32
    %c0_i32_1 = arith.constant 0 : i32
    %c0_i32_2 = arith.constant 0 : i32
    return %c0_i32, %c0_i32_0, %c0_i32_1 : i32, i32, i32
  }
  func.func @transform_6(%arg0: i32) -> (i32, i32, i32) {
    %c0_i32 = arith.constant 0 : i32
    %c0_i32_0 = arith.constant 0 : i32
    %c0_i32_1 = arith.constant 0 : i32
    %c0_i32_2 = arith.constant 0 : i32
    return %c0_i32, %c0_i32_0, %c0_i32_1 : i32, i32, i32
  }
  func.func @transform_7(%arg0: i32) -> (i32, i32, i32) {
    %c0_i32 = arith.constant 0 : i32
    %c0_i32_0 = arith.constant 0 : i32
    %c0_i32_1 = arith.constant 0 : i32
    %c0_i32_2 = arith.constant 0 : i32
    return %c0_i32, %c0_i32_0, %c0_i32_1 : i32, i32, i32
  }
  func.func @transform_8(%arg0: i32) -> (i32, i32, i32) {
    %c0_i32 = arith.constant 0 : i32
    %c0_i32_0 = arith.constant 0 : i32
    %c0_i32_1 = arith.constant 0 : i32
    %c0_i32_2 = arith.constant 0 : i32
    return %c0_i32, %c0_i32_0, %c0_i32_1 : i32, i32, i32
  }
  func.func @transform_9(%arg0: i32) -> (i32, i32) {
    %c0_i32 = arith.constant 0 : i32
    %c0_i32_0 = arith.constant 0 : i32
    %c0_i32_1 = arith.constant 0 : i32
    return %c0_i32, %c0_i32_0 : i32, i32
  }
  func.func @transform_10(%arg0: i32) -> (i32, i32) {
    %c0_i32 = arith.constant 0 : i32
    %c0_i32_0 = arith.constant 0 : i32
    %c0_i32_1 = arith.constant 0 : i32
    return %c0_i32, %c0_i32_0 : i32, i32
  }
  func.func @transform_11(%arg0: i32) -> (i32, i32) {
    %c0_i32 = arith.constant 0 : i32
    %c0_i32_0 = arith.constant 0 : i32
    %c0_i32_1 = arith.constant 0 : i32
    return %c0_i32, %c0_i32_0 : i32, i32
  }
  func.func @transform_12(%arg0: i32) -> (i32, i32) {
    %c0_i32 = arith.constant 0 : i32
    %c0_i32_0 = arith.constant 0 : i32
    %c0_i32_1 = arith.constant 0 : i32
    return %c0_i32, %c0_i32_0 : i32, i32
  }
  func.func @transform_13(%arg0: i32) -> (i32, i32) {
    %c0_i32 = arith.constant 0 : i32
    %c0_i32_0 = arith.constant 0 : i32
    %c0_i32_1 = arith.constant 0 : i32
    return %c0_i32, %c0_i32_0 : i32, i32
  }
  func.func @transform_14(%arg0: i32) -> (i32, i32) {
    %c0_i32 = arith.constant 0 : i32
    %c0_i32_0 = arith.constant 0 : i32
    %c0_i32_1 = arith.constant 0 : i32
    return %c0_i32, %c0_i32_0 : i32, i32
  }
  func.func @transform_15(%arg0: i32) -> (i32, i32) {
    %c0_i32 = arith.constant 0 : i32
    %c0_i32_0 = arith.constant 0 : i32
    %c0_i32_1 = arith.constant 0 : i32
    return %c0_i32, %c0_i32_0 : i32, i32
  }
  func.func @transform_16(%arg0: i32) -> (i32, i32) {
    %c0_i32 = arith.constant 0 : i32
    %c0_i32_0 = arith.constant 0 : i32
    %c0_i32_1 = arith.constant 0 : i32
    return %c0_i32, %c0_i32_0 : i32, i32
  }
  func.func @transform_17(%arg0: i32) -> (i32, i32) {
    %c0_i32 = arith.constant 0 : i32
    %c0_i32_0 = arith.constant 0 : i32
    %c0_i32_1 = arith.constant 0 : i32
    return %c0_i32, %c0_i32_0 : i32, i32
  }
  func.func @transform_18(%arg0: i32) -> (i32, i32) {
    %c0_i32 = arith.constant 0 : i32
    %c0_i32_0 = arith.constant 0 : i32
    %c0_i32_1 = arith.constant 0 : i32
    return %c0_i32, %c0_i32_0 : i32, i32
  }
  func.func @transform_19(%arg0: i32) -> (i32, i32) {
    %c0_i32 = arith.constant 0 : i32
    %c0_i32_0 = arith.constant 0 : i32
    %c0_i32_1 = arith.constant 0 : i32
    return %c0_i32, %c0_i32_0 : i32, i32
  }
  func.func @transform_20(%arg0: i32) -> (i32, i32) {
    %c0_i32 = arith.constant 0 : i32
    %c0_i32_0 = arith.constant 0 : i32
    %c0_i32_1 = arith.constant 0 : i32
    return %c0_i32, %c0_i32_0 : i32, i32
  }
  func.func @transform_21(%arg0: i32) -> (i32, i32) {
    %c0_i32 = arith.constant 0 : i32
    %c0_i32_0 = arith.constant 0 : i32
    %c0_i32_1 = arith.constant 0 : i32
    return %c0_i32, %c0_i32_0 : i32, i32
  }
  func.func @transform_22(%arg0: i32) -> (i32, i32) {
    %c0_i32 = arith.constant 0 : i32
    %c0_i32_0 = arith.constant 0 : i32
    %c0_i32_1 = arith.constant 0 : i32
    return %c0_i32, %c0_i32_0 : i32, i32
  }
  func.func @transform_23(%arg0: i32) -> (i32, i32) {
    %c0_i32 = arith.constant 0 : i32
    %c0_i32_0 = arith.constant 0 : i32
    %c0_i32_1 = arith.constant 0 : i32
    return %c0_i32, %c0_i32_0 : i32, i32
  }
  func.func @transform_24(%arg0: i32) -> (i32, i32, i32) {
    %c0_i32 = arith.constant 0 : i32
    %c0_i32_0 = arith.constant 0 : i32
    %c0_i32_1 = arith.constant 0 : i32
    %c0_i32_2 = arith.constant 0 : i32
    return %c0_i32, %c0_i32_0, %c0_i32_1 : i32, i32, i32
  }
  func.func @transform_25(%arg0: i32) -> (i32, i32, i32) {
    %c0_i32 = arith.constant 0 : i32
    %c0_i32_0 = arith.constant 0 : i32
    %c0_i32_1 = arith.constant 0 : i32
    %c0_i32_2 = arith.constant 0 : i32
    return %c0_i32, %c0_i32_0, %c0_i32_1 : i32, i32, i32
  }
  func.func @transform_26(%arg0: i32) -> (i32, i32, i32) {
    %c0_i32 = arith.constant 0 : i32
    %c0_i32_0 = arith.constant 0 : i32
    %c0_i32_1 = arith.constant 0 : i32
    %c0_i32_2 = arith.constant 0 : i32
    return %c0_i32, %c0_i32_0, %c0_i32_1 : i32, i32, i32
  }
  func.func @transform_27(%arg0: i32) -> (i32, i32, i32) {
    %c0_i32 = arith.constant 0 : i32
    %c0_i32_0 = arith.constant 0 : i32
    %c0_i32_1 = arith.constant 0 : i32
    %c0_i32_2 = arith.constant 0 : i32
    return %c0_i32, %c0_i32_0, %c0_i32_1 : i32, i32, i32
  }
  func.func @transform_28(%arg0: i32) -> (i32, i32, i32) {
    %c0_i32 = arith.constant 0 : i32
    %c0_i32_0 = arith.constant 0 : i32
    %c0_i32_1 = arith.constant 0 : i32
    %c0_i32_2 = arith.constant 0 : i32
    return %c0_i32, %c0_i32_0, %c0_i32_1 : i32, i32, i32
  }
  func.func @transform_29(%arg0: i32) -> (i32, i32, i32) {
    %c0_i32 = arith.constant 0 : i32
    %c0_i32_0 = arith.constant 0 : i32
    %c0_i32_1 = arith.constant 0 : i32
    %c0_i32_2 = arith.constant 0 : i32
    return %c0_i32, %c0_i32_0, %c0_i32_1 : i32, i32, i32
  }
  func.func @transform_30(%arg0: i32) -> (i32, i32, i32) {
    %c0_i32 = arith.constant 0 : i32
    %c0_i32_0 = arith.constant 0 : i32
    %c0_i32_1 = arith.constant 0 : i32
    %c0_i32_2 = arith.constant 0 : i32
    return %c0_i32, %c0_i32_0, %c0_i32_1 : i32, i32, i32
  }
  func.func @transform_31(%arg0: i32) -> (i32, i32) {
    %c0_i32 = arith.constant 0 : i32
    %c0_i32_0 = arith.constant 0 : i32
    %c0_i32_1 = arith.constant 0 : i32
    return %c0_i32, %c0_i32_0 : i32, i32
  }
  func.func @transform_32(%arg0: i32) -> (i32, i32) {
    %c0_i32 = arith.constant 0 : i32
    %c0_i32_0 = arith.constant 0 : i32
    %c0_i32_1 = arith.constant 0 : i32
    return %c0_i32, %c0_i32_0 : i32, i32
  }
  func.func @transform_33(%arg0: i32) -> (i32, i32) {
    %c0_i32 = arith.constant 0 : i32
    %c0_i32_0 = arith.constant 0 : i32
    %c0_i32_1 = arith.constant 0 : i32
    return %c0_i32, %c0_i32_0 : i32, i32
  }
  func.func @transform_34(%arg0: i32) -> (i32, i32) {
    %c0_i32 = arith.constant 0 : i32
    %c0_i32_0 = arith.constant 0 : i32
    %c0_i32_1 = arith.constant 0 : i32
    return %c0_i32, %c0_i32_0 : i32, i32
  }
  func.func @transform_35(%arg0: i32) -> (i32, i32) {
    %c0_i32 = arith.constant 0 : i32
    %c0_i32_0 = arith.constant 0 : i32
    %c0_i32_1 = arith.constant 0 : i32
    return %c0_i32, %c0_i32_0 : i32, i32
  }
  func.func @transform_36(%arg0: i32) -> (i32, i32) {
    %c0_i32 = arith.constant 0 : i32
    %c0_i32_0 = arith.constant 0 : i32
    %c0_i32_1 = arith.constant 0 : i32
    return %c0_i32, %c0_i32_0 : i32, i32
  }
  func.func @transform_37(%arg0: i32) -> (i32, i32) {
    %c0_i32 = arith.constant 0 : i32
    %c0_i32_0 = arith.constant 0 : i32
    %c0_i32_1 = arith.constant 0 : i32
    return %c0_i32, %c0_i32_0 : i32, i32
  }
  func.func @transform_38(%arg0: i32) -> (i32, i32) {
    %c0_i32 = arith.constant 0 : i32
    %c0_i32_0 = arith.constant 0 : i32
    %c0_i32_1 = arith.constant 0 : i32
    return %c0_i32, %c0_i32_0 : i32, i32
  }
  func.func @transform_39(%arg0: i32) -> (i32, i32) {
    %c0_i32 = arith.constant 0 : i32
    %c0_i32_0 = arith.constant 0 : i32
    %c0_i32_1 = arith.constant 0 : i32
    return %c0_i32, %c0_i32_0 : i32, i32
  }
  func.func @transform_40(%arg0: i32) -> (i32, i32) {
    %c0_i32 = arith.constant 0 : i32
    %c0_i32_0 = arith.constant 0 : i32
    %c0_i32_1 = arith.constant 0 : i32
    return %c0_i32, %c0_i32_0 : i32, i32
  }
  func.func @transform_41(%arg0: i32) -> (i32, i32) {
    %c0_i32 = arith.constant 0 : i32
    %c0_i32_0 = arith.constant 0 : i32
    %c0_i32_1 = arith.constant 0 : i32
    return %c0_i32, %c0_i32_0 : i32, i32
  }
  func.func @transform_42(%arg0: i32) -> (i32, i32) {
    %c0_i32 = arith.constant 0 : i32
    %c0_i32_0 = arith.constant 0 : i32
    %c0_i32_1 = arith.constant 0 : i32
    return %c0_i32, %c0_i32_0 : i32, i32
  }
  func.func @transform_43(%arg0: i32) -> (i32, i32) {
    %c0_i32 = arith.constant 0 : i32
    %c0_i32_0 = arith.constant 0 : i32
    %c0_i32_1 = arith.constant 0 : i32
    return %c0_i32, %c0_i32_0 : i32, i32
  }
  func.func @transform_44(%arg0: i32) -> (i32, i32) {
    %c0_i32 = arith.constant 0 : i32
    %c0_i32_0 = arith.constant 0 : i32
    %c0_i32_1 = arith.constant 0 : i32
    return %c0_i32, %c0_i32_0 : i32, i32
  }
  func.func @transform_45(%arg0: i32) -> (i32, i32) {
    %c0_i32 = arith.constant 0 : i32
    %c0_i32_0 = arith.constant 0 : i32
    %c0_i32_1 = arith.constant 0 : i32
    return %c0_i32, %c0_i32_0 : i32, i32
  }
  func.func @transform_46(%arg0: i32) -> (i32, i32) {
    %c0_i32 = arith.constant 0 : i32
    %c0_i32_0 = arith.constant 0 : i32
    %c0_i32_1 = arith.constant 0 : i32
    return %c0_i32, %c0_i32_0 : i32, i32
  }
  func.func @transform_47(%arg0: i32) -> (i32, i32) {
    %c0_i32 = arith.constant 0 : i32
    %c0_i32_0 = arith.constant 0 : i32
    %c0_i32_1 = arith.constant 0 : i32
    return %c0_i32, %c0_i32_0 : i32, i32
  }
  func.func @transform_48(%arg0: i32) -> (i32, i32, i32) {
    %c0_i32 = arith.constant 0 : i32
    %c0_i32_0 = arith.constant 0 : i32
    %c0_i32_1 = arith.constant 0 : i32
    return %arg0, %c0_i32, %c0_i32_0 : i32, i32, i32
  }
}

</mosaic_0001>

<llo_original>
// kernel: transformer_decoder_forward.1
$region0: #{transformer_decoder_forward.1}
  #allocation0 [shape = 'u32[]', space=smem, size = 0x4, offset = 0x4, fixed_abs, tag = 'smem constant byte address 0x4 - core index']
  #allocation1 [shape = 'u32[144,128]{1,0:T(1,128)}', space=vmem, size = 0x12000, scoped, tag = 'internal scratch']
  %s0 = inlined_call_operand.smem [shape: u32[49], index: -1, kind: input, shape index: {}]
  %s1 = sld [smem:[%s0]]
  %s2 = scalar_lea.smem %s0, 1
  %s3 = sld [smem:[%s2]]
  %s4 = scalar_lea.smem %s0, 2
  %s5 = sld [smem:[%s4]]
  %s6 = scalar_lea.smem %s0, 3
  %s7 = sld [smem:[%s6]]
  %s8 = scalar_lea.smem %s0, 4
  %s9 = sld [smem:[%s8]]
  %s10 = scalar_lea.smem %s0, 5
  %s11 = sld [smem:[%s10]]
  %s12 = scalar_lea.smem %s0, 6
  %s13 = sld [smem:[%s12]]
  %s14 = scalar_lea.smem %s0, 7
  %s15 = sld [smem:[%s14]]
  %s16 = scalar_lea.smem %s0, 8
  %s17 = sld [smem:[%s16]]
  %s18 = scalar_lea.smem %s0, 9
  %s19 = sld [smem:[%s18]]
  %s20 = scalar_lea.smem %s0, 10
  %s21 = sld [smem:[%s20]]
  %s22 = scalar_lea.smem %s0, 11
  %s23 = sld [smem:[%s22]]
  %s24 = scalar_lea.smem %s0, 12
  %s25 = sld [smem:[%s24]]
  %s26 = scalar_lea.smem %s0, 13
  %s27 = sld [smem:[%s26]]
  %s28 = scalar_lea.smem %s0, 14
  %s29 = sld [smem:[%s28]]
  %s30 = scalar_lea.smem %s0, 15
  %s31 = sld [smem:[%s30]]
  %s32 = scalar_lea.smem %s0, 16
  %s33 = sld [smem:[%s32]]
  %s34 = scalar_lea.smem %s0, 17
  %s35 = sld [smem:[%s34]]
  %s36 = scalar_lea.smem %s0, 18
  %s37 = sld [smem:[%s36]]
  %s38 = scalar_lea.smem %s0, 19
  %s39 = sld [smem:[%s38]]
  %s40 = scalar_lea.smem %s0, 20
  %s41 = sld [smem:[%s40]]
  %s42 = scalar_lea.smem %s0, 21
  %s43 = sld [smem:[%s42]]
  %s44 = scalar_lea.smem %s0, 22
  %s45 = sld [smem:[%s44]]
  %s46 = scalar_lea.smem %s0, 23
  %s47 = sld [smem:[%s46]]
  %s48 = scalar_lea.smem %s0, 24
  %s49 = sld [smem:[%s48]]
  %s50 = scalar_lea.smem %s0, 25
  %s51 = sld [smem:[%s50]]
  %s52 = scalar_lea.smem %s0, 26
  %s53 = sld [smem:[%s52]]
  %s54 = scalar_lea.smem %s0, 27
  %s55 = sld [smem:[%s54]]
  %s56 = scalar_lea.smem %s0, 28
  %s57 = sld [smem:[%s56]]
  %s58 = scalar_lea.smem %s0, 29
  %s59 = sld [smem:[%s58]]
  %s60 = scalar_lea.smem %s0, 30
  %s61 = sld [smem:[%s60]]
  %s62 = scalar_lea.smem %s0, 31
  %s63 = sld [smem:[%s62]]
  %s64 = scalar_lea.smem %s0, 32
  %s65 = sld [smem:[%s64]]
  %s66 = scalar_lea.smem %s0, 33
  %s67 = sld [smem:[%s66]]
  %s68 = scalar_lea.smem %s0, 34
  %s69 = sld [smem:[%s68]]
  %s70 = scalar_lea.smem %s0, 35
  %s71 = sld [smem:[%s70]]
  %s72 = scalar_lea.smem %s0, 36
  %s73 = sld [smem:[%s72]]
  %s74 = scalar_lea.smem %s0, 37
  %s75 = sld [smem:[%s74]]
  %s76 = scalar_lea.smem %s0, 38
  %s77 = sld [smem:[%s76]]
  %s78 = scalar_lea.smem %s0, 39
  %s79 = sld [smem:[%s78]]
  %s80 = scalar_lea.smem %s0, 40
  %s81 = sld [smem:[%s80]]
  %s82 = scalar_lea.smem %s0, 41
  %s83 = sld [smem:[%s82]]
  %s84 = scalar_lea.smem %s0, 42
  %s85 = sld [smem:[%s84]]
  %s86 = scalar_lea.smem %s0, 43
  %s87 = sld [smem:[%s86]]
  %s88 = scalar_lea.smem %s0, 44
  %s89 = sld [smem:[%s88]]
  %s90 = scalar_lea.smem %s0, 45
  %s91 = sld [smem:[%s90]]
  %s92 = scalar_lea.smem %s0, 46
  %s93 = sld [smem:[%s92]]
  %s94 = scalar_lea.smem %s0, 47
  %s95 = sld [smem:[%s94]]
  %s96 = scalar_lea.smem %s0, 48
  %s97 = sld [smem:[%s96]]
  %s98 = sld [smem:[#allocation0]]
  $region229: #{transformer_decoder_forward.1} parent=0
    _
  %s100 = ssub.s32 1, %s98
  %s101 = scalar_select 0, %s100, %s98
  $region1: #{transformer_decoder_forward.1} parent=0
    #allocation2 [shape = 'u8[512]{0}', space=vmem, size = 0x400, scoped, tag = 'input window, operand 45, single buffered']
    #allocation3 [shape = 's32[2]{0}', space=sflag, size = 0x8, scoped, tag = 'scoped memory for transformer_decoder_forward.1']
    #allocation4 [shape = 's32[2]{0}', space=sflag, size = 0x8, scoped, tag = 'scoped memory for transformer_decoder_forward.1']
    #allocation5 [shape = 'u8[16384]{0}', space=vmem, size = 0x4000, scoped, tag = 'output window, operand 0']
    %102 = vsyncpa [#allocation3], 0
    %103 = vsyncpa [#allocation4], 0
    %s104 = scalar_lea.sflag [#allocation4], 1
    %105 = vsyncpa %s104, 0
    loop: start=0, step=1, limit=4
    $region2: #{transformer_decoder_forward.1} parent=1 // loop_pre_header
      _
    $region3: #{transformer_decoder_forward.1} parent=1 // loop_header
      %s107 = sphi 0, %s111
      %p108 = scmp.ge.s32.totalorder %s107, 4
      %s117 = sphi 0, %s119
      %s120 = sphi 0, %s117
      %s121 = sphi 0, %s120
      %s137 = sphi 0, %s121
      %s143 = sphi 0, %s145
      %s146 = sphi 0, %s143
      %s147 = sphi 0, %s146
      %s163 = sphi 0, %s147
      %s167 = sphi 0, %s167
      %s169 = sphi 0, %s167
      %s170 = sphi 0, %s169
      %s184 = sphi 0, %s170
      %s188 = sphi 0, %s188
      %s190 = sphi 0, %s188
      %s191 = sphi 0, %s190
      %s205 = sphi 0, %s191
      %s209 = sphi 0, %s209
      %s211 = sphi 0, %s209
      %s212 = sphi 0, %s211
      %s226 = sphi 0, %s212
      %s230 = sphi 0, %s230
      %s232 = sphi 0, %s230
      %s233 = sphi 0, %s232
      %s247 = sphi 0, %s233
      %s251 = sphi 0, %s251
      %s253 = sphi 0, %s251
      %s254 = sphi 0, %s253
      %s268 = sphi 0, %s254
      %s272 = sphi 0, %s272
      %s274 = sphi 0, %s272
      %s275 = sphi 0, %s274
      %s289 = sphi 0, %s275
      %s293 = sphi 0, %s293
      %s295 = sphi 0, %s293
      %s296 = sphi 0, %s295
      %s310 = sphi 0, %s296
      %s314 = sphi 0, %s314
      %s316 = sphi 0, %s314
      %s317 = sphi 0, %s316
      %s331 = sphi 0, %s317
      %s335 = sphi 0, %s335
      %s337 = sphi 0, %s335
      %s338 = sphi 0, %s337
      %s352 = sphi 0, %s338
      %s356 = sphi 0, %s356
      %s358 = sphi 0, %s356
      %s359 = sphi 0, %s358
      %s373 = sphi 0, %s359
      %s377 = sphi 0, %s377
      %s379 = sphi 0, %s377
      %s380 = sphi 0, %s379
      %s394 = sphi 0, %s380
      %s398 = sphi 0, %s398
      %s400 = sphi 0, %s398
      %s401 = sphi 0, %s400
      %s415 = sphi 0, %s401
      %s419 = sphi 0, %s419
      %s421 = sphi 0, %s419
      %s422 = sphi 0, %s421
      %s436 = sphi 0, %s422
      %s440 = sphi 0, %s440
      %s442 = sphi 0, %s440
      %s443 = sphi 0, %s442
      %s457 = sphi 0, %s443
      %s461 = sphi 0, %s461
      %s463 = sphi 0, %s461
      %s464 = sphi 0, %s463
      %s478 = sphi 0, %s464
      %s482 = sphi 0, %s482
      %s484 = sphi 0, %s482
      %s485 = sphi 0, %s484
      %s499 = sphi 0, %s485
      %s503 = sphi 0, %s503
      %s505 = sphi 0, %s503
      %s506 = sphi 0, %s505
      %s520 = sphi 0, %s506
      %s524 = sphi 0, %s524
      %s526 = sphi 0, %s524
      %s527 = sphi 0, %s526
      %s541 = sphi 0, %s527
      %s545 = sphi 0, %s545
      %s547 = sphi 0, %s545
      %s548 = sphi 0, %s547
      %s562 = sphi 0, %s548
      %s566 = sphi 0, %s566
      %s568 = sphi 0, %s566
      %s569 = sphi 0, %s568
      %s583 = sphi 0, %s569
      %s587 = sphi 0, %s587
      %s589 = sphi 0, %s587
      %s590 = sphi 0, %s589
      %s604 = sphi 0, %s590
      %s608 = sphi 0, %s608
      %s610 = sphi 0, %s608
      %s611 = sphi 0, %s610
      %s625 = sphi 0, %s611
      %s629 = sphi 0, %s629
      %s631 = sphi 0, %s629
      %s632 = sphi 0, %s631
      %s646 = sphi 0, %s632
      %s650 = sphi 0, %s650
      %s652 = sphi 0, %s650
      %s653 = sphi 0, %s652
      %s667 = sphi 0, %s653
      %s671 = sphi 0, %s671
      %s673 = sphi 0, %s671
      %s674 = sphi 0, %s673
      %s688 = sphi 0, %s674
      %s692 = sphi 0, %s692
      %s694 = sphi 0, %s692
      %s695 = sphi 0, %s694
      %s709 = sphi 0, %s695
      %s713 = sphi 0, %s713
      %s715 = sphi 0, %s713
      %s716 = sphi 0, %s715
      %s730 = sphi 0, %s716
      %s734 = sphi 0, %s734
      %s736 = sphi 0, %s734
      %s737 = sphi 0, %s736
      %s751 = sphi 0, %s737
      %s755 = sphi 0, %s755
      %s757 = sphi 0, %s755
      %s758 = sphi 0, %s757
      %s772 = sphi 0, %s758
      %s776 = sphi 0, %s776
      %s778 = sphi 0, %s776
      %s779 = sphi 0, %s778
      %s793 = sphi 0, %s779
      %s797 = sphi 0, %s797
      %s799 = sphi 0, %s797
      %s800 = sphi 0, %s799
      %s814 = sphi 0, %s800
      %s818 = sphi 0, %s818
      %s820 = sphi 0, %s818
      %s821 = sphi 0, %s820
      %s835 = sphi 0, %s821
      %s839 = sphi 0, %s839
      %s841 = sphi 0, %s839
      %s842 = sphi 0, %s841
      %s856 = sphi 0, %s842
      %s860 = sphi 0, %s860
      %s862 = sphi 0, %s860
      %s863 = sphi 0, %s862
      %s877 = sphi 0, %s863
      %s881 = sphi 0, %s881
      %s883 = sphi 0, %s881
      %s884 = sphi 0, %s883
      %s898 = sphi 0, %s884
      %s902 = sphi 0, %s902
      %s904 = sphi 0, %s902
      %s905 = sphi 0, %s904
      %s919 = sphi 0, %s905
      %s923 = sphi 0, %s923
      %s925 = sphi 0, %s923
      %s926 = sphi 0, %s925
      %s940 = sphi 0, %s926
      %s944 = sphi 0, %s944
      %s946 = sphi 0, %s944
      %s947 = sphi 0, %s946
      %s961 = sphi 0, %s947
      %s965 = sphi 0, %s965
      %s967 = sphi 0, %s965
      %s968 = sphi 0, %s967
      %s982 = sphi 0, %s968
      %s986 = sphi 0, %s986
      %s988 = sphi 0, %s986
      %s989 = sphi 0, %s988
      %s1003 = sphi 0, %s989
      %s1007 = sphi 0, %s1007
      %s1009 = sphi 0, %s1007
      %s1010 = sphi 0, %s1009
      %s1024 = sphi 0, %s1010
      %s1028 = sphi 0, %s1028
      %s1030 = sphi 0, %s1028
      %s1031 = sphi 0, %s1030
      %s1045 = sphi 0, %s1031
      %s1049 = sphi 0, %s1049
      %s1051 = sphi 0, %s1049
      %s1052 = sphi 0, %s1051
      %s1066 = sphi 0, %s1052
      %s1070 = sphi 0, %s1070
      %s1072 = sphi 0, %s1070
      %s1073 = sphi 0, %s1072
      %s1087 = sphi 0, %s1073
      %s1091 = sphi 0, %s1091
      %s1093 = sphi 0, %s1091
      %s1094 = sphi 0, %s1093
      %s1108 = sphi 0, %s1094
      %s1112 = sphi 0, %s1112
      %s1114 = sphi 0, %s1112
      %s1115 = sphi 0, %s1114
      %s1129 = sphi 0, %s1115
      %s1135 = sphi 0, %s1137
      %s1138 = sphi 0, %s1135
      %s1139 = sphi 0, %s1138
      %s1155 = sphi 0, %s1139
    $region4: #{transformer_decoder_forward.1} parent=1 // loop_header_branch
      %110 = sbr.rel (%p108) target = $region8
    $region5: #{transformer_decoder_forward.1} parent=1 // loop_body
      %s112 = ssub.s32 %s107, 1
      %s113 = ssub.s32 %s107, 2
      %s114 = sadd.s32 %s107, 1
      %s115 = ssub.s32 %s107, %s114
      %p116 = scmp.eq.s32.totalorder %s115, 0
      %s118 = sadd.s32 %s117, 1
      %s119 = scalar_select %p116, %s117, %s118
      %p122 = pneg %p116
      %p123 = scmp.eq.s32.totalorder %s107, 1
      %p124 = por %p122, %p123
      %p125 = scmp.ne.s32.totalorder %s117, %s120
      %p126 = scmp.eq.s32.totalorder %s107, 0
      %p127 = por %p125, %p126
      %p128 = scmp.ne.s32.totalorder %s117, %s120
      %p129 = scmp.eq.s32.totalorder %s112, 1
      %p130 = por %p128, %p129
      %p131 = scmp.ne.s32.totalorder %s120, %s121
      %p132 = scmp.eq.s32.totalorder %s112, 0
      %p133 = por %p131, %p132
      %p134 = scmp.ne.s32.totalorder %s120, %s121
      %p135 = scmp.eq.s32.totalorder %s113, 1
      %p136 = por %p134, %p135
      %p138 = scmp.ne.s32.totalorder %s121, %s137
      %p139 = scmp.eq.s32.totalorder %s113, 0
      %p140 = por %p138, %p139
      %s141 = ssub.s32 %s107, %s114
      %p142 = scmp.eq.s32.totalorder %s141, 0
      %s144 = sadd.s32 %s143, 1
      %s145 = scalar_select %p142, %s143, %s144
      %p148 = pneg %p142
      %p149 = scmp.eq.s32.totalorder %s107, 1
      %p150 = por %p148, %p149
      %p151 = scmp.ne.s32.totalorder %s143, %s146
      %p152 = scmp.eq.s32.totalorder %s107, 0
      %p153 = por %p151, %p152
      %p154 = scmp.ne.s32.totalorder %s143, %s146
      %p155 = scmp.eq.s32.totalorder %s112, 1
      %p156 = por %p154, %p155
      %p157 = scmp.ne.s32.totalorder %s146, %s147
      %p158 = scmp.eq.s32.totalorder %s112, 0
      %p159 = por %p157, %p158
      %p160 = scmp.ne.s32.totalorder %s146, %s147
      %p161 = scmp.eq.s32.totalorder %s113, 1
      %p162 = por %p160, %p161
      %p164 = scmp.ne.s32.totalorder %s147, %s163
      %p165 = scmp.eq.s32.totalorder %s113, 0
      %p166 = por %p164, %p165
      %s168 = sadd.s32 %s167, 1
      %p171 = scmp.eq.s32.totalorder %s107, 1
      %p172 = scmp.ne.s32.totalorder %s167, %s169
      %p173 = scmp.eq.s32.totalorder %s107, 0
      %p174 = por %p172, %p173
      %p175 = scmp.ne.s32.totalorder %s167, %s169
      %p176 = scmp.eq.s32.totalorder %s112, 1
      %p177 = por %p175, %p176
      %p178 = scmp.ne.s32.totalorder %s169, %s170
      %p179 = scmp.eq.s32.totalorder %s112, 0
      %p180 = por %p178, %p179
      %p181 = scmp.ne.s32.totalorder %s169, %s170
      %p182 = scmp.eq.s32.totalorder %s113, 1
      %p183 = por %p181, %p182
      %p185 = scmp.ne.s32.totalorder %s170, %s184
      %p186 = scmp.eq.s32.totalorder %s113, 0
      %p187 = por %p185, %p186
      %s189 = sadd.s32 %s188, 1
      %p192 = scmp.eq.s32.totalorder %s107, 1
      %p193 = scmp.ne.s32.totalorder %s188, %s190
      %p194 = scmp.eq.s32.totalorder %s107, 0
      %p195 = por %p193, %p194
      %p196 = scmp.ne.s32.totalorder %s188, %s190
      %p197 = scmp.eq.s32.totalorder %s112, 1
      %p198 = por %p196, %p197
      %p199 = scmp.ne.s32.totalorder %s190, %s191
      %p200 = scmp.eq.s32.totalorder %s112, 0
      %p201 = por %p199, %p200
      %p202 = scmp.ne.s32.totalorder %s190, %s191
      %p203 = scmp.eq.s32.totalorder %s113, 1
      %p204 = por %p202, %p203
      %p206 = scmp.ne.s32.totalorder %s191, %s205
      %p207 = scmp.eq.s32.totalorder %s113, 0
      %p208 = por %p206, %p207
      %s210 = sadd.s32 %s209, 1
      %p213 = scmp.eq.s32.totalorder %s107, 1
      %p214 = scmp.ne.s32.totalorder %s209, %s211
      %p215 = scmp.eq.s32.totalorder %s107, 0
      %p216 = por %p214, %p215
      %p217 = scmp.ne.s32.totalorder %s209, %s211
      %p218 = scmp.eq.s32.totalorder %s112, 1
      %p219 = por %p217, %p218
      %p220 = scmp.ne.s32.totalorder %s211, %s212
      %p221 = scmp.eq.s32.totalorder %s112, 0
      %p222 = por %p220, %p221
      %p223 = scmp.ne.s32.totalorder %s211, %s212
      %p224 = scmp.eq.s32.totalorder %s113, 1
      %p225 = por %p223, %p224
      %p227 = scmp.ne.s32.totalorder %s212, %s226
      %p228 = scmp.eq.s32.totalorder %s113, 0
      %p229 = por %p227, %p228
      %s231 = sadd.s32 %s230, 1
      %p234 = scmp.eq.s32.totalorder %s107, 1
      %p235 = scmp.ne.s32.totalorder %s230, %s232
      %p236 = scmp.eq.s32.totalorder %s107, 0
      %p237 = por %p235, %p236
      %p238 = scmp.ne.s32.totalorder %s230, %s232
      %p239 = scmp.eq.s32.totalorder %s112, 1
      %p240 = por %p238, %p239
      %p241 = scmp.ne.s32.totalorder %s232, %s233
      %p242 = scmp.eq.s32.totalorder %s112, 0
      %p243 = por %p241, %p242
      %p244 = scmp.ne.s32.totalorder %s232, %s233
      %p245 = scmp.eq.s32.totalorder %s113, 1
      %p246 = por %p244, %p245
      %p248 = scmp.ne.s32.totalorder %s233, %s247
      %p249 = scmp.eq.s32.totalorder %s113, 0
      %p250 = por %p248, %p249
      %s252 = sadd.s32 %s251, 1
      %p255 = scmp.eq.s32.totalorder %s107, 1
      %p256 = scmp.ne.s32.totalorder %s251, %s253
      %p257 = scmp.eq.s32.totalorder %s107, 0
      %p258 = por %p256, %p257
      %p259 = scmp.ne.s32.totalorder %s251, %s253
      %p260 = scmp.eq.s32.totalorder %s112, 1
      %p261 = por %p259, %p260
      %p262 = scmp.ne.s32.totalorder %s253, %s254
      %p263 = scmp.eq.s32.totalorder %s112, 0
      %p264 = por %p262, %p263
      %p265 = scmp.ne.s32.totalorder %s253, %s254
      %p266 = scmp.eq.s32.totalorder %s113, 1
      %p267 = por %p265, %p266
      %p269 = scmp.ne.s32.totalorder %s254, %s268
      %p270 = scmp.eq.s32.totalorder %s113, 0
      %p271 = por %p269, %p270
      %s273 = sadd.s32 %s272, 1
      %p276 = scmp.eq.s32.totalorder %s107, 1
      %p277 = scmp.ne.s32.totalorder %s272, %s274
      %p278 = scmp.eq.s32.totalorder %s107, 0
      %p279 = por %p277, %p278
      %p280 = scmp.ne.s32.totalorder %s272, %s274
      %p281 = scmp.eq.s32.totalorder %s112, 1
      %p282 = por %p280, %p281
      %p283 = scmp.ne.s32.totalorder %s274, %s275
      %p284 = scmp.eq.s32.totalorder %s112, 0
      %p285 = por %p283, %p284
      %p286 = scmp.ne.s32.totalorder %s274, %s275
      %p287 = scmp.eq.s32.totalorder %s113, 1
      %p288 = por %p286, %p287
      %p290 = scmp.ne.s32.totalorder %s275, %s289
      %p291 = scmp.eq.s32.totalorder %s113, 0
      %p292 = por %p290, %p291
      %s294 = sadd.s32 %s293, 1
      %p297 = scmp.eq.s32.totalorder %s107, 1
      %p298 = scmp.ne.s32.totalorder %s293, %s295
      %p299 = scmp.eq.s32.totalorder %s107, 0
      %p300 = por %p298, %p299
      %p301 = scmp.ne.s32.totalorder %s293, %s295
      %p302 = scmp.eq.s32.totalorder %s112, 1
      %p303 = por %p301, %p302
      %p304 = scmp.ne.s32.totalorder %s295, %s296
      %p305 = scmp.eq.s32.totalorder %s112, 0
      %p306 = por %p304, %p305
      %p307 = scmp.ne.s32.totalorder %s295, %s296
      %p308 = scmp.eq.s32.totalorder %s113, 1
      %p309 = por %p307, %p308
      %p311 = scmp.ne.s32.totalorder %s296, %s310
      %p312 = scmp.eq.s32.totalorder %s113, 0
      %p313 = por %p311, %p312
      %s315 = sadd.s32 %s314, 1
      %p318 = scmp.eq.s32.totalorder %s107, 1
      %p319 = scmp.ne.s32.totalorder %s314, %s316
      %p320 = scmp.eq.s32.totalorder %s107, 0
      %p321 = por %p319, %p320
      %p322 = scmp.ne.s32.totalorder %s314, %s316
      %p323 = scmp.eq.s32.totalorder %s112, 1
      %p324 = por %p322, %p323
      %p325 = scmp.ne.s32.totalorder %s316, %s317
      %p326 = scmp.eq.s32.totalorder %s112, 0
      %p327 = por %p325, %p326
      %p328 = scmp.ne.s32.totalorder %s316, %s317
      %p329 = scmp.eq.s32.totalorder %s113, 1
      %p330 = por %p328, %p329
      %p332 = scmp.ne.s32.totalorder %s317, %s331
      %p333 = scmp.eq.s32.totalorder %s113, 0
      %p334 = por %p332, %p333
      %s336 = sadd.s32 %s335, 1
      %p339 = scmp.eq.s32.totalorder %s107, 1
      %p340 = scmp.ne.s32.totalorder %s335, %s337
      %p341 = scmp.eq.s32.totalorder %s107, 0
      %p342 = por %p340, %p341
      %p343 = scmp.ne.s32.totalorder %s335, %s337
      %p344 = scmp.eq.s32.totalorder %s112, 1
      %p345 = por %p343, %p344
      %p346 = scmp.ne.s32.totalorder %s337, %s338
      %p347 = scmp.eq.s32.totalorder %s112, 0
      %p348 = por %p346, %p347
      %p349 = scmp.ne.s32.totalorder %s337, %s338
      %p350 = scmp.eq.s32.totalorder %s113, 1
      %p351 = por %p349, %p350
      %p353 = scmp.ne.s32.totalorder %s338, %s352
      %p354 = scmp.eq.s32.totalorder %s113, 0
      %p355 = por %p353, %p354
      %s357 = sadd.s32 %s356, 1
      %p360 = scmp.eq.s32.totalorder %s107, 1
      %p361 = scmp.ne.s32.totalorder %s356, %s358
      %p362 = scmp.eq.s32.totalorder %s107, 0
      %p363 = por %p361, %p362
      %p364 = scmp.ne.s32.totalorder %s356, %s358
      %p365 = scmp.eq.s32.totalorder %s112, 1
      %p366 = por %p364, %p365
      %p367 = scmp.ne.s32.totalorder %s358, %s359
      %p368 = scmp.eq.s32.totalorder %s112, 0
      %p369 = por %p367, %p368
      %p370 = scmp.ne.s32.totalorder %s358, %s359
      %p371 = scmp.eq.s32.totalorder %s113, 1
      %p372 = por %p370, %p371
      %p374 = scmp.ne.s32.totalorder %s359, %s373
      %p375 = scmp.eq.s32.totalorder %s113, 0
      %p376 = por %p374, %p375
      %s378 = sadd.s32 %s377, 1
      %p381 = scmp.eq.s32.totalorder %s107, 1
      %p382 = scmp.ne.s32.totalorder %s377, %s379
      %p383 = scmp.eq.s32.totalorder %s107, 0
      %p384 = por %p382, %p383
      %p385 = scmp.ne.s32.totalorder %s377, %s379
      %p386 = scmp.eq.s32.totalorder %s112, 1
      %p387 = por %p385, %p386
      %p388 = scmp.ne.s32.totalorder %s379, %s380
      %p389 = scmp.eq.s32.totalorder %s112, 0
      %p390 = por %p388, %p389
      %p391 = scmp.ne.s32.totalorder %s379, %s380
      %p392 = scmp.eq.s32.totalorder %s113, 1
      %p393 = por %p391, %p392
      %p395 = scmp.ne.s32.totalorder %s380, %s394
      %p396 = scmp.eq.s32.totalorder %s113, 0
      %p397 = por %p395, %p396
      %s399 = sadd.s32 %s398, 1
      %p402 = scmp.eq.s32.totalorder %s107, 1
      %p403 = scmp.ne.s32.totalorder %s398, %s400
      %p404 = scmp.eq.s32.totalorder %s107, 0
      %p405 = por %p403, %p404
      %p406 = scmp.ne.s32.totalorder %s398, %s400
      %p407 = scmp.eq.s32.totalorder %s112, 1
      %p408 = por %p406, %p407
      %p409 = scmp.ne.s32.totalorder %s400, %s401
      %p410 = scmp.eq.s32.totalorder %s112, 0
      %p411 = por %p409, %p410
      %p412 = scmp.ne.s32.totalorder %s400, %s401
      %p413 = scmp.eq.s32.totalorder %s113, 1
      %p414 = por %p412, %p413
      %p416 = scmp.ne.s32.totalorder %s401, %s415
      %p417 = scmp.eq.s32.totalorder %s113, 0
      %p418 = por %p416, %p417
      %s420 = sadd.s32 %s419, 1
      %p423 = scmp.eq.s32.totalorder %s107, 1
      %p424 = scmp.ne.s32.totalorder %s419, %s421
      %p425 = scmp.eq.s32.totalorder %s107, 0
      %p426 = por %p424, %p425
      %p427 = scmp.ne.s32.totalorder %s419, %s421
      %p428 = scmp.eq.s32.totalorder %s112, 1
      %p429 = por %p427, %p428
      %p430 = scmp.ne.s32.totalorder %s421, %s422
      %p431 = scmp.eq.s32.totalorder %s112, 0
      %p432 = por %p430, %p431
      %p433 = scmp.ne.s32.totalorder %s421, %s422
      %p434 = scmp.eq.s32.totalorder %s113, 1
      %p435 = por %p433, %p434
      %p437 = scmp.ne.s32.totalorder %s422, %s436
      %p438 = scmp.eq.s32.totalorder %s113, 0
      %p439 = por %p437, %p438
      %s441 = sadd.s32 %s440, 1
      %p444 = scmp.eq.s32.totalorder %s107, 1
      %p445 = scmp.ne.s32.totalorder %s440, %s442
      %p446 = scmp.eq.s32.totalorder %s107, 0
      %p447 = por %p445, %p446
      %p448 = scmp.ne.s32.totalorder %s440, %s442
      %p449 = scmp.eq.s32.totalorder %s112, 1
      %p450 = por %p448, %p449
      %p451 = scmp.ne.s32.totalorder %s442, %s443
      %p452 = scmp.eq.s32.totalorder %s112, 0
      %p453 = por %p451, %p452
      %p454 = scmp.ne.s32.totalorder %s442, %s443
      %p455 = scmp.eq.s32.totalorder %s113, 1
      %p456 = por %p454, %p455
      %p458 = scmp.ne.s32.totalorder %s443, %s457
      %p459 = scmp.eq.s32.totalorder %s113, 0
      %p460 = por %p458, %p459
      %s462 = sadd.s32 %s461, 1
      %p465 = scmp.eq.s32.totalorder %s107, 1
      %p466 = scmp.ne.s32.totalorder %s461, %s463
      %p467 = scmp.eq.s32.totalorder %s107, 0
      %p468 = por %p466, %p467
      %p469 = scmp.ne.s32.totalorder %s461, %s463
      %p470 = scmp.eq.s32.totalorder %s112, 1
      %p471 = por %p469, %p470
      %p472 = scmp.ne.s32.totalorder %s463, %s464
      %p473 = scmp.eq.s32.totalorder %s112, 0
      %p474 = por %p472, %p473
      %p475 = scmp.ne.s32.totalorder %s463, %s464
      %p476 = scmp.eq.s32.totalorder %s113, 1
      %p477 = por %p475, %p476
      %p479 = scmp.ne.s32.totalorder %s464, %s478
      %p480 = scmp.eq.s32.totalorder %s113, 0
      %p481 = por %p479, %p480
      %s483 = sadd.s32 %s482, 1
      %p486 = scmp.eq.s32.totalorder %s107, 1
      %p487 = scmp.ne.s32.totalorder %s482, %s484
      %p488 = scmp.eq.s32.totalorder %s107, 0
      %p489 = por %p487, %p488
      %p490 = scmp.ne.s32.totalorder %s482, %s484
      %p491 = scmp.eq.s32.totalorder %s112, 1
      %p492 = por %p490, %p491
      %p493 = scmp.ne.s32.totalorder %s484, %s485
      %p494 = scmp.eq.s32.totalorder %s112, 0
      %p495 = por %p493, %p494
      %p496 = scmp.ne.s32.totalorder %s484, %s485
      %p497 = scmp.eq.s32.totalorder %s113, 1
      %p498 = por %p496, %p497
      %p500 = scmp.ne.s32.totalorder %s485, %s499
      %p501 = scmp.eq.s32.totalorder %s113, 0
      %p502 = por %p500, %p501
      %s504 = sadd.s32 %s503, 1
      %p507 = scmp.eq.s32.totalorder %s107, 1
      %p508 = scmp.ne.s32.totalorder %s503, %s505
      %p509 = scmp.eq.s32.totalorder %s107, 0
      %p510 = por %p508, %p509
      %p511 = scmp.ne.s32.totalorder %s503, %s505
      %p512 = scmp.eq.s32.totalorder %s112, 1
      %p513 = por %p511, %p512
      %p514 = scmp.ne.s32.totalorder %s505, %s506
      %p515 = scmp.eq.s32.totalorder %s112, 0
      %p516 = por %p514, %p515
      %p517 = scmp.ne.s32.totalorder %s505, %s506
      %p518 = scmp.eq.s32.totalorder %s113, 1
      %p519 = por %p517, %p518
      %p521 = scmp.ne.s32.totalorder %s506, %s520
      %p522 = scmp.eq.s32.totalorder %s113, 0
      %p523 = por %p521, %p522
      %s525 = sadd.s32 %s524, 1
      %p528 = scmp.eq.s32.totalorder %s107, 1
      %p529 = scmp.ne.s32.totalorder %s524, %s526
      %p530 = scmp.eq.s32.totalorder %s107, 0
      %p531 = por %p529, %p530
      %p532 = scmp.ne.s32.totalorder %s524, %s526
      %p533 = scmp.eq.s32.totalorder %s112, 1
      %p534 = por %p532, %p533
      %p535 = scmp.ne.s32.totalorder %s526, %s527
      %p536 = scmp.eq.s32.totalorder %s112, 0
      %p537 = por %p535, %p536
      %p538 = scmp.ne.s32.totalorder %s526, %s527
      %p539 = scmp.eq.s32.totalorder %s113, 1
      %p540 = por %p538, %p539
      %p542 = scmp.ne.s32.totalorder %s527, %s541
      %p543 = scmp.eq.s32.totalorder %s113, 0
      %p544 = por %p542, %p543
      %s546 = sadd.s32 %s545, 1
      %p549 = scmp.eq.s32.totalorder %s107, 1
      %p550 = scmp.ne.s32.totalorder %s545, %s547
      %p551 = scmp.eq.s32.totalorder %s107, 0
      %p552 = por %p550, %p551
      %p553 = scmp.ne.s32.totalorder %s545, %s547
      %p554 = scmp.eq.s32.totalorder %s112, 1
      %p555 = por %p553, %p554
      %p556 = scmp.ne.s32.totalorder %s547, %s548
      %p557 = scmp.eq.s32.totalorder %s112, 0
      %p558 = por %p556, %p557
      %p559 = scmp.ne.s32.totalorder %s547, %s548
      %p560 = scmp.eq.s32.totalorder %s113, 1
      %p561 = por %p559, %p560
      %p563 = scmp.ne.s32.totalorder %s548, %s562
      %p564 = scmp.eq.s32.totalorder %s113, 0
      %p565 = por %p563, %p564
      %s567 = sadd.s32 %s566, 1
      %p570 = scmp.eq.s32.totalorder %s107, 1
      %p571 = scmp.ne.s32.totalorder %s566, %s568
      %p572 = scmp.eq.s32.totalorder %s107, 0
      %p573 = por %p571, %p572
      %p574 = scmp.ne.s32.totalorder %s566, %s568
      %p575 = scmp.eq.s32.totalorder %s112, 1
      %p576 = por %p574, %p575
      %p577 = scmp.ne.s32.totalorder %s568, %s569
      %p578 = scmp.eq.s32.totalorder %s112, 0
      %p579 = por %p577, %p578
      %p580 = scmp.ne.s32.totalorder %s568, %s569
      %p581 = scmp.eq.s32.totalorder %s113, 1
      %p582 = por %p580, %p581
      %p584 = scmp.ne.s32.totalorder %s569, %s583
      %p585 = scmp.eq.s32.totalorder %s113, 0
      %p586 = por %p584, %p585
      %s588 = sadd.s32 %s587, 1
      %p591 = scmp.eq.s32.totalorder %s107, 1
      %p592 = scmp.ne.s32.totalorder %s587, %s589
      %p593 = scmp.eq.s32.totalorder %s107, 0
      %p594 = por %p592, %p593
      %p595 = scmp.ne.s32.totalorder %s587, %s589
      %p596 = scmp.eq.s32.totalorder %s112, 1
      %p597 = por %p595, %p596
      %p598 = scmp.ne.s32.totalorder %s589, %s590
      %p599 = scmp.eq.s32.totalorder %s112, 0
      %p600 = por %p598, %p599
      %p601 = scmp.ne.s32.totalorder %s589, %s590
      %p602 = scmp.eq.s32.totalorder %s113, 1
      %p603 = por %p601, %p602
      %p605 = scmp.ne.s32.totalorder %s590, %s604
      %p606 = scmp.eq.s32.totalorder %s113, 0
      %p607 = por %p605, %p606
      %s609 = sadd.s32 %s608, 1
      %p612 = scmp.eq.s32.totalorder %s107, 1
      %p613 = scmp.ne.s32.totalorder %s608, %s610
      %p614 = scmp.eq.s32.totalorder %s107, 0
      %p615 = por %p613, %p614
      %p616 = scmp.ne.s32.totalorder %s608, %s610
      %p617 = scmp.eq.s32.totalorder %s112, 1
      %p618 = por %p616, %p617
      %p619 = scmp.ne.s32.totalorder %s610, %s611
      %p620 = scmp.eq.s32.totalorder %s112, 0
      %p621 = por %p619, %p620
      %p622 = scmp.ne.s32.totalorder %s610, %s611
      %p623 = scmp.eq.s32.totalorder %s113, 1
      %p624 = por %p622, %p623
      %p626 = scmp.ne.s32.totalorder %s611, %s625
      %p627 = scmp.eq.s32.totalorder %s113, 0
      %p628 = por %p626, %p627
      %s630 = sadd.s32 %s629, 1
      %p633 = scmp.eq.s32.totalorder %s107, 1
      %p634 = scmp.ne.s32.totalorder %s629, %s631
      %p635 = scmp.eq.s32.totalorder %s107, 0
      %p636 = por %p634, %p635
      %p637 = scmp.ne.s32.totalorder %s629, %s631
      %p638 = scmp.eq.s32.totalorder %s112, 1
      %p639 = por %p637, %p638
      %p640 = scmp.ne.s32.totalorder %s631, %s632
      %p641 = scmp.eq.s32.totalorder %s112, 0
      %p642 = por %p640, %p641
      %p643 = scmp.ne.s32.totalorder %s631, %s632
      %p644 = scmp.eq.s32.totalorder %s113, 1
      %p645 = por %p643, %p644
      %p647 = scmp.ne.s32.totalorder %s632, %s646
      %p648 = scmp.eq.s32.totalorder %s113, 0
      %p649 = por %p647, %p648
      %s651 = sadd.s32 %s650, 1
      %p654 = scmp.eq.s32.totalorder %s107, 1
      %p655 = scmp.ne.s32.totalorder %s650, %s652
      %p656 = scmp.eq.s32.totalorder %s107, 0
      %p657 = por %p655, %p656
      %p658 = scmp.ne.s32.totalorder %s650, %s652
      %p659 = scmp.eq.s32.totalorder %s112, 1
      %p660 = por %p658, %p659
      %p661 = scmp.ne.s32.totalorder %s652, %s653
      %p662 = scmp.eq.s32.totalorder %s112, 0
      %p663 = por %p661, %p662
      %p664 = scmp.ne.s32.totalorder %s652, %s653
      %p665 = scmp.eq.s32.totalorder %s113, 1
      %p666 = por %p664, %p665
      %p668 = scmp.ne.s32.totalorder %s653, %s667
      %p669 = scmp.eq.s32.totalorder %s113, 0
      %p670 = por %p668, %p669
      %s672 = sadd.s32 %s671, 1
      %p675 = scmp.eq.s32.totalorder %s107, 1
      %p676 = scmp.ne.s32.totalorder %s671, %s673
      %p677 = scmp.eq.s32.totalorder %s107, 0
      %p678 = por %p676, %p677
      %p679 = scmp.ne.s32.totalorder %s671, %s673
      %p680 = scmp.eq.s32.totalorder %s112, 1
      %p681 = por %p679, %p680
      %p682 = scmp.ne.s32.totalorder %s673, %s674
      %p683 = scmp.eq.s32.totalorder %s112, 0
      %p684 = por %p682, %p683
      %p685 = scmp.ne.s32.totalorder %s673, %s674
      %p686 = scmp.eq.s32.totalorder %s113, 1
      %p687 = por %p685, %p686
      %p689 = scmp.ne.s32.totalorder %s674, %s688
      %p690 = scmp.eq.s32.totalorder %s113, 0
      %p691 = por %p689, %p690
      %s693 = sadd.s32 %s692, 1
      %p696 = scmp.eq.s32.totalorder %s107, 1
      %p697 = scmp.ne.s32.totalorder %s692, %s694
      %p698 = scmp.eq.s32.totalorder %s107, 0
      %p699 = por %p697, %p698
      %p700 = scmp.ne.s32.totalorder %s692, %s694
      %p701 = scmp.eq.s32.totalorder %s112, 1
      %p702 = por %p700, %p701
      %p703 = scmp.ne.s32.totalorder %s694, %s695
      %p704 = scmp.eq.s32.totalorder %s112, 0
      %p705 = por %p703, %p704
      %p706 = scmp.ne.s32.totalorder %s694, %s695
      %p707 = scmp.eq.s32.totalorder %s113, 1
      %p708 = por %p706, %p707
      %p710 = scmp.ne.s32.totalorder %s695, %s709
      %p711 = scmp.eq.s32.totalorder %s113, 0
      %p712 = por %p710, %p711
      %s714 = sadd.s32 %s713, 1
      %p717 = scmp.eq.s32.totalorder %s107, 1
      %p718 = scmp.ne.s32.totalorder %s713, %s715
      %p719 = scmp.eq.s32.totalorder %s107, 0
      %p720 = por %p718, %p719
      %p721 = scmp.ne.s32.totalorder %s713, %s715
      %p722 = scmp.eq.s32.totalorder %s112, 1
      %p723 = por %p721, %p722
      %p724 = scmp.ne.s32.totalorder %s715, %s716
      %p725 = scmp.eq.s32.totalorder %s112, 0
      %p726 = por %p724, %p725
      %p727 = scmp.ne.s32.totalorder %s715, %s716
      %p728 = scmp.eq.s32.totalorder %s113, 1
      %p729 = por %p727, %p728
      %p731 = scmp.ne.s32.totalorder %s716, %s730
      %p732 = scmp.eq.s32.totalorder %s113, 0
      %p733 = por %p731, %p732
      %s735 = sadd.s32 %s734, 1
      %p738 = scmp.eq.s32.totalorder %s107, 1
      %p739 = scmp.ne.s32.totalorder %s734, %s736
      %p740 = scmp.eq.s32.totalorder %s107, 0
      %p741 = por %p739, %p740
      %p742 = scmp.ne.s32.totalorder %s734, %s736
      %p743 = scmp.eq.s32.totalorder %s112, 1
      %p744 = por %p742, %p743
      %p745 = scmp.ne.s32.totalorder %s736, %s737
      %p746 = scmp.eq.s32.totalorder %s112, 0
      %p747 = por %p745, %p746
      %p748 = scmp.ne.s32.totalorder %s736, %s737
      %p749 = scmp.eq.s32.totalorder %s113, 1
      %p750 = por %p748, %p749
      %p752 = scmp.ne.s32.totalorder %s737, %s751
      %p753 = scmp.eq.s32.totalorder %s113, 0
      %p754 = por %p752, %p753
      %s756 = sadd.s32 %s755, 1
      %p759 = scmp.eq.s32.totalorder %s107, 1
      %p760 = scmp.ne.s32.totalorder %s755, %s757
      %p761 = scmp.eq.s32.totalorder %s107, 0
      %p762 = por %p760, %p761
      %p763 = scmp.ne.s32.totalorder %s755, %s757
      %p764 = scmp.eq.s32.totalorder %s112, 1
      %p765 = por %p763, %p764
      %p766 = scmp.ne.s32.totalorder %s757, %s758
      %p767 = scmp.eq.s32.totalorder %s112, 0
      %p768 = por %p766, %p767
      %p769 = scmp.ne.s32.totalorder %s757, %s758
      %p770 = scmp.eq.s32.totalorder %s113, 1
      %p771 = por %p769, %p770
      %p773 = scmp.ne.s32.totalorder %s758, %s772
      %p774 = scmp.eq.s32.totalorder %s113, 0
      %p775 = por %p773, %p774
      %s777 = sadd.s32 %s776, 1
      %p780 = scmp.eq.s32.totalorder %s107, 1
      %p781 = scmp.ne.s32.totalorder %s776, %s778
      %p782 = scmp.eq.s32.totalorder %s107, 0
      %p783 = por %p781, %p782
      %p784 = scmp.ne.s32.totalorder %s776, %s778
      %p785 = scmp.eq.s32.totalorder %s112, 1
      %p786 = por %p784, %p785
      %p787 = scmp.ne.s32.totalorder %s778, %s779
      %p788 = scmp.eq.s32.totalorder %s112, 0
      %p789 = por %p787, %p788
      %p790 = scmp.ne.s32.totalorder %s778, %s779
      %p791 = scmp.eq.s32.totalorder %s113, 1
      %p792 = por %p790, %p791
      %p794 = scmp.ne.s32.totalorder %s779, %s793
      %p795 = scmp.eq.s32.totalorder %s113, 0
      %p796 = por %p794, %p795
      %s798 = sadd.s32 %s797, 1
      %p801 = scmp.eq.s32.totalorder %s107, 1
      %p802 = scmp.ne.s32.totalorder %s797, %s799
      %p803 = scmp.eq.s32.totalorder %s107, 0
      %p804 = por %p802, %p803
      %p805 = scmp.ne.s32.totalorder %s797, %s799
      %p806 = scmp.eq.s32.totalorder %s112, 1
      %p807 = por %p805, %p806
      %p808 = scmp.ne.s32.totalorder %s799, %s800
      %p809 = scmp.eq.s32.totalorder %s112, 0
      %p810 = por %p808, %p809
      %p811 = scmp.ne.s32.totalorder %s799, %s800
      %p812 = scmp.eq.s32.totalorder %s113, 1
      %p813 = por %p811, %p812
      %p815 = scmp.ne.s32.totalorder %s800, %s814
      %p816 = scmp.eq.s32.totalorder %s113, 0
      %p817 = por %p815, %p816
      %s819 = sadd.s32 %s818, 1
      %p822 = scmp.eq.s32.totalorder %s107, 1
      %p823 = scmp.ne.s32.totalorder %s818, %s820
      %p824 = scmp.eq.s32.totalorder %s107, 0
      %p825 = por %p823, %p824
      %p826 = scmp.ne.s32.totalorder %s818, %s820
      %p827 = scmp.eq.s32.totalorder %s112, 1
      %p828 = por %p826, %p827
      %p829 = scmp.ne.s32.totalorder %s820, %s821
      %p830 = scmp.eq.s32.totalorder %s112, 0
      %p831 = por %p829, %p830
      %p832 = scmp.ne.s32.totalorder %s820, %s821
      %p833 = scmp.eq.s32.totalorder %s113, 1
      %p834 = por %p832, %p833
      %p836 = scmp.ne.s32.totalorder %s821, %s835
      %p837 = scmp.eq.s32.totalorder %s113, 0
      %p838 = por %p836, %p837
      %s840 = sadd.s32 %s839, 1
      %p843 = scmp.eq.s32.totalorder %s107, 1
      %p844 = scmp.ne.s32.totalorder %s839, %s841
      %p845 = scmp.eq.s32.totalorder %s107, 0
      %p846 = por %p844, %p845
      %p847 = scmp.ne.s32.totalorder %s839, %s841
      %p848 = scmp.eq.s32.totalorder %s112, 1
      %p849 = por %p847, %p848
      %p850 = scmp.ne.s32.totalorder %s841, %s842
      %p851 = scmp.eq.s32.totalorder %s112, 0
      %p852 = por %p850, %p851
      %p853 = scmp.ne.s32.totalorder %s841, %s842
      %p854 = scmp.eq.s32.totalorder %s113, 1
      %p855 = por %p853, %p854
      %p857 = scmp.ne.s32.totalorder %s842, %s856
      %p858 = scmp.eq.s32.totalorder %s113, 0
      %p859 = por %p857, %p858
      %s861 = sadd.s32 %s860, 1
      %p864 = scmp.eq.s32.totalorder %s107, 1
      %p865 = scmp.ne.s32.totalorder %s860, %s862
      %p866 = scmp.eq.s32.totalorder %s107, 0
      %p867 = por %p865, %p866
      %p868 = scmp.ne.s32.totalorder %s860, %s862
      %p869 = scmp.eq.s32.totalorder %s112, 1
      %p870 = por %p868, %p869
      %p871 = scmp.ne.s32.totalorder %s862, %s863
      %p872 = scmp.eq.s32.totalorder %s112, 0
      %p873 = por %p871, %p872
      %p874 = scmp.ne.s32.totalorder %s862, %s863
      %p875 = scmp.eq.s32.totalorder %s113, 1
      %p876 = por %p874, %p875
      %p878 = scmp.ne.s32.totalorder %s863, %s877
      %p879 = scmp.eq.s32.totalorder %s113, 0
      %p880 = por %p878, %p879
      %s882 = sadd.s32 %s881, 1
      %p885 = scmp.eq.s32.totalorder %s107, 1
      %p886 = scmp.ne.s32.totalorder %s881, %s883
      %p887 = scmp.eq.s32.totalorder %s107, 0
      %p888 = por %p886, %p887
      %p889 = scmp.ne.s32.totalorder %s881, %s883
      %p890 = scmp.eq.s32.totalorder %s112, 1
      %p891 = por %p889, %p890
      %p892 = scmp.ne.s32.totalorder %s883, %s884
      %p893 = scmp.eq.s32.totalorder %s112, 0
      %p894 = por %p892, %p893
      %p895 = scmp.ne.s32.totalorder %s883, %s884
      %p896 = scmp.eq.s32.totalorder %s113, 1
      %p897 = por %p895, %p896
      %p899 = scmp.ne.s32.totalorder %s884, %s898
      %p900 = scmp.eq.s32.totalorder %s113, 0
      %p901 = por %p899, %p900
      %s903 = sadd.s32 %s902, 1
      %p906 = scmp.eq.s32.totalorder %s107, 1
      %p907 = scmp.ne.s32.totalorder %s902, %s904
      %p908 = scmp.eq.s32.totalorder %s107, 0
      %p909 = por %p907, %p908
      %p910 = scmp.ne.s32.totalorder %s902, %s904
      %p911 = scmp.eq.s32.totalorder %s112, 1
      %p912 = por %p910, %p911
      %p913 = scmp.ne.s32.totalorder %s904, %s905
      %p914 = scmp.eq.s32.totalorder %s112, 0
      %p915 = por %p913, %p914
      %p916 = scmp.ne.s32.totalorder %s904, %s905
      %p917 = scmp.eq.s32.totalorder %s113, 1
      %p918 = por %p916, %p917
      %p920 = scmp.ne.s32.totalorder %s905, %s919
      %p921 = scmp.eq.s32.totalorder %s113, 0
      %p922 = por %p920, %p921
      %s924 = sadd.s32 %s923, 1
      %p927 = scmp.eq.s32.totalorder %s107, 1
      %p928 = scmp.ne.s32.totalorder %s923, %s925
      %p929 = scmp.eq.s32.totalorder %s107, 0
      %p930 = por %p928, %p929
      %p931 = scmp.ne.s32.totalorder %s923, %s925
      %p932 = scmp.eq.s32.totalorder %s112, 1
      %p933 = por %p931, %p932
      %p934 = scmp.ne.s32.totalorder %s925, %s926
      %p935 = scmp.eq.s32.totalorder %s112, 0
      %p936 = por %p934, %p935
      %p937 = scmp.ne.s32.totalorder %s925, %s926
      %p938 = scmp.eq.s32.totalorder %s113, 1
      %p939 = por %p937, %p938
      %p941 = scmp.ne.s32.totalorder %s926, %s940
      %p942 = scmp.eq.s32.totalorder %s113, 0
      %p943 = por %p941, %p942
      %s945 = sadd.s32 %s944, 1
      %p948 = scmp.eq.s32.totalorder %s107, 1
      %p949 = scmp.ne.s32.totalorder %s944, %s946
      %p950 = scmp.eq.s32.totalorder %s107, 0
      %p951 = por %p949, %p950
      %p952 = scmp.ne.s32.totalorder %s944, %s946
      %p953 = scmp.eq.s32.totalorder %s112, 1
      %p954 = por %p952, %p953
      %p955 = scmp.ne.s32.totalorder %s946, %s947
      %p956 = scmp.eq.s32.totalorder %s112, 0
      %p957 = por %p955, %p956
      %p958 = scmp.ne.s32.totalorder %s946, %s947
      %p959 = scmp.eq.s32.totalorder %s113, 1
      %p960 = por %p958, %p959
      %p962 = scmp.ne.s32.totalorder %s947, %s961
      %p963 = scmp.eq.s32.totalorder %s113, 0
      %p964 = por %p962, %p963
      %s966 = sadd.s32 %s965, 1
      %p969 = scmp.eq.s32.totalorder %s107, 1
      %p970 = scmp.ne.s32.totalorder %s965, %s967
      %p971 = scmp.eq.s32.totalorder %s107, 0
      %p972 = por %p970, %p971
      %p973 = scmp.ne.s32.totalorder %s965, %s967
      %p974 = scmp.eq.s32.totalorder %s112, 1
      %p975 = por %p973, %p974
      %p976 = scmp.ne.s32.totalorder %s967, %s968
      %p977 = scmp.eq.s32.totalorder %s112, 0
      %p978 = por %p976, %p977
      %p979 = scmp.ne.s32.totalorder %s967, %s968
      %p980 = scmp.eq.s32.totalorder %s113, 1
      %p981 = por %p979, %p980
      %p983 = scmp.ne.s32.totalorder %s968, %s982
      %p984 = scmp.eq.s32.totalorder %s113, 0
      %p985 = por %p983, %p984
      %s987 = sadd.s32 %s986, 1
      %p990 = scmp.eq.s32.totalorder %s107, 1
      %p991 = scmp.ne.s32.totalorder %s986, %s988
      %p992 = scmp.eq.s32.totalorder %s107, 0
      %p993 = por %p991, %p992
      %p994 = scmp.ne.s32.totalorder %s986, %s988
      %p995 = scmp.eq.s32.totalorder %s112, 1
      %p996 = por %p994, %p995
      %p997 = scmp.ne.s32.totalorder %s988, %s989
      %p998 = scmp.eq.s32.totalorder %s112, 0
      %p999 = por %p997, %p998
      %p1000 = scmp.ne.s32.totalorder %s988, %s989
      %p1001 = scmp.eq.s32.totalorder %s113, 1
      %p1002 = por %p1000, %p1001
      %p1004 = scmp.ne.s32.totalorder %s989, %s1003
      %p1005 = scmp.eq.s32.totalorder %s113, 0
      %p1006 = por %p1004, %p1005
      %s1008 = sadd.s32 %s1007, 1
      %p1011 = scmp.eq.s32.totalorder %s107, 1
      %p1012 = scmp.ne.s32.totalorder %s1007, %s1009
      %p1013 = scmp.eq.s32.totalorder %s107, 0
      %p1014 = por %p1012, %p1013
      %p1015 = scmp.ne.s32.totalorder %s1007, %s1009
      %p1016 = scmp.eq.s32.totalorder %s112, 1
      %p1017 = por %p1015, %p1016
      %p1018 = scmp.ne.s32.totalorder %s1009, %s1010
      %p1019 = scmp.eq.s32.totalorder %s112, 0
      %p1020 = por %p1018, %p1019
      %p1021 = scmp.ne.s32.totalorder %s1009, %s1010
      %p1022 = scmp.eq.s32.totalorder %s113, 1
      %p1023 = por %p1021, %p1022
      %p1025 = scmp.ne.s32.totalorder %s1010, %s1024
      %p1026 = scmp.eq.s32.totalorder %s113, 0
      %p1027 = por %p1025, %p1026
      %s1029 = sadd.s32 %s1028, 1
      %p1032 = scmp.eq.s32.totalorder %s107, 1
      %p1033 = scmp.ne.s32.totalorder %s1028, %s1030
      %p1034 = scmp.eq.s32.totalorder %s107, 0
      %p1035 = por %p1033, %p1034
      %p1036 = scmp.ne.s32.totalorder %s1028, %s1030
      %p1037 = scmp.eq.s32.totalorder %s112, 1
      %p1038 = por %p1036, %p1037
      %p1039 = scmp.ne.s32.totalorder %s1030, %s1031
      %p1040 = scmp.eq.s32.totalorder %s112, 0
      %p1041 = por %p1039, %p1040
      %p1042 = scmp.ne.s32.totalorder %s1030, %s1031
      %p1043 = scmp.eq.s32.totalorder %s113, 1
      %p1044 = por %p1042, %p1043
      %p1046 = scmp.ne.s32.totalorder %s1031, %s1045
      %p1047 = scmp.eq.s32.totalorder %s113, 0
      %p1048 = por %p1046, %p1047
      %s1050 = sadd.s32 %s1049, 1
      %p1053 = scmp.eq.s32.totalorder %s107, 1
      %p1054 = scmp.ne.s32.totalorder %s1049, %s1051
      %p1055 = scmp.eq.s32.totalorder %s107, 0
      %p1056 = por %p1054, %p1055
      %p1057 = scmp.ne.s32.totalorder %s1049, %s1051
      %p1058 = scmp.eq.s32.totalorder %s112, 1
      %p1059 = por %p1057, %p1058
      %p1060 = scmp.ne.s32.totalorder %s1051, %s1052
      %p1061 = scmp.eq.s32.totalorder %s112, 0
      %p1062 = por %p1060, %p1061
      %p1063 = scmp.ne.s32.totalorder %s1051, %s1052
      %p1064 = scmp.eq.s32.totalorder %s113, 1
      %p1065 = por %p1063, %p1064
      %p1067 = scmp.ne.s32.totalorder %s1052, %s1066
      %p1068 = scmp.eq.s32.totalorder %s113, 0
      %p1069 = por %p1067, %p1068
      %s1071 = sadd.s32 %s1070, 1
      %p1074 = scmp.eq.s32.totalorder %s107, 1
      %p1075 = scmp.ne.s32.totalorder %s1070, %s1072
      %p1076 = scmp.eq.s32.totalorder %s107, 0
      %p1077 = por %p1075, %p1076
      %p1078 = scmp.ne.s32.totalorder %s1070, %s1072
      %p1079 = scmp.eq.s32.totalorder %s112, 1
      %p1080 = por %p1078, %p1079
      %p1081 = scmp.ne.s32.totalorder %s1072, %s1073
      %p1082 = scmp.eq.s32.totalorder %s112, 0
      %p1083 = por %p1081, %p1082
      %p1084 = scmp.ne.s32.totalorder %s1072, %s1073
      %p1085 = scmp.eq.s32.totalorder %s113, 1
      %p1086 = por %p1084, %p1085
      %p1088 = scmp.ne.s32.totalorder %s1073, %s1087
      %p1089 = scmp.eq.s32.totalorder %s113, 0
      %p1090 = por %p1088, %p1089
      %s1092 = sadd.s32 %s1091, 1
      %p1095 = scmp.eq.s32.totalorder %s107, 1
      %p1096 = scmp.ne.s32.totalorder %s1091, %s1093
      %p1097 = scmp.eq.s32.totalorder %s107, 0
      %p1098 = por %p1096, %p1097
      %p1099 = scmp.ne.s32.totalorder %s1091, %s1093
      %p1100 = scmp.eq.s32.totalorder %s112, 1
      %p1101 = por %p1099, %p1100
      %p1102 = scmp.ne.s32.totalorder %s1093, %s1094
      %p1103 = scmp.eq.s32.totalorder %s112, 0
      %p1104 = por %p1102, %p1103
      %p1105 = scmp.ne.s32.totalorder %s1093, %s1094
      %p1106 = scmp.eq.s32.totalorder %s113, 1
      %p1107 = por %p1105, %p1106
      %p1109 = scmp.ne.s32.totalorder %s1094, %s1108
      %p1110 = scmp.eq.s32.totalorder %s113, 0
      %p1111 = por %p1109, %p1110
      %s1113 = sadd.s32 %s1112, 1
      %p1116 = scmp.eq.s32.totalorder %s107, 1
      %p1117 = scmp.ne.s32.totalorder %s1112, %s1114
      %p1118 = scmp.eq.s32.totalorder %s107, 0
      %p1119 = por %p1117, %p1118
      %p1120 = scmp.ne.s32.totalorder %s1112, %s1114
      %p1121 = scmp.eq.s32.totalorder %s112, 1
      %p1122 = por %p1120, %p1121
      %p1123 = scmp.ne.s32.totalorder %s1114, %s1115
      %p1124 = scmp.eq.s32.totalorder %s112, 0
      %p1125 = por %p1123, %p1124
      %p1126 = scmp.ne.s32.totalorder %s1114, %s1115
      %p1127 = scmp.eq.s32.totalorder %s113, 1
      %p1128 = por %p1126, %p1127
      %p1130 = scmp.ne.s32.totalorder %s1115, %s1129
      %p1131 = scmp.eq.s32.totalorder %s113, 0
      %p1132 = por %p1130, %p1131
      %s1133 = ssub.s32 %s107, %s114
      %p1134 = scmp.eq.s32.totalorder %s1133, 0
      %s1136 = sadd.s32 %s1135, 1
      %s1137 = scalar_select %p1134, %s1135, %s1136
      %p1140 = pneg %p1134
      %p1141 = scmp.eq.s32.totalorder %s107, 1
      %p1142 = por %p1140, %p1141
      %p1143 = scmp.ne.s32.totalorder %s1135, %s1138
      %p1144 = scmp.eq.s32.totalorder %s107, 0
      %p1145 = por %p1143, %p1144
      %p1146 = scmp.ne.s32.totalorder %s1135, %s1138
      %p1147 = scmp.eq.s32.totalorder %s112, 1
      %p1148 = por %p1146, %p1147
      %p1149 = scmp.ne.s32.totalorder %s1138, %s1139
      %p1150 = scmp.eq.s32.totalorder %s112, 0
      %p1151 = por %p1149, %p1150
      %p1152 = scmp.ne.s32.totalorder %s1138, %s1139
      %p1153 = scmp.eq.s32.totalorder %s113, 1
      %p1154 = por %p1152, %p1153
      %p1156 = scmp.ne.s32.totalorder %s1139, %s1155
      %p1157 = scmp.eq.s32.totalorder %s113, 0
      %p1158 = por %p1156, %p1157
      %p1159 = scmp.le.s32.totalorder 1, %s107
      %p1160 = scmp.lt.s32.totalorder %s107, 3
      %p1161 = pnand %p1159, %p1160
      %p1162 = pneg %p1161
      // Predicated region
      $region9: #{transformer_decoder_forward.1} parent=5 // pred_check
        _
      $region10: #{transformer_decoder_forward.1} parent=5 // pred_check_branch
        %1164 = sbr.rel (%p1161) target = $region12
      $region11: #{transformer_decoder_forward.1} parent=5 // pred_region
        %s1165 = ssub.s32 %s107, 1
        // Predicated region
        $region13: #{transformer_decoder_forward.1} parent=11 // pred_check
          %p1166 = pneg %p180
        $region14: #{transformer_decoder_forward.1} parent=11 // pred_check_branch
          %1168 = sbr.rel (%p1166) target = $region16
        $region15: #{transformer_decoder_forward.1} parent=11 // pred_region
          _
        $region16: #{transformer_decoder_forward.1} parent=11 // pred_fallthru
          _
        // Predicated region
        $region17: #{transformer_decoder_forward.1} parent=11 // pred_check
          %p1169 = pneg %p201
        $region18: #{transformer_decoder_forward.1} parent=11 // pred_check_branch
          %1171 = sbr.rel (%p1169) target = $region20
        $region19: #{transformer_decoder_forward.1} parent=11 // pred_region
          _
        $region20: #{transformer_decoder_forward.1} parent=11 // pred_fallthru
          _
        // Predicated region
        $region21: #{transformer_decoder_forward.1} parent=11 // pred_check
          %p1172 = pneg %p222
        $region22: #{transformer_decoder_forward.1} parent=11 // pred_check_branch
          %1174 = sbr.rel (%p1172) target = $region24
        $region23: #{transformer_decoder_forward.1} parent=11 // pred_region
          _
        $region24: #{transformer_decoder_forward.1} parent=11 // pred_fallthru
          _
        // Predicated region
        $region25: #{transformer_decoder_forward.1} parent=11 // pred_check
          %p1175 = pneg %p243
        $region26: #{transformer_decoder_forward.1} parent=11 // pred_check_branch
          %1177 = sbr.rel (%p1175) target = $region28
        $region27: #{transformer_decoder_forward.1} parent=11 // pred_region
          _
        $region28: #{transformer_decoder_forward.1} parent=11 // pred_fallthru
          _
        // Predicated region
        $region29: #{transformer_decoder_forward.1} parent=11 // pred_check
          %p1178 = pneg %p264
        $region30: #{transformer_decoder_forward.1} parent=11 // pred_check_branch
          %1180 = sbr.rel (%p1178) target = $region32
        $region31: #{transformer_decoder_forward.1} parent=11 // pred_region
          _
        $region32: #{transformer_decoder_forward.1} parent=11 // pred_fallthru
          _
        // Predicated region
        $region33: #{transformer_decoder_forward.1} parent=11 // pred_check
          %p1181 = pneg %p285
        $region34: #{transformer_decoder_forward.1} parent=11 // pred_check_branch
          %1183 = sbr.rel (%p1181) target = $region36
        $region35: #{transformer_decoder_forward.1} parent=11 // pred_region
          _
        $region36: #{transformer_decoder_forward.1} parent=11 // pred_fallthru
          _
        // Predicated region
        $region37: #{transformer_decoder_forward.1} parent=11 // pred_check
          %p1184 = pneg %p306
        $region38: #{transformer_decoder_forward.1} parent=11 // pred_check_branch
          %1186 = sbr.rel (%p1184) target = $region40
        $region39: #{transformer_decoder_forward.1} parent=11 // pred_region
          _
        $region40: #{transformer_decoder_forward.1} parent=11 // pred_fallthru
          _
        // Predicated region
        $region41: #{transformer_decoder_forward.1} parent=11 // pred_check
          %p1187 = pneg %p327
        $region42: #{transformer_decoder_forward.1} parent=11 // pred_check_branch
          %1189 = sbr.rel (%p1187) target = $region44
        $region43: #{transformer_decoder_forward.1} parent=11 // pred_region
          _
        $region44: #{transformer_decoder_forward.1} parent=11 // pred_fallthru
          _
        // Predicated region
        $region45: #{transformer_decoder_forward.1} parent=11 // pred_check
          %p1190 = pneg %p348
        $region46: #{transformer_decoder_forward.1} parent=11 // pred_check_branch
          %1192 = sbr.rel (%p1190) target = $region48
        $region47: #{transformer_decoder_forward.1} parent=11 // pred_region
          _
        $region48: #{transformer_decoder_forward.1} parent=11 // pred_fallthru
          _
        // Predicated region
        $region49: #{transformer_decoder_forward.1} parent=11 // pred_check
          %p1193 = pneg %p369
        $region50: #{transformer_decoder_forward.1} parent=11 // pred_check_branch
          %1195 = sbr.rel (%p1193) target = $region52
        $region51: #{transformer_decoder_forward.1} parent=11 // pred_region
          _
        $region52: #{transformer_decoder_forward.1} parent=11 // pred_fallthru
          _
        // Predicated region
        $region53: #{transformer_decoder_forward.1} parent=11 // pred_check
          %p1196 = pneg %p390
        $region54: #{transformer_decoder_forward.1} parent=11 // pred_check_branch
          %1198 = sbr.rel (%p1196) target = $region56
        $region55: #{transformer_decoder_forward.1} parent=11 // pred_region
          _
        $region56: #{transformer_decoder_forward.1} parent=11 // pred_fallthru
          _
        // Predicated region
        $region57: #{transformer_decoder_forward.1} parent=11 // pred_check
          %p1199 = pneg %p411
        $region58: #{transformer_decoder_forward.1} parent=11 // pred_check_branch
          %1201 = sbr.rel (%p1199) target = $region60
        $region59: #{transformer_decoder_forward.1} parent=11 // pred_region
          _
        $region60: #{transformer_decoder_forward.1} parent=11 // pred_fallthru
          _
        // Predicated region
        $region61: #{transformer_decoder_forward.1} parent=11 // pred_check
          %p1202 = pneg %p432
        $region62: #{transformer_decoder_forward.1} parent=11 // pred_check_branch
          %1204 = sbr.rel (%p1202) target = $region64
        $region63: #{transformer_decoder_forward.1} parent=11 // pred_region
          _
        $region64: #{transformer_decoder_forward.1} parent=11 // pred_fallthru
          _
        // Predicated region
        $region65: #{transformer_decoder_forward.1} parent=11 // pred_check
          %p1205 = pneg %p453
        $region66: #{transformer_decoder_forward.1} parent=11 // pred_check_branch
          %1207 = sbr.rel (%p1205) target = $region68
        $region67: #{transformer_decoder_forward.1} parent=11 // pred_region
          _
        $region68: #{transformer_decoder_forward.1} parent=11 // pred_fallthru
          _
        // Predicated region
        $region69: #{transformer_decoder_forward.1} parent=11 // pred_check
          %p1208 = pneg %p474
        $region70: #{transformer_decoder_forward.1} parent=11 // pred_check_branch
          %1210 = sbr.rel (%p1208) target = $region72
        $region71: #{transformer_decoder_forward.1} parent=11 // pred_region
          _
        $region72: #{transformer_decoder_forward.1} parent=11 // pred_fallthru
          _
        // Predicated region
        $region73: #{transformer_decoder_forward.1} parent=11 // pred_check
          %p1211 = pneg %p495
        $region74: #{transformer_decoder_forward.1} parent=11 // pred_check_branch
          %1213 = sbr.rel (%p1211) target = $region76
        $region75: #{transformer_decoder_forward.1} parent=11 // pred_region
          _
        $region76: #{transformer_decoder_forward.1} parent=11 // pred_fallthru
          _
        // Predicated region
        $region77: #{transformer_decoder_forward.1} parent=11 // pred_check
          %p1214 = pneg %p516
        $region78: #{transformer_decoder_forward.1} parent=11 // pred_check_branch
          %1216 = sbr.rel (%p1214) target = $region80
        $region79: #{transformer_decoder_forward.1} parent=11 // pred_region
          _
        $region80: #{transformer_decoder_forward.1} parent=11 // pred_fallthru
          _
        // Predicated region
        $region81: #{transformer_decoder_forward.1} parent=11 // pred_check
          %p1217 = pneg %p537
        $region82: #{transformer_decoder_forward.1} parent=11 // pred_check_branch
          %1219 = sbr.rel (%p1217) target = $region84
        $region83: #{transformer_decoder_forward.1} parent=11 // pred_region
          _
        $region84: #{transformer_decoder_forward.1} parent=11 // pred_fallthru
          _
        // Predicated region
        $region85: #{transformer_decoder_forward.1} parent=11 // pred_check
          %p1220 = pneg %p558
        $region86: #{transformer_decoder_forward.1} parent=11 // pred_check_branch
          %1222 = sbr.rel (%p1220) target = $region88
        $region87: #{transformer_decoder_forward.1} parent=11 // pred_region
          _
        $region88: #{transformer_decoder_forward.1} parent=11 // pred_fallthru
          _
        // Predicated region
        $region89: #{transformer_decoder_forward.1} parent=11 // pred_check
          %p1223 = pneg %p579
        $region90: #{transformer_decoder_forward.1} parent=11 // pred_check_branch
          %1225 = sbr.rel (%p1223) target = $region92
        $region91: #{transformer_decoder_forward.1} parent=11 // pred_region
          _
        $region92: #{transformer_decoder_forward.1} parent=11 // pred_fallthru
          _
        // Predicated region
        $region93: #{transformer_decoder_forward.1} parent=11 // pred_check
          %p1226 = pneg %p600
        $region94: #{transformer_decoder_forward.1} parent=11 // pred_check_branch
          %1228 = sbr.rel (%p1226) target = $region96
        $region95: #{transformer_decoder_forward.1} parent=11 // pred_region
          _
        $region96: #{transformer_decoder_forward.1} parent=11 // pred_fallthru
          _
        // Predicated region
        $region97: #{transformer_decoder_forward.1} parent=11 // pred_check
          %p1229 = pneg %p621
        $region98: #{transformer_decoder_forward.1} parent=11 // pred_check_branch
          %1231 = sbr.rel (%p1229) target = $region100
        $region99: #{transformer_decoder_forward.1} parent=11 // pred_region
          _
        $region100: #{transformer_decoder_forward.1} parent=11 // pred_fallthru
          _
        // Predicated region
        $region101: #{transformer_decoder_forward.1} parent=11 // pred_check
          %p1232 = pneg %p642
        $region102: #{transformer_decoder_forward.1} parent=11 // pred_check_branch
          %1234 = sbr.rel (%p1232) target = $region104
        $region103: #{transformer_decoder_forward.1} parent=11 // pred_region
          _
        $region104: #{transformer_decoder_forward.1} parent=11 // pred_fallthru
          _
        // Predicated region
        $region105: #{transformer_decoder_forward.1} parent=11 // pred_check
          %p1235 = pneg %p663
        $region106: #{transformer_decoder_forward.1} parent=11 // pred_check_branch
          %1237 = sbr.rel (%p1235) target = $region108
        $region107: #{transformer_decoder_forward.1} parent=11 // pred_region
          _
        $region108: #{transformer_decoder_forward.1} parent=11 // pred_fallthru
          _
        // Predicated region
        $region109: #{transformer_decoder_forward.1} parent=11 // pred_check
          %p1238 = pneg %p684
        $region110: #{transformer_decoder_forward.1} parent=11 // pred_check_branch
          %1240 = sbr.rel (%p1238) target = $region112
        $region111: #{transformer_decoder_forward.1} parent=11 // pred_region
          _
        $region112: #{transformer_decoder_forward.1} parent=11 // pred_fallthru
          _
        // Predicated region
        $region113: #{transformer_decoder_forward.1} parent=11 // pred_check
          %p1241 = pneg %p705
        $region114: #{transformer_decoder_forward.1} parent=11 // pred_check_branch
          %1243 = sbr.rel (%p1241) target = $region116
        $region115: #{transformer_decoder_forward.1} parent=11 // pred_region
          _
        $region116: #{transformer_decoder_forward.1} parent=11 // pred_fallthru
          _
        // Predicated region
        $region117: #{transformer_decoder_forward.1} parent=11 // pred_check
          %p1244 = pneg %p726
        $region118: #{transformer_decoder_forward.1} parent=11 // pred_check_branch
          %1246 = sbr.rel (%p1244) target = $region120
        $region119: #{transformer_decoder_forward.1} parent=11 // pred_region
          _
        $region120: #{transformer_decoder_forward.1} parent=11 // pred_fallthru
          _
        // Predicated region
        $region121: #{transformer_decoder_forward.1} parent=11 // pred_check
          %p1247 = pneg %p747
        $region122: #{transformer_decoder_forward.1} parent=11 // pred_check_branch
          %1249 = sbr.rel (%p1247) target = $region124
        $region123: #{transformer_decoder_forward.1} parent=11 // pred_region
          _
        $region124: #{transformer_decoder_forward.1} parent=11 // pred_fallthru
          _
        // Predicated region
        $region125: #{transformer_decoder_forward.1} parent=11 // pred_check
          %p1250 = pneg %p768
        $region126: #{transformer_decoder_forward.1} parent=11 // pred_check_branch
          %1252 = sbr.rel (%p1250) target = $region128
        $region127: #{transformer_decoder_forward.1} parent=11 // pred_region
          _
        $region128: #{transformer_decoder_forward.1} parent=11 // pred_fallthru
          _
        // Predicated region
        $region129: #{transformer_decoder_forward.1} parent=11 // pred_check
          %p1253 = pneg %p789
        $region130: #{transformer_decoder_forward.1} parent=11 // pred_check_branch
          %1255 = sbr.rel (%p1253) target = $region132
        $region131: #{transformer_decoder_forward.1} parent=11 // pred_region
          _
        $region132: #{transformer_decoder_forward.1} parent=11 // pred_fallthru
          _
        // Predicated region
        $region133: #{transformer_decoder_forward.1} parent=11 // pred_check
          %p1256 = pneg %p810
        $region134: #{transformer_decoder_forward.1} parent=11 // pred_check_branch
          %1258 = sbr.rel (%p1256) target = $region136
        $region135: #{transformer_decoder_forward.1} parent=11 // pred_region
          _
        $region136: #{transformer_decoder_forward.1} parent=11 // pred_fallthru
          _
        // Predicated region
        $region137: #{transformer_decoder_forward.1} parent=11 // pred_check
          %p1259 = pneg %p831
        $region138: #{transformer_decoder_forward.1} parent=11 // pred_check_branch
          %1261 = sbr.rel (%p1259) target = $region140
        $region139: #{transformer_decoder_forward.1} parent=11 // pred_region
          _
        $region140: #{transformer_decoder_forward.1} parent=11 // pred_fallthru
          _
        // Predicated region
        $region141: #{transformer_decoder_forward.1} parent=11 // pred_check
          %p1262 = pneg %p852
        $region142: #{transformer_decoder_forward.1} parent=11 // pred_check_branch
          %1264 = sbr.rel (%p1262) target = $region144
        $region143: #{transformer_decoder_forward.1} parent=11 // pred_region
          _
        $region144: #{transformer_decoder_forward.1} parent=11 // pred_fallthru
          _
        // Predicated region
        $region145: #{transformer_decoder_forward.1} parent=11 // pred_check
          %p1265 = pneg %p873
        $region146: #{transformer_decoder_forward.1} parent=11 // pred_check_branch
          %1267 = sbr.rel (%p1265) target = $region148
        $region147: #{transformer_decoder_forward.1} parent=11 // pred_region
          _
        $region148: #{transformer_decoder_forward.1} parent=11 // pred_fallthru
          _
        // Predicated region
        $region149: #{transformer_decoder_forward.1} parent=11 // pred_check
          %p1268 = pneg %p894
        $region150: #{transformer_decoder_forward.1} parent=11 // pred_check_branch
          %1270 = sbr.rel (%p1268) target = $region152
        $region151: #{transformer_decoder_forward.1} parent=11 // pred_region
          _
        $region152: #{transformer_decoder_forward.1} parent=11 // pred_fallthru
          _
        // Predicated region
        $region153: #{transformer_decoder_forward.1} parent=11 // pred_check
          %p1271 = pneg %p915
        $region154: #{transformer_decoder_forward.1} parent=11 // pred_check_branch
          %1273 = sbr.rel (%p1271) target = $region156
        $region155: #{transformer_decoder_forward.1} parent=11 // pred_region
          _
        $region156: #{transformer_decoder_forward.1} parent=11 // pred_fallthru
          _
        // Predicated region
        $region157: #{transformer_decoder_forward.1} parent=11 // pred_check
          %p1274 = pneg %p936
        $region158: #{transformer_decoder_forward.1} parent=11 // pred_check_branch
          %1276 = sbr.rel (%p1274) target = $region160
        $region159: #{transformer_decoder_forward.1} parent=11 // pred_region
          _
        $region160: #{transformer_decoder_forward.1} parent=11 // pred_fallthru
          _
        // Predicated region
        $region161: #{transformer_decoder_forward.1} parent=11 // pred_check
          %p1277 = pneg %p957
        $region162: #{transformer_decoder_forward.1} parent=11 // pred_check_branch
          %1279 = sbr.rel (%p1277) target = $region164
        $region163: #{transformer_decoder_forward.1} parent=11 // pred_region
          _
        $region164: #{transformer_decoder_forward.1} parent=11 // pred_fallthru
          _
        // Predicated region
        $region165: #{transformer_decoder_forward.1} parent=11 // pred_check
          %p1280 = pneg %p978
        $region166: #{transformer_decoder_forward.1} parent=11 // pred_check_branch
          %1282 = sbr.rel (%p1280) target = $region168
        $region167: #{transformer_decoder_forward.1} parent=11 // pred_region
          _
        $region168: #{transformer_decoder_forward.1} parent=11 // pred_fallthru
          _
        // Predicated region
        $region169: #{transformer_decoder_forward.1} parent=11 // pred_check
          %p1283 = pneg %p999
        $region170: #{transformer_decoder_forward.1} parent=11 // pred_check_branch
          %1285 = sbr.rel (%p1283) target = $region172
        $region171: #{transformer_decoder_forward.1} parent=11 // pred_region
          _
        $region172: #{transformer_decoder_forward.1} parent=11 // pred_fallthru
          _
        // Predicated region
        $region173: #{transformer_decoder_forward.1} parent=11 // pred_check
          %p1286 = pneg %p1020
        $region174: #{transformer_decoder_forward.1} parent=11 // pred_check_branch
          %1288 = sbr.rel (%p1286) target = $region176
        $region175: #{transformer_decoder_forward.1} parent=11 // pred_region
          _
        $region176: #{transformer_decoder_forward.1} parent=11 // pred_fallthru
          _
        // Predicated region
        $region177: #{transformer_decoder_forward.1} parent=11 // pred_check
          %p1289 = pneg %p1041
        $region178: #{transformer_decoder_forward.1} parent=11 // pred_check_branch
          %1291 = sbr.rel (%p1289) target = $region180
        $region179: #{transformer_decoder_forward.1} parent=11 // pred_region
          _
        $region180: #{transformer_decoder_forward.1} parent=11 // pred_fallthru
          _
        // Predicated region
        $region181: #{transformer_decoder_forward.1} parent=11 // pred_check
          %p1292 = pneg %p1062
        $region182: #{transformer_decoder_forward.1} parent=11 // pred_check_branch
          %1294 = sbr.rel (%p1292) target = $region184
        $region183: #{transformer_decoder_forward.1} parent=11 // pred_region
          _
        $region184: #{transformer_decoder_forward.1} parent=11 // pred_fallthru
          _
        // Predicated region
        $region185: #{transformer_decoder_forward.1} parent=11 // pred_check
          %p1295 = pneg %p1083
        $region186: #{transformer_decoder_forward.1} parent=11 // pred_check_branch
          %1297 = sbr.rel (%p1295) target = $region188
        $region187: #{transformer_decoder_forward.1} parent=11 // pred_region
          %s1299 = ssub.s32 16, 16
          %1300 = vsyncadd [#allocation3], %s1299
          %s1302 = sshll.u32 [#allocation2], 4
          %s1303 = int_to_ptr.vmem [resolvable:$true] %s1302
          %1305 = dma.hbm_to_vmem [thread:$0]  %s91, 16, %s1303, [#allocation3]
        $region188: #{transformer_decoder_forward.1} parent=11 // pred_fallthru
          _
        // Predicated region
        $region189: #{transformer_decoder_forward.1} parent=11 // pred_check
          %p1306 = pneg %p1104
        $region190: #{transformer_decoder_forward.1} parent=11 // pred_check_branch
          %1308 = sbr.rel (%p1306) target = $region192
        $region191: #{transformer_decoder_forward.1} parent=11 // pred_region
          _
        $region192: #{transformer_decoder_forward.1} parent=11 // pred_fallthru
          _
        // Predicated region
        $region193: #{transformer_decoder_forward.1} parent=11 // pred_check
          %p1309 = pneg %p1125
        $region194: #{transformer_decoder_forward.1} parent=11 // pred_check_branch
          %1311 = sbr.rel (%p1309) target = $region196
        $region195: #{transformer_decoder_forward.1} parent=11 // pred_region
          _
        $region196: #{transformer_decoder_forward.1} parent=11 // pred_fallthru
          _
      $region12: #{transformer_decoder_forward.1} parent=5 // pred_fallthru
        _
      %p1312 = scmp.lt.s32.totalorder %s107, 2
      // Predicated region
      $region197: #{transformer_decoder_forward.1} parent=5 // pred_check
        %p1313 = pneg %p1312
      $region198: #{transformer_decoder_forward.1} parent=5 // pred_check_branch
        %1315 = sbr.rel (%p1313) target = $region200
      $region199: #{transformer_decoder_forward.1} parent=5 // pred_region
        // Predicated region
        $region201: #{transformer_decoder_forward.1} parent=199 // pred_check
          %p1316 = pneg %p127
        $region202: #{transformer_decoder_forward.1} parent=199 // pred_check_branch
          %1318 = sbr.rel (%p1316) target = $region204
        $region203: #{transformer_decoder_forward.1} parent=199 // pred_region
          %p1319 = scmp.lt.s32.totalorder %s107, 1
          %s1320 = scalar_select %p1319, %s107, 1
          %s1321 = smul.addr %s1320, 8
          %s1322 = scalar_lea.vmem %s1, %s1321
        $region204: #{transformer_decoder_forward.1} parent=199 // pred_fallthru
          _
        // Predicated region
        $region205: #{transformer_decoder_forward.1} parent=199 // pred_check
          %p1323 = pneg %p153
        $region206: #{transformer_decoder_forward.1} parent=199 // pred_check_branch
          %1325 = sbr.rel (%p1323) target = $region208
        $region207: #{transformer_decoder_forward.1} parent=199 // pred_region
          %p1326 = scmp.lt.s32.totalorder %s107, 1
          %s1327 = scalar_select %p1326, %s107, 1
          %s1328 = scalar_lea.vmem %s3, %s1327
        $region208: #{transformer_decoder_forward.1} parent=199 // pred_fallthru
          _
      $region200: #{transformer_decoder_forward.1} parent=5 // pred_fallthru
        _
      %p1329 = scmp.le.s32.totalorder 1, %s107
      %p1330 = scmp.lt.s32.totalorder %s107, 3
      %p1331 = pnand %p1329, %p1330
      %p1332 = pneg %p1331
      // Predicated region
      $region209: #{transformer_decoder_forward.1} parent=5 // pred_check
        _
      $region210: #{transformer_decoder_forward.1} parent=5 // pred_check_branch
        %1334 = sbr.rel (%p1331) target = $region212
      $region211: #{transformer_decoder_forward.1} parent=5 // pred_region
        %s1335 = ssub.s32 %s107, 1
        // Predicated region
        $region213: #{transformer_decoder_forward.1} parent=211 // pred_check
          %p1336 = pneg %p1083
        $region214: #{transformer_decoder_forward.1} parent=211 // pred_check_branch
          %1338 = sbr.rel (%p1336) target = $region216
        $region215: #{transformer_decoder_forward.1} parent=211 // pred_region
          %1339 = dma.done [#allocation3], 16
        $region216: #{transformer_decoder_forward.1} parent=211 // pred_fallthru
          _
        %p1340 = scmp.lt.s32.totalorder %s112, 1
        %s1341 = scalar_select %p1340, %s112, 1
        %s1342 = smul.addr %s1341, 8
        %s1343 = scalar_lea.vmem %s1, %s1342
        %p1344 = pneg %p133
        %p1345 = pneg %p130
        %p1346 = scmp.lt.s32.totalorder %s112, 1
        %s1347 = scalar_select %p1346, %s112, 1
        %s1348 = scalar_lea.vmem %s3, %s1347
        %p1349 = pneg %p159
        %p1350 = pneg %p156
        %p1351 = pneg %p180
        %p1352 = pneg %p177
        %p1353 = pneg %p201
        %p1354 = pneg %p198
        %p1355 = pneg %p222
        %p1356 = pneg %p219
        %p1357 = pneg %p243
        %p1358 = pneg %p240
        %p1359 = pneg %p264
        %p1360 = pneg %p261
        %p1361 = pneg %p285
        %p1362 = pneg %p282
        %p1363 = pneg %p306
        %p1364 = pneg %p303
        %p1365 = pneg %p327
        %p1366 = pneg %p324
        %p1367 = pneg %p348
        %p1368 = pneg %p345
        %p1369 = pneg %p369
        %p1370 = pneg %p366
        %p1371 = pneg %p390
        %p1372 = pneg %p387
        %p1373 = pneg %p411
        %p1374 = pneg %p408
        %p1375 = pneg %p432
        %p1376 = pneg %p429
        %p1377 = pneg %p453
        %p1378 = pneg %p450
        %p1379 = pneg %p474
        %p1380 = pneg %p471
        %p1381 = pneg %p495
        %p1382 = pneg %p492
        %p1383 = pneg %p516
        %p1384 = pneg %p513
        %p1385 = pneg %p537
        %p1386 = pneg %p534
        %p1387 = pneg %p558
        %p1388 = pneg %p555
        %p1389 = pneg %p579
        %p1390 = pneg %p576
        %p1391 = pneg %p600
        %p1392 = pneg %p597
        %p1393 = pneg %p621
        %p1394 = pneg %p618
        %p1395 = pneg %p642
        %p1396 = pneg %p639
        %p1397 = pneg %p663
        %p1398 = pneg %p660
        %p1399 = pneg %p684
        %p1400 = pneg %p681
        %p1401 = pneg %p705
        %p1402 = pneg %p702
        %p1403 = pneg %p726
        %p1404 = pneg %p723
        %p1405 = pneg %p747
        %p1406 = pneg %p744
        %p1407 = pneg %p768
        %p1408 = pneg %p765
        %p1409 = pneg %p789
        %p1410 = pneg %p786
        %p1411 = pneg %p810
        %p1412 = pneg %p807
        %p1413 = pneg %p831
        %p1414 = pneg %p828
        %p1415 = pneg %p852
        %p1416 = pneg %p849
        %p1417 = pneg %p873
        %p1418 = pneg %p870
        %p1419 = pneg %p894
        %p1420 = pneg %p891
        %p1421 = pneg %p915
        %p1422 = pneg %p912
        %p1423 = pneg %p936
        %p1424 = pneg %p933
        %p1425 = pneg %p957
        %p1426 = pneg %p954
        %p1427 = pneg %p978
        %p1428 = pneg %p975
        %p1429 = pneg %p999
        %p1430 = pneg %p996
        %p1431 = pneg %p1020
        %p1432 = pneg %p1017
        %p1433 = pneg %p1041
        %p1434 = pneg %p1038
        %p1435 = pneg %p1062
        %p1436 = pneg %p1059
        %p1437 = pneg %p1083
        %p1438 = pneg %p1080
        %p1439 = pneg %p1104
        %p1440 = pneg %p1101
        %p1441 = pneg %p1125
        %p1442 = pneg %p1122
        %p1443 = pneg %p1151
        %p1444 = pneg %p1148
        %s1445 = sand.u32 %s1138, 1
        %s1446 = scalar_lea.sflag [#allocation4], %s1445
        %s1447 = sand.u32 %s1138, 1
        %s1448 = smul.addr %s1447, 16
        %s1449 = scalar_lea.vmem [#allocation5], %s1448
        %p1450 = scmp.lt.s32.totalorder %s112, 1
        %s1451 = scalar_select %p1450, %s112, 1
        %s1452 = smul.addr %s1451, 8
        %s1453 = scalar_lea.vmem %s1, %s1452
        %p1454 = scmp.lt.s32.totalorder %s112, 1
        %s1455 = scalar_select %p1454, %s112, 1
        %s1456 = scalar_lea.vmem %s3, %s1455
        %v1457 = vld [vmem:[%s1453] sm:$0xff]
        %v1458 = vld [vmem:[%s1456] sm:$0x1]
        %v1459 = vld [vmem:[%s5] sm:$0xff]
        %v1460 = vld [vmem:[%s5 + $0x8] sm:$0xff]
        %v1461 = vld [vmem:[%s5 + $0x10] sm:$0xff]
        %v1462 = vld [vmem:[%s5 + $0x18] sm:$0xff]
        %v1463 = vld [vmem:[%s11] sm:$0x1]
        %v1465 = vlaneseq
        %v1466 = vshrl.u32 %v1465, 7
        %v1467 = vsub.s32 0, %v1466
        %v1468 = vrot.slane %v1463, %v1467
        %vm1470 = vcmask 261120
        %v1472 = vsel %vm1470, %v1457, 0
        %1474 = vmatprep.subr.mxu0 0.0
        %1475 = vmatpush1.msra.mxu0 0.0
        %1476 = vmatprep.subr.mxu0 0.0
        %1477 = vmatpush1.msra.mxu0 0.0
        %1478 = vmatprep.subr.mxu0 0.0
        %1479 = vmatpush1.msra.mxu0 0.0
        %1480 = vmatprep.subr.mxu0 0.0
        %1481 = vmatpush1.msra.mxu0 0.0
        %1482 = vmatprep.subr.mxu0 0.0
        %1483 = vmatpush1.msra.mxu0 0.0
        %1484 = vmatprep.subr.mxu0 0.0
        %1485 = vmatpush1.msra.mxu0 0.0
        %1486 = vmatprep.subr.mxu0 0.0
        %1487 = vmatpush1.msra.mxu0 0.0
        %1488 = vmatprep.subr.mxu0 0.0
        %1489 = vmatpush1.msra.mxu0 0.0
        %1490 = vmatprep.subr.mxu0 0.0
        %1491 = vmatpush1.msra.mxu0 0.0
        %1492 = vmatprep.subr.mxu0 0.0
        %1493 = vmatpush1.msra.mxu0 0.0
        %1494 = vmatprep.subr.mxu0 0.0
        %1495 = vmatpush1.msra.mxu0 0.0
        %1496 = vmatprep.subr.mxu0 0.0
        %1497 = vmatpush1.msra.mxu0 0.0
        %1498 = vmatprep.subr.mxu0 0.0
        %1499 = vmatpush1.msra.mxu0 %v1462
        %1500 = vmatprep.subr.mxu0 0.0
        %1501 = vmatpush1.msra.mxu0 %v1461
        %1502 = vmatprep.subr.mxu0 0.0
        %1503 = vmatpush1.msra.mxu0 %v1460
        %1504 = vmatprep.subr.mxu0 0.0
        %1505 = vmatpush1.msra.mxu0 %v1459
        %1506 = vmatprep.subr.mxu0 0.0
        %1507 = vmatpush2.msra.mxu0 0.0
        %1508 = vmatprep.subr.mxu0 0.0
        %1509 = vmatpush2.msra.mxu0 0.0
        %1510 = vmatprep.subr.mxu0 0.0
        %1511 = vmatpush2.msra.mxu0 0.0
        %1512 = vmatprep.subr.mxu0 0.0
        %1513 = vmatpush2.msra.mxu0 0.0
        %1514 = vmatprep.subr.mxu0 0.0
        %1515 = vmatpush2.msra.mxu0 0.0
        %1516 = vmatprep.subr.mxu0 0.0
        %1517 = vmatpush2.msra.mxu0 0.0
        %1518 = vmatprep.subr.mxu0 0.0
        %1519 = vmatpush2.msra.mxu0 0.0
        %1520 = vmatprep.subr.mxu0 0.0
        %1521 = vmatpush2.msra.mxu0 0.0
        %1522 = vmatprep.subr.mxu0 0.0
        %1523 = vmatpush2.msra.mxu0 0.0
        %1524 = vmatprep.subr.mxu0 0.0
        %1525 = vmatpush2.msra.mxu0 0.0
        %1526 = vmatprep.subr.mxu0 0.0
        %1527 = vmatpush2.msra.mxu0 0.0
        %1528 = vmatprep.subr.mxu0 0.0
        %1529 = vmatpush2.msra.mxu0 0.0
        %1530 = vmatprep.subr.mxu0 0.0
        %1531 = vmatpush2.msra.mxu0 0.0
        %1532 = vmatprep.subr.mxu0 0.0
        %1533 = vmatpush2.msra.mxu0 0.0
        %1534 = vmatprep.subr.mxu0 0.0
        %1535 = vmatpush2.msra.mxu0 0.0
        %1536 = vmatprep.subr.mxu0 0.0
        %1537 = vmatpush2.msra.mxu0 0.0
        %1538 = vmatprep.mubr.f32.mxu0 0.0
        %1539 = vmatmul.mubr.f32.gmra.mxu0 %v1472
        %v1540 = vpop.f32.mrf.mxu0
        %v1541 = vadd.f32 %v1468, %v1540
        %v1542 = vpop.f32.mrf.mxu0
        %1543 = vdwg.mxu0
        %v1544 = vld [vmem:[%s7] sm:$0xff]
        %v1545 = vld [vmem:[%s7 + $0x8] sm:$0xff]
        %v1546 = vld [vmem:[%s7 + $0x10] sm:$0xff]
        %v1547 = vld [vmem:[%s7 + $0x18] sm:$0xff]
        %v1548 = vld [vmem:[%s13] sm:$0x1]
        %v1550 = vlaneseq
        %v1551 = vshrl.u32 %v1550, 7
        %v1552 = vsub.s32 0, %v1551
        %v1553 = vrot.slane %v1548, %v1552
        %1555 = vmatprep.subr.mxu0 0.0
        %1556 = vmatpush1.msra.mxu0 0.0
        %1557 = vmatprep.subr.mxu0 0.0
        %1558 = vmatpush1.msra.mxu0 0.0
        %1559 = vmatprep.subr.mxu0 0.0
        %1560 = vmatpush1.msra.mxu0 0.0
        %1561 = vmatprep.subr.mxu0 0.0
        %1562 = vmatpush1.msra.mxu0 0.0
        %1563 = vmatprep.subr.mxu0 0.0
        %1564 = vmatpush1.msra.mxu0 0.0
        %1565 = vmatprep.subr.mxu0 0.0
        %1566 = vmatpush1.msra.mxu0 0.0
        %1567 = vmatprep.subr.mxu0 0.0
        %1568 = vmatpush1.msra.mxu0 0.0
        %1569 = vmatprep.subr.mxu0 0.0
        %1570 = vmatpush1.msra.mxu0 0.0
        %1571 = vmatprep.subr.mxu0 0.0
        %1572 = vmatpush1.msra.mxu0 0.0
        %1573 = vmatprep.subr.mxu0 0.0
        %1574 = vmatpush1.msra.mxu0 0.0
        %1575 = vmatprep.subr.mxu0 0.0
        %1576 = vmatpush1.msra.mxu0 0.0
        %1577 = vmatprep.subr.mxu0 0.0
        %1578 = vmatpush1.msra.mxu0 0.0
        %1579 = vmatprep.subr.mxu0 0.0
        %1580 = vmatpush1.msra.mxu0 %v1547
        %1581 = vmatprep.subr.mxu0 0.0
        %1582 = vmatpush1.msra.mxu0 %v1546
        %1583 = vmatprep.subr.mxu0 0.0
        %1584 = vmatpush1.msra.mxu0 %v1545
        %1585 = vmatprep.subr.mxu0 0.0
        %1586 = vmatpush1.msra.mxu0 %v1544
        %1587 = vmatprep.subr.mxu0 0.0
        %1588 = vmatpush2.msra.mxu0 0.0
        %1589 = vmatprep.subr.mxu0 0.0
        %1590 = vmatpush2.msra.mxu0 0.0
        %1591 = vmatprep.subr.mxu0 0.0
        %1592 = vmatpush2.msra.mxu0 0.0
        %1593 = vmatprep.subr.mxu0 0.0
        %1594 = vmatpush2.msra.mxu0 0.0
        %1595 = vmatprep.subr.mxu0 0.0
        %1596 = vmatpush2.msra.mxu0 0.0
        %1597 = vmatprep.subr.mxu0 0.0
        %1598 = vmatpush2.msra.mxu0 0.0
        %1599 = vmatprep.subr.mxu0 0.0
        %1600 = vmatpush2.msra.mxu0 0.0
        %1601 = vmatprep.subr.mxu0 0.0
        %1602 = vmatpush2.msra.mxu0 0.0
        %1603 = vmatprep.subr.mxu0 0.0
        %1604 = vmatpush2.msra.mxu0 0.0
        %1605 = vmatprep.subr.mxu0 0.0
        %1606 = vmatpush2.msra.mxu0 0.0
        %1607 = vmatprep.subr.mxu0 0.0
        %1608 = vmatpush2.msra.mxu0 0.0
        %1609 = vmatprep.subr.mxu0 0.0
        %1610 = vmatpush2.msra.mxu0 0.0
        %1611 = vmatprep.subr.mxu0 0.0
        %1612 = vmatpush2.msra.mxu0 0.0
        %1613 = vmatprep.subr.mxu0 0.0
        %1614 = vmatpush2.msra.mxu0 0.0
        %1615 = vmatprep.subr.mxu0 0.0
        %1616 = vmatpush2.msra.mxu0 0.0
        %1617 = vmatprep.subr.mxu0 0.0
        %1618 = vmatpush2.msra.mxu0 0.0
        %1619 = vmatprep.mubr.f32.mxu0 0.0
        %1620 = vmatmul.mubr.f32.gmra.mxu0 %v1472
        %v1621 = vpop.f32.mrf.mxu0
        %v1622 = vadd.f32 %v1553, %v1621
        %v1623 = vpop.f32.mrf.mxu0
        %1624 = vdwg.mxu0
        %v1625 = vld [vmem:[%s9] sm:$0xff]
        %v1626 = vld [vmem:[%s9 + $0x8] sm:$0xff]
        %v1627 = vld [vmem:[%s9 + $0x10] sm:$0xff]
        %v1628 = vld [vmem:[%s9 + $0x18] sm:$0xff]
        %v1629 = vld [vmem:[%s15] sm:$0x1]
        %v1631 = vlaneseq
        %v1632 = vshrl.u32 %v1631, 7
        %v1633 = vsub.s32 0, %v1632
        %v1634 = vrot.slane %v1629, %v1633
        %1636 = vmatprep.subr.mxu0 0.0
        %1637 = vmatpush1.msra.mxu0 0.0
        %1638 = vmatprep.subr.mxu0 0.0
        %1639 = vmatpush1.msra.mxu0 0.0
        %1640 = vmatprep.subr.mxu0 0.0
        %1641 = vmatpush1.msra.mxu0 0.0
        %1642 = vmatprep.subr.mxu0 0.0
        %1643 = vmatpush1.msra.mxu0 0.0
        %1644 = vmatprep.subr.mxu0 0.0
        %1645 = vmatpush1.msra.mxu0 0.0
        %1646 = vmatprep.subr.mxu0 0.0
        %1647 = vmatpush1.msra.mxu0 0.0
        %1648 = vmatprep.subr.mxu0 0.0
        %1649 = vmatpush1.msra.mxu0 0.0
        %1650 = vmatprep.subr.mxu0 0.0
        %1651 = vmatpush1.msra.mxu0 0.0
        %1652 = vmatprep.subr.mxu0 0.0
        %1653 = vmatpush1.msra.mxu0 0.0
        %1654 = vmatprep.subr.mxu0 0.0
        %1655 = vmatpush1.msra.mxu0 0.0
        %1656 = vmatprep.subr.mxu0 0.0
        %1657 = vmatpush1.msra.mxu0 0.0
        %1658 = vmatprep.subr.mxu0 0.0
        %1659 = vmatpush1.msra.mxu0 0.0
        %1660 = vmatprep.subr.mxu0 0.0
        %1661 = vmatpush1.msra.mxu0 %v1628
        %1662 = vmatprep.subr.mxu0 0.0
        %1663 = vmatpush1.msra.mxu0 %v1627
        %1664 = vmatprep.subr.mxu0 0.0
        %1665 = vmatpush1.msra.mxu0 %v1626
        %1666 = vmatprep.subr.mxu0 0.0
        %1667 = vmatpush1.msra.mxu0 %v1625
        %1668 = vmatprep.subr.mxu0 0.0
        %1669 = vmatpush2.msra.mxu0 0.0
        %1670 = vmatprep.subr.mxu0 0.0
        %1671 = vmatpush2.msra.mxu0 0.0
        %1672 = vmatprep.subr.mxu0 0.0
        %1673 = vmatpush2.msra.mxu0 0.0
        %1674 = vmatprep.subr.mxu0 0.0
        %1675 = vmatpush2.msra.mxu0 0.0
        %1676 = vmatprep.subr.mxu0 0.0
        %1677 = vmatpush2.msra.mxu0 0.0
        %1678 = vmatprep.subr.mxu0 0.0
        %1679 = vmatpush2.msra.mxu0 0.0
        %1680 = vmatprep.subr.mxu0 0.0
        %1681 = vmatpush2.msra.mxu0 0.0
        %1682 = vmatprep.subr.mxu0 0.0
        %1683 = vmatpush2.msra.mxu0 0.0
        %1684 = vmatprep.subr.mxu0 0.0
        %1685 = vmatpush2.msra.mxu0 0.0
        %1686 = vmatprep.subr.mxu0 0.0
        %1687 = vmatpush2.msra.mxu0 0.0
        %1688 = vmatprep.subr.mxu0 0.0
        %1689 = vmatpush2.msra.mxu0 0.0
        %1690 = vmatprep.subr.mxu0 0.0
        %1691 = vmatpush2.msra.mxu0 0.0
        %1692 = vmatprep.subr.mxu0 0.0
        %1693 = vmatpush2.msra.mxu0 0.0
        %1694 = vmatprep.subr.mxu0 0.0
        %1695 = vmatpush2.msra.mxu0 0.0
        %1696 = vmatprep.subr.mxu0 0.0
        %1697 = vmatpush2.msra.mxu0 0.0
        %1698 = vmatprep.subr.mxu0 0.0
        %1699 = vmatpush2.msra.mxu0 0.0
        %1700 = vmatprep.mubr.f32.mxu0 0.0
        %1701 = vmatmul.mubr.f32.gmra.mxu0 %v1472
        %v1702 = vpop.f32.mrf.mxu0
        %v1703 = vadd.f32 %v1634, %v1702
        %v1704 = vpop.f32.mrf.mxu0
        %1705 = vdwg.mxu0
        %vm1706 = vcmask 64512
        %v1708 = vsel %vm1706, %v1541, 0
        %v1711 = vsel %vm1706, %v1622, 0
        %1713 = vmatprep.subr.mxu0 0.0
        %1714 = vmatpush1.xpose.msra.mxu0 0.0
        %1715 = vmatprep.subr.mxu0 0.0
        %1716 = vmatpush1.xpose.msra.mxu0 0.0
        %1717 = vmatprep.subr.mxu0 0.0
        %1718 = vmatpush1.xpose.msra.mxu0 0.0
        %1719 = vmatprep.subr.mxu0 0.0
        %1720 = vmatpush1.xpose.msra.mxu0 0.0
        %1721 = vmatprep.subr.mxu0 0.0
        %1722 = vmatpush1.xpose.msra.mxu0 0.0
        %1723 = vmatprep.subr.mxu0 0.0
        %1724 = vmatpush1.xpose.msra.mxu0 0.0
        %1725 = vmatprep.subr.mxu0 0.0
        %1726 = vmatpush1.xpose.msra.mxu0 0.0
        %1727 = vmatprep.subr.mxu0 0.0
        %1728 = vmatpush1.xpose.msra.mxu0 0.0
        %1729 = vmatprep.subr.mxu0 0.0
        %1730 = vmatpush1.xpose.msra.mxu0 0.0
        %1731 = vmatprep.subr.mxu0 0.0
        %1732 = vmatpush1.xpose.msra.mxu0 0.0
        %1733 = vmatprep.subr.mxu0 0.0
        %1734 = vmatpush1.xpose.msra.mxu0 0.0
        %1735 = vmatprep.subr.mxu0 0.0
        %1736 = vmatpush1.xpose.msra.mxu0 0.0
        %1737 = vmatprep.subr.mxu0 0.0
        %1738 = vmatpush1.xpose.msra.mxu0 0.0
        %1739 = vmatprep.subr.mxu0 0.0
        %1740 = vmatpush1.xpose.msra.mxu0 0.0
        %1741 = vmatprep.subr.mxu0 0.0
        %1742 = vmatpush1.xpose.msra.mxu0 0.0
        %1743 = vmatprep.subr.mxu0 0.0
        %1744 = vmatpush1.xpose.msra.mxu0 %v1711
        %1745 = vmatprep.subr.mxu0 0.0
        %1746 = vmatpush2.xpose.msra.mxu0 0.0
        %1747 = vmatprep.subr.mxu0 0.0
        %1748 = vmatpush2.xpose.msra.mxu0 0.0
        %1749 = vmatprep.subr.mxu0 0.0
        %1750 = vmatpush2.xpose.msra.mxu0 0.0
        %1751 = vmatprep.subr.mxu0 0.0
        %1752 = vmatpush2.xpose.msra.mxu0 0.0
        %1753 = vmatprep.subr.mxu0 0.0
        %1754 = vmatpush2.xpose.msra.mxu0 0.0
        %1755 = vmatprep.subr.mxu0 0.0
        %1756 = vmatpush2.xpose.msra.mxu0 0.0
        %1757 = vmatprep.subr.mxu0 0.0
        %1758 = vmatpush2.xpose.msra.mxu0 0.0
        %1759 = vmatprep.subr.mxu0 0.0
        %1760 = vmatpush2.xpose.msra.mxu0 0.0
        %1761 = vmatprep.subr.mxu0 0.0
        %1762 = vmatpush2.xpose.msra.mxu0 0.0
        %1763 = vmatprep.subr.mxu0 0.0
        %1764 = vmatpush2.xpose.msra.mxu0 0.0
        %1765 = vmatprep.subr.mxu0 0.0
        %1766 = vmatpush2.xpose.msra.mxu0 0.0
        %1767 = vmatprep.subr.mxu0 0.0
        %1768 = vmatpush2.xpose.msra.mxu0 0.0
        %1769 = vmatprep.subr.mxu0 0.0
        %1770 = vmatpush2.xpose.msra.mxu0 0.0
        %1771 = vmatprep.subr.mxu0 0.0
        %1772 = vmatpush2.xpose.msra.mxu0 0.0
        %1773 = vmatprep.subr.mxu0 0.0
        %1774 = vmatpush2.xpose.msra.mxu0 0.0
        %1775 = vmatprep.subr.mxu0 0.0
        %1776 = vmatpush2.xpose.msra.mxu0 0.0
        %1777 = vmatprep.mubr.f32.mxu0 0.0
        %1778 = vmatmul.mubr.f32.gmra.mxu0 %v1708
        %v1779 = vpop.f32.mrf.mxu0
        %v1780 = vadd.f32 0.0, %v1779
        %v1781 = vpop.f32.mrf.mxu0
        %1782 = vdwg.mxu0
        %v1783 = vmul.f32 %v1780, 0.35355338
        %v1784 = vsel %vm1706, %v1783, -inf
        %1785 = vmax.xlane.f32.xlu0 %v1784
        %v1786 = vpop.xlane.xlu0 %1785
        %v1787 = vsub.f32 %v1783, %v1786
        %v1788 = vmul.f32 %v1787, 1.442695
        %v1789 = vpow.pop %v1788
        %v1790 = vsel %vm1706, %v1789, 0.0
        %1791 = vadd.xlane.f32.xlu0 %v1790
        %v1792 = vpop.xlane.xlu0 %1791
        %v1793 = vrcp.pop %v1792
        %v1794 = vmul.f32 %v1789, %v1793
        %v1796 = vsel %vm1706, %v1794, 0
        %1798 = vmatprep.subr.mxu0 0.0
        %1799 = vmatpush1.msra.mxu0 0.0
        %1800 = vmatprep.subr.mxu0 0.0
        %1801 = vmatpush1.msra.mxu0 0.0
        %1802 = vmatprep.subr.mxu0 0.0
        %1803 = vmatpush1.msra.mxu0 0.0
        %1804 = vmatprep.subr.mxu0 0.0
        %1805 = vmatpush1.msra.mxu0 0.0
        %1806 = vmatprep.subr.mxu0 0.0
        %1807 = vmatpush1.msra.mxu0 0.0
        %1808 = vmatprep.subr.mxu0 0.0
        %1809 = vmatpush1.msra.mxu0 0.0
        %1810 = vmatprep.subr.mxu0 0.0
        %1811 = vmatpush1.msra.mxu0 0.0
        %1812 = vmatprep.subr.mxu0 0.0
        %1813 = vmatpush1.msra.mxu0 0.0
        %1814 = vmatprep.subr.mxu0 0.0
        %1815 = vmatpush1.msra.mxu0 0.0
        %1816 = vmatprep.subr.mxu0 0.0
        %1817 = vmatpush1.msra.mxu0 0.0
        %1818 = vmatprep.subr.mxu0 0.0
        %1819 = vmatpush1.msra.mxu0 0.0
        %1820 = vmatprep.subr.mxu0 0.0
        %1821 = vmatpush1.msra.mxu0 0.0
        %1822 = vmatprep.subr.mxu0 0.0
        %1823 = vmatpush1.msra.mxu0 0.0
        %1824 = vmatprep.subr.mxu0 0.0
        %1825 = vmatpush1.msra.mxu0 0.0
        %1826 = vmatprep.subr.mxu0 0.0
        %1827 = vmatpush1.msra.mxu0 0.0
        %1828 = vmatprep.subr.mxu0 0.0
        %1829 = vmatpush1.msra.mxu0 %v1703
        %1830 = vmatprep.subr.mxu0 0.0
        %1831 = vmatpush2.msra.mxu0 0.0
        %1832 = vmatprep.subr.mxu0 0.0
        %1833 = vmatpush2.msra.mxu0 0.0
        %1834 = vmatprep.subr.mxu0 0.0
        %1835 = vmatpush2.msra.mxu0 0.0
        %1836 = vmatprep.subr.mxu0 0.0
        %1837 = vmatpush2.msra.mxu0 0.0
        %1838 = vmatprep.subr.mxu0 0.0
        %1839 = vmatpush2.msra.mxu0 0.0
        %1840 = vmatprep.subr.mxu0 0.0
        %1841 = vmatpush2.msra.mxu0 0.0
        %1842 = vmatprep.subr.mxu0 0.0
        %1843 = vmatpush2.msra.mxu0 0.0
        %1844 = vmatprep.subr.mxu0 0.0
        %1845 = vmatpush2.msra.mxu0 0.0
        %1846 = vmatprep.subr.mxu0 0.0
        %1847 = vmatpush2.msra.mxu0 0.0
        %1848 = vmatprep.subr.mxu0 0.0
        %1849 = vmatpush2.msra.mxu0 0.0
        %1850 = vmatprep.subr.mxu0 0.0
        %1851 = vmatpush2.msra.mxu0 0.0
        %1852 = vmatprep.subr.mxu0 0.0
        %1853 = vmatpush2.msra.mxu0 0.0
        %1854 = vmatprep.subr.mxu0 0.0
        %1855 = vmatpush2.msra.mxu0 0.0
        %1856 = vmatprep.subr.mxu0 0.0
        %1857 = vmatpush2.msra.mxu0 0.0
        %1858 = vmatprep.subr.mxu0 0.0
        %1859 = vmatpush2.msra.mxu0 0.0
        %1860 = vmatprep.subr.mxu0 0.0
        %1861 = vmatpush2.msra.mxu0 0.0
        %1862 = vmatprep.mubr.f32.mxu0 0.0
        %1863 = vmatmul.mubr.f32.gmra.mxu0 %v1796
        %v1864 = vpop.f32.mrf.mxu0
        %v1865 = vadd.f32 0.0, %v1864
        %v1866 = vpop.f32.mrf.mxu0
        %1867 = vdwg.mxu0
        %v1868 = vld [vmem:[%s17] sm:$0xff]
        %s1869 = scalar_lea.vmem %s5, 32
        %v1870 = vld [vmem:[%s1869] sm:$0xff]
        %v1871 = vld [vmem:[%s1869 + $0x8] sm:$0xff]
        %v1872 = vld [vmem:[%s1869 + $0x10] sm:$0xff]
        %v1873 = vld [vmem:[%s1869 + $0x18] sm:$0xff]
        %s1874 = scalar_lea.vmem %s11, 1
        %v1875 = vld [vmem:[%s1874] sm:$0x1]
        %v1877 = vlaneseq
        %v1878 = vshrl.u32 %v1877, 7
        %v1879 = vsub.s32 0, %v1878
        %v1880 = vrot.slane %v1875, %v1879
        %1882 = vmatprep.subr.mxu0 0.0
        %1883 = vmatpush1.msra.mxu0 0.0
        %1884 = vmatprep.subr.mxu0 0.0
        %1885 = vmatpush1.msra.mxu0 0.0
        %1886 = vmatprep.subr.mxu0 0.0
        %1887 = vmatpush1.msra.mxu0 0.0
        %1888 = vmatprep.subr.mxu0 0.0
        %1889 = vmatpush1.msra.mxu0 0.0
        %1890 = vmatprep.subr.mxu0 0.0
        %1891 = vmatpush1.msra.mxu0 0.0
        %1892 = vmatprep.subr.mxu0 0.0
        %1893 = vmatpush1.msra.mxu0 0.0
        %1894 = vmatprep.subr.mxu0 0.0
        %1895 = vmatpush1.msra.mxu0 0.0
        %1896 = vmatprep.subr.mxu0 0.0
        %1897 = vmatpush1.msra.mxu0 0.0
        %1898 = vmatprep.subr.mxu0 0.0
        %1899 = vmatpush1.msra.mxu0 0.0
        %1900 = vmatprep.subr.mxu0 0.0
        %1901 = vmatpush1.msra.mxu0 0.0
        %1902 = vmatprep.subr.mxu0 0.0
        %1903 = vmatpush1.msra.mxu0 0.0
        %1904 = vmatprep.subr.mxu0 0.0
        %1905 = vmatpush1.msra.mxu0 0.0
        %1906 = vmatprep.subr.mxu0 0.0
        %1907 = vmatpush1.msra.mxu0 %v1873
        %1908 = vmatprep.subr.mxu0 0.0
        %1909 = vmatpush1.msra.mxu0 %v1872
        %1910 = vmatprep.subr.mxu0 0.0
        %1911 = vmatpush1.msra.mxu0 %v1871
        %1912 = vmatprep.subr.mxu0 0.0
        %1913 = vmatpush1.msra.mxu0 %v1870
        %1914 = vmatprep.subr.mxu0 0.0
        %1915 = vmatpush2.msra.mxu0 0.0
        %1916 = vmatprep.subr.mxu0 0.0
        %1917 = vmatpush2.msra.mxu0 0.0
        %1918 = vmatprep.subr.mxu0 0.0
        %1919 = vmatpush2.msra.mxu0 0.0
        %1920 = vmatprep.subr.mxu0 0.0
        %1921 = vmatpush2.msra.mxu0 0.0
        %1922 = vmatprep.subr.mxu0 0.0
        %1923 = vmatpush2.msra.mxu0 0.0
        %1924 = vmatprep.subr.mxu0 0.0
        %1925 = vmatpush2.msra.mxu0 0.0
        %1926 = vmatprep.subr.mxu0 0.0
        %1927 = vmatpush2.msra.mxu0 0.0
        %1928 = vmatprep.subr.mxu0 0.0
        %1929 = vmatpush2.msra.mxu0 0.0
        %1930 = vmatprep.subr.mxu0 0.0
        %1931 = vmatpush2.msra.mxu0 0.0
        %1932 = vmatprep.subr.mxu0 0.0
        %1933 = vmatpush2.msra.mxu0 0.0
        %1934 = vmatprep.subr.mxu0 0.0
        %1935 = vmatpush2.msra.mxu0 0.0
        %1936 = vmatprep.subr.mxu0 0.0
        %1937 = vmatpush2.msra.mxu0 0.0
        %1938 = vmatprep.subr.mxu0 0.0
        %1939 = vmatpush2.msra.mxu0 0.0
        %1940 = vmatprep.subr.mxu0 0.0
        %1941 = vmatpush2.msra.mxu0 0.0
        %1942 = vmatprep.subr.mxu0 0.0
        %1943 = vmatpush2.msra.mxu0 0.0
        %1944 = vmatprep.subr.mxu0 0.0
        %1945 = vmatpush2.msra.mxu0 0.0
        %1946 = vmatprep.mubr.f32.mxu0 0.0
        %1947 = vmatmul.mubr.f32.gmra.mxu0 %v1472
        %v1948 = vpop.f32.mrf.mxu0
        %v1949 = vadd.f32 %v1880, %v1948
        %v1950 = vpop.f32.mrf.mxu0
        %1951 = vdwg.mxu0
        %s1952 = scalar_lea.vmem %s7, 32
        %v1953 = vld [vmem:[%s1952] sm:$0xff]
        %v1954 = vld [vmem:[%s1952 + $0x8] sm:$0xff]
        %v1955 = vld [vmem:[%s1952 + $0x10] sm:$0xff]
        %v1956 = vld [vmem:[%s1952 + $0x18] sm:$0xff]
        %s1957 = scalar_lea.vmem %s13, 1
        %v1958 = vld [vmem:[%s1957] sm:$0x1]
        %v1960 = vlaneseq
        %v1961 = vshrl.u32 %v1960, 7
        %v1962 = vsub.s32 0, %v1961
        %v1963 = vrot.slane %v1958, %v1962
        %1965 = vmatprep.subr.mxu0 0.0
        %1966 = vmatpush1.msra.mxu0 0.0
        %1967 = vmatprep.subr.mxu0 0.0
        %1968 = vmatpush1.msra.mxu0 0.0
        %1969 = vmatprep.subr.mxu0 0.0
        %1970 = vmatpush1.msra.mxu0 0.0
        %1971 = vmatprep.subr.mxu0 0.0
        %1972 = vmatpush1.msra.mxu0 0.0
        %1973 = vmatprep.subr.mxu0 0.0
        %1974 = vmatpush1.msra.mxu0 0.0
        %1975 = vmatprep.subr.mxu0 0.0
        %1976 = vmatpush1.msra.mxu0 0.0
        %1977 = vmatprep.subr.mxu0 0.0
        %1978 = vmatpush1.msra.mxu0 0.0
        %1979 = vmatprep.subr.mxu0 0.0
        %1980 = vmatpush1.msra.mxu0 0.0
        %1981 = vmatprep.subr.mxu0 0.0
        %1982 = vmatpush1.msra.mxu0 0.0
        %1983 = vmatprep.subr.mxu0 0.0
        %1984 = vmatpush1.msra.mxu0 0.0
        %1985 = vmatprep.subr.mxu0 0.0
        %1986 = vmatpush1.msra.mxu0 0.0
        %1987 = vmatprep.subr.mxu0 0.0
        %1988 = vmatpush1.msra.mxu0 0.0
        %1989 = vmatprep.subr.mxu0 0.0
        %1990 = vmatpush1.msra.mxu0 %v1956
        %1991 = vmatprep.subr.mxu0 0.0
        %1992 = vmatpush1.msra.mxu0 %v1955
        %1993 = vmatprep.subr.mxu0 0.0
        %1994 = vmatpush1.msra.mxu0 %v1954
        %1995 = vmatprep.subr.mxu0 0.0
        %1996 = vmatpush1.msra.mxu0 %v1953
        %1997 = vmatprep.subr.mxu0 0.0
        %1998 = vmatpush2.msra.mxu0 0.0
        %1999 = vmatprep.subr.mxu0 0.0
        %2000 = vmatpush2.msra.mxu0 0.0
        %2001 = vmatprep.subr.mxu0 0.0
        %2002 = vmatpush2.msra.mxu0 0.0
        %2003 = vmatprep.subr.mxu0 0.0
        %2004 = vmatpush2.msra.mxu0 0.0
        %2005 = vmatprep.subr.mxu0 0.0
        %2006 = vmatpush2.msra.mxu0 0.0
        %2007 = vmatprep.subr.mxu0 0.0
        %2008 = vmatpush2.msra.mxu0 0.0
        %2009 = vmatprep.subr.mxu0 0.0
        %2010 = vmatpush2.msra.mxu0 0.0
        %2011 = vmatprep.subr.mxu0 0.0
        %2012 = vmatpush2.msra.mxu0 0.0
        %2013 = vmatprep.subr.mxu0 0.0
        %2014 = vmatpush2.msra.mxu0 0.0
        %2015 = vmatprep.subr.mxu0 0.0
        %2016 = vmatpush2.msra.mxu0 0.0
        %2017 = vmatprep.subr.mxu0 0.0
        %2018 = vmatpush2.msra.mxu0 0.0
        %2019 = vmatprep.subr.mxu0 0.0
        %2020 = vmatpush2.msra.mxu0 0.0
        %2021 = vmatprep.subr.mxu0 0.0
        %2022 = vmatpush2.msra.mxu0 0.0
        %2023 = vmatprep.subr.mxu0 0.0
        %2024 = vmatpush2.msra.mxu0 0.0
        %2025 = vmatprep.subr.mxu0 0.0
        %2026 = vmatpush2.msra.mxu0 0.0
        %2027 = vmatprep.subr.mxu0 0.0
        %2028 = vmatpush2.msra.mxu0 0.0
        %2029 = vmatprep.mubr.f32.mxu0 0.0
        %2030 = vmatmul.mubr.f32.gmra.mxu0 %v1472
        %v2031 = vpop.f32.mrf.mxu0
        %v2032 = vadd.f32 %v1963, %v2031
        %v2033 = vpop.f32.mrf.mxu0
        %2034 = vdwg.mxu0
        %s2035 = scalar_lea.vmem %s9, 32
        %v2036 = vld [vmem:[%s2035] sm:$0xff]
        %v2037 = vld [vmem:[%s2035 + $0x8] sm:$0xff]
        %v2038 = vld [vmem:[%s2035 + $0x10] sm:$0xff]
        %v2039 = vld [vmem:[%s2035 + $0x18] sm:$0xff]
        %s2040 = scalar_lea.vmem %s15, 1
        %v2041 = vld [vmem:[%s2040] sm:$0x1]
        %v2043 = vlaneseq
        %v2044 = vshrl.u32 %v2043, 7
        %v2045 = vsub.s32 0, %v2044
        %v2046 = vrot.slane %v2041, %v2045
        %2048 = vmatprep.subr.mxu0 0.0
        %2049 = vmatpush1.msra.mxu0 0.0
        %2050 = vmatprep.subr.mxu0 0.0
        %2051 = vmatpush1.msra.mxu0 0.0
        %2052 = vmatprep.subr.mxu0 0.0
        %2053 = vmatpush1.msra.mxu0 0.0
        %2054 = vmatprep.subr.mxu0 0.0
        %2055 = vmatpush1.msra.mxu0 0.0
        %2056 = vmatprep.subr.mxu0 0.0
        %2057 = vmatpush1.msra.mxu0 0.0
        %2058 = vmatprep.subr.mxu0 0.0
        %2059 = vmatpush1.msra.mxu0 0.0
        %2060 = vmatprep.subr.mxu0 0.0
        %2061 = vmatpush1.msra.mxu0 0.0
        %2062 = vmatprep.subr.mxu0 0.0
        %2063 = vmatpush1.msra.mxu0 0.0
        %2064 = vmatprep.subr.mxu0 0.0
        %2065 = vmatpush1.msra.mxu0 0.0
        %2066 = vmatprep.subr.mxu0 0.0
        %2067 = vmatpush1.msra.mxu0 0.0
        %2068 = vmatprep.subr.mxu0 0.0
        %2069 = vmatpush1.msra.mxu0 0.0
        %2070 = vmatprep.subr.mxu0 0.0
        %2071 = vmatpush1.msra.mxu0 0.0
        %2072 = vmatprep.subr.mxu0 0.0
        %2073 = vmatpush1.msra.mxu0 %v2039
        %2074 = vmatprep.subr.mxu0 0.0
        %2075 = vmatpush1.msra.mxu0 %v2038
        %2076 = vmatprep.subr.mxu0 0.0
        %2077 = vmatpush1.msra.mxu0 %v2037
        %2078 = vmatprep.subr.mxu0 0.0
        %2079 = vmatpush1.msra.mxu0 %v2036
        %2080 = vmatprep.subr.mxu0 0.0
        %2081 = vmatpush2.msra.mxu0 0.0
        %2082 = vmatprep.subr.mxu0 0.0
        %2083 = vmatpush2.msra.mxu0 0.0
        %2084 = vmatprep.subr.mxu0 0.0
        %2085 = vmatpush2.msra.mxu0 0.0
        %2086 = vmatprep.subr.mxu0 0.0
        %2087 = vmatpush2.msra.mxu0 0.0
        %2088 = vmatprep.subr.mxu0 0.0
        %2089 = vmatpush2.msra.mxu0 0.0
        %2090 = vmatprep.subr.mxu0 0.0
        %2091 = vmatpush2.msra.mxu0 0.0
        %2092 = vmatprep.subr.mxu0 0.0
        %2093 = vmatpush2.msra.mxu0 0.0
        %2094 = vmatprep.subr.mxu0 0.0
        %2095 = vmatpush2.msra.mxu0 0.0
        %2096 = vmatprep.subr.mxu0 0.0
        %2097 = vmatpush2.msra.mxu0 0.0
        %2098 = vmatprep.subr.mxu0 0.0
        %2099 = vmatpush2.msra.mxu0 0.0
        %2100 = vmatprep.subr.mxu0 0.0
        %2101 = vmatpush2.msra.mxu0 0.0
        %2102 = vmatprep.subr.mxu0 0.0
        %2103 = vmatpush2.msra.mxu0 0.0
        %2104 = vmatprep.subr.mxu0 0.0
        %2105 = vmatpush2.msra.mxu0 0.0
        %2106 = vmatprep.subr.mxu0 0.0
        %2107 = vmatpush2.msra.mxu0 0.0
        %2108 = vmatprep.subr.mxu0 0.0
        %2109 = vmatpush2.msra.mxu0 0.0
        %2110 = vmatprep.subr.mxu0 0.0
        %2111 = vmatpush2.msra.mxu0 0.0
        %2112 = vmatprep.mubr.f32.mxu0 0.0
        %2113 = vmatmul.mubr.f32.gmra.mxu0 %v1472
        %v2114 = vpop.f32.mrf.mxu0
        %v2115 = vadd.f32 %v2046, %v2114
        %v2116 = vpop.f32.mrf.mxu0
        %2117 = vdwg.mxu0
        %v2119 = vsel %vm1706, %v1949, 0
        %v2122 = vsel %vm1706, %v2032, 0
        %2124 = vmatprep.subr.mxu0 0.0
        %2125 = vmatpush1.xpose.msra.mxu0 0.0
        %2126 = vmatprep.subr.mxu0 0.0
        %2127 = vmatpush1.xpose.msra.mxu0 0.0
        %2128 = vmatprep.subr.mxu0 0.0
        %2129 = vmatpush1.xpose.msra.mxu0 0.0
        %2130 = vmatprep.subr.mxu0 0.0
        %2131 = vmatpush1.xpose.msra.mxu0 0.0
        %2132 = vmatprep.subr.mxu0 0.0
        %2133 = vmatpush1.xpose.msra.mxu0 0.0
        %2134 = vmatprep.subr.mxu0 0.0
        %2135 = vmatpush1.xpose.msra.mxu0 0.0
        %2136 = vmatprep.subr.mxu0 0.0
        %2137 = vmatpush1.xpose.msra.mxu0 0.0
        %2138 = vmatprep.subr.mxu0 0.0
        %2139 = vmatpush1.xpose.msra.mxu0 0.0
        %2140 = vmatprep.subr.mxu0 0.0
        %2141 = vmatpush1.xpose.msra.mxu0 0.0
        %2142 = vmatprep.subr.mxu0 0.0
        %2143 = vmatpush1.xpose.msra.mxu0 0.0
        %2144 = vmatprep.subr.mxu0 0.0
        %2145 = vmatpush1.xpose.msra.mxu0 0.0
        %2146 = vmatprep.subr.mxu0 0.0
        %2147 = vmatpush1.xpose.msra.mxu0 0.0
        %2148 = vmatprep.subr.mxu0 0.0
        %2149 = vmatpush1.xpose.msra.mxu0 0.0
        %2150 = vmatprep.subr.mxu0 0.0
        %2151 = vmatpush1.xpose.msra.mxu0 0.0
        %2152 = vmatprep.subr.mxu0 0.0
        %2153 = vmatpush1.xpose.msra.mxu0 0.0
        %2154 = vmatprep.subr.mxu0 0.0
        %2155 = vmatpush1.xpose.msra.mxu0 %v2122
        %2156 = vmatprep.subr.mxu0 0.0
        %2157 = vmatpush2.xpose.msra.mxu0 0.0
        %2158 = vmatprep.subr.mxu0 0.0
        %2159 = vmatpush2.xpose.msra.mxu0 0.0
        %2160 = vmatprep.subr.mxu0 0.0
        %2161 = vmatpush2.xpose.msra.mxu0 0.0
        %2162 = vmatprep.subr.mxu0 0.0
        %2163 = vmatpush2.xpose.msra.mxu0 0.0
        %2164 = vmatprep.subr.mxu0 0.0
        %2165 = vmatpush2.xpose.msra.mxu0 0.0
        %2166 = vmatprep.subr.mxu0 0.0
        %2167 = vmatpush2.xpose.msra.mxu0 0.0
        %2168 = vmatprep.subr.mxu0 0.0
        %2169 = vmatpush2.xpose.msra.mxu0 0.0
        %2170 = vmatprep.subr.mxu0 0.0
        %2171 = vmatpush2.xpose.msra.mxu0 0.0
        %2172 = vmatprep.subr.mxu0 0.0
        %2173 = vmatpush2.xpose.msra.mxu0 0.0
        %2174 = vmatprep.subr.mxu0 0.0
        %2175 = vmatpush2.xpose.msra.mxu0 0.0
        %2176 = vmatprep.subr.mxu0 0.0
        %2177 = vmatpush2.xpose.msra.mxu0 0.0
        %2178 = vmatprep.subr.mxu0 0.0
        %2179 = vmatpush2.xpose.msra.mxu0 0.0
        %2180 = vmatprep.subr.mxu0 0.0
        %2181 = vmatpush2.xpose.msra.mxu0 0.0
        %2182 = vmatprep.subr.mxu0 0.0
        %2183 = vmatpush2.xpose.msra.mxu0 0.0
        %2184 = vmatprep.subr.mxu0 0.0
        %2185 = vmatpush2.xpose.msra.mxu0 0.0
        %2186 = vmatprep.subr.mxu0 0.0
        %2187 = vmatpush2.xpose.msra.mxu0 0.0
        %2188 = vmatprep.mubr.f32.mxu0 0.0
        %2189 = vmatmul.mubr.f32.gmra.mxu0 %v2119
        %v2190 = vpop.f32.mrf.mxu0
        %v2191 = vadd.f32 0.0, %v2190
        %v2192 = vpop.f32.mrf.mxu0
        %2193 = vdwg.mxu0
        %v2194 = vmul.f32 %v2191, 0.35355338
        %v2195 = vsel %vm1706, %v2194, -inf
        %2196 = vmax.xlane.f32.xlu0 %v2195
        %v2197 = vpop.xlane.xlu0 %2196
        %v2198 = vsub.f32 %v2194, %v2197
        %v2199 = vmul.f32 %v2198, 1.442695
        %v2200 = vpow.pop %v2199
        %v2201 = vsel %vm1706, %v2200, 0.0
        %2202 = vadd.xlane.f32.xlu0 %v2201
        %v2203 = vpop.xlane.xlu0 %2202
        %v2204 = vrcp.pop %v2203
        %v2205 = vmul.f32 %v2200, %v2204
        %v2207 = vsel %vm1706, %v2205, 0
        %2209 = vmatprep.subr.mxu0 0.0
        %2210 = vmatpush1.msra.mxu0 0.0
        %2211 = vmatprep.subr.mxu0 0.0
        %2212 = vmatpush1.msra.mxu0 0.0
        %2213 = vmatprep.subr.mxu0 0.0
        %2214 = vmatpush1.msra.mxu0 0.0
        %2215 = vmatprep.subr.mxu0 0.0
        %2216 = vmatpush1.msra.mxu0 0.0
        %2217 = vmatprep.subr.mxu0 0.0
        %2218 = vmatpush1.msra.mxu0 0.0
        %2219 = vmatprep.subr.mxu0 0.0
        %2220 = vmatpush1.msra.mxu0 0.0
        %2221 = vmatprep.subr.mxu0 0.0
        %2222 = vmatpush1.msra.mxu0 0.0
        %2223 = vmatprep.subr.mxu0 0.0
        %2224 = vmatpush1.msra.mxu0 0.0
        %2225 = vmatprep.subr.mxu0 0.0
        %2226 = vmatpush1.msra.mxu0 0.0
        %2227 = vmatprep.subr.mxu0 0.0
        %2228 = vmatpush1.msra.mxu0 0.0
        %2229 = vmatprep.subr.mxu0 0.0
        %2230 = vmatpush1.msra.mxu0 0.0
        %2231 = vmatprep.subr.mxu0 0.0
        %2232 = vmatpush1.msra.mxu0 0.0
        %2233 = vmatprep.subr.mxu0 0.0
        %2234 = vmatpush1.msra.mxu0 0.0
        %2235 = vmatprep.subr.mxu0 0.0
        %2236 = vmatpush1.msra.mxu0 0.0
        %2237 = vmatprep.subr.mxu0 0.0
        %2238 = vmatpush1.msra.mxu0 0.0
        %2239 = vmatprep.subr.mxu0 0.0
        %2240 = vmatpush1.msra.mxu0 %v2115
        %2241 = vmatprep.subr.mxu0 0.0
        %2242 = vmatpush2.msra.mxu0 0.0
        %2243 = vmatprep.subr.mxu0 0.0
        %2244 = vmatpush2.msra.mxu0 0.0
        %2245 = vmatprep.subr.mxu0 0.0
        %2246 = vmatpush2.msra.mxu0 0.0
        %2247 = vmatprep.subr.mxu0 0.0
        %2248 = vmatpush2.msra.mxu0 0.0
        %2249 = vmatprep.subr.mxu0 0.0
        %2250 = vmatpush2.msra.mxu0 0.0
        %2251 = vmatprep.subr.mxu0 0.0
        %2252 = vmatpush2.msra.mxu0 0.0
        %2253 = vmatprep.subr.mxu0 0.0
        %2254 = vmatpush2.msra.mxu0 0.0
        %2255 = vmatprep.subr.mxu0 0.0
        %2256 = vmatpush2.msra.mxu0 0.0
        %2257 = vmatprep.subr.mxu0 0.0
        %2258 = vmatpush2.msra.mxu0 0.0
        %2259 = vmatprep.subr.mxu0 0.0
        %2260 = vmatpush2.msra.mxu0 0.0
        %2261 = vmatprep.subr.mxu0 0.0
        %2262 = vmatpush2.msra.mxu0 0.0
        %2263 = vmatprep.subr.mxu0 0.0
        %2264 = vmatpush2.msra.mxu0 0.0
        %2265 = vmatprep.subr.mxu0 0.0
        %2266 = vmatpush2.msra.mxu0 0.0
        %2267 = vmatprep.subr.mxu0 0.0
        %2268 = vmatpush2.msra.mxu0 0.0
        %2269 = vmatprep.subr.mxu0 0.0
        %2270 = vmatpush2.msra.mxu0 0.0
        %2271 = vmatprep.subr.mxu0 0.0
        %2272 = vmatpush2.msra.mxu0 0.0
        %2273 = vmatprep.mubr.f32.mxu0 0.0
        %2274 = vmatmul.mubr.f32.gmra.mxu0 %v2207
        %v2275 = vpop.f32.mrf.mxu0
        %v2276 = vadd.f32 0.0, %v2275
        %v2277 = vpop.f32.mrf.mxu0
        %2278 = vdwg.mxu0
        %s2279 = scalar_lea.vmem %s17, 8
        %v2280 = vld [vmem:[%s2279] sm:$0xff]
        %v2282 = vsel %vm1706, %v2276, 0
        %2284 = vmatprep.subr.mxu0 0.0
        %2285 = vmatpush1.msra.mxu0 0.0
        %2286 = vmatprep.subr.mxu0 0.0
        %2287 = vmatpush1.msra.mxu0 0.0
        %2288 = vmatprep.subr.mxu0 0.0
        %2289 = vmatpush1.msra.mxu0 0.0
        %2290 = vmatprep.subr.mxu0 0.0
        %2291 = vmatpush1.msra.mxu0 0.0
        %2292 = vmatprep.subr.mxu0 0.0
        %2293 = vmatpush1.msra.mxu0 0.0
        %2294 = vmatprep.subr.mxu0 0.0
        %2295 = vmatpush1.msra.mxu0 0.0
        %2296 = vmatprep.subr.mxu0 0.0
        %2297 = vmatpush1.msra.mxu0 0.0
        %2298 = vmatprep.subr.mxu0 0.0
        %2299 = vmatpush1.msra.mxu0 0.0
        %2300 = vmatprep.subr.mxu0 0.0
        %2301 = vmatpush1.msra.mxu0 0.0
        %2302 = vmatprep.subr.mxu0 0.0
        %2303 = vmatpush1.msra.mxu0 0.0
        %2304 = vmatprep.subr.mxu0 0.0
        %2305 = vmatpush1.msra.mxu0 0.0
        %2306 = vmatprep.subr.mxu0 0.0
        %2307 = vmatpush1.msra.mxu0 0.0
        %2308 = vmatprep.subr.mxu0 0.0
        %2309 = vmatpush1.msra.mxu0 0.0
        %2310 = vmatprep.subr.mxu0 0.0
        %2311 = vmatpush1.msra.mxu0 0.0
        %2312 = vmatprep.subr.mxu0 0.0
        %2313 = vmatpush1.msra.mxu0 0.0
        %2314 = vmatprep.subr.mxu0 0.0
        %2315 = vmatpush1.msra.mxu0 %v2280
        %2316 = vmatprep.subr.mxu0 0.0
        %2317 = vmatpush2.msra.mxu0 0.0
        %2318 = vmatprep.subr.mxu0 0.0
        %2319 = vmatpush2.msra.mxu0 0.0
        %2320 = vmatprep.subr.mxu0 0.0
        %2321 = vmatpush2.msra.mxu0 0.0
        %2322 = vmatprep.subr.mxu0 0.0
        %2323 = vmatpush2.msra.mxu0 0.0
        %2324 = vmatprep.subr.mxu0 0.0
        %2325 = vmatpush2.msra.mxu0 0.0
        %2326 = vmatprep.subr.mxu0 0.0
        %2327 = vmatpush2.msra.mxu0 0.0
        %2328 = vmatprep.subr.mxu0 0.0
        %2329 = vmatpush2.msra.mxu0 0.0
        %2330 = vmatprep.subr.mxu0 0.0
        %2331 = vmatpush2.msra.mxu0 0.0
        %2332 = vmatprep.subr.mxu0 0.0
        %2333 = vmatpush2.msra.mxu0 0.0
        %2334 = vmatprep.subr.mxu0 0.0
        %2335 = vmatpush2.msra.mxu0 0.0
        %2336 = vmatprep.subr.mxu0 0.0
        %2337 = vmatpush2.msra.mxu0 0.0
        %2338 = vmatprep.subr.mxu0 0.0
        %2339 = vmatpush2.msra.mxu0 0.0
        %2340 = vmatprep.subr.mxu0 0.0
        %2341 = vmatpush2.msra.mxu0 0.0
        %2342 = vmatprep.subr.mxu0 0.0
        %2343 = vmatpush2.msra.mxu0 0.0
        %2344 = vmatprep.subr.mxu0 0.0
        %2345 = vmatpush2.msra.mxu0 0.0
        %2346 = vmatprep.subr.mxu0 0.0
        %2347 = vmatpush2.msra.mxu0 0.0
        %2348 = vmatprep.mubr.f32.mxu0 0.0
        %2349 = vmatmul.mubr.f32.gmra.mxu0 %v2282
        %v2350 = vpop.f32.mrf.mxu0
        %v2351 = vadd.f32 0.0, %v2350
        %v2352 = vpop.f32.mrf.mxu0
        %2353 = vdwg.mxu0
        %v2355 = vsel %vm1706, %v1865, 0
        %2357 = vmatprep.subr.mxu0 0.0
        %2358 = vmatpush1.msra.mxu0 0.0
        %2359 = vmatprep.subr.mxu0 0.0
        %2360 = vmatpush1.msra.mxu0 0.0
        %2361 = vmatprep.subr.mxu0 0.0
        %2362 = vmatpush1.msra.mxu0 0.0
        %2363 = vmatprep.subr.mxu0 0.0
        %2364 = vmatpush1.msra.mxu0 0.0
        %2365 = vmatprep.subr.mxu0 0.0
        %2366 = vmatpush1.msra.mxu0 0.0
        %2367 = vmatprep.subr.mxu0 0.0
        %2368 = vmatpush1.msra.mxu0 0.0
        %2369 = vmatprep.subr.mxu0 0.0
        %2370 = vmatpush1.msra.mxu0 0.0
        %2371 = vmatprep.subr.mxu0 0.0
        %2372 = vmatpush1.msra.mxu0 0.0
        %2373 = vmatprep.subr.mxu0 0.0
        %2374 = vmatpush1.msra.mxu0 0.0
        %2375 = vmatprep.subr.mxu0 0.0
        %2376 = vmatpush1.msra.mxu0 0.0
        %2377 = vmatprep.subr.mxu0 0.0
        %2378 = vmatpush1.msra.mxu0 0.0
        %2379 = vmatprep.subr.mxu0 0.0
        %2380 = vmatpush1.msra.mxu0 0.0
        %2381 = vmatprep.subr.mxu0 0.0
        %2382 = vmatpush1.msra.mxu0 0.0
        %2383 = vmatprep.subr.mxu0 0.0
        %2384 = vmatpush1.msra.mxu0 0.0
        %2385 = vmatprep.subr.mxu0 0.0
        %2386 = vmatpush1.msra.mxu0 0.0
        %2387 = vmatprep.subr.mxu0 0.0
        %2388 = vmatpush1.msra.mxu0 %v1868
        %2389 = vmatprep.subr.mxu0 0.0
        %2390 = vmatpush2.msra.mxu0 0.0
        %2391 = vmatprep.subr.mxu0 0.0
        %2392 = vmatpush2.msra.mxu0 0.0
        %2393 = vmatprep.subr.mxu0 0.0
        %2394 = vmatpush2.msra.mxu0 0.0
        %2395 = vmatprep.subr.mxu0 0.0
        %2396 = vmatpush2.msra.mxu0 0.0
        %2397 = vmatprep.subr.mxu0 0.0
        %2398 = vmatpush2.msra.mxu0 0.0
        %2399 = vmatprep.subr.mxu0 0.0
        %2400 = vmatpush2.msra.mxu0 0.0
        %2401 = vmatprep.subr.mxu0 0.0
        %2402 = vmatpush2.msra.mxu0 0.0
        %2403 = vmatprep.subr.mxu0 0.0
        %2404 = vmatpush2.msra.mxu0 0.0
        %2405 = vmatprep.subr.mxu0 0.0
        %2406 = vmatpush2.msra.mxu0 0.0
        %2407 = vmatprep.subr.mxu0 0.0
        %2408 = vmatpush2.msra.mxu0 0.0
        %2409 = vmatprep.subr.mxu0 0.0
        %2410 = vmatpush2.msra.mxu0 0.0
        %2411 = vmatprep.subr.mxu0 0.0
        %2412 = vmatpush2.msra.mxu0 0.0
        %2413 = vmatprep.subr.mxu0 0.0
        %2414 = vmatpush2.msra.mxu0 0.0
        %2415 = vmatprep.subr.mxu0 0.0
        %2416 = vmatpush2.msra.mxu0 0.0
        %2417 = vmatprep.subr.mxu0 0.0
        %2418 = vmatpush2.msra.mxu0 0.0
        %2419 = vmatprep.subr.mxu0 0.0
        %2420 = vmatpush2.msra.mxu0 0.0
        %2421 = vmatprep.mubr.f32.mxu0 0.0
        %2422 = vmatmul.mubr.f32.gmra.mxu0 %v2355
        %v2423 = vpop.f32.mrf.mxu0
        %v2424 = vadd.f32 %v2351, %v2423
        %v2425 = vpop.f32.mrf.mxu0
        %2426 = vdwg.mxu0
        %s2427 = scalar_lea.vmem %s5, 64
        %v2428 = vld [vmem:[%s2427] sm:$0xff]
        %v2429 = vld [vmem:[%s2427 + $0x8] sm:$0xff]
        %v2430 = vld [vmem:[%s2427 + $0x10] sm:$0xff]
        %v2431 = vld [vmem:[%s2427 + $0x18] sm:$0xff]
        %s2432 = scalar_lea.vmem %s11, 2
        %v2433 = vld [vmem:[%s2432] sm:$0x1]
        %v2435 = vlaneseq
        %v2436 = vshrl.u32 %v2435, 7
        %v2437 = vsub.s32 0, %v2436
        %v2438 = vrot.slane %v2433, %v2437
        %2440 = vmatprep.subr.mxu0 0.0
        %2441 = vmatpush1.msra.mxu0 0.0
        %2442 = vmatprep.subr.mxu0 0.0
        %2443 = vmatpush1.msra.mxu0 0.0
        %2444 = vmatprep.subr.mxu0 0.0
        %2445 = vmatpush1.msra.mxu0 0.0
        %2446 = vmatprep.subr.mxu0 0.0
        %2447 = vmatpush1.msra.mxu0 0.0
        %2448 = vmatprep.subr.mxu0 0.0
        %2449 = vmatpush1.msra.mxu0 0.0
        %2450 = vmatprep.subr.mxu0 0.0
        %2451 = vmatpush1.msra.mxu0 0.0
        %2452 = vmatprep.subr.mxu0 0.0
        %2453 = vmatpush1.msra.mxu0 0.0
        %2454 = vmatprep.subr.mxu0 0.0
        %2455 = vmatpush1.msra.mxu0 0.0
        %2456 = vmatprep.subr.mxu0 0.0
        %2457 = vmatpush1.msra.mxu0 0.0
        %2458 = vmatprep.subr.mxu0 0.0
        %2459 = vmatpush1.msra.mxu0 0.0
        %2460 = vmatprep.subr.mxu0 0.0
        %2461 = vmatpush1.msra.mxu0 0.0
        %2462 = vmatprep.subr.mxu0 0.0
        %2463 = vmatpush1.msra.mxu0 0.0
        %2464 = vmatprep.subr.mxu0 0.0
        %2465 = vmatpush1.msra.mxu0 %v2431
        %2466 = vmatprep.subr.mxu0 0.0
        %2467 = vmatpush1.msra.mxu0 %v2430
        %2468 = vmatprep.subr.mxu0 0.0
        %2469 = vmatpush1.msra.mxu0 %v2429
        %2470 = vmatprep.subr.mxu0 0.0
        %2471 = vmatpush1.msra.mxu0 %v2428
        %2472 = vmatprep.subr.mxu0 0.0
        %2473 = vmatpush2.msra.mxu0 0.0
        %2474 = vmatprep.subr.mxu0 0.0
        %2475 = vmatpush2.msra.mxu0 0.0
        %2476 = vmatprep.subr.mxu0 0.0
        %2477 = vmatpush2.msra.mxu0 0.0
        %2478 = vmatprep.subr.mxu0 0.0
        %2479 = vmatpush2.msra.mxu0 0.0
        %2480 = vmatprep.subr.mxu0 0.0
        %2481 = vmatpush2.msra.mxu0 0.0
        %2482 = vmatprep.subr.mxu0 0.0
        %2483 = vmatpush2.msra.mxu0 0.0
        %2484 = vmatprep.subr.mxu0 0.0
        %2485 = vmatpush2.msra.mxu0 0.0
        %2486 = vmatprep.subr.mxu0 0.0
        %2487 = vmatpush2.msra.mxu0 0.0
        %2488 = vmatprep.subr.mxu0 0.0
        %2489 = vmatpush2.msra.mxu0 0.0
        %2490 = vmatprep.subr.mxu0 0.0
        %2491 = vmatpush2.msra.mxu0 0.0
        %2492 = vmatprep.subr.mxu0 0.0
        %2493 = vmatpush2.msra.mxu0 0.0
        %2494 = vmatprep.subr.mxu0 0.0
        %2495 = vmatpush2.msra.mxu0 0.0
        %2496 = vmatprep.subr.mxu0 0.0
        %2497 = vmatpush2.msra.mxu0 0.0
        %2498 = vmatprep.subr.mxu0 0.0
        %2499 = vmatpush2.msra.mxu0 0.0
        %2500 = vmatprep.subr.mxu0 0.0
        %2501 = vmatpush2.msra.mxu0 0.0
        %2502 = vmatprep.subr.mxu0 0.0
        %2503 = vmatpush2.msra.mxu0 0.0
        %2504 = vmatprep.mubr.f32.mxu0 0.0
        %2505 = vmatmul.mubr.f32.gmra.mxu0 %v1472
        %v2506 = vpop.f32.mrf.mxu0
        %v2507 = vadd.f32 %v2438, %v2506
        %v2508 = vpop.f32.mrf.mxu0
        %2509 = vdwg.mxu0
        %s2510 = scalar_lea.vmem %s7, 64
        %v2511 = vld [vmem:[%s2510] sm:$0xff]
        %v2512 = vld [vmem:[%s2510 + $0x8] sm:$0xff]
        %v2513 = vld [vmem:[%s2510 + $0x10] sm:$0xff]
        %v2514 = vld [vmem:[%s2510 + $0x18] sm:$0xff]
        %s2515 = scalar_lea.vmem %s13, 2
        %v2516 = vld [vmem:[%s2515] sm:$0x1]
        %v2518 = vlaneseq
        %v2519 = vshrl.u32 %v2518, 7
        %v2520 = vsub.s32 0, %v2519
        %v2521 = vrot.slane %v2516, %v2520
        %2523 = vmatprep.subr.mxu0 0.0
        %2524 = vmatpush1.msra.mxu0 0.0
        %2525 = vmatprep.subr.mxu0 0.0
        %2526 = vmatpush1.msra.mxu0 0.0
        %2527 = vmatprep.subr.mxu0 0.0
        %2528 = vmatpush1.msra.mxu0 0.0
        %2529 = vmatprep.subr.mxu0 0.0
        %2530 = vmatpush1.msra.mxu0 0.0
        %2531 = vmatprep.subr.mxu0 0.0
        %2532 = vmatpush1.msra.mxu0 0.0
        %2533 = vmatprep.subr.mxu0 0.0
        %2534 = vmatpush1.msra.mxu0 0.0
        %2535 = vmatprep.subr.mxu0 0.0
        %2536 = vmatpush1.msra.mxu0 0.0
        %2537 = vmatprep.subr.mxu0 0.0
        %2538 = vmatpush1.msra.mxu0 0.0
        %2539 = vmatprep.subr.mxu0 0.0
        %2540 = vmatpush1.msra.mxu0 0.0
        %2541 = vmatprep.subr.mxu0 0.0
        %2542 = vmatpush1.msra.mxu0 0.0
        %2543 = vmatprep.subr.mxu0 0.0
        %2544 = vmatpush1.msra.mxu0 0.0
        %2545 = vmatprep.subr.mxu0 0.0
        %2546 = vmatpush1.msra.mxu0 0.0
        %2547 = vmatprep.subr.mxu0 0.0
        %2548 = vmatpush1.msra.mxu0 %v2514
        %2549 = vmatprep.subr.mxu0 0.0
        %2550 = vmatpush1.msra.mxu0 %v2513
        %2551 = vmatprep.subr.mxu0 0.0
        %2552 = vmatpush1.msra.mxu0 %v2512
        %2553 = vmatprep.subr.mxu0 0.0
        %2554 = vmatpush1.msra.mxu0 %v2511
        %2555 = vmatprep.subr.mxu0 0.0
        %2556 = vmatpush2.msra.mxu0 0.0
        %2557 = vmatprep.subr.mxu0 0.0
        %2558 = vmatpush2.msra.mxu0 0.0
        %2559 = vmatprep.subr.mxu0 0.0
        %2560 = vmatpush2.msra.mxu0 0.0
        %2561 = vmatprep.subr.mxu0 0.0
        %2562 = vmatpush2.msra.mxu0 0.0
        %2563 = vmatprep.subr.mxu0 0.0
        %2564 = vmatpush2.msra.mxu0 0.0
        %2565 = vmatprep.subr.mxu0 0.0
        %2566 = vmatpush2.msra.mxu0 0.0
        %2567 = vmatprep.subr.mxu0 0.0
        %2568 = vmatpush2.msra.mxu0 0.0
        %2569 = vmatprep.subr.mxu0 0.0
        %2570 = vmatpush2.msra.mxu0 0.0
        %2571 = vmatprep.subr.mxu0 0.0
        %2572 = vmatpush2.msra.mxu0 0.0
        %2573 = vmatprep.subr.mxu0 0.0
        %2574 = vmatpush2.msra.mxu0 0.0
        %2575 = vmatprep.subr.mxu0 0.0
        %2576 = vmatpush2.msra.mxu0 0.0
        %2577 = vmatprep.subr.mxu0 0.0
        %2578 = vmatpush2.msra.mxu0 0.0
        %2579 = vmatprep.subr.mxu0 0.0
        %2580 = vmatpush2.msra.mxu0 0.0
        %2581 = vmatprep.subr.mxu0 0.0
        %2582 = vmatpush2.msra.mxu0 0.0
        %2583 = vmatprep.subr.mxu0 0.0
        %2584 = vmatpush2.msra.mxu0 0.0
        %2585 = vmatprep.subr.mxu0 0.0
        %2586 = vmatpush2.msra.mxu0 0.0
        %2587 = vmatprep.mubr.f32.mxu0 0.0
        %2588 = vmatmul.mubr.f32.gmra.mxu0 %v1472
        %v2589 = vpop.f32.mrf.mxu0
        %v2590 = vadd.f32 %v2521, %v2589
        %v2591 = vpop.f32.mrf.mxu0
        %2592 = vdwg.mxu0
        %s2593 = scalar_lea.vmem %s9, 64
        %v2594 = vld [vmem:[%s2593] sm:$0xff]
        %v2595 = vld [vmem:[%s2593 + $0x8] sm:$0xff]
        %v2596 = vld [vmem:[%s2593 + $0x10] sm:$0xff]
        %v2597 = vld [vmem:[%s2593 + $0x18] sm:$0xff]
        %s2598 = scalar_lea.vmem %s15, 2
        %v2599 = vld [vmem:[%s2598] sm:$0x1]
        %v2601 = vlaneseq
        %v2602 = vshrl.u32 %v2601, 7
        %v2603 = vsub.s32 0, %v2602
        %v2604 = vrot.slane %v2599, %v2603
        %2606 = vmatprep.subr.mxu0 0.0
        %2607 = vmatpush1.msra.mxu0 0.0
        %2608 = vmatprep.subr.mxu0 0.0
        %2609 = vmatpush1.msra.mxu0 0.0
        %2610 = vmatprep.subr.mxu0 0.0
        %2611 = vmatpush1.msra.mxu0 0.0
        %2612 = vmatprep.subr.mxu0 0.0
        %2613 = vmatpush1.msra.mxu0 0.0
        %2614 = vmatprep.subr.mxu0 0.0
        %2615 = vmatpush1.msra.mxu0 0.0
        %2616 = vmatprep.subr.mxu0 0.0
        %2617 = vmatpush1.msra.mxu0 0.0
        %2618 = vmatprep.subr.mxu0 0.0
        %2619 = vmatpush1.msra.mxu0 0.0
        %2620 = vmatprep.subr.mxu0 0.0
        %2621 = vmatpush1.msra.mxu0 0.0
        %2622 = vmatprep.subr.mxu0 0.0
        %2623 = vmatpush1.msra.mxu0 0.0
        %2624 = vmatprep.subr.mxu0 0.0
        %2625 = vmatpush1.msra.mxu0 0.0
        %2626 = vmatprep.subr.mxu0 0.0
        %2627 = vmatpush1.msra.mxu0 0.0
        %2628 = vmatprep.subr.mxu0 0.0
        %2629 = vmatpush1.msra.mxu0 0.0
        %2630 = vmatprep.subr.mxu0 0.0
        %2631 = vmatpush1.msra.mxu0 %v2597
        %2632 = vmatprep.subr.mxu0 0.0
        %2633 = vmatpush1.msra.mxu0 %v2596
        %2634 = vmatprep.subr.mxu0 0.0
        %2635 = vmatpush1.msra.mxu0 %v2595
        %2636 = vmatprep.subr.mxu0 0.0
        %2637 = vmatpush1.msra.mxu0 %v2594
        %2638 = vmatprep.subr.mxu0 0.0
        %2639 = vmatpush2.msra.mxu0 0.0
        %2640 = vmatprep.subr.mxu0 0.0
        %2641 = vmatpush2.msra.mxu0 0.0
        %2642 = vmatprep.subr.mxu0 0.0
        %2643 = vmatpush2.msra.mxu0 0.0
        %2644 = vmatprep.subr.mxu0 0.0
        %2645 = vmatpush2.msra.mxu0 0.0
        %2646 = vmatprep.subr.mxu0 0.0
        %2647 = vmatpush2.msra.mxu0 0.0
        %2648 = vmatprep.subr.mxu0 0.0
        %2649 = vmatpush2.msra.mxu0 0.0
        %2650 = vmatprep.subr.mxu0 0.0
        %2651 = vmatpush2.msra.mxu0 0.0
        %2652 = vmatprep.subr.mxu0 0.0
        %2653 = vmatpush2.msra.mxu0 0.0
        %2654 = vmatprep.subr.mxu0 0.0
        %2655 = vmatpush2.msra.mxu0 0.0
        %2656 = vmatprep.subr.mxu0 0.0
        %2657 = vmatpush2.msra.mxu0 0.0
        %2658 = vmatprep.subr.mxu0 0.0
        %2659 = vmatpush2.msra.mxu0 0.0
        %2660 = vmatprep.subr.mxu0 0.0
        %2661 = vmatpush2.msra.mxu0 0.0
        %2662 = vmatprep.subr.mxu0 0.0
        %2663 = vmatpush2.msra.mxu0 0.0
        %2664 = vmatprep.subr.mxu0 0.0
        %2665 = vmatpush2.msra.mxu0 0.0
        %2666 = vmatprep.subr.mxu0 0.0
        %2667 = vmatpush2.msra.mxu0 0.0
        %2668 = vmatprep.subr.mxu0 0.0
        %2669 = vmatpush2.msra.mxu0 0.0
        %2670 = vmatprep.mubr.f32.mxu0 0.0
        %2671 = vmatmul.mubr.f32.gmra.mxu0 %v1472
        %v2672 = vpop.f32.mrf.mxu0
        %v2673 = vadd.f32 %v2604, %v2672
        %v2674 = vpop.f32.mrf.mxu0
        %2675 = vdwg.mxu0
        %v2677 = vsel %vm1706, %v2507, 0
        %v2680 = vsel %vm1706, %v2590, 0
        %2682 = vmatprep.subr.mxu0 0.0
        %2683 = vmatpush1.xpose.msra.mxu0 0.0
        %2684 = vmatprep.subr.mxu0 0.0
        %2685 = vmatpush1.xpose.msra.mxu0 0.0
        %2686 = vmatprep.subr.mxu0 0.0
        %2687 = vmatpush1.xpose.msra.mxu0 0.0
        %2688 = vmatprep.subr.mxu0 0.0
        %2689 = vmatpush1.xpose.msra.mxu0 0.0
        %2690 = vmatprep.subr.mxu0 0.0
        %2691 = vmatpush1.xpose.msra.mxu0 0.0
        %2692 = vmatprep.subr.mxu0 0.0
        %2693 = vmatpush1.xpose.msra.mxu0 0.0
        %2694 = vmatprep.subr.mxu0 0.0
        %2695 = vmatpush1.xpose.msra.mxu0 0.0
        %2696 = vmatprep.subr.mxu0 0.0
        %2697 = vmatpush1.xpose.msra.mxu0 0.0
        %2698 = vmatprep.subr.mxu0 0.0
        %2699 = vmatpush1.xpose.msra.mxu0 0.0
        %2700 = vmatprep.subr.mxu0 0.0
        %2701 = vmatpush1.xpose.msra.mxu0 0.0
        %2702 = vmatprep.subr.mxu0 0.0
        %2703 = vmatpush1.xpose.msra.mxu0 0.0
        %2704 = vmatprep.subr.mxu0 0.0
        %2705 = vmatpush1.xpose.msra.mxu0 0.0
        %2706 = vmatprep.subr.mxu0 0.0
        %2707 = vmatpush1.xpose.msra.mxu0 0.0
        %2708 = vmatprep.subr.mxu0 0.0
        %2709 = vmatpush1.xpose.msra.mxu0 0.0
        %2710 = vmatprep.subr.mxu0 0.0
        %2711 = vmatpush1.xpose.msra.mxu0 0.0
        %2712 = vmatprep.subr.mxu0 0.0
        %2713 = vmatpush1.xpose.msra.mxu0 %v2680
        %2714 = vmatprep.subr.mxu0 0.0
        %2715 = vmatpush2.xpose.msra.mxu0 0.0
        %2716 = vmatprep.subr.mxu0 0.0
        %2717 = vmatpush2.xpose.msra.mxu0 0.0
        %2718 = vmatprep.subr.mxu0 0.0
        %2719 = vmatpush2.xpose.msra.mxu0 0.0
        %2720 = vmatprep.subr.mxu0 0.0
        %2721 = vmatpush2.xpose.msra.mxu0 0.0
        %2722 = vmatprep.subr.mxu0 0.0
        %2723 = vmatpush2.xpose.msra.mxu0 0.0
        %2724 = vmatprep.subr.mxu0 0.0
        %2725 = vmatpush2.xpose.msra.mxu0 0.0
        %2726 = vmatprep.subr.mxu0 0.0
        %2727 = vmatpush2.xpose.msra.mxu0 0.0
        %2728 = vmatprep.subr.mxu0 0.0
        %2729 = vmatpush2.xpose.msra.mxu0 0.0
        %2730 = vmatprep.subr.mxu0 0.0
        %2731 = vmatpush2.xpose.msra.mxu0 0.0
        %2732 = vmatprep.subr.mxu0 0.0
        %2733 = vmatpush2.xpose.msra.mxu0 0.0
        %2734 = vmatprep.subr.mxu0 0.0
        %2735 = vmatpush2.xpose.msra.mxu0 0.0
        %2736 = vmatprep.subr.mxu0 0.0
        %2737 = vmatpush2.xpose.msra.mxu0 0.0
        %2738 = vmatprep.subr.mxu0 0.0
        %2739 = vmatpush2.xpose.msra.mxu0 0.0
        %2740 = vmatprep.subr.mxu0 0.0
        %2741 = vmatpush2.xpose.msra.mxu0 0.0
        %2742 = vmatprep.subr.mxu0 0.0
        %2743 = vmatpush2.xpose.msra.mxu0 0.0
        %2744 = vmatprep.subr.mxu0 0.0
        %2745 = vmatpush2.xpose.msra.mxu0 0.0
        %2746 = vmatprep.mubr.f32.mxu0 0.0
        %2747 = vmatmul.mubr.f32.gmra.mxu0 %v2677
        %v2748 = vpop.f32.mrf.mxu0
        %v2749 = vadd.f32 0.0, %v2748
        %v2750 = vpop.f32.mrf.mxu0
        %2751 = vdwg.mxu0
        %v2752 = vmul.f32 %v2749, 0.35355338
        %v2753 = vsel %vm1706, %v2752, -inf
        %2754 = vmax.xlane.f32.xlu0 %v2753
        %v2755 = vpop.xlane.xlu0 %2754
        %v2756 = vsub.f32 %v2752, %v2755
        %v2757 = vmul.f32 %v2756, 1.442695
        %v2758 = vpow.pop %v2757
        %v2759 = vsel %vm1706, %v2758, 0.0
        %2760 = vadd.xlane.f32.xlu0 %v2759
        %v2761 = vpop.xlane.xlu0 %2760
        %v2762 = vrcp.pop %v2761
        %v2763 = vmul.f32 %v2758, %v2762
        %v2765 = vsel %vm1706, %v2763, 0
        %2767 = vmatprep.subr.mxu0 0.0
        %2768 = vmatpush1.msra.mxu0 0.0
        %2769 = vmatprep.subr.mxu0 0.0
        %2770 = vmatpush1.msra.mxu0 0.0
        %2771 = vmatprep.subr.mxu0 0.0
        %2772 = vmatpush1.msra.mxu0 0.0
        %2773 = vmatprep.subr.mxu0 0.0
        %2774 = vmatpush1.msra.mxu0 0.0
        %2775 = vmatprep.subr.mxu0 0.0
        %2776 = vmatpush1.msra.mxu0 0.0
        %2777 = vmatprep.subr.mxu0 0.0
        %2778 = vmatpush1.msra.mxu0 0.0
        %2779 = vmatprep.subr.mxu0 0.0
        %2780 = vmatpush1.msra.mxu0 0.0
        %2781 = vmatprep.subr.mxu0 0.0
        %2782 = vmatpush1.msra.mxu0 0.0
        %2783 = vmatprep.subr.mxu0 0.0
        %2784 = vmatpush1.msra.mxu0 0.0
        %2785 = vmatprep.subr.mxu0 0.0
        %2786 = vmatpush1.msra.mxu0 0.0
        %2787 = vmatprep.subr.mxu0 0.0
        %2788 = vmatpush1.msra.mxu0 0.0
        %2789 = vmatprep.subr.mxu0 0.0
        %2790 = vmatpush1.msra.mxu0 0.0
        %2791 = vmatprep.subr.mxu0 0.0
        %2792 = vmatpush1.msra.mxu0 0.0
        %2793 = vmatprep.subr.mxu0 0.0
        %2794 = vmatpush1.msra.mxu0 0.0
        %2795 = vmatprep.subr.mxu0 0.0
        %2796 = vmatpush1.msra.mxu0 0.0
        %2797 = vmatprep.subr.mxu0 0.0
        %2798 = vmatpush1.msra.mxu0 %v2673
        %2799 = vmatprep.subr.mxu0 0.0
        %2800 = vmatpush2.msra.mxu0 0.0
        %2801 = vmatprep.subr.mxu0 0.0
        %2802 = vmatpush2.msra.mxu0 0.0
        %2803 = vmatprep.subr.mxu0 0.0
        %2804 = vmatpush2.msra.mxu0 0.0
        %2805 = vmatprep.subr.mxu0 0.0
        %2806 = vmatpush2.msra.mxu0 0.0
        %2807 = vmatprep.subr.mxu0 0.0
        %2808 = vmatpush2.msra.mxu0 0.0
        %2809 = vmatprep.subr.mxu0 0.0
        %2810 = vmatpush2.msra.mxu0 0.0
        %2811 = vmatprep.subr.mxu0 0.0
        %2812 = vmatpush2.msra.mxu0 0.0
        %2813 = vmatprep.subr.mxu0 0.0
        %2814 = vmatpush2.msra.mxu0 0.0
        %2815 = vmatprep.subr.mxu0 0.0
        %2816 = vmatpush2.msra.mxu0 0.0
        %2817 = vmatprep.subr.mxu0 0.0
        %2818 = vmatpush2.msra.mxu0 0.0
        %2819 = vmatprep.subr.mxu0 0.0
        %2820 = vmatpush2.msra.mxu0 0.0
        %2821 = vmatprep.subr.mxu0 0.0
        %2822 = vmatpush2.msra.mxu0 0.0
        %2823 = vmatprep.subr.mxu0 0.0
        %2824 = vmatpush2.msra.mxu0 0.0
        %2825 = vmatprep.subr.mxu0 0.0
        %2826 = vmatpush2.msra.mxu0 0.0
        %2827 = vmatprep.subr.mxu0 0.0
        %2828 = vmatpush2.msra.mxu0 0.0
        %2829 = vmatprep.subr.mxu0 0.0
        %2830 = vmatpush2.msra.mxu0 0.0
        %2831 = vmatprep.mubr.f32.mxu0 0.0
        %2832 = vmatmul.mubr.f32.gmra.mxu0 %v2765
        %v2833 = vpop.f32.mrf.mxu0
        %v2834 = vadd.f32 0.0, %v2833
        %v2835 = vpop.f32.mrf.mxu0
        %2836 = vdwg.mxu0
        %s2837 = scalar_lea.vmem %s17, 16
        %v2838 = vld [vmem:[%s2837] sm:$0xff]
        %v2840 = vsel %vm1706, %v2834, 0
        %2842 = vmatprep.subr.mxu0 0.0
        %2843 = vmatpush1.msra.mxu0 0.0
        %2844 = vmatprep.subr.mxu0 0.0
        %2845 = vmatpush1.msra.mxu0 0.0
        %2846 = vmatprep.subr.mxu0 0.0
        %2847 = vmatpush1.msra.mxu0 0.0
        %2848 = vmatprep.subr.mxu0 0.0
        %2849 = vmatpush1.msra.mxu0 0.0
        %2850 = vmatprep.subr.mxu0 0.0
        %2851 = vmatpush1.msra.mxu0 0.0
        %2852 = vmatprep.subr.mxu0 0.0
        %2853 = vmatpush1.msra.mxu0 0.0
        %2854 = vmatprep.subr.mxu0 0.0
        %2855 = vmatpush1.msra.mxu0 0.0
        %2856 = vmatprep.subr.mxu0 0.0
        %2857 = vmatpush1.msra.mxu0 0.0
        %2858 = vmatprep.subr.mxu0 0.0
        %2859 = vmatpush1.msra.mxu0 0.0
        %2860 = vmatprep.subr.mxu0 0.0
        %2861 = vmatpush1.msra.mxu0 0.0
        %2862 = vmatprep.subr.mxu0 0.0
        %2863 = vmatpush1.msra.mxu0 0.0
        %2864 = vmatprep.subr.mxu0 0.0
        %2865 = vmatpush1.msra.mxu0 0.0
        %2866 = vmatprep.subr.mxu0 0.0
        %2867 = vmatpush1.msra.mxu0 0.0
        %2868 = vmatprep.subr.mxu0 0.0
        %2869 = vmatpush1.msra.mxu0 0.0
        %2870 = vmatprep.subr.mxu0 0.0
        %2871 = vmatpush1.msra.mxu0 0.0
        %2872 = vmatprep.subr.mxu0 0.0
        %2873 = vmatpush1.msra.mxu0 %v2838
        %2874 = vmatprep.subr.mxu0 0.0
        %2875 = vmatpush2.msra.mxu0 0.0
        %2876 = vmatprep.subr.mxu0 0.0
        %2877 = vmatpush2.msra.mxu0 0.0
        %2878 = vmatprep.subr.mxu0 0.0
        %2879 = vmatpush2.msra.mxu0 0.0
        %2880 = vmatprep.subr.mxu0 0.0
        %2881 = vmatpush2.msra.mxu0 0.0
        %2882 = vmatprep.subr.mxu0 0.0
        %2883 = vmatpush2.msra.mxu0 0.0
        %2884 = vmatprep.subr.mxu0 0.0
        %2885 = vmatpush2.msra.mxu0 0.0
        %2886 = vmatprep.subr.mxu0 0.0
        %2887 = vmatpush2.msra.mxu0 0.0
        %2888 = vmatprep.subr.mxu0 0.0
        %2889 = vmatpush2.msra.mxu0 0.0
        %2890 = vmatprep.subr.mxu0 0.0
        %2891 = vmatpush2.msra.mxu0 0.0
        %2892 = vmatprep.subr.mxu0 0.0
        %2893 = vmatpush2.msra.mxu0 0.0
        %2894 = vmatprep.subr.mxu0 0.0
        %2895 = vmatpush2.msra.mxu0 0.0
        %2896 = vmatprep.subr.mxu0 0.0
        %2897 = vmatpush2.msra.mxu0 0.0
        %2898 = vmatprep.subr.mxu0 0.0
        %2899 = vmatpush2.msra.mxu0 0.0
        %2900 = vmatprep.subr.mxu0 0.0
        %2901 = vmatpush2.msra.mxu0 0.0
        %2902 = vmatprep.subr.mxu0 0.0
        %2903 = vmatpush2.msra.mxu0 0.0
        %2904 = vmatprep.subr.mxu0 0.0
        %2905 = vmatpush2.msra.mxu0 0.0
        %2906 = vmatprep.mubr.f32.mxu0 0.0
        %2907 = vmatmul.mubr.f32.gmra.mxu0 %v2840
        %v2908 = vpop.f32.mrf.mxu0
        %v2909 = vadd.f32 0.0, %v2908
        %v2910 = vpop.f32.mrf.mxu0
        %2911 = vdwg.mxu0
        %v2912 = vadd.f32 %v2424, %v2909
        %s2913 = scalar_lea.vmem %s5, 96
        %v2914 = vld [vmem:[%s2913] sm:$0xff]
        %v2915 = vld [vmem:[%s2913 + $0x8] sm:$0xff]
        %v2916 = vld [vmem:[%s2913 + $0x10] sm:$0xff]
        %v2917 = vld [vmem:[%s2913 + $0x18] sm:$0xff]
        %s2918 = scalar_lea.vmem %s11, 3
        %v2919 = vld [vmem:[%s2918] sm:$0x1]
        %v2921 = vlaneseq
        %v2922 = vshrl.u32 %v2921, 7
        %v2923 = vsub.s32 0, %v2922
        %v2924 = vrot.slane %v2919, %v2923
        %2926 = vmatprep.subr.mxu0 0.0
        %2927 = vmatpush1.msra.mxu0 0.0
        %2928 = vmatprep.subr.mxu0 0.0
        %2929 = vmatpush1.msra.mxu0 0.0
        %2930 = vmatprep.subr.mxu0 0.0
        %2931 = vmatpush1.msra.mxu0 0.0
        %2932 = vmatprep.subr.mxu0 0.0
        %2933 = vmatpush1.msra.mxu0 0.0
        %2934 = vmatprep.subr.mxu0 0.0
        %2935 = vmatpush1.msra.mxu0 0.0
        %2936 = vmatprep.subr.mxu0 0.0
        %2937 = vmatpush1.msra.mxu0 0.0
        %2938 = vmatprep.subr.mxu0 0.0
        %2939 = vmatpush1.msra.mxu0 0.0
        %2940 = vmatprep.subr.mxu0 0.0
        %2941 = vmatpush1.msra.mxu0 0.0
        %2942 = vmatprep.subr.mxu0 0.0
        %2943 = vmatpush1.msra.mxu0 0.0
        %2944 = vmatprep.subr.mxu0 0.0
        %2945 = vmatpush1.msra.mxu0 0.0
        %2946 = vmatprep.subr.mxu0 0.0
        %2947 = vmatpush1.msra.mxu0 0.0
        %2948 = vmatprep.subr.mxu0 0.0
        %2949 = vmatpush1.msra.mxu0 0.0
        %2950 = vmatprep.subr.mxu0 0.0
        %2951 = vmatpush1.msra.mxu0 %v2917
        %2952 = vmatprep.subr.mxu0 0.0
        %2953 = vmatpush1.msra.mxu0 %v2916
        %2954 = vmatprep.subr.mxu0 0.0
        %2955 = vmatpush1.msra.mxu0 %v2915
        %2956 = vmatprep.subr.mxu0 0.0
        %2957 = vmatpush1.msra.mxu0 %v2914
        %2958 = vmatprep.subr.mxu0 0.0
        %2959 = vmatpush2.msra.mxu0 0.0
        %2960 = vmatprep.subr.mxu0 0.0
        %2961 = vmatpush2.msra.mxu0 0.0
        %2962 = vmatprep.subr.mxu0 0.0
        %2963 = vmatpush2.msra.mxu0 0.0
        %2964 = vmatprep.subr.mxu0 0.0
        %2965 = vmatpush2.msra.mxu0 0.0
        %2966 = vmatprep.subr.mxu0 0.0
        %2967 = vmatpush2.msra.mxu0 0.0
        %2968 = vmatprep.subr.mxu0 0.0
        %2969 = vmatpush2.msra.mxu0 0.0
        %2970 = vmatprep.subr.mxu0 0.0
        %2971 = vmatpush2.msra.mxu0 0.0
        %2972 = vmatprep.subr.mxu0 0.0
        %2973 = vmatpush2.msra.mxu0 0.0
        %2974 = vmatprep.subr.mxu0 0.0
        %2975 = vmatpush2.msra.mxu0 0.0
        %2976 = vmatprep.subr.mxu0 0.0
        %2977 = vmatpush2.msra.mxu0 0.0
        %2978 = vmatprep.subr.mxu0 0.0
        %2979 = vmatpush2.msra.mxu0 0.0
        %2980 = vmatprep.subr.mxu0 0.0
        %2981 = vmatpush2.msra.mxu0 0.0
        %2982 = vmatprep.subr.mxu0 0.0
        %2983 = vmatpush2.msra.mxu0 0.0
        %2984 = vmatprep.subr.mxu0 0.0
        %2985 = vmatpush2.msra.mxu0 0.0
        %2986 = vmatprep.subr.mxu0 0.0
        %2987 = vmatpush2.msra.mxu0 0.0
        %2988 = vmatprep.subr.mxu0 0.0
        %2989 = vmatpush2.msra.mxu0 0.0
        %2990 = vmatprep.mubr.f32.mxu0 0.0
        %2991 = vmatmul.mubr.f32.gmra.mxu0 %v1472
        %v2992 = vpop.f32.mrf.mxu0
        %v2993 = vadd.f32 %v2924, %v2992
        %v2994 = vpop.f32.mrf.mxu0
        %2995 = vdwg.mxu0
        %s2996 = scalar_lea.vmem %s7, 96
        %v2997 = vld [vmem:[%s2996] sm:$0xff]
        %v2998 = vld [vmem:[%s2996 + $0x8] sm:$0xff]
        %v2999 = vld [vmem:[%s2996 + $0x10] sm:$0xff]
        %v3000 = vld [vmem:[%s2996 + $0x18] sm:$0xff]
        %s3001 = scalar_lea.vmem %s13, 3
        %v3002 = vld [vmem:[%s3001] sm:$0x1]
        %v3004 = vlaneseq
        %v3005 = vshrl.u32 %v3004, 7
        %v3006 = vsub.s32 0, %v3005
        %v3007 = vrot.slane %v3002, %v3006
        %3009 = vmatprep.subr.mxu0 0.0
        %3010 = vmatpush1.msra.mxu0 0.0
        %3011 = vmatprep.subr.mxu0 0.0
        %3012 = vmatpush1.msra.mxu0 0.0
        %3013 = vmatprep.subr.mxu0 0.0
        %3014 = vmatpush1.msra.mxu0 0.0
        %3015 = vmatprep.subr.mxu0 0.0
        %3016 = vmatpush1.msra.mxu0 0.0
        %3017 = vmatprep.subr.mxu0 0.0
        %3018 = vmatpush1.msra.mxu0 0.0
        %3019 = vmatprep.subr.mxu0 0.0
        %3020 = vmatpush1.msra.mxu0 0.0
        %3021 = vmatprep.subr.mxu0 0.0
        %3022 = vmatpush1.msra.mxu0 0.0
        %3023 = vmatprep.subr.mxu0 0.0
        %3024 = vmatpush1.msra.mxu0 0.0
        %3025 = vmatprep.subr.mxu0 0.0
        %3026 = vmatpush1.msra.mxu0 0.0
        %3027 = vmatprep.subr.mxu0 0.0
        %3028 = vmatpush1.msra.mxu0 0.0
        %3029 = vmatprep.subr.mxu0 0.0
        %3030 = vmatpush1.msra.mxu0 0.0
        %3031 = vmatprep.subr.mxu0 0.0
        %3032 = vmatpush1.msra.mxu0 0.0
        %3033 = vmatprep.subr.mxu0 0.0
        %3034 = vmatpush1.msra.mxu0 %v3000
        %3035 = vmatprep.subr.mxu0 0.0
        %3036 = vmatpush1.msra.mxu0 %v2999
        %3037 = vmatprep.subr.mxu0 0.0
        %3038 = vmatpush1.msra.mxu0 %v2998
        %3039 = vmatprep.subr.mxu0 0.0
        %3040 = vmatpush1.msra.mxu0 %v2997
        %3041 = vmatprep.subr.mxu0 0.0
        %3042 = vmatpush2.msra.mxu0 0.0
        %3043 = vmatprep.subr.mxu0 0.0
        %3044 = vmatpush2.msra.mxu0 0.0
        %3045 = vmatprep.subr.mxu0 0.0
        %3046 = vmatpush2.msra.mxu0 0.0
        %3047 = vmatprep.subr.mxu0 0.0
        %3048 = vmatpush2.msra.mxu0 0.0
        %3049 = vmatprep.subr.mxu0 0.0
        %3050 = vmatpush2.msra.mxu0 0.0
        %3051 = vmatprep.subr.mxu0 0.0
        %3052 = vmatpush2.msra.mxu0 0.0
        %3053 = vmatprep.subr.mxu0 0.0
        %3054 = vmatpush2.msra.mxu0 0.0
        %3055 = vmatprep.subr.mxu0 0.0
        %3056 = vmatpush2.msra.mxu0 0.0
        %3057 = vmatprep.subr.mxu0 0.0
        %3058 = vmatpush2.msra.mxu0 0.0
        %3059 = vmatprep.subr.mxu0 0.0
        %3060 = vmatpush2.msra.mxu0 0.0
        %3061 = vmatprep.subr.mxu0 0.0
        %3062 = vmatpush2.msra.mxu0 0.0
        %3063 = vmatprep.subr.mxu0 0.0
        %3064 = vmatpush2.msra.mxu0 0.0
        %3065 = vmatprep.subr.mxu0 0.0
        %3066 = vmatpush2.msra.mxu0 0.0
        %3067 = vmatprep.subr.mxu0 0.0
        %3068 = vmatpush2.msra.mxu0 0.0
        %3069 = vmatprep.subr.mxu0 0.0
        %3070 = vmatpush2.msra.mxu0 0.0
        %3071 = vmatprep.subr.mxu0 0.0
        %3072 = vmatpush2.msra.mxu0 0.0
        %3073 = vmatprep.mubr.f32.mxu0 0.0
        %3074 = vmatmul.mubr.f32.gmra.mxu0 %v1472
        %v3075 = vpop.f32.mrf.mxu0
        %v3076 = vadd.f32 %v3007, %v3075
        %v3077 = vpop.f32.mrf.mxu0
        %3078 = vdwg.mxu0
        %s3079 = scalar_lea.vmem %s9, 96
        %v3080 = vld [vmem:[%s3079] sm:$0xff]
        %v3081 = vld [vmem:[%s3079 + $0x8] sm:$0xff]
        %v3082 = vld [vmem:[%s3079 + $0x10] sm:$0xff]
        %v3083 = vld [vmem:[%s3079 + $0x18] sm:$0xff]
        %s3084 = scalar_lea.vmem %s15, 3
        %v3085 = vld [vmem:[%s3084] sm:$0x1]
        %v3087 = vlaneseq
        %v3088 = vshrl.u32 %v3087, 7
        %v3089 = vsub.s32 0, %v3088
        %v3090 = vrot.slane %v3085, %v3089
        %3092 = vmatprep.subr.mxu0 0.0
        %3093 = vmatpush1.msra.mxu0 0.0
        %3094 = vmatprep.subr.mxu0 0.0
        %3095 = vmatpush1.msra.mxu0 0.0
        %3096 = vmatprep.subr.mxu0 0.0
        %3097 = vmatpush1.msra.mxu0 0.0
        %3098 = vmatprep.subr.mxu0 0.0
        %3099 = vmatpush1.msra.mxu0 0.0
        %3100 = vmatprep.subr.mxu0 0.0
        %3101 = vmatpush1.msra.mxu0 0.0
        %3102 = vmatprep.subr.mxu0 0.0
        %3103 = vmatpush1.msra.mxu0 0.0
        %3104 = vmatprep.subr.mxu0 0.0
        %3105 = vmatpush1.msra.mxu0 0.0
        %3106 = vmatprep.subr.mxu0 0.0
        %3107 = vmatpush1.msra.mxu0 0.0
        %3108 = vmatprep.subr.mxu0 0.0
        %3109 = vmatpush1.msra.mxu0 0.0
        %3110 = vmatprep.subr.mxu0 0.0
        %3111 = vmatpush1.msra.mxu0 0.0
        %3112 = vmatprep.subr.mxu0 0.0
        %3113 = vmatpush1.msra.mxu0 0.0
        %3114 = vmatprep.subr.mxu0 0.0
        %3115 = vmatpush1.msra.mxu0 0.0
        %3116 = vmatprep.subr.mxu0 0.0
        %3117 = vmatpush1.msra.mxu0 %v3083
        %3118 = vmatprep.subr.mxu0 0.0
        %3119 = vmatpush1.msra.mxu0 %v3082
        %3120 = vmatprep.subr.mxu0 0.0
        %3121 = vmatpush1.msra.mxu0 %v3081
        %3122 = vmatprep.subr.mxu0 0.0
        %3123 = vmatpush1.msra.mxu0 %v3080
        %3124 = vmatprep.subr.mxu0 0.0
        %3125 = vmatpush2.msra.mxu0 0.0
        %3126 = vmatprep.subr.mxu0 0.0
        %3127 = vmatpush2.msra.mxu0 0.0
        %3128 = vmatprep.subr.mxu0 0.0
        %3129 = vmatpush2.msra.mxu0 0.0
        %3130 = vmatprep.subr.mxu0 0.0
        %3131 = vmatpush2.msra.mxu0 0.0
        %3132 = vmatprep.subr.mxu0 0.0
        %3133 = vmatpush2.msra.mxu0 0.0
        %3134 = vmatprep.subr.mxu0 0.0
        %3135 = vmatpush2.msra.mxu0 0.0
        %3136 = vmatprep.subr.mxu0 0.0
        %3137 = vmatpush2.msra.mxu0 0.0
        %3138 = vmatprep.subr.mxu0 0.0
        %3139 = vmatpush2.msra.mxu0 0.0
        %3140 = vmatprep.subr.mxu0 0.0
        %3141 = vmatpush2.msra.mxu0 0.0
        %3142 = vmatprep.subr.mxu0 0.0
        %3143 = vmatpush2.msra.mxu0 0.0
        %3144 = vmatprep.subr.mxu0 0.0
        %3145 = vmatpush2.msra.mxu0 0.0
        %3146 = vmatprep.subr.mxu0 0.0
        %3147 = vmatpush2.msra.mxu0 0.0
        %3148 = vmatprep.subr.mxu0 0.0
        %3149 = vmatpush2.msra.mxu0 0.0
        %3150 = vmatprep.subr.mxu0 0.0
        %3151 = vmatpush2.msra.mxu0 0.0
        %3152 = vmatprep.subr.mxu0 0.0
        %3153 = vmatpush2.msra.mxu0 0.0
        %3154 = vmatprep.subr.mxu0 0.0
        %3155 = vmatpush2.msra.mxu0 0.0
        %3156 = vmatprep.mubr.f32.mxu0 0.0
        %3157 = vmatmul.mubr.f32.gmra.mxu0 %v1472
        %v3158 = vpop.f32.mrf.mxu0
        %v3159 = vadd.f32 %v3090, %v3158
        %v3160 = vpop.f32.mrf.mxu0
        %3161 = vdwg.mxu0
        %v3163 = vsel %vm1706, %v2993, 0
        %v3166 = vsel %vm1706, %v3076, 0
        %3168 = vmatprep.subr.mxu0 0.0
        %3169 = vmatpush1.xpose.msra.mxu0 0.0
        %3170 = vmatprep.subr.mxu0 0.0
        %3171 = vmatpush1.xpose.msra.mxu0 0.0
        %3172 = vmatprep.subr.mxu0 0.0
        %3173 = vmatpush1.xpose.msra.mxu0 0.0
        %3174 = vmatprep.subr.mxu0 0.0
        %3175 = vmatpush1.xpose.msra.mxu0 0.0
        %3176 = vmatprep.subr.mxu0 0.0
        %3177 = vmatpush1.xpose.msra.mxu0 0.0
        %3178 = vmatprep.subr.mxu0 0.0
        %3179 = vmatpush1.xpose.msra.mxu0 0.0
        %3180 = vmatprep.subr.mxu0 0.0
        %3181 = vmatpush1.xpose.msra.mxu0 0.0
        %3182 = vmatprep.subr.mxu0 0.0
        %3183 = vmatpush1.xpose.msra.mxu0 0.0
        %3184 = vmatprep.subr.mxu0 0.0
        %3185 = vmatpush1.xpose.msra.mxu0 0.0
        %3186 = vmatprep.subr.mxu0 0.0
        %3187 = vmatpush1.xpose.msra.mxu0 0.0
        %3188 = vmatprep.subr.mxu0 0.0
        %3189 = vmatpush1.xpose.msra.mxu0 0.0
        %3190 = vmatprep.subr.mxu0 0.0
        %3191 = vmatpush1.xpose.msra.mxu0 0.0
        %3192 = vmatprep.subr.mxu0 0.0
        %3193 = vmatpush1.xpose.msra.mxu0 0.0
        %3194 = vmatprep.subr.mxu0 0.0
        %3195 = vmatpush1.xpose.msra.mxu0 0.0
        %3196 = vmatprep.subr.mxu0 0.0
        %3197 = vmatpush1.xpose.msra.mxu0 0.0
        %3198 = vmatprep.subr.mxu0 0.0
        %3199 = vmatpush1.xpose.msra.mxu0 %v3166
        %3200 = vmatprep.subr.mxu0 0.0
        %3201 = vmatpush2.xpose.msra.mxu0 0.0
        %3202 = vmatprep.subr.mxu0 0.0
        %3203 = vmatpush2.xpose.msra.mxu0 0.0
        %3204 = vmatprep.subr.mxu0 0.0
        %3205 = vmatpush2.xpose.msra.mxu0 0.0
        %3206 = vmatprep.subr.mxu0 0.0
        %3207 = vmatpush2.xpose.msra.mxu0 0.0
        %3208 = vmatprep.subr.mxu0 0.0
        %3209 = vmatpush2.xpose.msra.mxu0 0.0
        %3210 = vmatprep.subr.mxu0 0.0
        %3211 = vmatpush2.xpose.msra.mxu0 0.0
        %3212 = vmatprep.subr.mxu0 0.0
        %3213 = vmatpush2.xpose.msra.mxu0 0.0
        %3214 = vmatprep.subr.mxu0 0.0
        %3215 = vmatpush2.xpose.msra.mxu0 0.0
        %3216 = vmatprep.subr.mxu0 0.0
        %3217 = vmatpush2.xpose.msra.mxu0 0.0
        %3218 = vmatprep.subr.mxu0 0.0
        %3219 = vmatpush2.xpose.msra.mxu0 0.0
        %3220 = vmatprep.subr.mxu0 0.0
        %3221 = vmatpush2.xpose.msra.mxu0 0.0
        %3222 = vmatprep.subr.mxu0 0.0
        %3223 = vmatpush2.xpose.msra.mxu0 0.0
        %3224 = vmatprep.subr.mxu0 0.0
        %3225 = vmatpush2.xpose.msra.mxu0 0.0
        %3226 = vmatprep.subr.mxu0 0.0
        %3227 = vmatpush2.xpose.msra.mxu0 0.0
        %3228 = vmatprep.subr.mxu0 0.0
        %3229 = vmatpush2.xpose.msra.mxu0 0.0
        %3230 = vmatprep.subr.mxu0 0.0
        %3231 = vmatpush2.xpose.msra.mxu0 0.0
        %3232 = vmatprep.mubr.f32.mxu0 0.0
        %3233 = vmatmul.mubr.f32.gmra.mxu0 %v3163
        %v3234 = vpop.f32.mrf.mxu0
        %v3235 = vadd.f32 0.0, %v3234
        %v3236 = vpop.f32.mrf.mxu0
        %3237 = vdwg.mxu0
        %v3238 = vmul.f32 %v3235, 0.35355338
        %v3239 = vsel %vm1706, %v3238, -inf
        %3240 = vmax.xlane.f32.xlu0 %v3239
        %v3241 = vpop.xlane.xlu0 %3240
        %v3242 = vsub.f32 %v3238, %v3241
        %v3243 = vmul.f32 %v3242, 1.442695
        %v3244 = vpow.pop %v3243
        %v3245 = vsel %vm1706, %v3244, 0.0
        %3246 = vadd.xlane.f32.xlu0 %v3245
        %v3247 = vpop.xlane.xlu0 %3246
        %v3248 = vrcp.pop %v3247
        %v3249 = vmul.f32 %v3244, %v3248
        %v3251 = vsel %vm1706, %v3249, 0
        %3253 = vmatprep.subr.mxu0 0.0
        %3254 = vmatpush1.msra.mxu0 0.0
        %3255 = vmatprep.subr.mxu0 0.0
        %3256 = vmatpush1.msra.mxu0 0.0
        %3257 = vmatprep.subr.mxu0 0.0
        %3258 = vmatpush1.msra.mxu0 0.0
        %3259 = vmatprep.subr.mxu0 0.0
        %3260 = vmatpush1.msra.mxu0 0.0
        %3261 = vmatprep.subr.mxu0 0.0
        %3262 = vmatpush1.msra.mxu0 0.0
        %3263 = vmatprep.subr.mxu0 0.0
        %3264 = vmatpush1.msra.mxu0 0.0
        %3265 = vmatprep.subr.mxu0 0.0
        %3266 = vmatpush1.msra.mxu0 0.0
        %3267 = vmatprep.subr.mxu0 0.0
        %3268 = vmatpush1.msra.mxu0 0.0
        %3269 = vmatprep.subr.mxu0 0.0
        %3270 = vmatpush1.msra.mxu0 0.0
        %3271 = vmatprep.subr.mxu0 0.0
        %3272 = vmatpush1.msra.mxu0 0.0
        %3273 = vmatprep.subr.mxu0 0.0
        %3274 = vmatpush1.msra.mxu0 0.0
        %3275 = vmatprep.subr.mxu0 0.0
        %3276 = vmatpush1.msra.mxu0 0.0
        %3277 = vmatprep.subr.mxu0 0.0
        %3278 = vmatpush1.msra.mxu0 0.0
        %3279 = vmatprep.subr.mxu0 0.0
        %3280 = vmatpush1.msra.mxu0 0.0
        %3281 = vmatprep.subr.mxu0 0.0
        %3282 = vmatpush1.msra.mxu0 0.0
        %3283 = vmatprep.subr.mxu0 0.0
        %3284 = vmatpush1.msra.mxu0 %v3159
        %3285 = vmatprep.subr.mxu0 0.0
        %3286 = vmatpush2.msra.mxu0 0.0
        %3287 = vmatprep.subr.mxu0 0.0
        %3288 = vmatpush2.msra.mxu0 0.0
        %3289 = vmatprep.subr.mxu0 0.0
        %3290 = vmatpush2.msra.mxu0 0.0
        %3291 = vmatprep.subr.mxu0 0.0
        %3292 = vmatpush2.msra.mxu0 0.0
        %3293 = vmatprep.subr.mxu0 0.0
        %3294 = vmatpush2.msra.mxu0 0.0
        %3295 = vmatprep.subr.mxu0 0.0
        %3296 = vmatpush2.msra.mxu0 0.0
        %3297 = vmatprep.subr.mxu0 0.0
        %3298 = vmatpush2.msra.mxu0 0.0
        %3299 = vmatprep.subr.mxu0 0.0
        %3300 = vmatpush2.msra.mxu0 0.0
        %3301 = vmatprep.subr.mxu0 0.0
        %3302 = vmatpush2.msra.mxu0 0.0
        %3303 = vmatprep.subr.mxu0 0.0
        %3304 = vmatpush2.msra.mxu0 0.0
        %3305 = vmatprep.subr.mxu0 0.0
        %3306 = vmatpush2.msra.mxu0 0.0
        %3307 = vmatprep.subr.mxu0 0.0
        %3308 = vmatpush2.msra.mxu0 0.0
        %3309 = vmatprep.subr.mxu0 0.0
        %3310 = vmatpush2.msra.mxu0 0.0
        %3311 = vmatprep.subr.mxu0 0.0
        %3312 = vmatpush2.msra.mxu0 0.0
        %3313 = vmatprep.subr.mxu0 0.0
        %3314 = vmatpush2.msra.mxu0 0.0
        %3315 = vmatprep.subr.mxu0 0.0
        %3316 = vmatpush2.msra.mxu0 0.0
        %3317 = vmatprep.mubr.f32.mxu0 0.0
        %3318 = vmatmul.mubr.f32.gmra.mxu0 %v3251
        %v3319 = vpop.f32.mrf.mxu0
        %v3320 = vadd.f32 0.0, %v3319
        %v3321 = vpop.f32.mrf.mxu0
        %3322 = vdwg.mxu0
        %s3323 = scalar_lea.vmem %s17, 24
        %v3324 = vld [vmem:[%s3323] sm:$0xff]
        %v3326 = vsel %vm1706, %v3320, 0
        %3328 = vmatprep.subr.mxu0 0.0
        %3329 = vmatpush1.msra.mxu0 0.0
        %3330 = vmatprep.subr.mxu0 0.0
        %3331 = vmatpush1.msra.mxu0 0.0
        %3332 = vmatprep.subr.mxu0 0.0
        %3333 = vmatpush1.msra.mxu0 0.0
        %3334 = vmatprep.subr.mxu0 0.0
        %3335 = vmatpush1.msra.mxu0 0.0
        %3336 = vmatprep.subr.mxu0 0.0
        %3337 = vmatpush1.msra.mxu0 0.0
        %3338 = vmatprep.subr.mxu0 0.0
        %3339 = vmatpush1.msra.mxu0 0.0
        %3340 = vmatprep.subr.mxu0 0.0
        %3341 = vmatpush1.msra.mxu0 0.0
        %3342 = vmatprep.subr.mxu0 0.0
        %3343 = vmatpush1.msra.mxu0 0.0
        %3344 = vmatprep.subr.mxu0 0.0
        %3345 = vmatpush1.msra.mxu0 0.0
        %3346 = vmatprep.subr.mxu0 0.0
        %3347 = vmatpush1.msra.mxu0 0.0
        %3348 = vmatprep.subr.mxu0 0.0
        %3349 = vmatpush1.msra.mxu0 0.0
        %3350 = vmatprep.subr.mxu0 0.0
        %3351 = vmatpush1.msra.mxu0 0.0
        %3352 = vmatprep.subr.mxu0 0.0
        %3353 = vmatpush1.msra.mxu0 0.0
        %3354 = vmatprep.subr.mxu0 0.0
        %3355 = vmatpush1.msra.mxu0 0.0
        %3356 = vmatprep.subr.mxu0 0.0
        %3357 = vmatpush1.msra.mxu0 0.0
        %3358 = vmatprep.subr.mxu0 0.0
        %3359 = vmatpush1.msra.mxu0 %v3324
        %3360 = vmatprep.subr.mxu0 0.0
        %3361 = vmatpush2.msra.mxu0 0.0
        %3362 = vmatprep.subr.mxu0 0.0
        %3363 = vmatpush2.msra.mxu0 0.0
        %3364 = vmatprep.subr.mxu0 0.0
        %3365 = vmatpush2.msra.mxu0 0.0
        %3366 = vmatprep.subr.mxu0 0.0
        %3367 = vmatpush2.msra.mxu0 0.0
        %3368 = vmatprep.subr.mxu0 0.0
        %3369 = vmatpush2.msra.mxu0 0.0
        %3370 = vmatprep.subr.mxu0 0.0
        %3371 = vmatpush2.msra.mxu0 0.0
        %3372 = vmatprep.subr.mxu0 0.0
        %3373 = vmatpush2.msra.mxu0 0.0
        %3374 = vmatprep.subr.mxu0 0.0
        %3375 = vmatpush2.msra.mxu0 0.0
        %3376 = vmatprep.subr.mxu0 0.0
        %3377 = vmatpush2.msra.mxu0 0.0
        %3378 = vmatprep.subr.mxu0 0.0
        %3379 = vmatpush2.msra.mxu0 0.0
        %3380 = vmatprep.subr.mxu0 0.0
        %3381 = vmatpush2.msra.mxu0 0.0
        %3382 = vmatprep.subr.mxu0 0.0
        %3383 = vmatpush2.msra.mxu0 0.0
        %3384 = vmatprep.subr.mxu0 0.0
        %3385 = vmatpush2.msra.mxu0 0.0
        %3386 = vmatprep.subr.mxu0 0.0
        %3387 = vmatpush2.msra.mxu0 0.0
        %3388 = vmatprep.subr.mxu0 0.0
        %3389 = vmatpush2.msra.mxu0 0.0
        %3390 = vmatprep.subr.mxu0 0.0
        %3391 = vmatpush2.msra.mxu0 0.0
        %3392 = vmatprep.mubr.f32.mxu0 0.0
        %3393 = vmatmul.mubr.f32.gmra.mxu0 %v3326
        %v3394 = vpop.f32.mrf.mxu0
        %v3395 = vadd.f32 0.0, %v3394
        %v3396 = vpop.f32.mrf.mxu0
        %3397 = vdwg.mxu0
        %v3398 = vadd.f32 %v2912, %v3395
        %v3399 = vld [vmem:[%s19] sm:$0x1]
        %v3401 = vlaneseq
        %v3402 = vshrl.u32 %v3401, 7
        %v3403 = vsub.s32 0, %v3402
        %v3404 = vrot.slane %v3399, %v3403
        %v3406 = vadd.f32 %v3398, %v3404
        %v3407 = vadd.f32 %v1457, %v3406
        %v3408 = vld [vmem:[%s29] sm:$0x1]
        %v3409 = vld [vmem:[%s31] sm:$0x1]
        %v3410 = vsel %vm1470, %v3407, 0.0
        %3411 = vadd.xlane.f32.xlu0 %v3410
        %v3412 = vpop.xlane.xlu0 %3411
        %v3413 = vrcp.pop 32.0
        %v3414 = vmul.f32 %v3412, %v3413
        %v3415 = vsub.f32 %v3407, %v3414
        %v3416 = vmul.f32 %v3415, %v3415
        %v3417 = vsel %vm1470, %v3416, 0.0
        %3418 = vadd.xlane.f32.xlu0 %v3417
        %v3419 = vpop.xlane.xlu0 %3418
        %v3420 = vmul.f32 %v3419, %v3413
        %v3421 = vadd.f32 %v3420, 1e-05
        %v3422 = vrsqrt.pop %v3421
        %v3423 = vmul.f32 %v3415, %v3422
        %v3425 = vlaneseq
        %v3426 = vshrl.u32 %v3425, 7
        %v3427 = vsub.s32 0, %v3426
        %v3428 = vrot.slane %v3408, %v3427
        %v3430 = vmul.f32 %v3423, %v3428
        %v3432 = vlaneseq
        %v3433 = vshrl.u32 %v3432, 7
        %v3434 = vsub.s32 0, %v3433
        %v3435 = vrot.slane %v3409, %v3434
        %v3437 = vadd.f32 %v3430, %v3435
        %v3438 = vld [vmem:[%s21] sm:$0xff]
        %v3439 = vld [vmem:[%s21 + $0x8] sm:$0xff]
        %v3440 = vld [vmem:[%s21 + $0x10] sm:$0xff]
        %v3441 = vld [vmem:[%s21 + $0x18] sm:$0xff]
        %v3442 = vld [vmem:[%s23] sm:$0x1]
        %v3444 = vsel %vm1470, %v1458, 0
        %3446 = vmatprep.subr.mxu0 0.0
        %3447 = vmatpush1.msra.mxu0 0.0
        %3448 = vmatprep.subr.mxu0 0.0
        %3449 = vmatpush1.msra.mxu0 0.0
        %3450 = vmatprep.subr.mxu0 0.0
        %3451 = vmatpush1.msra.mxu0 0.0
        %3452 = vmatprep.subr.mxu0 0.0
        %3453 = vmatpush1.msra.mxu0 0.0
        %3454 = vmatprep.subr.mxu0 0.0
        %3455 = vmatpush1.msra.mxu0 0.0
        %3456 = vmatprep.subr.mxu0 0.0
        %3457 = vmatpush1.msra.mxu0 0.0
        %3458 = vmatprep.subr.mxu0 0.0
        %3459 = vmatpush1.msra.mxu0 0.0
        %3460 = vmatprep.subr.mxu0 0.0
        %3461 = vmatpush1.msra.mxu0 0.0
        %3462 = vmatprep.subr.mxu0 0.0
        %3463 = vmatpush1.msra.mxu0 0.0
        %3464 = vmatprep.subr.mxu0 0.0
        %3465 = vmatpush1.msra.mxu0 0.0
        %3466 = vmatprep.subr.mxu0 0.0
        %3467 = vmatpush1.msra.mxu0 0.0
        %3468 = vmatprep.subr.mxu0 0.0
        %3469 = vmatpush1.msra.mxu0 0.0
        %3470 = vmatprep.subr.mxu0 0.0
        %3471 = vmatpush1.msra.mxu0 %v3441
        %3472 = vmatprep.subr.mxu0 0.0
        %3473 = vmatpush1.msra.mxu0 %v3440
        %3474 = vmatprep.subr.mxu0 0.0
        %3475 = vmatpush1.msra.mxu0 %v3439
        %3476 = vmatprep.subr.mxu0 0.0
        %3477 = vmatpush1.msra.mxu0 %v3438
        %3478 = vmatprep.subr.mxu0 0.0
        %3479 = vmatpush2.msra.mxu0 0.0
        %3480 = vmatprep.subr.mxu0 0.0
        %3481 = vmatpush2.msra.mxu0 0.0
        %3482 = vmatprep.subr.mxu0 0.0
        %3483 = vmatpush2.msra.mxu0 0.0
        %3484 = vmatprep.subr.mxu0 0.0
        %3485 = vmatpush2.msra.mxu0 0.0
        %3486 = vmatprep.subr.mxu0 0.0
        %3487 = vmatpush2.msra.mxu0 0.0
        %3488 = vmatprep.subr.mxu0 0.0
        %3489 = vmatpush2.msra.mxu0 0.0
        %3490 = vmatprep.subr.mxu0 0.0
        %3491 = vmatpush2.msra.mxu0 0.0
        %3492 = vmatprep.subr.mxu0 0.0
        %3493 = vmatpush2.msra.mxu0 0.0
        %3494 = vmatprep.subr.mxu0 0.0
        %3495 = vmatpush2.msra.mxu0 0.0
        %3496 = vmatprep.subr.mxu0 0.0
        %3497 = vmatpush2.msra.mxu0 0.0
        %3498 = vmatprep.subr.mxu0 0.0
        %3499 = vmatpush2.msra.mxu0 0.0
        %3500 = vmatprep.subr.mxu0 0.0
        %3501 = vmatpush2.msra.mxu0 0.0
        %3502 = vmatprep.subr.mxu0 0.0
        %3503 = vmatpush2.msra.mxu0 0.0
        %3504 = vmatprep.subr.mxu0 0.0
        %3505 = vmatpush2.msra.mxu0 0.0
        %3506 = vmatprep.subr.mxu0 0.0
        %3507 = vmatpush2.msra.mxu0 0.0
        %3508 = vmatprep.subr.mxu0 0.0
        %3509 = vmatpush2.msra.mxu0 0.0
        %3510 = vmatprep.mubr.f32.mxu0 0.0
        %3511 = vmatmul.mubr.f32.gmra.mxu0 %v3444
        %v3512 = vpop.f32.mrf.mxu0
        %v3513 = vadd.f32 %v3442, %v3512
        %v3514 = vpop.f32.mrf.mxu0
        %3515 = vdwg.mxu0
        %v3516 = vld [vmem:[%s25] sm:$0xff]
        %v3517 = vld [vmem:[%s25 + $0x8] sm:$0xff]
        %v3518 = vld [vmem:[%s25 + $0x10] sm:$0xff]
        %v3519 = vld [vmem:[%s25 + $0x18] sm:$0xff]
        %v3520 = vld [vmem:[%s27] sm:$0x1]
        %v3522 = vsel %vm1470, %v3513, 0
        %3524 = vmatprep.subr.mxu0 0.0
        %3525 = vmatpush1.msra.mxu0 0.0
        %3526 = vmatprep.subr.mxu0 0.0
        %3527 = vmatpush1.msra.mxu0 0.0
        %3528 = vmatprep.subr.mxu0 0.0
        %3529 = vmatpush1.msra.mxu0 0.0
        %3530 = vmatprep.subr.mxu0 0.0
        %3531 = vmatpush1.msra.mxu0 0.0
        %3532 = vmatprep.subr.mxu0 0.0
        %3533 = vmatpush1.msra.mxu0 0.0
        %3534 = vmatprep.subr.mxu0 0.0
        %3535 = vmatpush1.msra.mxu0 0.0
        %3536 = vmatprep.subr.mxu0 0.0
        %3537 = vmatpush1.msra.mxu0 0.0
        %3538 = vmatprep.subr.mxu0 0.0
        %3539 = vmatpush1.msra.mxu0 0.0
        %3540 = vmatprep.subr.mxu0 0.0
        %3541 = vmatpush1.msra.mxu0 0.0
        %3542 = vmatprep.subr.mxu0 0.0
        %3543 = vmatpush1.msra.mxu0 0.0
        %3544 = vmatprep.subr.mxu0 0.0
        %3545 = vmatpush1.msra.mxu0 0.0
        %3546 = vmatprep.subr.mxu0 0.0
        %3547 = vmatpush1.msra.mxu0 0.0
        %3548 = vmatprep.subr.mxu0 0.0
        %3549 = vmatpush1.msra.mxu0 %v3519
        %3550 = vmatprep.subr.mxu0 0.0
        %3551 = vmatpush1.msra.mxu0 %v3518
        %3552 = vmatprep.subr.mxu0 0.0
        %3553 = vmatpush1.msra.mxu0 %v3517
        %3554 = vmatprep.subr.mxu0 0.0
        %3555 = vmatpush1.msra.mxu0 %v3516
        %3556 = vmatprep.subr.mxu0 0.0
        %3557 = vmatpush2.msra.mxu0 0.0
        %3558 = vmatprep.subr.mxu0 0.0
        %3559 = vmatpush2.msra.mxu0 0.0
        %3560 = vmatprep.subr.mxu0 0.0
        %3561 = vmatpush2.msra.mxu0 0.0
        %3562 = vmatprep.subr.mxu0 0.0
        %3563 = vmatpush2.msra.mxu0 0.0
        %3564 = vmatprep.subr.mxu0 0.0
        %3565 = vmatpush2.msra.mxu0 0.0
        %3566 = vmatprep.subr.mxu0 0.0
        %3567 = vmatpush2.msra.mxu0 0.0
        %3568 = vmatprep.subr.mxu0 0.0
        %3569 = vmatpush2.msra.mxu0 0.0
        %3570 = vmatprep.subr.mxu0 0.0
        %3571 = vmatpush2.msra.mxu0 0.0
        %3572 = vmatprep.subr.mxu0 0.0
        %3573 = vmatpush2.msra.mxu0 0.0
        %3574 = vmatprep.subr.mxu0 0.0
        %3575 = vmatpush2.msra.mxu0 0.0
        %3576 = vmatprep.subr.mxu0 0.0
        %3577 = vmatpush2.msra.mxu0 0.0
        %3578 = vmatprep.subr.mxu0 0.0
        %3579 = vmatpush2.msra.mxu0 0.0
        %3580 = vmatprep.subr.mxu0 0.0
        %3581 = vmatpush2.msra.mxu0 0.0
        %3582 = vmatprep.subr.mxu0 0.0
        %3583 = vmatpush2.msra.mxu0 0.0
        %3584 = vmatprep.subr.mxu0 0.0
        %3585 = vmatpush2.msra.mxu0 0.0
        %3586 = vmatprep.subr.mxu0 0.0
        %3587 = vmatpush2.msra.mxu0 0.0
        %3588 = vmatprep.mubr.f32.mxu0 0.0
        %3589 = vmatmul.mubr.f32.gmra.mxu0 %v3522
        %v3590 = vpop.f32.mrf.mxu0
        %v3591 = vadd.f32 %v3520, %v3590
        %v3592 = vpop.f32.mrf.mxu0
        %3593 = vdwg.mxu0
        %v3594 = vlaneseq
        %v3595 = vshrl.u32 %v3594, 7
        %v3596 = vsub.s32 0, %v3595
        %v3597 = vrot.slane %v3591, %v3596
        %v3598 = vadd.f32 %v3437, %v3597
        %v3599 = vld [vmem:[%s33] sm:$0x1]
        %v3600 = vld [vmem:[%s35] sm:$0x1]
        %v3601 = vsel %vm1470, %v3598, 0.0
        %3602 = vadd.xlane.f32.xlu0 %v3601
        %v3603 = vpop.xlane.xlu0 %3602
        %v3604 = vmul.f32 %v3603, %v3413
        %v3605 = vsub.f32 %v3598, %v3604
        %v3606 = vmul.f32 %v3605, %v3605
        %v3607 = vsel %vm1470, %v3606, 0.0
        %3608 = vadd.xlane.f32.xlu0 %v3607
        %v3609 = vpop.xlane.xlu0 %3608
        %v3610 = vmul.f32 %v3609, %v3413
        %v3611 = vadd.f32 %v3610, 1e-05
        %v3612 = vrsqrt.pop %v3611
        %v3613 = vmul.f32 %v3605, %v3612
        %v3615 = vlaneseq
        %v3616 = vshrl.u32 %v3615, 7
        %v3617 = vsub.s32 0, %v3616
        %v3618 = vrot.slane %v3599, %v3617
        %v3620 = vmul.f32 %v3613, %v3618
        %v3622 = vlaneseq
        %v3623 = vshrl.u32 %v3622, 7
        %v3624 = vsub.s32 0, %v3623
        %v3625 = vrot.slane %v3600, %v3624
        %v3627 = vadd.f32 %v3620, %v3625
        %v3628 = vld [vmem:[%s41] sm:$0xff]
        %v3629 = vld [vmem:[%s41 + $0x8] sm:$0xff]
        %v3630 = vld [vmem:[%s41 + $0x10] sm:$0xff]
        %v3631 = vld [vmem:[%s41 + $0x18] sm:$0xff]
        %v3632 = vld [vmem:[%s41 + $0x20] sm:$0xff]
        %v3633 = vld [vmem:[%s41 + $0x28] sm:$0xff]
        %v3634 = vld [vmem:[%s41 + $0x30] sm:$0xff]
        %v3635 = vld [vmem:[%s41 + $0x38] sm:$0xff]
        %v3636 = vld [vmem:[%s41 + $0x40] sm:$0xff]
        %v3637 = vld [vmem:[%s41 + $0x48] sm:$0xff]
        %v3638 = vld [vmem:[%s41 + $0x50] sm:$0xff]
        %v3639 = vld [vmem:[%s41 + $0x58] sm:$0xff]
        %v3640 = vld [vmem:[%s41 + $0x60] sm:$0xff]
        %v3641 = vld [vmem:[%s41 + $0x68] sm:$0xff]
        %v3642 = vld [vmem:[%s41 + $0x70] sm:$0xff]
        %v3643 = vld [vmem:[%s41 + $0x78] sm:$0xff]
        %v3644 = vld [vmem:[%s41 + $0x80] sm:$0xff]
        %v3645 = vld [vmem:[%s41 + $0x88] sm:$0xff]
        %v3646 = vld [vmem:[%s41 + $0x90] sm:$0xff]
        %v3647 = vld [vmem:[%s41 + $0x98] sm:$0xff]
        %v3648 = vld [vmem:[%s41 + $0xa0] sm:$0xff]
        %v3649 = vld [vmem:[%s41 + $0xa8] sm:$0xff]
        %v3650 = vld [vmem:[%s41 + $0xb0] sm:$0xff]
        %v3651 = vld [vmem:[%s41 + $0xb8] sm:$0xff]
        %v3652 = vld [vmem:[%s41 + $0xc0] sm:$0xff]
        %v3653 = vld [vmem:[%s41 + $0xc8] sm:$0xff]
        %v3654 = vld [vmem:[%s41 + $0xd0] sm:$0xff]
        %v3655 = vld [vmem:[%s41 + $0xd8] sm:$0xff]
        %v3656 = vld [vmem:[%s41 + $0xe0] sm:$0xff]
        %v3657 = vld [vmem:[%s41 + $0xe8] sm:$0xff]
        %v3658 = vld [vmem:[%s41 + $0xf0] sm:$0xff]
        %v3659 = vld [vmem:[%s41 + $0xf8] sm:$0xff]
        %v3660 = vld [vmem:[%s41 + $0x100] sm:$0xff]
        %v3661 = vld [vmem:[%s41 + $0x108] sm:$0xff]
        %v3662 = vld [vmem:[%s41 + $0x110] sm:$0xff]
        %v3663 = vld [vmem:[%s41 + $0x118] sm:$0xff]
        %v3664 = vld [vmem:[%s41 + $0x120] sm:$0xff]
        %v3665 = vld [vmem:[%s41 + $0x128] sm:$0xff]
        %v3666 = vld [vmem:[%s41 + $0x130] sm:$0xff]
        %v3667 = vld [vmem:[%s41 + $0x138] sm:$0xff]
        %v3668 = vld [vmem:[%s41 + $0x140] sm:$0xff]
        %v3669 = vld [vmem:[%s41 + $0x148] sm:$0xff]
        %v3670 = vld [vmem:[%s41 + $0x150] sm:$0xff]
        %v3671 = vld [vmem:[%s41 + $0x158] sm:$0xff]
        %v3672 = vld [vmem:[%s41 + $0x160] sm:$0xff]
        %v3673 = vld [vmem:[%s41 + $0x168] sm:$0xff]
        %v3674 = vld [vmem:[%s41 + $0x170] sm:$0xff]
        %v3675 = vld [vmem:[%s41 + $0x178] sm:$0xff]
        %v3676 = vld [vmem:[%s41 + $0x180] sm:$0xff]
        %v3677 = vld [vmem:[%s41 + $0x188] sm:$0xff]
        %v3678 = vld [vmem:[%s41 + $0x190] sm:$0xff]
        %v3679 = vld [vmem:[%s41 + $0x198] sm:$0xff]
        %v3680 = vld [vmem:[%s41 + $0x1a0] sm:$0xff]
        %v3681 = vld [vmem:[%s41 + $0x1a8] sm:$0xff]
        %v3682 = vld [vmem:[%s41 + $0x1b0] sm:$0xff]
        %v3683 = vld [vmem:[%s41 + $0x1b8] sm:$0xff]
        %v3684 = vld [vmem:[%s41 + $0x1c0] sm:$0xff]
        %v3685 = vld [vmem:[%s41 + $0x1c8] sm:$0xff]
        %v3686 = vld [vmem:[%s41 + $0x1d0] sm:$0xff]
        %v3687 = vld [vmem:[%s41 + $0x1d8] sm:$0xff]
        %v3688 = vld [vmem:[%s41 + $0x1e0] sm:$0xff]
        %v3689 = vld [vmem:[%s41 + $0x1e8] sm:$0xff]
        %v3690 = vld [vmem:[%s41 + $0x1f0] sm:$0xff]
        %v3691 = vld [vmem:[%s41 + $0x1f8] sm:$0xff]
        %v3692 = vld [vmem:[%s43] sm:$0xff]
        %v3693 = vld [vmem:[%s43 + $0x8] sm:$0xff]
        %v3696 = vlaneseq
        %v3697 = vshrl.u32 %v3696, 7
        %v3698 = vsub.s32 0, %v3697
        %v3699 = vrot.slane %v3692, %v3698
        %v3700 = vlaneseq
        %v3701 = vshrl.u32 %v3700, 7
        %v3702 = vsub.s32 1, %v3701
        %v3703 = vrot.slane %v3692, %v3702
        %v3704 = vlaneseq
        %v3705 = vshrl.u32 %v3704, 7
        %v3706 = vsub.s32 2, %v3705
        %v3707 = vrot.slane %v3692, %v3706
        %v3708 = vlaneseq
        %v3709 = vshrl.u32 %v3708, 7
        %v3710 = vsub.s32 3, %v3709
        %v3711 = vrot.slane %v3692, %v3710
        %v3712 = vlaneseq
        %v3713 = vshrl.u32 %v3712, 7
        %v3714 = vsub.s32 4, %v3713
        %v3715 = vrot.slane %v3692, %v3714
        %v3716 = vlaneseq
        %v3717 = vshrl.u32 %v3716, 7
        %v3718 = vsub.s32 5, %v3717
        %v3719 = vrot.slane %v3692, %v3718
        %v3720 = vlaneseq
        %v3721 = vshrl.u32 %v3720, 7
        %v3722 = vsub.s32 6, %v3721
        %v3723 = vrot.slane %v3692, %v3722
        %v3724 = vlaneseq
        %v3725 = vshrl.u32 %v3724, 7
        %v3726 = vsub.s32 7, %v3725
        %v3727 = vrot.slane %v3692, %v3726
        %v3728 = vlaneseq
        %v3729 = vshrl.u32 %v3728, 7
        %v3730 = vsub.s32 0, %v3729
        %v3731 = vrot.slane %v3693, %v3730
        %v3732 = vlaneseq
        %v3733 = vshrl.u32 %v3732, 7
        %v3734 = vsub.s32 1, %v3733
        %v3735 = vrot.slane %v3693, %v3734
        %v3736 = vlaneseq
        %v3737 = vshrl.u32 %v3736, 7
        %v3738 = vsub.s32 2, %v3737
        %v3739 = vrot.slane %v3693, %v3738
        %v3740 = vlaneseq
        %v3741 = vshrl.u32 %v3740, 7
        %v3742 = vsub.s32 3, %v3741
        %v3743 = vrot.slane %v3693, %v3742
        %v3744 = vlaneseq
        %v3745 = vshrl.u32 %v3744, 7
        %v3746 = vsub.s32 4, %v3745
        %v3747 = vrot.slane %v3693, %v3746
        %v3748 = vlaneseq
        %v3749 = vshrl.u32 %v3748, 7
        %v3750 = vsub.s32 5, %v3749
        %v3751 = vrot.slane %v3693, %v3750
        %v3752 = vlaneseq
        %v3753 = vshrl.u32 %v3752, 7
        %v3754 = vsub.s32 6, %v3753
        %v3755 = vrot.slane %v3693, %v3754
        %v3756 = vlaneseq
        %v3757 = vshrl.u32 %v3756, 7
        %v3758 = vsub.s32 7, %v3757
        %v3759 = vrot.slane %v3693, %v3758
        %v3777 = vsel %vm1470, %v3627, 0
        %3779 = vmatprep.subr.mxu0 0.0
        %3780 = vmatpush1.msra.mxu0 0.0
        %3781 = vmatprep.subr.mxu0 0.0
        %3782 = vmatpush1.msra.mxu0 0.0
        %3783 = vmatprep.subr.mxu0 0.0
        %3784 = vmatpush1.msra.mxu0 0.0
        %3785 = vmatprep.subr.mxu0 0.0
        %3786 = vmatpush1.msra.mxu0 0.0
        %3787 = vmatprep.subr.mxu0 0.0
        %3788 = vmatpush1.msra.mxu0 0.0
        %3789 = vmatprep.subr.mxu0 0.0
        %3790 = vmatpush1.msra.mxu0 0.0
        %3791 = vmatprep.subr.mxu0 0.0
        %3792 = vmatpush1.msra.mxu0 0.0
        %3793 = vmatprep.subr.mxu0 0.0
        %3794 = vmatpush1.msra.mxu0 0.0
        %3795 = vmatprep.subr.mxu0 0.0
        %3796 = vmatpush1.msra.mxu0 0.0
        %3797 = vmatprep.subr.mxu0 0.0
        %3798 = vmatpush1.msra.mxu0 0.0
        %3799 = vmatprep.subr.mxu0 0.0
        %3800 = vmatpush1.msra.mxu0 0.0
        %3801 = vmatprep.subr.mxu0 0.0
        %3802 = vmatpush1.msra.mxu0 0.0
        %3803 = vmatprep.subr.mxu0 %v3677
        %3804 = vmatpush1.msra.mxu0 %v3676
        %3805 = vmatprep.subr.mxu0 %v3661
        %3806 = vmatpush1.msra.mxu0 %v3660
        %3807 = vmatprep.subr.mxu0 %v3645
        %3808 = vmatpush1.msra.mxu0 %v3644
        %3809 = vmatprep.subr.mxu0 %v3629
        %3810 = vmatpush1.msra.mxu0 %v3628
        %3811 = vmatprep.subr.mxu0 0.0
        %3812 = vmatpush2.msra.mxu0 0.0
        %3813 = vmatprep.subr.mxu0 0.0
        %3814 = vmatpush2.msra.mxu0 0.0
        %3815 = vmatprep.subr.mxu0 0.0
        %3816 = vmatpush2.msra.mxu0 0.0
        %3817 = vmatprep.subr.mxu0 0.0
        %3818 = vmatpush2.msra.mxu0 0.0
        %3819 = vmatprep.subr.mxu0 0.0
        %3820 = vmatpush2.msra.mxu0 0.0
        %3821 = vmatprep.subr.mxu0 0.0
        %3822 = vmatpush2.msra.mxu0 0.0
        %3823 = vmatprep.subr.mxu0 0.0
        %3824 = vmatpush2.msra.mxu0 0.0
        %3825 = vmatprep.subr.mxu0 0.0
        %3826 = vmatpush2.msra.mxu0 0.0
        %3827 = vmatprep.subr.mxu0 0.0
        %3828 = vmatpush2.msra.mxu0 0.0
        %3829 = vmatprep.subr.mxu0 0.0
        %3830 = vmatpush2.msra.mxu0 0.0
        %3831 = vmatprep.subr.mxu0 0.0
        %3832 = vmatpush2.msra.mxu0 0.0
        %3833 = vmatprep.subr.mxu0 0.0
        %3834 = vmatpush2.msra.mxu0 0.0
        %3835 = vmatprep.subr.mxu0 0.0
        %3836 = vmatpush2.msra.mxu0 0.0
        %3837 = vmatprep.subr.mxu0 0.0
        %3838 = vmatpush2.msra.mxu0 0.0
        %3839 = vmatprep.subr.mxu0 0.0
        %3840 = vmatpush2.msra.mxu0 0.0
        %3841 = vmatprep.subr.mxu0 0.0
        %3842 = vmatpush2.msra.mxu0 0.0
        %3843 = vmatprep.mubr.f32.mxu0 0.0
        %3844 = vmatmul.mubr.f32.gmra.mxu0 %v3777
        %v3845 = vpop.f32.mrf.mxu0
        %v3846 = vadd.f32 %v3699, %v3845
        %v3847 = vpop.f32.mrf.mxu0
        %v3848 = vadd.f32 %v3703, %v3847
        %3849 = vdwg.mxu0
        %3850 = vmatprep.subr.mxu0 0.0
        %3851 = vmatpush1.msra.mxu0 0.0
        %3852 = vmatprep.subr.mxu0 0.0
        %3853 = vmatpush1.msra.mxu0 0.0
        %3854 = vmatprep.subr.mxu0 0.0
        %3855 = vmatpush1.msra.mxu0 0.0
        %3856 = vmatprep.subr.mxu0 0.0
        %3857 = vmatpush1.msra.mxu0 0.0
        %3858 = vmatprep.subr.mxu0 0.0
        %3859 = vmatpush1.msra.mxu0 0.0
        %3860 = vmatprep.subr.mxu0 0.0
        %3861 = vmatpush1.msra.mxu0 0.0
        %3862 = vmatprep.subr.mxu0 0.0
        %3863 = vmatpush1.msra.mxu0 0.0
        %3864 = vmatprep.subr.mxu0 0.0
        %3865 = vmatpush1.msra.mxu0 0.0
        %3866 = vmatprep.subr.mxu0 0.0
        %3867 = vmatpush1.msra.mxu0 0.0
        %3868 = vmatprep.subr.mxu0 0.0
        %3869 = vmatpush1.msra.mxu0 0.0
        %3870 = vmatprep.subr.mxu0 0.0
        %3871 = vmatpush1.msra.mxu0 0.0
        %3872 = vmatprep.subr.mxu0 0.0
        %3873 = vmatpush1.msra.mxu0 0.0
        %3874 = vmatprep.subr.mxu0 %v3679
        %3875 = vmatpush1.msra.mxu0 %v3678
        %3876 = vmatprep.subr.mxu0 %v3663
        %3877 = vmatpush1.msra.mxu0 %v3662
        %3878 = vmatprep.subr.mxu0 %v3647
        %3879 = vmatpush1.msra.mxu0 %v3646
        %3880 = vmatprep.subr.mxu0 %v3631
        %3881 = vmatpush1.msra.mxu0 %v3630
        %3882 = vmatprep.subr.mxu0 0.0
        %3883 = vmatpush2.msra.mxu0 0.0
        %3884 = vmatprep.subr.mxu0 0.0
        %3885 = vmatpush2.msra.mxu0 0.0
        %3886 = vmatprep.subr.mxu0 0.0
        %3887 = vmatpush2.msra.mxu0 0.0
        %3888 = vmatprep.subr.mxu0 0.0
        %3889 = vmatpush2.msra.mxu0 0.0
        %3890 = vmatprep.subr.mxu0 0.0
        %3891 = vmatpush2.msra.mxu0 0.0
        %3892 = vmatprep.subr.mxu0 0.0
        %3893 = vmatpush2.msra.mxu0 0.0
        %3894 = vmatprep.subr.mxu0 0.0
        %3895 = vmatpush2.msra.mxu0 0.0
        %3896 = vmatprep.subr.mxu0 0.0
        %3897 = vmatpush2.msra.mxu0 0.0
        %3898 = vmatprep.subr.mxu0 0.0
        %3899 = vmatpush2.msra.mxu0 0.0
        %3900 = vmatprep.subr.mxu0 0.0
        %3901 = vmatpush2.msra.mxu0 0.0
        %3902 = vmatprep.subr.mxu0 0.0
        %3903 = vmatpush2.msra.mxu0 0.0
        %3904 = vmatprep.subr.mxu0 0.0
        %3905 = vmatpush2.msra.mxu0 0.0
        %3906 = vmatprep.subr.mxu0 0.0
        %3907 = vmatpush2.msra.mxu0 0.0
        %3908 = vmatprep.subr.mxu0 0.0
        %3909 = vmatpush2.msra.mxu0 0.0
        %3910 = vmatprep.subr.mxu0 0.0
        %3911 = vmatpush2.msra.mxu0 0.0
        %3912 = vmatprep.subr.mxu0 0.0
        %3913 = vmatpush2.msra.mxu0 0.0
        %3914 = vmatprep.mubr.f32.mxu0 0.0
        %3915 = vmatmul.mubr.f32.gmra.mxu0 %v3777
        %v3916 = vpop.f32.mrf.mxu0
        %v3917 = vadd.f32 %v3707, %v3916
        %v3918 = vpop.f32.mrf.mxu0
        %v3919 = vadd.f32 %v3711, %v3918
        %3920 = vdwg.mxu0
        %3921 = vmatprep.subr.mxu0 0.0
        %3922 = vmatpush1.msra.mxu0 0.0
        %3923 = vmatprep.subr.mxu0 0.0
        %3924 = vmatpush1.msra.mxu0 0.0
        %3925 = vmatprep.subr.mxu0 0.0
        %3926 = vmatpush1.msra.mxu0 0.0
        %3927 = vmatprep.subr.mxu0 0.0
        %3928 = vmatpush1.msra.mxu0 0.0
        %3929 = vmatprep.subr.mxu0 0.0
        %3930 = vmatpush1.msra.mxu0 0.0
        %3931 = vmatprep.subr.mxu0 0.0
        %3932 = vmatpush1.msra.mxu0 0.0
        %3933 = vmatprep.subr.mxu0 0.0
        %3934 = vmatpush1.msra.mxu0 0.0
        %3935 = vmatprep.subr.mxu0 0.0
        %3936 = vmatpush1.msra.mxu0 0.0
        %3937 = vmatprep.subr.mxu0 0.0
        %3938 = vmatpush1.msra.mxu0 0.0
        %3939 = vmatprep.subr.mxu0 0.0
        %3940 = vmatpush1.msra.mxu0 0.0
        %3941 = vmatprep.subr.mxu0 0.0
        %3942 = vmatpush1.msra.mxu0 0.0
        %3943 = vmatprep.subr.mxu0 0.0
        %3944 = vmatpush1.msra.mxu0 0.0
        %3945 = vmatprep.subr.mxu0 %v3681
        %3946 = vmatpush1.msra.mxu0 %v3680
        %3947 = vmatprep.subr.mxu0 %v3665
        %3948 = vmatpush1.msra.mxu0 %v3664
        %3949 = vmatprep.subr.mxu0 %v3649
        %3950 = vmatpush1.msra.mxu0 %v3648
        %3951 = vmatprep.subr.mxu0 %v3633
        %3952 = vmatpush1.msra.mxu0 %v3632
        %3953 = vmatprep.subr.mxu0 0.0
        %3954 = vmatpush2.msra.mxu0 0.0
        %3955 = vmatprep.subr.mxu0 0.0
        %3956 = vmatpush2.msra.mxu0 0.0
        %3957 = vmatprep.subr.mxu0 0.0
        %3958 = vmatpush2.msra.mxu0 0.0
        %3959 = vmatprep.subr.mxu0 0.0
        %3960 = vmatpush2.msra.mxu0 0.0
        %3961 = vmatprep.subr.mxu0 0.0
        %3962 = vmatpush2.msra.mxu0 0.0
        %3963 = vmatprep.subr.mxu0 0.0
        %3964 = vmatpush2.msra.mxu0 0.0
        %3965 = vmatprep.subr.mxu0 0.0
        %3966 = vmatpush2.msra.mxu0 0.0
        %3967 = vmatprep.subr.mxu0 0.0
        %3968 = vmatpush2.msra.mxu0 0.0
        %3969 = vmatprep.subr.mxu0 0.0
        %3970 = vmatpush2.msra.mxu0 0.0
        %3971 = vmatprep.subr.mxu0 0.0
        %3972 = vmatpush2.msra.mxu0 0.0
        %3973 = vmatprep.subr.mxu0 0.0
        %3974 = vmatpush2.msra.mxu0 0.0
        %3975 = vmatprep.subr.mxu0 0.0
        %3976 = vmatpush2.msra.mxu0 0.0
        %3977 = vmatprep.subr.mxu0 0.0
        %3978 = vmatpush2.msra.mxu0 0.0
        %3979 = vmatprep.subr.mxu0 0.0
        %3980 = vmatpush2.msra.mxu0 0.0
        %3981 = vmatprep.subr.mxu0 0.0
        %3982 = vmatpush2.msra.mxu0 0.0
        %3983 = vmatprep.subr.mxu0 0.0
        %3984 = vmatpush2.msra.mxu0 0.0
        %3985 = vmatprep.mubr.f32.mxu0 0.0
        %3986 = vmatmul.mubr.f32.gmra.mxu0 %v3777
        %v3987 = vpop.f32.mrf.mxu0
        %v3988 = vadd.f32 %v3715, %v3987
        %v3989 = vpop.f32.mrf.mxu0
        %v3990 = vadd.f32 %v3719, %v3989
        %3991 = vdwg.mxu0
        %3992 = vmatprep.subr.mxu0 0.0
        %3993 = vmatpush1.msra.mxu0 0.0
        %3994 = vmatprep.subr.mxu0 0.0
        %3995 = vmatpush1.msra.mxu0 0.0
        %3996 = vmatprep.subr.mxu0 0.0
        %3997 = vmatpush1.msra.mxu0 0.0
        %3998 = vmatprep.subr.mxu0 0.0
        %3999 = vmatpush1.msra.mxu0 0.0
        %4000 = vmatprep.subr.mxu0 0.0
        %4001 = vmatpush1.msra.mxu0 0.0
        %4002 = vmatprep.subr.mxu0 0.0
        %4003 = vmatpush1.msra.mxu0 0.0
        %4004 = vmatprep.subr.mxu0 0.0
        %4005 = vmatpush1.msra.mxu0 0.0
        %4006 = vmatprep.subr.mxu0 0.0
        %4007 = vmatpush1.msra.mxu0 0.0
        %4008 = vmatprep.subr.mxu0 0.0
        %4009 = vmatpush1.msra.mxu0 0.0
        %4010 = vmatprep.subr.mxu0 0.0
        %4011 = vmatpush1.msra.mxu0 0.0
        %4012 = vmatprep.subr.mxu0 0.0
        %4013 = vmatpush1.msra.mxu0 0.0
        %4014 = vmatprep.subr.mxu0 0.0
        %4015 = vmatpush1.msra.mxu0 0.0
        %4016 = vmatprep.subr.mxu0 %v3683
        %4017 = vmatpush1.msra.mxu0 %v3682
        %4018 = vmatprep.subr.mxu0 %v3667
        %4019 = vmatpush1.msra.mxu0 %v3666
        %4020 = vmatprep.subr.mxu0 %v3651
        %4021 = vmatpush1.msra.mxu0 %v3650
        %4022 = vmatprep.subr.mxu0 %v3635
        %4023 = vmatpush1.msra.mxu0 %v3634
        %4024 = vmatprep.subr.mxu0 0.0
        %4025 = vmatpush2.msra.mxu0 0.0
        %4026 = vmatprep.subr.mxu0 0.0
        %4027 = vmatpush2.msra.mxu0 0.0
        %4028 = vmatprep.subr.mxu0 0.0
        %4029 = vmatpush2.msra.mxu0 0.0
        %4030 = vmatprep.subr.mxu0 0.0
        %4031 = vmatpush2.msra.mxu0 0.0
        %4032 = vmatprep.subr.mxu0 0.0
        %4033 = vmatpush2.msra.mxu0 0.0
        %4034 = vmatprep.subr.mxu0 0.0
        %4035 = vmatpush2.msra.mxu0 0.0
        %4036 = vmatprep.subr.mxu0 0.0
        %4037 = vmatpush2.msra.mxu0 0.0
        %4038 = vmatprep.subr.mxu0 0.0
        %4039 = vmatpush2.msra.mxu0 0.0
        %4040 = vmatprep.subr.mxu0 0.0
        %4041 = vmatpush2.msra.mxu0 0.0
        %4042 = vmatprep.subr.mxu0 0.0
        %4043 = vmatpush2.msra.mxu0 0.0
        %4044 = vmatprep.subr.mxu0 0.0
        %4045 = vmatpush2.msra.mxu0 0.0
        %4046 = vmatprep.subr.mxu0 0.0
        %4047 = vmatpush2.msra.mxu0 0.0
        %4048 = vmatprep.subr.mxu0 0.0
        %4049 = vmatpush2.msra.mxu0 0.0
        %4050 = vmatprep.subr.mxu0 0.0
        %4051 = vmatpush2.msra.mxu0 0.0
        %4052 = vmatprep.subr.mxu0 0.0
        %4053 = vmatpush2.msra.mxu0 0.0
        %4054 = vmatprep.subr.mxu0 0.0
        %4055 = vmatpush2.msra.mxu0 0.0
        %4056 = vmatprep.mubr.f32.mxu0 0.0
        %4057 = vmatmul.mubr.f32.gmra.mxu0 %v3777
        %v4058 = vpop.f32.mrf.mxu0
        %v4059 = vadd.f32 %v3723, %v4058
        %v4060 = vpop.f32.mrf.mxu0
        %v4061 = vadd.f32 %v3727, %v4060
        %4062 = vdwg.mxu0
        %4063 = vmatprep.subr.mxu0 0.0
        %4064 = vmatpush1.msra.mxu0 0.0
        %4065 = vmatprep.subr.mxu0 0.0
        %4066 = vmatpush1.msra.mxu0 0.0
        %4067 = vmatprep.subr.mxu0 0.0
        %4068 = vmatpush1.msra.mxu0 0.0
        %4069 = vmatprep.subr.mxu0 0.0
        %4070 = vmatpush1.msra.mxu0 0.0
        %4071 = vmatprep.subr.mxu0 0.0
        %4072 = vmatpush1.msra.mxu0 0.0
        %4073 = vmatprep.subr.mxu0 0.0
        %4074 = vmatpush1.msra.mxu0 0.0
        %4075 = vmatprep.subr.mxu0 0.0
        %4076 = vmatpush1.msra.mxu0 0.0
        %4077 = vmatprep.subr.mxu0 0.0
        %4078 = vmatpush1.msra.mxu0 0.0
        %4079 = vmatprep.subr.mxu0 0.0
        %4080 = vmatpush1.msra.mxu0 0.0
        %4081 = vmatprep.subr.mxu0 0.0
        %4082 = vmatpush1.msra.mxu0 0.0
        %4083 = vmatprep.subr.mxu0 0.0
        %4084 = vmatpush1.msra.mxu0 0.0
        %4085 = vmatprep.subr.mxu0 0.0
        %4086 = vmatpush1.msra.mxu0 0.0
        %4087 = vmatprep.subr.mxu0 %v3685
        %4088 = vmatpush1.msra.mxu0 %v3684
        %4089 = vmatprep.subr.mxu0 %v3669
        %4090 = vmatpush1.msra.mxu0 %v3668
        %4091 = vmatprep.subr.mxu0 %v3653
        %4092 = vmatpush1.msra.mxu0 %v3652
        %4093 = vmatprep.subr.mxu0 %v3637
        %4094 = vmatpush1.msra.mxu0 %v3636
        %4095 = vmatprep.subr.mxu0 0.0
        %4096 = vmatpush2.msra.mxu0 0.0
        %4097 = vmatprep.subr.mxu0 0.0
        %4098 = vmatpush2.msra.mxu0 0.0
        %4099 = vmatprep.subr.mxu0 0.0
        %4100 = vmatpush2.msra.mxu0 0.0
        %4101 = vmatprep.subr.mxu0 0.0
        %4102 = vmatpush2.msra.mxu0 0.0
        %4103 = vmatprep.subr.mxu0 0.0
        %4104 = vmatpush2.msra.mxu0 0.0
        %4105 = vmatprep.subr.mxu0 0.0
        %4106 = vmatpush2.msra.mxu0 0.0
        %4107 = vmatprep.subr.mxu0 0.0
        %4108 = vmatpush2.msra.mxu0 0.0
        %4109 = vmatprep.subr.mxu0 0.0
        %4110 = vmatpush2.msra.mxu0 0.0
        %4111 = vmatprep.subr.mxu0 0.0
        %4112 = vmatpush2.msra.mxu0 0.0
        %4113 = vmatprep.subr.mxu0 0.0
        %4114 = vmatpush2.msra.mxu0 0.0
        %4115 = vmatprep.subr.mxu0 0.0
        %4116 = vmatpush2.msra.mxu0 0.0
        %4117 = vmatprep.subr.mxu0 0.0
        %4118 = vmatpush2.msra.mxu0 0.0
        %4119 = vmatprep.subr.mxu0 0.0
        %4120 = vmatpush2.msra.mxu0 0.0
        %4121 = vmatprep.subr.mxu0 0.0
        %4122 = vmatpush2.msra.mxu0 0.0
        %4123 = vmatprep.subr.mxu0 0.0
        %4124 = vmatpush2.msra.mxu0 0.0
        %4125 = vmatprep.subr.mxu0 0.0
        %4126 = vmatpush2.msra.mxu0 0.0
        %4127 = vmatprep.mubr.f32.mxu0 0.0
        %4128 = vmatmul.mubr.f32.gmra.mxu0 %v3777
        %v4129 = vpop.f32.mrf.mxu0
        %v4130 = vadd.f32 %v3731, %v4129
        %v4131 = vpop.f32.mrf.mxu0
        %v4132 = vadd.f32 %v3735, %v4131
        %4133 = vdwg.mxu0
        %4134 = vmatprep.subr.mxu0 0.0
        %4135 = vmatpush1.msra.mxu0 0.0
        %4136 = vmatprep.subr.mxu0 0.0
        %4137 = vmatpush1.msra.mxu0 0.0
        %4138 = vmatprep.subr.mxu0 0.0
        %4139 = vmatpush1.msra.mxu0 0.0
        %4140 = vmatprep.subr.mxu0 0.0
        %4141 = vmatpush1.msra.mxu0 0.0
        %4142 = vmatprep.subr.mxu0 0.0
        %4143 = vmatpush1.msra.mxu0 0.0
        %4144 = vmatprep.subr.mxu0 0.0
        %4145 = vmatpush1.msra.mxu0 0.0
        %4146 = vmatprep.subr.mxu0 0.0
        %4147 = vmatpush1.msra.mxu0 0.0
        %4148 = vmatprep.subr.mxu0 0.0
        %4149 = vmatpush1.msra.mxu0 0.0
        %4150 = vmatprep.subr.mxu0 0.0
        %4151 = vmatpush1.msra.mxu0 0.0
        %4152 = vmatprep.subr.mxu0 0.0
        %4153 = vmatpush1.msra.mxu0 0.0
        %4154 = vmatprep.subr.mxu0 0.0
        %4155 = vmatpush1.msra.mxu0 0.0
        %4156 = vmatprep.subr.mxu0 0.0
        %4157 = vmatpush1.msra.mxu0 0.0
        %4158 = vmatprep.subr.mxu0 %v3687
        %4159 = vmatpush1.msra.mxu0 %v3686
        %4160 = vmatprep.subr.mxu0 %v3671
        %4161 = vmatpush1.msra.mxu0 %v3670
        %4162 = vmatprep.subr.mxu0 %v3655
        %4163 = vmatpush1.msra.mxu0 %v3654
        %4164 = vmatprep.subr.mxu0 %v3639
        %4165 = vmatpush1.msra.mxu0 %v3638
        %4166 = vmatprep.subr.mxu0 0.0
        %4167 = vmatpush2.msra.mxu0 0.0
        %4168 = vmatprep.subr.mxu0 0.0
        %4169 = vmatpush2.msra.mxu0 0.0
        %4170 = vmatprep.subr.mxu0 0.0
        %4171 = vmatpush2.msra.mxu0 0.0
        %4172 = vmatprep.subr.mxu0 0.0
        %4173 = vmatpush2.msra.mxu0 0.0
        %4174 = vmatprep.subr.mxu0 0.0
        %4175 = vmatpush2.msra.mxu0 0.0
        %4176 = vmatprep.subr.mxu0 0.0
        %4177 = vmatpush2.msra.mxu0 0.0
        %4178 = vmatprep.subr.mxu0 0.0
        %4179 = vmatpush2.msra.mxu0 0.0
        %4180 = vmatprep.subr.mxu0 0.0
        %4181 = vmatpush2.msra.mxu0 0.0
        %4182 = vmatprep.subr.mxu0 0.0
        %4183 = vmatpush2.msra.mxu0 0.0
        %4184 = vmatprep.subr.mxu0 0.0
        %4185 = vmatpush2.msra.mxu0 0.0
        %4186 = vmatprep.subr.mxu0 0.0
        %4187 = vmatpush2.msra.mxu0 0.0
        %4188 = vmatprep.subr.mxu0 0.0
        %4189 = vmatpush2.msra.mxu0 0.0
        %4190 = vmatprep.subr.mxu0 0.0
        %4191 = vmatpush2.msra.mxu0 0.0
        %4192 = vmatprep.subr.mxu0 0.0
        %4193 = vmatpush2.msra.mxu0 0.0
        %4194 = vmatprep.subr.mxu0 0.0
        %4195 = vmatpush2.msra.mxu0 0.0
        %4196 = vmatprep.subr.mxu0 0.0
        %4197 = vmatpush2.msra.mxu0 0.0
        %4198 = vmatprep.mubr.f32.mxu0 0.0
        %4199 = vmatmul.mubr.f32.gmra.mxu0 %v3777
        %v4200 = vpop.f32.mrf.mxu0
        %v4201 = vadd.f32 %v3739, %v4200
        %v4202 = vpop.f32.mrf.mxu0
        %v4203 = vadd.f32 %v3743, %v4202
        %4204 = vdwg.mxu0
        %4205 = vmatprep.subr.mxu0 0.0
        %4206 = vmatpush1.msra.mxu0 0.0
        %4207 = vmatprep.subr.mxu0 0.0
        %4208 = vmatpush1.msra.mxu0 0.0
        %4209 = vmatprep.subr.mxu0 0.0
        %4210 = vmatpush1.msra.mxu0 0.0
        %4211 = vmatprep.subr.mxu0 0.0
        %4212 = vmatpush1.msra.mxu0 0.0
        %4213 = vmatprep.subr.mxu0 0.0
        %4214 = vmatpush1.msra.mxu0 0.0
        %4215 = vmatprep.subr.mxu0 0.0
        %4216 = vmatpush1.msra.mxu0 0.0
        %4217 = vmatprep.subr.mxu0 0.0
        %4218 = vmatpush1.msra.mxu0 0.0
        %4219 = vmatprep.subr.mxu0 0.0
        %4220 = vmatpush1.msra.mxu0 0.0
        %4221 = vmatprep.subr.mxu0 0.0
        %4222 = vmatpush1.msra.mxu0 0.0
        %4223 = vmatprep.subr.mxu0 0.0
        %4224 = vmatpush1.msra.mxu0 0.0
        %4225 = vmatprep.subr.mxu0 0.0
        %4226 = vmatpush1.msra.mxu0 0.0
        %4227 = vmatprep.subr.mxu0 0.0
        %4228 = vmatpush1.msra.mxu0 0.0
        %4229 = vmatprep.subr.mxu0 %v3689
        %4230 = vmatpush1.msra.mxu0 %v3688
        %4231 = vmatprep.subr.mxu0 %v3673
        %4232 = vmatpush1.msra.mxu0 %v3672
        %4233 = vmatprep.subr.mxu0 %v3657
        %4234 = vmatpush1.msra.mxu0 %v3656
        %4235 = vmatprep.subr.mxu0 %v3641
        %4236 = vmatpush1.msra.mxu0 %v3640
        %4237 = vmatprep.subr.mxu0 0.0
        %4238 = vmatpush2.msra.mxu0 0.0
        %4239 = vmatprep.subr.mxu0 0.0
        %4240 = vmatpush2.msra.mxu0 0.0
        %4241 = vmatprep.subr.mxu0 0.0
        %4242 = vmatpush2.msra.mxu0 0.0
        %4243 = vmatprep.subr.mxu0 0.0
        %4244 = vmatpush2.msra.mxu0 0.0
        %4245 = vmatprep.subr.mxu0 0.0
        %4246 = vmatpush2.msra.mxu0 0.0
        %4247 = vmatprep.subr.mxu0 0.0
        %4248 = vmatpush2.msra.mxu0 0.0
        %4249 = vmatprep.subr.mxu0 0.0
        %4250 = vmatpush2.msra.mxu0 0.0
        %4251 = vmatprep.subr.mxu0 0.0
        %4252 = vmatpush2.msra.mxu0 0.0
        %4253 = vmatprep.subr.mxu0 0.0
        %4254 = vmatpush2.msra.mxu0 0.0
        %4255 = vmatprep.subr.mxu0 0.0
        %4256 = vmatpush2.msra.mxu0 0.0
        %4257 = vmatprep.subr.mxu0 0.0
        %4258 = vmatpush2.msra.mxu0 0.0
        %4259 = vmatprep.subr.mxu0 0.0
        %4260 = vmatpush2.msra.mxu0 0.0
        %4261 = vmatprep.subr.mxu0 0.0
        %4262 = vmatpush2.msra.mxu0 0.0
        %4263 = vmatprep.subr.mxu0 0.0
        %4264 = vmatpush2.msra.mxu0 0.0
        %4265 = vmatprep.subr.mxu0 0.0
        %4266 = vmatpush2.msra.mxu0 0.0
        %4267 = vmatprep.subr.mxu0 0.0
        %4268 = vmatpush2.msra.mxu0 0.0
        %4269 = vmatprep.mubr.f32.mxu0 0.0
        %4270 = vmatmul.mubr.f32.gmra.mxu0 %v3777
        %v4271 = vpop.f32.mrf.mxu0
        %v4272 = vadd.f32 %v3747, %v4271
        %v4273 = vpop.f32.mrf.mxu0
        %v4274 = vadd.f32 %v3751, %v4273
        %4275 = vdwg.mxu0
        %4276 = vmatprep.subr.mxu0 0.0
        %4277 = vmatpush1.msra.mxu0 0.0
        %4278 = vmatprep.subr.mxu0 0.0
        %4279 = vmatpush1.msra.mxu0 0.0
        %4280 = vmatprep.subr.mxu0 0.0
        %4281 = vmatpush1.msra.mxu0 0.0
        %4282 = vmatprep.subr.mxu0 0.0
        %4283 = vmatpush1.msra.mxu0 0.0
        %4284 = vmatprep.subr.mxu0 0.0
        %4285 = vmatpush1.msra.mxu0 0.0
        %4286 = vmatprep.subr.mxu0 0.0
        %4287 = vmatpush1.msra.mxu0 0.0
        %4288 = vmatprep.subr.mxu0 0.0
        %4289 = vmatpush1.msra.mxu0 0.0
        %4290 = vmatprep.subr.mxu0 0.0
        %4291 = vmatpush1.msra.mxu0 0.0
        %4292 = vmatprep.subr.mxu0 0.0
        %4293 = vmatpush1.msra.mxu0 0.0
        %4294 = vmatprep.subr.mxu0 0.0
        %4295 = vmatpush1.msra.mxu0 0.0
        %4296 = vmatprep.subr.mxu0 0.0
        %4297 = vmatpush1.msra.mxu0 0.0
        %4298 = vmatprep.subr.mxu0 0.0
        %4299 = vmatpush1.msra.mxu0 0.0
        %4300 = vmatprep.subr.mxu0 %v3691
        %4301 = vmatpush1.msra.mxu0 %v3690
        %4302 = vmatprep.subr.mxu0 %v3675
        %4303 = vmatpush1.msra.mxu0 %v3674
        %4304 = vmatprep.subr.mxu0 %v3659
        %4305 = vmatpush1.msra.mxu0 %v3658
        %4306 = vmatprep.subr.mxu0 %v3643
        %4307 = vmatpush1.msra.mxu0 %v3642
        %4308 = vmatprep.subr.mxu0 0.0
        %4309 = vmatpush2.msra.mxu0 0.0
        %4310 = vmatprep.subr.mxu0 0.0
        %4311 = vmatpush2.msra.mxu0 0.0
        %4312 = vmatprep.subr.mxu0 0.0
        %4313 = vmatpush2.msra.mxu0 0.0
        %4314 = vmatprep.subr.mxu0 0.0
        %4315 = vmatpush2.msra.mxu0 0.0
        %4316 = vmatprep.subr.mxu0 0.0
        %4317 = vmatpush2.msra.mxu0 0.0
        %4318 = vmatprep.subr.mxu0 0.0
        %4319 = vmatpush2.msra.mxu0 0.0
        %4320 = vmatprep.subr.mxu0 0.0
        %4321 = vmatpush2.msra.mxu0 0.0
        %4322 = vmatprep.subr.mxu0 0.0
        %4323 = vmatpush2.msra.mxu0 0.0
        %4324 = vmatprep.subr.mxu0 0.0
        %4325 = vmatpush2.msra.mxu0 0.0
        %4326 = vmatprep.subr.mxu0 0.0
        %4327 = vmatpush2.msra.mxu0 0.0
        %4328 = vmatprep.subr.mxu0 0.0
        %4329 = vmatpush2.msra.mxu0 0.0
        %4330 = vmatprep.subr.mxu0 0.0
        %4331 = vmatpush2.msra.mxu0 0.0
        %4332 = vmatprep.subr.mxu0 0.0
        %4333 = vmatpush2.msra.mxu0 0.0
        %4334 = vmatprep.subr.mxu0 0.0
        %4335 = vmatpush2.msra.mxu0 0.0
        %4336 = vmatprep.subr.mxu0 0.0
        %4337 = vmatpush2.msra.mxu0 0.0
        %4338 = vmatprep.subr.mxu0 0.0
        %4339 = vmatpush2.msra.mxu0 0.0
        %4340 = vmatprep.mubr.f32.mxu0 0.0
        %4341 = vmatmul.mubr.f32.gmra.mxu0 %v3777
        %v4342 = vpop.f32.mrf.mxu0
        %v4343 = vadd.f32 %v3755, %v4342
        %v4344 = vpop.f32.mrf.mxu0
        %v4345 = vadd.f32 %v3759, %v4344
        %4346 = vdwg.mxu0
        %v4347 = vmax.f32 %v3846, 0.0
        %v4348 = vmax.f32 %v3848, 0.0
        %v4349 = vmax.f32 %v3917, 0.0
        %v4350 = vmax.f32 %v3919, 0.0
        %v4351 = vmax.f32 %v3988, 0.0
        %v4352 = vmax.f32 %v3990, 0.0
        %v4353 = vmax.f32 %v4059, 0.0
        %v4354 = vmax.f32 %v4061, 0.0
        %v4355 = vmax.f32 %v4130, 0.0
        %v4356 = vmax.f32 %v4132, 0.0
        %v4357 = vmax.f32 %v4201, 0.0
        %v4358 = vmax.f32 %v4203, 0.0
        %v4359 = vmax.f32 %v4272, 0.0
        %v4360 = vmax.f32 %v4274, 0.0
        %v4361 = vmax.f32 %v4343, 0.0
        %v4362 = vmax.f32 %v4345, 0.0
        %v4363 = vld [vmem:[%s45] sm:$0xff]
        %v4364 = vld [vmem:[%s45 + $0x8] sm:$0xff]
        %v4365 = vld [vmem:[%s45 + $0x10] sm:$0xff]
        %v4366 = vld [vmem:[%s45 + $0x18] sm:$0xff]
        %v4367 = vld [vmem:[%s45 + $0x20] sm:$0xff]
        %v4368 = vld [vmem:[%s45 + $0x28] sm:$0xff]
        %v4369 = vld [vmem:[%s45 + $0x30] sm:$0xff]
        %v4370 = vld [vmem:[%s45 + $0x38] sm:$0xff]
        %v4371 = vld [vmem:[%s45 + $0x40] sm:$0xff]
        %v4372 = vld [vmem:[%s45 + $0x48] sm:$0xff]
        %v4373 = vld [vmem:[%s45 + $0x50] sm:$0xff]
        %v4374 = vld [vmem:[%s45 + $0x58] sm:$0xff]
        %v4375 = vld [vmem:[%s45 + $0x60] sm:$0xff]
        %v4376 = vld [vmem:[%s45 + $0x68] sm:$0xff]
        %v4377 = vld [vmem:[%s45 + $0x70] sm:$0xff]
        %v4378 = vld [vmem:[%s45 + $0x78] sm:$0xff]
        %v4379 = vld [vmem:[%s45 + $0x80] sm:$0xff]
        %v4380 = vld [vmem:[%s45 + $0x88] sm:$0xff]
        %v4381 = vld [vmem:[%s45 + $0x90] sm:$0xff]
        %v4382 = vld [vmem:[%s45 + $0x98] sm:$0xff]
        %v4383 = vld [vmem:[%s45 + $0xa0] sm:$0xff]
        %v4384 = vld [vmem:[%s45 + $0xa8] sm:$0xff]
        %v4385 = vld [vmem:[%s45 + $0xb0] sm:$0xff]
        %v4386 = vld [vmem:[%s45 + $0xb8] sm:$0xff]
        %v4387 = vld [vmem:[%s45 + $0xc0] sm:$0xff]
        %v4388 = vld [vmem:[%s45 + $0xc8] sm:$0xff]
        %v4389 = vld [vmem:[%s45 + $0xd0] sm:$0xff]
        %v4390 = vld [vmem:[%s45 + $0xd8] sm:$0xff]
        %v4391 = vld [vmem:[%s45 + $0xe0] sm:$0xff]
        %v4392 = vld [vmem:[%s45 + $0xe8] sm:$0xff]
        %v4393 = vld [vmem:[%s45 + $0xf0] sm:$0xff]
        %v4394 = vld [vmem:[%s45 + $0xf8] sm:$0xff]
        %v4395 = vld [vmem:[%s45 + $0x100] sm:$0xff]
        %v4396 = vld [vmem:[%s45 + $0x108] sm:$0xff]
        %v4397 = vld [vmem:[%s45 + $0x110] sm:$0xff]
        %v4398 = vld [vmem:[%s45 + $0x118] sm:$0xff]
        %v4399 = vld [vmem:[%s45 + $0x120] sm:$0xff]
        %v4400 = vld [vmem:[%s45 + $0x128] sm:$0xff]
        %v4401 = vld [vmem:[%s45 + $0x130] sm:$0xff]
        %v4402 = vld [vmem:[%s45 + $0x138] sm:$0xff]
        %v4403 = vld [vmem:[%s45 + $0x140] sm:$0xff]
        %v4404 = vld [vmem:[%s45 + $0x148] sm:$0xff]
        %v4405 = vld [vmem:[%s45 + $0x150] sm:$0xff]
        %v4406 = vld [vmem:[%s45 + $0x158] sm:$0xff]
        %v4407 = vld [vmem:[%s45 + $0x160] sm:$0xff]
        %v4408 = vld [vmem:[%s45 + $0x168] sm:$0xff]
        %v4409 = vld [vmem:[%s45 + $0x170] sm:$0xff]
        %v4410 = vld [vmem:[%s45 + $0x178] sm:$0xff]
        %v4411 = vld [vmem:[%s45 + $0x180] sm:$0xff]
        %v4412 = vld [vmem:[%s45 + $0x188] sm:$0xff]
        %v4413 = vld [vmem:[%s45 + $0x190] sm:$0xff]
        %v4414 = vld [vmem:[%s45 + $0x198] sm:$0xff]
        %v4415 = vld [vmem:[%s45 + $0x1a0] sm:$0xff]
        %v4416 = vld [vmem:[%s45 + $0x1a8] sm:$0xff]
        %v4417 = vld [vmem:[%s45 + $0x1b0] sm:$0xff]
        %v4418 = vld [vmem:[%s45 + $0x1b8] sm:$0xff]
        %v4419 = vld [vmem:[%s45 + $0x1c0] sm:$0xff]
        %v4420 = vld [vmem:[%s45 + $0x1c8] sm:$0xff]
        %v4421 = vld [vmem:[%s45 + $0x1d0] sm:$0xff]
        %v4422 = vld [vmem:[%s45 + $0x1d8] sm:$0xff]
        %v4423 = vld [vmem:[%s45 + $0x1e0] sm:$0xff]
        %v4424 = vld [vmem:[%s45 + $0x1e8] sm:$0xff]
        %v4425 = vld [vmem:[%s45 + $0x1f0] sm:$0xff]
        %v4426 = vld [vmem:[%s45 + $0x1f8] sm:$0xff]
        %v4427 = vld [vmem:[%s45 + $0x200] sm:$0xff]
        %v4428 = vld [vmem:[%s45 + $0x208] sm:$0xff]
        %v4429 = vld [vmem:[%s45 + $0x210] sm:$0xff]
        %v4430 = vld [vmem:[%s45 + $0x218] sm:$0xff]
        %v4431 = vld [vmem:[%s45 + $0x220] sm:$0xff]
        %v4432 = vld [vmem:[%s45 + $0x228] sm:$0xff]
        %v4433 = vld [vmem:[%s45 + $0x230] sm:$0xff]
        %v4434 = vld [vmem:[%s45 + $0x238] sm:$0xff]
        %v4435 = vld [vmem:[%s45 + $0x240] sm:$0xff]
        %v4436 = vld [vmem:[%s45 + $0x248] sm:$0xff]
        %v4437 = vld [vmem:[%s45 + $0x250] sm:$0xff]
        %v4438 = vld [vmem:[%s45 + $0x258] sm:$0xff]
        %v4439 = vld [vmem:[%s45 + $0x260] sm:$0xff]
        %v4440 = vld [vmem:[%s45 + $0x268] sm:$0xff]
        %v4441 = vld [vmem:[%s45 + $0x270] sm:$0xff]
        %v4442 = vld [vmem:[%s45 + $0x278] sm:$0xff]
        %v4443 = vld [vmem:[%s45 + $0x280] sm:$0xff]
        %v4444 = vld [vmem:[%s45 + $0x288] sm:$0xff]
        %v4445 = vld [vmem:[%s45 + $0x290] sm:$0xff]
        %v4446 = vld [vmem:[%s45 + $0x298] sm:$0xff]
        %v4447 = vld [vmem:[%s45 + $0x2a0] sm:$0xff]
        %v4448 = vld [vmem:[%s45 + $0x2a8] sm:$0xff]
        %v4449 = vld [vmem:[%s45 + $0x2b0] sm:$0xff]
        %v4450 = vld [vmem:[%s45 + $0x2b8] sm:$0xff]
        %v4451 = vld [vmem:[%s45 + $0x2c0] sm:$0xff]
        %v4452 = vld [vmem:[%s45 + $0x2c8] sm:$0xff]
        %v4453 = vld [vmem:[%s45 + $0x2d0] sm:$0xff]
        %v4454 = vld [vmem:[%s45 + $0x2d8] sm:$0xff]
        %v4455 = vld [vmem:[%s45 + $0x2e0] sm:$0xff]
        %v4456 = vld [vmem:[%s45 + $0x2e8] sm:$0xff]
        %v4457 = vld [vmem:[%s45 + $0x2f0] sm:$0xff]
        %v4458 = vld [vmem:[%s45 + $0x2f8] sm:$0xff]
        %v4459 = vld [vmem:[%s45 + $0x300] sm:$0xff]
        %v4460 = vld [vmem:[%s45 + $0x308] sm:$0xff]
        %v4461 = vld [vmem:[%s45 + $0x310] sm:$0xff]
        %v4462 = vld [vmem:[%s45 + $0x318] sm:$0xff]
        %v4463 = vld [vmem:[%s45 + $0x320] sm:$0xff]
        %v4464 = vld [vmem:[%s45 + $0x328] sm:$0xff]
        %v4465 = vld [vmem:[%s45 + $0x330] sm:$0xff]
        %v4466 = vld [vmem:[%s45 + $0x338] sm:$0xff]
        %v4467 = vld [vmem:[%s45 + $0x340] sm:$0xff]
        %v4468 = vld [vmem:[%s45 + $0x348] sm:$0xff]
        %v4469 = vld [vmem:[%s45 + $0x350] sm:$0xff]
        %v4470 = vld [vmem:[%s45 + $0x358] sm:$0xff]
        %v4471 = vld [vmem:[%s45 + $0x360] sm:$0xff]
        %v4472 = vld [vmem:[%s45 + $0x368] sm:$0xff]
        %v4473 = vld [vmem:[%s45 + $0x370] sm:$0xff]
        %v4474 = vld [vmem:[%s45 + $0x378] sm:$0xff]
        %v4475 = vld [vmem:[%s45 + $0x380] sm:$0xff]
        %v4476 = vld [vmem:[%s45 + $0x388] sm:$0xff]
        %v4477 = vld [vmem:[%s45 + $0x390] sm:$0xff]
        %v4478 = vld [vmem:[%s45 + $0x398] sm:$0xff]
        %v4479 = vld [vmem:[%s45 + $0x3a0] sm:$0xff]
        %v4480 = vld [vmem:[%s45 + $0x3a8] sm:$0xff]
        %v4481 = vld [vmem:[%s45 + $0x3b0] sm:$0xff]
        %v4482 = vld [vmem:[%s45 + $0x3b8] sm:$0xff]
        %v4483 = vld [vmem:[%s45 + $0x3c0] sm:$0xff]
        %v4484 = vld [vmem:[%s45 + $0x3c8] sm:$0xff]
        %v4485 = vld [vmem:[%s45 + $0x3d0] sm:$0xff]
        %v4486 = vld [vmem:[%s45 + $0x3d8] sm:$0xff]
        %v4487 = vld [vmem:[%s45 + $0x3e0] sm:$0xff]
        %v4488 = vld [vmem:[%s45 + $0x3e8] sm:$0xff]
        %v4489 = vld [vmem:[%s45 + $0x3f0] sm:$0xff]
        %v4490 = vld [vmem:[%s45 + $0x3f8] sm:$0xff]
        %v4491 = vld [vmem:[%s45 + $0x400] sm:$0xff]
        %v4492 = vld [vmem:[%s45 + $0x408] sm:$0xff]
        %v4493 = vld [vmem:[%s45 + $0x410] sm:$0xff]
        %v4494 = vld [vmem:[%s45 + $0x418] sm:$0xff]
        %v4495 = vld [vmem:[%s45 + $0x420] sm:$0xff]
        %v4496 = vld [vmem:[%s45 + $0x428] sm:$0xff]
        %v4497 = vld [vmem:[%s45 + $0x430] sm:$0xff]
        %v4498 = vld [vmem:[%s45 + $0x438] sm:$0xff]
        %v4499 = vld [vmem:[%s45 + $0x440] sm:$0xff]
        %v4500 = vld [vmem:[%s45 + $0x448] sm:$0xff]
        %v4501 = vld [vmem:[%s45 + $0x450] sm:$0xff]
        %v4502 = vld [vmem:[%s45 + $0x458] sm:$0xff]
        %v4503 = vld [vmem:[%s45 + $0x460] sm:$0xff]
        %v4504 = vld [vmem:[%s45 + $0x468] sm:$0xff]
        %v4505 = vld [vmem:[%s45 + $0x470] sm:$0xff]
        %v4506 = vld [vmem:[%s45 + $0x478] sm:$0xff]
        %v4507 = vld [vmem:[%s45 + $0x480] sm:$0xff]
        %v4508 = vld [vmem:[%s45 + $0x488] sm:$0xff]
        %v4509 = vld [vmem:[%s45 + $0x490] sm:$0xff]
        %v4510 = vld [vmem:[%s45 + $0x498] sm:$0xff]
        %v4511 = vld [vmem:[%s45 + $0x4a0] sm:$0xff]
        %v4512 = vld [vmem:[%s45 + $0x4a8] sm:$0xff]
        %v4513 = vld [vmem:[%s45 + $0x4b0] sm:$0xff]
        %v4514 = vld [vmem:[%s45 + $0x4b8] sm:$0xff]
        %v4515 = vld [vmem:[%s45 + $0x4c0] sm:$0xff]
        %v4516 = vld [vmem:[%s45 + $0x4c8] sm:$0xff]
        %v4517 = vld [vmem:[%s45 + $0x4d0] sm:$0xff]
        %v4518 = vld [vmem:[%s45 + $0x4d8] sm:$0xff]
        %v4519 = vld [vmem:[%s45 + $0x4e0] sm:$0xff]
        %v4520 = vld [vmem:[%s45 + $0x4e8] sm:$0xff]
        %v4521 = vld [vmem:[%s45 + $0x4f0] sm:$0xff]
        %v4522 = vld [vmem:[%s45 + $0x4f8] sm:$0xff]
        %v4523 = vld [vmem:[%s45 + $0x500] sm:$0xff]
        %v4524 = vld [vmem:[%s45 + $0x508] sm:$0xff]
        %v4525 = vld [vmem:[%s45 + $0x510] sm:$0xff]
        %v4526 = vld [vmem:[%s45 + $0x518] sm:$0xff]
        %v4527 = vld [vmem:[%s45 + $0x520] sm:$0xff]
        %v4528 = vld [vmem:[%s45 + $0x528] sm:$0xff]
        %v4529 = vld [vmem:[%s45 + $0x530] sm:$0xff]
        %v4530 = vld [vmem:[%s45 + $0x538] sm:$0xff]
        %v4531 = vld [vmem:[%s45 + $0x540] sm:$0xff]
        %v4532 = vld [vmem:[%s45 + $0x548] sm:$0xff]
        %v4533 = vld [vmem:[%s45 + $0x550] sm:$0xff]
        %v4534 = vld [vmem:[%s45 + $0x558] sm:$0xff]
        %v4535 = vld [vmem:[%s45 + $0x560] sm:$0xff]
        %v4536 = vld [vmem:[%s45 + $0x568] sm:$0xff]
        %v4537 = vld [vmem:[%s45 + $0x570] sm:$0xff]
        %v4538 = vld [vmem:[%s45 + $0x578] sm:$0xff]
        %v4539 = vld [vmem:[%s45 + $0x580] sm:$0xff]
        %v4540 = vld [vmem:[%s45 + $0x588] sm:$0xff]
        %v4541 = vld [vmem:[%s45 + $0x590] sm:$0xff]
        %v4542 = vld [vmem:[%s45 + $0x598] sm:$0xff]
        %v4543 = vld [vmem:[%s45 + $0x5a0] sm:$0xff]
        %v4544 = vld [vmem:[%s45 + $0x5a8] sm:$0xff]
        %v4545 = vld [vmem:[%s45 + $0x5b0] sm:$0xff]
        %v4546 = vld [vmem:[%s45 + $0x5b8] sm:$0xff]
        %v4547 = vld [vmem:[%s45 + $0x5c0] sm:$0xff]
        %v4548 = vld [vmem:[%s45 + $0x5c8] sm:$0xff]
        %v4549 = vld [vmem:[%s45 + $0x5d0] sm:$0xff]
        %v4550 = vld [vmem:[%s45 + $0x5d8] sm:$0xff]
        %v4551 = vld [vmem:[%s45 + $0x5e0] sm:$0xff]
        %v4552 = vld [vmem:[%s45 + $0x5e8] sm:$0xff]
        %v4553 = vld [vmem:[%s45 + $0x5f0] sm:$0xff]
        %v4554 = vld [vmem:[%s45 + $0x5f8] sm:$0xff]
        %v4555 = vld [vmem:[%s45 + $0x600] sm:$0xff]
        %v4556 = vld [vmem:[%s45 + $0x608] sm:$0xff]
        %v4557 = vld [vmem:[%s45 + $0x610] sm:$0xff]
        %v4558 = vld [vmem:[%s45 + $0x618] sm:$0xff]
        %v4559 = vld [vmem:[%s45 + $0x620] sm:$0xff]
        %v4560 = vld [vmem:[%s45 + $0x628] sm:$0xff]
        %v4561 = vld [vmem:[%s45 + $0x630] sm:$0xff]
        %v4562 = vld [vmem:[%s45 + $0x638] sm:$0xff]
        %v4563 = vld [vmem:[%s45 + $0x640] sm:$0xff]
        %v4564 = vld [vmem:[%s45 + $0x648] sm:$0xff]
        %v4565 = vld [vmem:[%s45 + $0x650] sm:$0xff]
        %v4566 = vld [vmem:[%s45 + $0x658] sm:$0xff]
        %v4567 = vld [vmem:[%s45 + $0x660] sm:$0xff]
        %v4568 = vld [vmem:[%s45 + $0x668] sm:$0xff]
        %v4569 = vld [vmem:[%s45 + $0x670] sm:$0xff]
        %v4570 = vld [vmem:[%s45 + $0x678] sm:$0xff]
        %v4571 = vld [vmem:[%s45 + $0x680] sm:$0xff]
        %v4572 = vld [vmem:[%s45 + $0x688] sm:$0xff]
        %v4573 = vld [vmem:[%s45 + $0x690] sm:$0xff]
        %v4574 = vld [vmem:[%s45 + $0x698] sm:$0xff]
        %v4575 = vld [vmem:[%s45 + $0x6a0] sm:$0xff]
        %v4576 = vld [vmem:[%s45 + $0x6a8] sm:$0xff]
        %v4577 = vld [vmem:[%s45 + $0x6b0] sm:$0xff]
        %v4578 = vld [vmem:[%s45 + $0x6b8] sm:$0xff]
        %v4579 = vld [vmem:[%s45 + $0x6c0] sm:$0xff]
        %v4580 = vld [vmem:[%s45 + $0x6c8] sm:$0xff]
        %v4581 = vld [vmem:[%s45 + $0x6d0] sm:$0xff]
        %v4582 = vld [vmem:[%s45 + $0x6d8] sm:$0xff]
        %v4583 = vld [vmem:[%s45 + $0x6e0] sm:$0xff]
        %v4584 = vld [vmem:[%s45 + $0x6e8] sm:$0xff]
        %v4585 = vld [vmem:[%s45 + $0x6f0] sm:$0xff]
        %v4586 = vld [vmem:[%s45 + $0x6f8] sm:$0xff]
        %v4587 = vld [vmem:[%s45 + $0x700] sm:$0xff]
        %v4588 = vld [vmem:[%s45 + $0x708] sm:$0xff]
        %v4589 = vld [vmem:[%s45 + $0x710] sm:$0xff]
        %v4590 = vld [vmem:[%s45 + $0x718] sm:$0xff]
        %v4591 = vld [vmem:[%s45 + $0x720] sm:$0xff]
        %v4592 = vld [vmem:[%s45 + $0x728] sm:$0xff]
        %v4593 = vld [vmem:[%s45 + $0x730] sm:$0xff]
        %v4594 = vld [vmem:[%s45 + $0x738] sm:$0xff]
        %v4595 = vld [vmem:[%s45 + $0x740] sm:$0xff]
        %v4596 = vld [vmem:[%s45 + $0x748] sm:$0xff]
        %v4597 = vld [vmem:[%s45 + $0x750] sm:$0xff]
        %v4598 = vld [vmem:[%s45 + $0x758] sm:$0xff]
        %v4599 = vld [vmem:[%s45 + $0x760] sm:$0xff]
        %v4600 = vld [vmem:[%s45 + $0x768] sm:$0xff]
        %v4601 = vld [vmem:[%s45 + $0x770] sm:$0xff]
        %v4602 = vld [vmem:[%s45 + $0x778] sm:$0xff]
        %v4603 = vld [vmem:[%s45 + $0x780] sm:$0xff]
        %v4604 = vld [vmem:[%s45 + $0x788] sm:$0xff]
        %v4605 = vld [vmem:[%s45 + $0x790] sm:$0xff]
        %v4606 = vld [vmem:[%s45 + $0x798] sm:$0xff]
        %v4607 = vld [vmem:[%s45 + $0x7a0] sm:$0xff]
        %v4608 = vld [vmem:[%s45 + $0x7a8] sm:$0xff]
        %v4609 = vld [vmem:[%s45 + $0x7b0] sm:$0xff]
        %v4610 = vld [vmem:[%s45 + $0x7b8] sm:$0xff]
        %v4611 = vld [vmem:[%s45 + $0x7c0] sm:$0xff]
        %v4612 = vld [vmem:[%s45 + $0x7c8] sm:$0xff]
        %v4613 = vld [vmem:[%s45 + $0x7d0] sm:$0xff]
        %v4614 = vld [vmem:[%s45 + $0x7d8] sm:$0xff]
        %v4615 = vld [vmem:[%s45 + $0x7e0] sm:$0xff]
        %v4616 = vld [vmem:[%s45 + $0x7e8] sm:$0xff]
        %v4617 = vld [vmem:[%s45 + $0x7f0] sm:$0xff]
        %v4618 = vld [vmem:[%s45 + $0x7f8] sm:$0xff]
        %v4619 = vld [vmem:[%s47] sm:$0x1]
        %v4621 = vlaneseq
        %v4622 = vshrl.u32 %v4621, 7
        %v4623 = vsub.s32 0, %v4622
        %v4624 = vrot.slane %v4619, %v4623
        %4626 = vmatprep.subr.mxu0 0.0
        %4627 = vmatpush1.msra.mxu0 %v4378
        %4628 = vmatprep.subr.mxu0 0.0
        %4629 = vmatpush1.msra.mxu0 %v4377
        %4630 = vmatprep.subr.mxu0 0.0
        %4631 = vmatpush1.msra.mxu0 %v4376
        %4632 = vmatprep.subr.mxu0 0.0
        %4633 = vmatpush1.msra.mxu0 %v4375
        %4634 = vmatprep.subr.mxu0 0.0
        %4635 = vmatpush1.msra.mxu0 %v4374
        %4636 = vmatprep.subr.mxu0 0.0
        %4637 = vmatpush1.msra.mxu0 %v4373
        %4638 = vmatprep.subr.mxu0 0.0
        %4639 = vmatpush1.msra.mxu0 %v4372
        %4640 = vmatprep.subr.mxu0 0.0
        %4641 = vmatpush1.msra.mxu0 %v4371
        %4642 = vmatprep.subr.mxu0 0.0
        %4643 = vmatpush1.msra.mxu0 %v4370
        %4644 = vmatprep.subr.mxu0 0.0
        %4645 = vmatpush1.msra.mxu0 %v4369
        %4646 = vmatprep.subr.mxu0 0.0
        %4647 = vmatpush1.msra.mxu0 %v4368
        %4648 = vmatprep.subr.mxu0 0.0
        %4649 = vmatpush1.msra.mxu0 %v4367
        %4650 = vmatprep.subr.mxu0 0.0
        %4651 = vmatpush1.msra.mxu0 %v4366
        %4652 = vmatprep.subr.mxu0 0.0
        %4653 = vmatpush1.msra.mxu0 %v4365
        %4654 = vmatprep.subr.mxu0 0.0
        %4655 = vmatpush1.msra.mxu0 %v4364
        %4656 = vmatprep.subr.mxu0 0.0
        %4657 = vmatpush1.msra.mxu0 %v4363
        %4658 = vmatprep.subr.mxu0 0.0
        %4659 = vmatpush2.msra.mxu0 %v4394
        %4660 = vmatprep.subr.mxu0 0.0
        %4661 = vmatpush2.msra.mxu0 %v4393
        %4662 = vmatprep.subr.mxu0 0.0
        %4663 = vmatpush2.msra.mxu0 %v4392
        %4664 = vmatprep.subr.mxu0 0.0
        %4665 = vmatpush2.msra.mxu0 %v4391
        %4666 = vmatprep.subr.mxu0 0.0
        %4667 = vmatpush2.msra.mxu0 %v4390
        %4668 = vmatprep.subr.mxu0 0.0
        %4669 = vmatpush2.msra.mxu0 %v4389
        %4670 = vmatprep.subr.mxu0 0.0
        %4671 = vmatpush2.msra.mxu0 %v4388
        %4672 = vmatprep.subr.mxu0 0.0
        %4673 = vmatpush2.msra.mxu0 %v4387
        %4674 = vmatprep.subr.mxu0 0.0
        %4675 = vmatpush2.msra.mxu0 %v4386
        %4676 = vmatprep.subr.mxu0 0.0
        %4677 = vmatpush2.msra.mxu0 %v4385
        %4678 = vmatprep.subr.mxu0 0.0
        %4679 = vmatpush2.msra.mxu0 %v4384
        %4680 = vmatprep.subr.mxu0 0.0
        %4681 = vmatpush2.msra.mxu0 %v4383
        %4682 = vmatprep.subr.mxu0 0.0
        %4683 = vmatpush2.msra.mxu0 %v4382
        %4684 = vmatprep.subr.mxu0 0.0
        %4685 = vmatpush2.msra.mxu0 %v4381
        %4686 = vmatprep.subr.mxu0 0.0
        %4687 = vmatpush2.msra.mxu0 %v4380
        %4688 = vmatprep.subr.mxu0 0.0
        %4689 = vmatpush2.msra.mxu0 %v4379
        %4690 = vmatprep.mubr.f32.mxu0 %v4348
        %4691 = vmatmul.mubr.f32.gmra.mxu0 %v4347
        %v4692 = vpop.f32.mrf.mxu0
        %v4693 = vadd.f32 %v4624, %v4692
        %v4694 = vpop.f32.mrf.mxu0
        %4695 = vdwg.mxu0
        %4696 = vmatprep.subr.mxu0 0.0
        %4697 = vmatpush1.msra.mxu0 %v4410
        %4698 = vmatprep.subr.mxu0 0.0
        %4699 = vmatpush1.msra.mxu0 %v4409
        %4700 = vmatprep.subr.mxu0 0.0
        %4701 = vmatpush1.msra.mxu0 %v4408
        %4702 = vmatprep.subr.mxu0 0.0
        %4703 = vmatpush1.msra.mxu0 %v4407
        %4704 = vmatprep.subr.mxu0 0.0
        %4705 = vmatpush1.msra.mxu0 %v4406
        %4706 = vmatprep.subr.mxu0 0.0
        %4707 = vmatpush1.msra.mxu0 %v4405
        %4708 = vmatprep.subr.mxu0 0.0
        %4709 = vmatpush1.msra.mxu0 %v4404
        %4710 = vmatprep.subr.mxu0 0.0
        %4711 = vmatpush1.msra.mxu0 %v4403
        %4712 = vmatprep.subr.mxu0 0.0
        %4713 = vmatpush1.msra.mxu0 %v4402
        %4714 = vmatprep.subr.mxu0 0.0
        %4715 = vmatpush1.msra.mxu0 %v4401
        %4716 = vmatprep.subr.mxu0 0.0
        %4717 = vmatpush1.msra.mxu0 %v4400
        %4718 = vmatprep.subr.mxu0 0.0
        %4719 = vmatpush1.msra.mxu0 %v4399
        %4720 = vmatprep.subr.mxu0 0.0
        %4721 = vmatpush1.msra.mxu0 %v4398
        %4722 = vmatprep.subr.mxu0 0.0
        %4723 = vmatpush1.msra.mxu0 %v4397
        %4724 = vmatprep.subr.mxu0 0.0
        %4725 = vmatpush1.msra.mxu0 %v4396
        %4726 = vmatprep.subr.mxu0 0.0
        %4727 = vmatpush1.msra.mxu0 %v4395
        %4728 = vmatprep.subr.mxu0 0.0
        %4729 = vmatpush2.msra.mxu0 %v4426
        %4730 = vmatprep.subr.mxu0 0.0
        %4731 = vmatpush2.msra.mxu0 %v4425
        %4732 = vmatprep.subr.mxu0 0.0
        %4733 = vmatpush2.msra.mxu0 %v4424
        %4734 = vmatprep.subr.mxu0 0.0
        %4735 = vmatpush2.msra.mxu0 %v4423
        %4736 = vmatprep.subr.mxu0 0.0
        %4737 = vmatpush2.msra.mxu0 %v4422
        %4738 = vmatprep.subr.mxu0 0.0
        %4739 = vmatpush2.msra.mxu0 %v4421
        %4740 = vmatprep.subr.mxu0 0.0
        %4741 = vmatpush2.msra.mxu0 %v4420
        %4742 = vmatprep.subr.mxu0 0.0
        %4743 = vmatpush2.msra.mxu0 %v4419
        %4744 = vmatprep.subr.mxu0 0.0
        %4745 = vmatpush2.msra.mxu0 %v4418
        %4746 = vmatprep.subr.mxu0 0.0
        %4747 = vmatpush2.msra.mxu0 %v4417
        %4748 = vmatprep.subr.mxu0 0.0
        %4749 = vmatpush2.msra.mxu0 %v4416
        %4750 = vmatprep.subr.mxu0 0.0
        %4751 = vmatpush2.msra.mxu0 %v4415
        %4752 = vmatprep.subr.mxu0 0.0
        %4753 = vmatpush2.msra.mxu0 %v4414
        %4754 = vmatprep.subr.mxu0 0.0
        %4755 = vmatpush2.msra.mxu0 %v4413
        %4756 = vmatprep.subr.mxu0 0.0
        %4757 = vmatpush2.msra.mxu0 %v4412
        %4758 = vmatprep.subr.mxu0 0.0
        %4759 = vmatpush2.msra.mxu0 %v4411
        %4760 = vmatprep.mubr.f32.mxu0 %v4350
        %4761 = vmatmul.mubr.f32.gmra.mxu0 %v4349
        %v4762 = vpop.f32.mrf.mxu0
        %v4763 = vadd.f32 %v4693, %v4762
        %v4764 = vpop.f32.mrf.mxu0
        %4765 = vdwg.mxu0
        %4766 = vmatprep.subr.mxu0 0.0
        %4767 = vmatpush1.msra.mxu0 %v4442
        %4768 = vmatprep.subr.mxu0 0.0
        %4769 = vmatpush1.msra.mxu0 %v4441
        %4770 = vmatprep.subr.mxu0 0.0
        %4771 = vmatpush1.msra.mxu0 %v4440
        %4772 = vmatprep.subr.mxu0 0.0
        %4773 = vmatpush1.msra.mxu0 %v4439
        %4774 = vmatprep.subr.mxu0 0.0
        %4775 = vmatpush1.msra.mxu0 %v4438
        %4776 = vmatprep.subr.mxu0 0.0
        %4777 = vmatpush1.msra.mxu0 %v4437
        %4778 = vmatprep.subr.mxu0 0.0
        %4779 = vmatpush1.msra.mxu0 %v4436
        %4780 = vmatprep.subr.mxu0 0.0
        %4781 = vmatpush1.msra.mxu0 %v4435
        %4782 = vmatprep.subr.mxu0 0.0
        %4783 = vmatpush1.msra.mxu0 %v4434
        %4784 = vmatprep.subr.mxu0 0.0
        %4785 = vmatpush1.msra.mxu0 %v4433
        %4786 = vmatprep.subr.mxu0 0.0
        %4787 = vmatpush1.msra.mxu0 %v4432
        %4788 = vmatprep.subr.mxu0 0.0
        %4789 = vmatpush1.msra.mxu0 %v4431
        %4790 = vmatprep.subr.mxu0 0.0
        %4791 = vmatpush1.msra.mxu0 %v4430
        %4792 = vmatprep.subr.mxu0 0.0
        %4793 = vmatpush1.msra.mxu0 %v4429
        %4794 = vmatprep.subr.mxu0 0.0
        %4795 = vmatpush1.msra.mxu0 %v4428
        %4796 = vmatprep.subr.mxu0 0.0
        %4797 = vmatpush1.msra.mxu0 %v4427
        %4798 = vmatprep.subr.mxu0 0.0
        %4799 = vmatpush2.msra.mxu0 %v4458
        %4800 = vmatprep.subr.mxu0 0.0
        %4801 = vmatpush2.msra.mxu0 %v4457
        %4802 = vmatprep.subr.mxu0 0.0
        %4803 = vmatpush2.msra.mxu0 %v4456
        %4804 = vmatprep.subr.mxu0 0.0
        %4805 = vmatpush2.msra.mxu0 %v4455
        %4806 = vmatprep.subr.mxu0 0.0
        %4807 = vmatpush2.msra.mxu0 %v4454
        %4808 = vmatprep.subr.mxu0 0.0
        %4809 = vmatpush2.msra.mxu0 %v4453
        %4810 = vmatprep.subr.mxu0 0.0
        %4811 = vmatpush2.msra.mxu0 %v4452
        %4812 = vmatprep.subr.mxu0 0.0
        %4813 = vmatpush2.msra.mxu0 %v4451
        %4814 = vmatprep.subr.mxu0 0.0
        %4815 = vmatpush2.msra.mxu0 %v4450
        %4816 = vmatprep.subr.mxu0 0.0
        %4817 = vmatpush2.msra.mxu0 %v4449
        %4818 = vmatprep.subr.mxu0 0.0
        %4819 = vmatpush2.msra.mxu0 %v4448
        %4820 = vmatprep.subr.mxu0 0.0
        %4821 = vmatpush2.msra.mxu0 %v4447
        %4822 = vmatprep.subr.mxu0 0.0
        %4823 = vmatpush2.msra.mxu0 %v4446
        %4824 = vmatprep.subr.mxu0 0.0
        %4825 = vmatpush2.msra.mxu0 %v4445
        %4826 = vmatprep.subr.mxu0 0.0
        %4827 = vmatpush2.msra.mxu0 %v4444
        %4828 = vmatprep.subr.mxu0 0.0
        %4829 = vmatpush2.msra.mxu0 %v4443
        %4830 = vmatprep.mubr.f32.mxu0 %v4352
        %4831 = vmatmul.mubr.f32.gmra.mxu0 %v4351
        %v4832 = vpop.f32.mrf.mxu0
        %v4833 = vadd.f32 %v4763, %v4832
        %v4834 = vpop.f32.mrf.mxu0
        %4835 = vdwg.mxu0
        %4836 = vmatprep.subr.mxu0 0.0
        %4837 = vmatpush1.msra.mxu0 %v4474
        %4838 = vmatprep.subr.mxu0 0.0
        %4839 = vmatpush1.msra.mxu0 %v4473
        %4840 = vmatprep.subr.mxu0 0.0
        %4841 = vmatpush1.msra.mxu0 %v4472
        %4842 = vmatprep.subr.mxu0 0.0
        %4843 = vmatpush1.msra.mxu0 %v4471
        %4844 = vmatprep.subr.mxu0 0.0
        %4845 = vmatpush1.msra.mxu0 %v4470
        %4846 = vmatprep.subr.mxu0 0.0
        %4847 = vmatpush1.msra.mxu0 %v4469
        %4848 = vmatprep.subr.mxu0 0.0
        %4849 = vmatpush1.msra.mxu0 %v4468
        %4850 = vmatprep.subr.mxu0 0.0
        %4851 = vmatpush1.msra.mxu0 %v4467
        %4852 = vmatprep.subr.mxu0 0.0
        %4853 = vmatpush1.msra.mxu0 %v4466
        %4854 = vmatprep.subr.mxu0 0.0
        %4855 = vmatpush1.msra.mxu0 %v4465
        %4856 = vmatprep.subr.mxu0 0.0
        %4857 = vmatpush1.msra.mxu0 %v4464
        %4858 = vmatprep.subr.mxu0 0.0
        %4859 = vmatpush1.msra.mxu0 %v4463
        %4860 = vmatprep.subr.mxu0 0.0
        %4861 = vmatpush1.msra.mxu0 %v4462
        %4862 = vmatprep.subr.mxu0 0.0
        %4863 = vmatpush1.msra.mxu0 %v4461
        %4864 = vmatprep.subr.mxu0 0.0
        %4865 = vmatpush1.msra.mxu0 %v4460
        %4866 = vmatprep.subr.mxu0 0.0
        %4867 = vmatpush1.msra.mxu0 %v4459
        %4868 = vmatprep.subr.mxu0 0.0
        %4869 = vmatpush2.msra.mxu0 %v4490
        %4870 = vmatprep.subr.mxu0 0.0
        %4871 = vmatpush2.msra.mxu0 %v4489
        %4872 = vmatprep.subr.mxu0 0.0
        %4873 = vmatpush2.msra.mxu0 %v4488
        %4874 = vmatprep.subr.mxu0 0.0
        %4875 = vmatpush2.msra.mxu0 %v4487
        %4876 = vmatprep.subr.mxu0 0.0
        %4877 = vmatpush2.msra.mxu0 %v4486
        %4878 = vmatprep.subr.mxu0 0.0
        %4879 = vmatpush2.msra.mxu0 %v4485
        %4880 = vmatprep.subr.mxu0 0.0
        %4881 = vmatpush2.msra.mxu0 %v4484
        %4882 = vmatprep.subr.mxu0 0.0
        %4883 = vmatpush2.msra.mxu0 %v4483
        %4884 = vmatprep.subr.mxu0 0.0
        %4885 = vmatpush2.msra.mxu0 %v4482
        %4886 = vmatprep.subr.mxu0 0.0
        %4887 = vmatpush2.msra.mxu0 %v4481
        %4888 = vmatprep.subr.mxu0 0.0
        %4889 = vmatpush2.msra.mxu0 %v4480
        %4890 = vmatprep.subr.mxu0 0.0
        %4891 = vmatpush2.msra.mxu0 %v4479
        %4892 = vmatprep.subr.mxu0 0.0
        %4893 = vmatpush2.msra.mxu0 %v4478
        %4894 = vmatprep.subr.mxu0 0.0
        %4895 = vmatpush2.msra.mxu0 %v4477
        %4896 = vmatprep.subr.mxu0 0.0
        %4897 = vmatpush2.msra.mxu0 %v4476
        %4898 = vmatprep.subr.mxu0 0.0
        %4899 = vmatpush2.msra.mxu0 %v4475
        %4900 = vmatprep.mubr.f32.mxu0 %v4354
        %4901 = vmatmul.mubr.f32.gmra.mxu0 %v4353
        %v4902 = vpop.f32.mrf.mxu0
        %v4903 = vadd.f32 %v4833, %v4902
        %v4904 = vpop.f32.mrf.mxu0
        %4905 = vdwg.mxu0
        %4906 = vmatprep.subr.mxu0 0.0
        %4907 = vmatpush1.msra.mxu0 %v4506
        %4908 = vmatprep.subr.mxu0 0.0
        %4909 = vmatpush1.msra.mxu0 %v4505
        %4910 = vmatprep.subr.mxu0 0.0
        %4911 = vmatpush1.msra.mxu0 %v4504
        %4912 = vmatprep.subr.mxu0 0.0
        %4913 = vmatpush1.msra.mxu0 %v4503
        %4914 = vmatprep.subr.mxu0 0.0
        %4915 = vmatpush1.msra.mxu0 %v4502
        %4916 = vmatprep.subr.mxu0 0.0
        %4917 = vmatpush1.msra.mxu0 %v4501
        %4918 = vmatprep.subr.mxu0 0.0
        %4919 = vmatpush1.msra.mxu0 %v4500
        %4920 = vmatprep.subr.mxu0 0.0
        %4921 = vmatpush1.msra.mxu0 %v4499
        %4922 = vmatprep.subr.mxu0 0.0
        %4923 = vmatpush1.msra.mxu0 %v4498
        %4924 = vmatprep.subr.mxu0 0.0
        %4925 = vmatpush1.msra.mxu0 %v4497
        %4926 = vmatprep.subr.mxu0 0.0
        %4927 = vmatpush1.msra.mxu0 %v4496
        %4928 = vmatprep.subr.mxu0 0.0
        %4929 = vmatpush1.msra.mxu0 %v4495
        %4930 = vmatprep.subr.mxu0 0.0
        %4931 = vmatpush1.msra.mxu0 %v4494
        %4932 = vmatprep.subr.mxu0 0.0
        %4933 = vmatpush1.msra.mxu0 %v4493
        %4934 = vmatprep.subr.mxu0 0.0
        %4935 = vmatpush1.msra.mxu0 %v4492
        %4936 = vmatprep.subr.mxu0 0.0
        %4937 = vmatpush1.msra.mxu0 %v4491
        %4938 = vmatprep.subr.mxu0 0.0
        %4939 = vmatpush2.msra.mxu0 %v4522
        %4940 = vmatprep.subr.mxu0 0.0
        %4941 = vmatpush2.msra.mxu0 %v4521
        %4942 = vmatprep.subr.mxu0 0.0
        %4943 = vmatpush2.msra.mxu0 %v4520
        %4944 = vmatprep.subr.mxu0 0.0
        %4945 = vmatpush2.msra.mxu0 %v4519
        %4946 = vmatprep.subr.mxu0 0.0
        %4947 = vmatpush2.msra.mxu0 %v4518
        %4948 = vmatprep.subr.mxu0 0.0
        %4949 = vmatpush2.msra.mxu0 %v4517
        %4950 = vmatprep.subr.mxu0 0.0
        %4951 = vmatpush2.msra.mxu0 %v4516
        %4952 = vmatprep.subr.mxu0 0.0
        %4953 = vmatpush2.msra.mxu0 %v4515
        %4954 = vmatprep.subr.mxu0 0.0
        %4955 = vmatpush2.msra.mxu0 %v4514
        %4956 = vmatprep.subr.mxu0 0.0
        %4957 = vmatpush2.msra.mxu0 %v4513
        %4958 = vmatprep.subr.mxu0 0.0
        %4959 = vmatpush2.msra.mxu0 %v4512
        %4960 = vmatprep.subr.mxu0 0.0
        %4961 = vmatpush2.msra.mxu0 %v4511
        %4962 = vmatprep.subr.mxu0 0.0
        %4963 = vmatpush2.msra.mxu0 %v4510
        %4964 = vmatprep.subr.mxu0 0.0
        %4965 = vmatpush2.msra.mxu0 %v4509
        %4966 = vmatprep.subr.mxu0 0.0
        %4967 = vmatpush2.msra.mxu0 %v4508
        %4968 = vmatprep.subr.mxu0 0.0
        %4969 = vmatpush2.msra.mxu0 %v4507
        %4970 = vmatprep.mubr.f32.mxu0 %v4356
        %4971 = vmatmul.mubr.f32.gmra.mxu0 %v4355
        %v4972 = vpop.f32.mrf.mxu0
        %v4973 = vadd.f32 %v4903, %v4972
        %v4974 = vpop.f32.mrf.mxu0
        %4975 = vdwg.mxu0
        %4976 = vmatprep.subr.mxu0 0.0
        %4977 = vmatpush1.msra.mxu0 %v4538
        %4978 = vmatprep.subr.mxu0 0.0
        %4979 = vmatpush1.msra.mxu0 %v4537
        %4980 = vmatprep.subr.mxu0 0.0
        %4981 = vmatpush1.msra.mxu0 %v4536
        %4982 = vmatprep.subr.mxu0 0.0
        %4983 = vmatpush1.msra.mxu0 %v4535
        %4984 = vmatprep.subr.mxu0 0.0
        %4985 = vmatpush1.msra.mxu0 %v4534
        %4986 = vmatprep.subr.mxu0 0.0
        %4987 = vmatpush1.msra.mxu0 %v4533
        %4988 = vmatprep.subr.mxu0 0.0
        %4989 = vmatpush1.msra.mxu0 %v4532
        %4990 = vmatprep.subr.mxu0 0.0
        %4991 = vmatpush1.msra.mxu0 %v4531
        %4992 = vmatprep.subr.mxu0 0.0
        %4993 = vmatpush1.msra.mxu0 %v4530
        %4994 = vmatprep.subr.mxu0 0.0
        %4995 = vmatpush1.msra.mxu0 %v4529
        %4996 = vmatprep.subr.mxu0 0.0
        %4997 = vmatpush1.msra.mxu0 %v4528
        %4998 = vmatprep.subr.mxu0 0.0
        %4999 = vmatpush1.msra.mxu0 %v4527
        %5000 = vmatprep.subr.mxu0 0.0
        %5001 = vmatpush1.msra.mxu0 %v4526
        %5002 = vmatprep.subr.mxu0 0.0
        %5003 = vmatpush1.msra.mxu0 %v4525
        %5004 = vmatprep.subr.mxu0 0.0
        %5005 = vmatpush1.msra.mxu0 %v4524
        %5006 = vmatprep.subr.mxu0 0.0
        %5007 = vmatpush1.msra.mxu0 %v4523
        %5008 = vmatprep.subr.mxu0 0.0
        %5009 = vmatpush2.msra.mxu0 %v4554
        %5010 = vmatprep.subr.mxu0 0.0
        %5011 = vmatpush2.msra.mxu0 %v4553
        %5012 = vmatprep.subr.mxu0 0.0
        %5013 = vmatpush2.msra.mxu0 %v4552
        %5014 = vmatprep.subr.mxu0 0.0
        %5015 = vmatpush2.msra.mxu0 %v4551
        %5016 = vmatprep.subr.mxu0 0.0
        %5017 = vmatpush2.msra.mxu0 %v4550
        %5018 = vmatprep.subr.mxu0 0.0
        %5019 = vmatpush2.msra.mxu0 %v4549
        %5020 = vmatprep.subr.mxu0 0.0
        %5021 = vmatpush2.msra.mxu0 %v4548
        %5022 = vmatprep.subr.mxu0 0.0
        %5023 = vmatpush2.msra.mxu0 %v4547
        %5024 = vmatprep.subr.mxu0 0.0
        %5025 = vmatpush2.msra.mxu0 %v4546
        %5026 = vmatprep.subr.mxu0 0.0
        %5027 = vmatpush2.msra.mxu0 %v4545
        %5028 = vmatprep.subr.mxu0 0.0
        %5029 = vmatpush2.msra.mxu0 %v4544
        %5030 = vmatprep.subr.mxu0 0.0
        %5031 = vmatpush2.msra.mxu0 %v4543
        %5032 = vmatprep.subr.mxu0 0.0
        %5033 = vmatpush2.msra.mxu0 %v4542
        %5034 = vmatprep.subr.mxu0 0.0
        %5035 = vmatpush2.msra.mxu0 %v4541
        %5036 = vmatprep.subr.mxu0 0.0
        %5037 = vmatpush2.msra.mxu0 %v4540
        %5038 = vmatprep.subr.mxu0 0.0
        %5039 = vmatpush2.msra.mxu0 %v4539
        %5040 = vmatprep.mubr.f32.mxu0 %v4358
        %5041 = vmatmul.mubr.f32.gmra.mxu0 %v4357
        %v5042 = vpop.f32.mrf.mxu0
        %v5043 = vadd.f32 %v4973, %v5042
        %v5044 = vpop.f32.mrf.mxu0
        %5045 = vdwg.mxu0
        %5046 = vmatprep.subr.mxu0 0.0
        %5047 = vmatpush1.msra.mxu0 %v4570
        %5048 = vmatprep.subr.mxu0 0.0
        %5049 = vmatpush1.msra.mxu0 %v4569
        %5050 = vmatprep.subr.mxu0 0.0
        %5051 = vmatpush1.msra.mxu0 %v4568
        %5052 = vmatprep.subr.mxu0 0.0
        %5053 = vmatpush1.msra.mxu0 %v4567
        %5054 = vmatprep.subr.mxu0 0.0
        %5055 = vmatpush1.msra.mxu0 %v4566
        %5056 = vmatprep.subr.mxu0 0.0
        %5057 = vmatpush1.msra.mxu0 %v4565
        %5058 = vmatprep.subr.mxu0 0.0
        %5059 = vmatpush1.msra.mxu0 %v4564
        %5060 = vmatprep.subr.mxu0 0.0
        %5061 = vmatpush1.msra.mxu0 %v4563
        %5062 = vmatprep.subr.mxu0 0.0
        %5063 = vmatpush1.msra.mxu0 %v4562
        %5064 = vmatprep.subr.mxu0 0.0
        %5065 = vmatpush1.msra.mxu0 %v4561
        %5066 = vmatprep.subr.mxu0 0.0
        %5067 = vmatpush1.msra.mxu0 %v4560
        %5068 = vmatprep.subr.mxu0 0.0
        %5069 = vmatpush1.msra.mxu0 %v4559
        %5070 = vmatprep.subr.mxu0 0.0
        %5071 = vmatpush1.msra.mxu0 %v4558
        %5072 = vmatprep.subr.mxu0 0.0
        %5073 = vmatpush1.msra.mxu0 %v4557
        %5074 = vmatprep.subr.mxu0 0.0
        %5075 = vmatpush1.msra.mxu0 %v4556
        %5076 = vmatprep.subr.mxu0 0.0
        %5077 = vmatpush1.msra.mxu0 %v4555
        %5078 = vmatprep.subr.mxu0 0.0
        %5079 = vmatpush2.msra.mxu0 %v4586
        %5080 = vmatprep.subr.mxu0 0.0
        %5081 = vmatpush2.msra.mxu0 %v4585
        %5082 = vmatprep.subr.mxu0 0.0
        %5083 = vmatpush2.msra.mxu0 %v4584
        %5084 = vmatprep.subr.mxu0 0.0
        %5085 = vmatpush2.msra.mxu0 %v4583
        %5086 = vmatprep.subr.mxu0 0.0
        %5087 = vmatpush2.msra.mxu0 %v4582
        %5088 = vmatprep.subr.mxu0 0.0
        %5089 = vmatpush2.msra.mxu0 %v4581
        %5090 = vmatprep.subr.mxu0 0.0
        %5091 = vmatpush2.msra.mxu0 %v4580
        %5092 = vmatprep.subr.mxu0 0.0
        %5093 = vmatpush2.msra.mxu0 %v4579
        %5094 = vmatprep.subr.mxu0 0.0
        %5095 = vmatpush2.msra.mxu0 %v4578
        %5096 = vmatprep.subr.mxu0 0.0
        %5097 = vmatpush2.msra.mxu0 %v4577
        %5098 = vmatprep.subr.mxu0 0.0
        %5099 = vmatpush2.msra.mxu0 %v4576
        %5100 = vmatprep.subr.mxu0 0.0
        %5101 = vmatpush2.msra.mxu0 %v4575
        %5102 = vmatprep.subr.mxu0 0.0
        %5103 = vmatpush2.msra.mxu0 %v4574
        %5104 = vmatprep.subr.mxu0 0.0
        %5105 = vmatpush2.msra.mxu0 %v4573
        %5106 = vmatprep.subr.mxu0 0.0
        %5107 = vmatpush2.msra.mxu0 %v4572
        %5108 = vmatprep.subr.mxu0 0.0
        %5109 = vmatpush2.msra.mxu0 %v4571
        %5110 = vmatprep.mubr.f32.mxu0 %v4360
        %5111 = vmatmul.mubr.f32.gmra.mxu0 %v4359
        %v5112 = vpop.f32.mrf.mxu0
        %v5113 = vadd.f32 %v5043, %v5112
        %v5114 = vpop.f32.mrf.mxu0
        %5115 = vdwg.mxu0
        %5116 = vmatprep.subr.mxu0 0.0
        %5117 = vmatpush1.msra.mxu0 %v4602
        %5118 = vmatprep.subr.mxu0 0.0
        %5119 = vmatpush1.msra.mxu0 %v4601
        %5120 = vmatprep.subr.mxu0 0.0
        %5121 = vmatpush1.msra.mxu0 %v4600
        %5122 = vmatprep.subr.mxu0 0.0
        %5123 = vmatpush1.msra.mxu0 %v4599
        %5124 = vmatprep.subr.mxu0 0.0
        %5125 = vmatpush1.msra.mxu0 %v4598
        %5126 = vmatprep.subr.mxu0 0.0
        %5127 = vmatpush1.msra.mxu0 %v4597
        %5128 = vmatprep.subr.mxu0 0.0
        %5129 = vmatpush1.msra.mxu0 %v4596
        %5130 = vmatprep.subr.mxu0 0.0
        %5131 = vmatpush1.msra.mxu0 %v4595
        %5132 = vmatprep.subr.mxu0 0.0
        %5133 = vmatpush1.msra.mxu0 %v4594
        %5134 = vmatprep.subr.mxu0 0.0
        %5135 = vmatpush1.msra.mxu0 %v4593
        %5136 = vmatprep.subr.mxu0 0.0
        %5137 = vmatpush1.msra.mxu0 %v4592
        %5138 = vmatprep.subr.mxu0 0.0
        %5139 = vmatpush1.msra.mxu0 %v4591
        %5140 = vmatprep.subr.mxu0 0.0
        %5141 = vmatpush1.msra.mxu0 %v4590
        %5142 = vmatprep.subr.mxu0 0.0
        %5143 = vmatpush1.msra.mxu0 %v4589
        %5144 = vmatprep.subr.mxu0 0.0
        %5145 = vmatpush1.msra.mxu0 %v4588
        %5146 = vmatprep.subr.mxu0 0.0
        %5147 = vmatpush1.msra.mxu0 %v4587
        %5148 = vmatprep.subr.mxu0 0.0
        %5149 = vmatpush2.msra.mxu0 %v4618
        %5150 = vmatprep.subr.mxu0 0.0
        %5151 = vmatpush2.msra.mxu0 %v4617
        %5152 = vmatprep.subr.mxu0 0.0
        %5153 = vmatpush2.msra.mxu0 %v4616
        %5154 = vmatprep.subr.mxu0 0.0
        %5155 = vmatpush2.msra.mxu0 %v4615
        %5156 = vmatprep.subr.mxu0 0.0
        %5157 = vmatpush2.msra.mxu0 %v4614
        %5158 = vmatprep.subr.mxu0 0.0
        %5159 = vmatpush2.msra.mxu0 %v4613
        %5160 = vmatprep.subr.mxu0 0.0
        %5161 = vmatpush2.msra.mxu0 %v4612
        %5162 = vmatprep.subr.mxu0 0.0
        %5163 = vmatpush2.msra.mxu0 %v4611
        %5164 = vmatprep.subr.mxu0 0.0
        %5165 = vmatpush2.msra.mxu0 %v4610
        %5166 = vmatprep.subr.mxu0 0.0
        %5167 = vmatpush2.msra.mxu0 %v4609
        %5168 = vmatprep.subr.mxu0 0.0
        %5169 = vmatpush2.msra.mxu0 %v4608
        %5170 = vmatprep.subr.mxu0 0.0
        %5171 = vmatpush2.msra.mxu0 %v4607
        %5172 = vmatprep.subr.mxu0 0.0
        %5173 = vmatpush2.msra.mxu0 %v4606
        %5174 = vmatprep.subr.mxu0 0.0
        %5175 = vmatpush2.msra.mxu0 %v4605
        %5176 = vmatprep.subr.mxu0 0.0
        %5177 = vmatpush2.msra.mxu0 %v4604
        %5178 = vmatprep.subr.mxu0 0.0
        %5179 = vmatpush2.msra.mxu0 %v4603
        %5180 = vmatprep.mubr.f32.mxu0 %v4362
        %5181 = vmatmul.mubr.f32.gmra.mxu0 %v4361
        %v5182 = vpop.f32.mrf.mxu0
        %v5183 = vadd.f32 %v5113, %v5182
        %v5184 = vpop.f32.mrf.mxu0
        %5185 = vdwg.mxu0
        %v5186 = vadd.f32 %v3627, %v5183
        %v5187 = vld [vmem:[%s37] sm:$0x1]
        %v5188 = vld [vmem:[%s39] sm:$0x1]
        %v5189 = vsel %vm1470, %v5186, 0.0
        %5190 = vadd.xlane.f32.xlu0 %v5189
        %v5191 = vpop.xlane.xlu0 %5190
        %v5192 = vmul.f32 %v5191, %v3413
        %v5193 = vsub.f32 %v5186, %v5192
        %v5194 = vmul.f32 %v5193, %v5193
        %v5195 = vsel %vm1470, %v5194, 0.0
        %5196 = vadd.xlane.f32.xlu0 %v5195
        %v5197 = vpop.xlane.xlu0 %5196
        %v5198 = vmul.f32 %v5197, %v3413
        %v5199 = vadd.f32 %v5198, 1e-05
        %v5200 = vrsqrt.pop %v5199
        %v5201 = vmul.f32 %v5193, %v5200
        %v5203 = vlaneseq
        %v5204 = vshrl.u32 %v5203, 7
        %v5205 = vsub.s32 0, %v5204
        %v5206 = vrot.slane %v5187, %v5205
        %v5208 = vmul.f32 %v5201, %v5206
        %v5210 = vlaneseq
        %v5211 = vshrl.u32 %v5210, 7
        %v5212 = vsub.s32 0, %v5211
        %v5213 = vrot.slane %v5188, %v5212
        %v5215 = vadd.f32 %v5208, %v5213
        %v5216 = vld [vmem:[%s49] sm:$0xff]
        %v5217 = vld [vmem:[%s49 + $0x8] sm:$0xff]
        %v5218 = vld [vmem:[%s49 + $0x10] sm:$0xff]
        %v5219 = vld [vmem:[%s49 + $0x18] sm:$0xff]
        %v5220 = vld [vmem:[%s55] sm:$0x1]
        %v5222 = vlaneseq
        %v5223 = vshrl.u32 %v5222, 7
        %v5224 = vsub.s32 0, %v5223
        %v5225 = vrot.slane %v5220, %v5224
        %v5228 = vsel %vm1470, %v5215, 0
        %5230 = vmatprep.subr.mxu0 0.0
        %5231 = vmatpush1.msra.mxu0 0.0
        %5232 = vmatprep.subr.mxu0 0.0
        %5233 = vmatpush1.msra.mxu0 0.0
        %5234 = vmatprep.subr.mxu0 0.0
        %5235 = vmatpush1.msra.mxu0 0.0
        %5236 = vmatprep.subr.mxu0 0.0
        %5237 = vmatpush1.msra.mxu0 0.0
        %5238 = vmatprep.subr.mxu0 0.0
        %5239 = vmatpush1.msra.mxu0 0.0
        %5240 = vmatprep.subr.mxu0 0.0
        %5241 = vmatpush1.msra.mxu0 0.0
        %5242 = vmatprep.subr.mxu0 0.0
        %5243 = vmatpush1.msra.mxu0 0.0
        %5244 = vmatprep.subr.mxu0 0.0
        %5245 = vmatpush1.msra.mxu0 0.0
        %5246 = vmatprep.subr.mxu0 0.0
        %5247 = vmatpush1.msra.mxu0 0.0
        %5248 = vmatprep.subr.mxu0 0.0
        %5249 = vmatpush1.msra.mxu0 0.0
        %5250 = vmatprep.subr.mxu0 0.0
        %5251 = vmatpush1.msra.mxu0 0.0
        %5252 = vmatprep.subr.mxu0 0.0
        %5253 = vmatpush1.msra.mxu0 0.0
        %5254 = vmatprep.subr.mxu0 0.0
        %5255 = vmatpush1.msra.mxu0 %v5219
        %5256 = vmatprep.subr.mxu0 0.0
        %5257 = vmatpush1.msra.mxu0 %v5218
        %5258 = vmatprep.subr.mxu0 0.0
        %5259 = vmatpush1.msra.mxu0 %v5217
        %5260 = vmatprep.subr.mxu0 0.0
        %5261 = vmatpush1.msra.mxu0 %v5216
        %5262 = vmatprep.subr.mxu0 0.0
        %5263 = vmatpush2.msra.mxu0 0.0
        %5264 = vmatprep.subr.mxu0 0.0
        %5265 = vmatpush2.msra.mxu0 0.0
        %5266 = vmatprep.subr.mxu0 0.0
        %5267 = vmatpush2.msra.mxu0 0.0
        %5268 = vmatprep.subr.mxu0 0.0
        %5269 = vmatpush2.msra.mxu0 0.0
        %5270 = vmatprep.subr.mxu0 0.0
        %5271 = vmatpush2.msra.mxu0 0.0
        %5272 = vmatprep.subr.mxu0 0.0
        %5273 = vmatpush2.msra.mxu0 0.0
        %5274 = vmatprep.subr.mxu0 0.0
        %5275 = vmatpush2.msra.mxu0 0.0
        %5276 = vmatprep.subr.mxu0 0.0
        %5277 = vmatpush2.msra.mxu0 0.0
        %5278 = vmatprep.subr.mxu0 0.0
        %5279 = vmatpush2.msra.mxu0 0.0
        %5280 = vmatprep.subr.mxu0 0.0
        %5281 = vmatpush2.msra.mxu0 0.0
        %5282 = vmatprep.subr.mxu0 0.0
        %5283 = vmatpush2.msra.mxu0 0.0
        %5284 = vmatprep.subr.mxu0 0.0
        %5285 = vmatpush2.msra.mxu0 0.0
        %5286 = vmatprep.subr.mxu0 0.0
        %5287 = vmatpush2.msra.mxu0 0.0
        %5288 = vmatprep.subr.mxu0 0.0
        %5289 = vmatpush2.msra.mxu0 0.0
        %5290 = vmatprep.subr.mxu0 0.0
        %5291 = vmatpush2.msra.mxu0 0.0
        %5292 = vmatprep.subr.mxu0 0.0
        %5293 = vmatpush2.msra.mxu0 0.0
        %5294 = vmatprep.mubr.f32.mxu0 0.0
        %5295 = vmatmul.mubr.f32.gmra.mxu0 %v5228
        %v5296 = vpop.f32.mrf.mxu0
        %v5297 = vadd.f32 %v5225, %v5296
        %v5298 = vpop.f32.mrf.mxu0
        %5299 = vdwg.mxu0
        %v5300 = vld [vmem:[%s51] sm:$0xff]
        %v5301 = vld [vmem:[%s51 + $0x8] sm:$0xff]
        %v5302 = vld [vmem:[%s51 + $0x10] sm:$0xff]
        %v5303 = vld [vmem:[%s51 + $0x18] sm:$0xff]
        %v5304 = vld [vmem:[%s57] sm:$0x1]
        %v5306 = vlaneseq
        %v5307 = vshrl.u32 %v5306, 7
        %v5308 = vsub.s32 0, %v5307
        %v5309 = vrot.slane %v5304, %v5308
        %5311 = vmatprep.subr.mxu0 0.0
        %5312 = vmatpush1.msra.mxu0 0.0
        %5313 = vmatprep.subr.mxu0 0.0
        %5314 = vmatpush1.msra.mxu0 0.0
        %5315 = vmatprep.subr.mxu0 0.0
        %5316 = vmatpush1.msra.mxu0 0.0
        %5317 = vmatprep.subr.mxu0 0.0
        %5318 = vmatpush1.msra.mxu0 0.0
        %5319 = vmatprep.subr.mxu0 0.0
        %5320 = vmatpush1.msra.mxu0 0.0
        %5321 = vmatprep.subr.mxu0 0.0
        %5322 = vmatpush1.msra.mxu0 0.0
        %5323 = vmatprep.subr.mxu0 0.0
        %5324 = vmatpush1.msra.mxu0 0.0
        %5325 = vmatprep.subr.mxu0 0.0
        %5326 = vmatpush1.msra.mxu0 0.0
        %5327 = vmatprep.subr.mxu0 0.0
        %5328 = vmatpush1.msra.mxu0 0.0
        %5329 = vmatprep.subr.mxu0 0.0
        %5330 = vmatpush1.msra.mxu0 0.0
        %5331 = vmatprep.subr.mxu0 0.0
        %5332 = vmatpush1.msra.mxu0 0.0
        %5333 = vmatprep.subr.mxu0 0.0
        %5334 = vmatpush1.msra.mxu0 0.0
        %5335 = vmatprep.subr.mxu0 0.0
        %5336 = vmatpush1.msra.mxu0 %v5303
        %5337 = vmatprep.subr.mxu0 0.0
        %5338 = vmatpush1.msra.mxu0 %v5302
        %5339 = vmatprep.subr.mxu0 0.0
        %5340 = vmatpush1.msra.mxu0 %v5301
        %5341 = vmatprep.subr.mxu0 0.0
        %5342 = vmatpush1.msra.mxu0 %v5300
        %5343 = vmatprep.subr.mxu0 0.0
        %5344 = vmatpush2.msra.mxu0 0.0
        %5345 = vmatprep.subr.mxu0 0.0
        %5346 = vmatpush2.msra.mxu0 0.0
        %5347 = vmatprep.subr.mxu0 0.0
        %5348 = vmatpush2.msra.mxu0 0.0
        %5349 = vmatprep.subr.mxu0 0.0
        %5350 = vmatpush2.msra.mxu0 0.0
        %5351 = vmatprep.subr.mxu0 0.0
        %5352 = vmatpush2.msra.mxu0 0.0
        %5353 = vmatprep.subr.mxu0 0.0
        %5354 = vmatpush2.msra.mxu0 0.0
        %5355 = vmatprep.subr.mxu0 0.0
        %5356 = vmatpush2.msra.mxu0 0.0
        %5357 = vmatprep.subr.mxu0 0.0
        %5358 = vmatpush2.msra.mxu0 0.0
        %5359 = vmatprep.subr.mxu0 0.0
        %5360 = vmatpush2.msra.mxu0 0.0
        %5361 = vmatprep.subr.mxu0 0.0
        %5362 = vmatpush2.msra.mxu0 0.0
        %5363 = vmatprep.subr.mxu0 0.0
        %5364 = vmatpush2.msra.mxu0 0.0
        %5365 = vmatprep.subr.mxu0 0.0
        %5366 = vmatpush2.msra.mxu0 0.0
        %5367 = vmatprep.subr.mxu0 0.0
        %5368 = vmatpush2.msra.mxu0 0.0
        %5369 = vmatprep.subr.mxu0 0.0
        %5370 = vmatpush2.msra.mxu0 0.0
        %5371 = vmatprep.subr.mxu0 0.0
        %5372 = vmatpush2.msra.mxu0 0.0
        %5373 = vmatprep.subr.mxu0 0.0
        %5374 = vmatpush2.msra.mxu0 0.0
        %5375 = vmatprep.mubr.f32.mxu0 0.0
        %5376 = vmatmul.mubr.f32.gmra.mxu0 %v5228
        %v5377 = vpop.f32.mrf.mxu0
        %v5378 = vadd.f32 %v5309, %v5377
        %v5379 = vpop.f32.mrf.mxu0
        %5380 = vdwg.mxu0
        %v5381 = vld [vmem:[%s53] sm:$0xff]
        %v5382 = vld [vmem:[%s53 + $0x8] sm:$0xff]
        %v5383 = vld [vmem:[%s53 + $0x10] sm:$0xff]
        %v5384 = vld [vmem:[%s53 + $0x18] sm:$0xff]
        %v5385 = vld [vmem:[%s59] sm:$0x1]
        %v5387 = vlaneseq
        %v5388 = vshrl.u32 %v5387, 7
        %v5389 = vsub.s32 0, %v5388
        %v5390 = vrot.slane %v5385, %v5389
        %5392 = vmatprep.subr.mxu0 0.0
        %5393 = vmatpush1.msra.mxu0 0.0
        %5394 = vmatprep.subr.mxu0 0.0
        %5395 = vmatpush1.msra.mxu0 0.0
        %5396 = vmatprep.subr.mxu0 0.0
        %5397 = vmatpush1.msra.mxu0 0.0
        %5398 = vmatprep.subr.mxu0 0.0
        %5399 = vmatpush1.msra.mxu0 0.0
        %5400 = vmatprep.subr.mxu0 0.0
        %5401 = vmatpush1.msra.mxu0 0.0
        %5402 = vmatprep.subr.mxu0 0.0
        %5403 = vmatpush1.msra.mxu0 0.0
        %5404 = vmatprep.subr.mxu0 0.0
        %5405 = vmatpush1.msra.mxu0 0.0
        %5406 = vmatprep.subr.mxu0 0.0
        %5407 = vmatpush1.msra.mxu0 0.0
        %5408 = vmatprep.subr.mxu0 0.0
        %5409 = vmatpush1.msra.mxu0 0.0
        %5410 = vmatprep.subr.mxu0 0.0
        %5411 = vmatpush1.msra.mxu0 0.0
        %5412 = vmatprep.subr.mxu0 0.0
        %5413 = vmatpush1.msra.mxu0 0.0
        %5414 = vmatprep.subr.mxu0 0.0
        %5415 = vmatpush1.msra.mxu0 0.0
        %5416 = vmatprep.subr.mxu0 0.0
        %5417 = vmatpush1.msra.mxu0 %v5384
        %5418 = vmatprep.subr.mxu0 0.0
        %5419 = vmatpush1.msra.mxu0 %v5383
        %5420 = vmatprep.subr.mxu0 0.0
        %5421 = vmatpush1.msra.mxu0 %v5382
        %5422 = vmatprep.subr.mxu0 0.0
        %5423 = vmatpush1.msra.mxu0 %v5381
        %5424 = vmatprep.subr.mxu0 0.0
        %5425 = vmatpush2.msra.mxu0 0.0
        %5426 = vmatprep.subr.mxu0 0.0
        %5427 = vmatpush2.msra.mxu0 0.0
        %5428 = vmatprep.subr.mxu0 0.0
        %5429 = vmatpush2.msra.mxu0 0.0
        %5430 = vmatprep.subr.mxu0 0.0
        %5431 = vmatpush2.msra.mxu0 0.0
        %5432 = vmatprep.subr.mxu0 0.0
        %5433 = vmatpush2.msra.mxu0 0.0
        %5434 = vmatprep.subr.mxu0 0.0
        %5435 = vmatpush2.msra.mxu0 0.0
        %5436 = vmatprep.subr.mxu0 0.0
        %5437 = vmatpush2.msra.mxu0 0.0
        %5438 = vmatprep.subr.mxu0 0.0
        %5439 = vmatpush2.msra.mxu0 0.0
        %5440 = vmatprep.subr.mxu0 0.0
        %5441 = vmatpush2.msra.mxu0 0.0
        %5442 = vmatprep.subr.mxu0 0.0
        %5443 = vmatpush2.msra.mxu0 0.0
        %5444 = vmatprep.subr.mxu0 0.0
        %5445 = vmatpush2.msra.mxu0 0.0
        %5446 = vmatprep.subr.mxu0 0.0
        %5447 = vmatpush2.msra.mxu0 0.0
        %5448 = vmatprep.subr.mxu0 0.0
        %5449 = vmatpush2.msra.mxu0 0.0
        %5450 = vmatprep.subr.mxu0 0.0
        %5451 = vmatpush2.msra.mxu0 0.0
        %5452 = vmatprep.subr.mxu0 0.0
        %5453 = vmatpush2.msra.mxu0 0.0
        %5454 = vmatprep.subr.mxu0 0.0
        %5455 = vmatpush2.msra.mxu0 0.0
        %5456 = vmatprep.mubr.f32.mxu0 0.0
        %5457 = vmatmul.mubr.f32.gmra.mxu0 %v5228
        %v5458 = vpop.f32.mrf.mxu0
        %v5459 = vadd.f32 %v5390, %v5458
        %v5460 = vpop.f32.mrf.mxu0
        %5461 = vdwg.mxu0
        %v5463 = vsel %vm1706, %v5297, 0
        %v5466 = vsel %vm1706, %v5378, 0
        %5468 = vmatprep.subr.mxu0 0.0
        %5469 = vmatpush1.xpose.msra.mxu0 0.0
        %5470 = vmatprep.subr.mxu0 0.0
        %5471 = vmatpush1.xpose.msra.mxu0 0.0
        %5472 = vmatprep.subr.mxu0 0.0
        %5473 = vmatpush1.xpose.msra.mxu0 0.0
        %5474 = vmatprep.subr.mxu0 0.0
        %5475 = vmatpush1.xpose.msra.mxu0 0.0
        %5476 = vmatprep.subr.mxu0 0.0
        %5477 = vmatpush1.xpose.msra.mxu0 0.0
        %5478 = vmatprep.subr.mxu0 0.0
        %5479 = vmatpush1.xpose.msra.mxu0 0.0
        %5480 = vmatprep.subr.mxu0 0.0
        %5481 = vmatpush1.xpose.msra.mxu0 0.0
        %5482 = vmatprep.subr.mxu0 0.0
        %5483 = vmatpush1.xpose.msra.mxu0 0.0
        %5484 = vmatprep.subr.mxu0 0.0
        %5485 = vmatpush1.xpose.msra.mxu0 0.0
        %5486 = vmatprep.subr.mxu0 0.0
        %5487 = vmatpush1.xpose.msra.mxu0 0.0
        %5488 = vmatprep.subr.mxu0 0.0
        %5489 = vmatpush1.xpose.msra.mxu0 0.0
        %5490 = vmatprep.subr.mxu0 0.0
        %5491 = vmatpush1.xpose.msra.mxu0 0.0
        %5492 = vmatprep.subr.mxu0 0.0
        %5493 = vmatpush1.xpose.msra.mxu0 0.0
        %5494 = vmatprep.subr.mxu0 0.0
        %5495 = vmatpush1.xpose.msra.mxu0 0.0
        %5496 = vmatprep.subr.mxu0 0.0
        %5497 = vmatpush1.xpose.msra.mxu0 0.0
        %5498 = vmatprep.subr.mxu0 0.0
        %5499 = vmatpush1.xpose.msra.mxu0 %v5466
        %5500 = vmatprep.subr.mxu0 0.0
        %5501 = vmatpush2.xpose.msra.mxu0 0.0
        %5502 = vmatprep.subr.mxu0 0.0
        %5503 = vmatpush2.xpose.msra.mxu0 0.0
        %5504 = vmatprep.subr.mxu0 0.0
        %5505 = vmatpush2.xpose.msra.mxu0 0.0
        %5506 = vmatprep.subr.mxu0 0.0
        %5507 = vmatpush2.xpose.msra.mxu0 0.0
        %5508 = vmatprep.subr.mxu0 0.0
        %5509 = vmatpush2.xpose.msra.mxu0 0.0
        %5510 = vmatprep.subr.mxu0 0.0
        %5511 = vmatpush2.xpose.msra.mxu0 0.0
        %5512 = vmatprep.subr.mxu0 0.0
        %5513 = vmatpush2.xpose.msra.mxu0 0.0
        %5514 = vmatprep.subr.mxu0 0.0
        %5515 = vmatpush2.xpose.msra.mxu0 0.0
        %5516 = vmatprep.subr.mxu0 0.0
        %5517 = vmatpush2.xpose.msra.mxu0 0.0
        %5518 = vmatprep.subr.mxu0 0.0
        %5519 = vmatpush2.xpose.msra.mxu0 0.0
        %5520 = vmatprep.subr.mxu0 0.0
        %5521 = vmatpush2.xpose.msra.mxu0 0.0
        %5522 = vmatprep.subr.mxu0 0.0
        %5523 = vmatpush2.xpose.msra.mxu0 0.0
        %5524 = vmatprep.subr.mxu0 0.0
        %5525 = vmatpush2.xpose.msra.mxu0 0.0
        %5526 = vmatprep.subr.mxu0 0.0
        %5527 = vmatpush2.xpose.msra.mxu0 0.0
        %5528 = vmatprep.subr.mxu0 0.0
        %5529 = vmatpush2.xpose.msra.mxu0 0.0
        %5530 = vmatprep.subr.mxu0 0.0
        %5531 = vmatpush2.xpose.msra.mxu0 0.0
        %5532 = vmatprep.mubr.f32.mxu0 0.0
        %5533 = vmatmul.mubr.f32.gmra.mxu0 %v5463
        %v5534 = vpop.f32.mrf.mxu0
        %v5535 = vadd.f32 0.0, %v5534
        %v5536 = vpop.f32.mrf.mxu0
        %5537 = vdwg.mxu0
        %v5538 = vmul.f32 %v5535, 0.35355338
        %v5539 = vsel %vm1706, %v5538, -inf
        %5540 = vmax.xlane.f32.xlu0 %v5539
        %v5541 = vpop.xlane.xlu0 %5540
        %v5542 = vsub.f32 %v5538, %v5541
        %v5543 = vmul.f32 %v5542, 1.442695
        %v5544 = vpow.pop %v5543
        %v5545 = vsel %vm1706, %v5544, 0.0
        %5546 = vadd.xlane.f32.xlu0 %v5545
        %v5547 = vpop.xlane.xlu0 %5546
        %v5548 = vrcp.pop %v5547
        %v5549 = vmul.f32 %v5544, %v5548
        %v5551 = vsel %vm1706, %v5549, 0
        %5553 = vmatprep.subr.mxu0 0.0
        %5554 = vmatpush1.msra.mxu0 0.0
        %5555 = vmatprep.subr.mxu0 0.0
        %5556 = vmatpush1.msra.mxu0 0.0
        %5557 = vmatprep.subr.mxu0 0.0
        %5558 = vmatpush1.msra.mxu0 0.0
        %5559 = vmatprep.subr.mxu0 0.0
        %5560 = vmatpush1.msra.mxu0 0.0
        %5561 = vmatprep.subr.mxu0 0.0
        %5562 = vmatpush1.msra.mxu0 0.0
        %5563 = vmatprep.subr.mxu0 0.0
        %5564 = vmatpush1.msra.mxu0 0.0
        %5565 = vmatprep.subr.mxu0 0.0
        %5566 = vmatpush1.msra.mxu0 0.0
        %5567 = vmatprep.subr.mxu0 0.0
        %5568 = vmatpush1.msra.mxu0 0.0
        %5569 = vmatprep.subr.mxu0 0.0
        %5570 = vmatpush1.msra.mxu0 0.0
        %5571 = vmatprep.subr.mxu0 0.0
        %5572 = vmatpush1.msra.mxu0 0.0
        %5573 = vmatprep.subr.mxu0 0.0
        %5574 = vmatpush1.msra.mxu0 0.0
        %5575 = vmatprep.subr.mxu0 0.0
        %5576 = vmatpush1.msra.mxu0 0.0
        %5577 = vmatprep.subr.mxu0 0.0
        %5578 = vmatpush1.msra.mxu0 0.0
        %5579 = vmatprep.subr.mxu0 0.0
        %5580 = vmatpush1.msra.mxu0 0.0
        %5581 = vmatprep.subr.mxu0 0.0
        %5582 = vmatpush1.msra.mxu0 0.0
        %5583 = vmatprep.subr.mxu0 0.0
        %5584 = vmatpush1.msra.mxu0 %v5459
        %5585 = vmatprep.subr.mxu0 0.0
        %5586 = vmatpush2.msra.mxu0 0.0
        %5587 = vmatprep.subr.mxu0 0.0
        %5588 = vmatpush2.msra.mxu0 0.0
        %5589 = vmatprep.subr.mxu0 0.0
        %5590 = vmatpush2.msra.mxu0 0.0
        %5591 = vmatprep.subr.mxu0 0.0
        %5592 = vmatpush2.msra.mxu0 0.0
        %5593 = vmatprep.subr.mxu0 0.0
        %5594 = vmatpush2.msra.mxu0 0.0
        %5595 = vmatprep.subr.mxu0 0.0
        %5596 = vmatpush2.msra.mxu0 0.0
        %5597 = vmatprep.subr.mxu0 0.0
        %5598 = vmatpush2.msra.mxu0 0.0
        %5599 = vmatprep.subr.mxu0 0.0
        %5600 = vmatpush2.msra.mxu0 0.0
        %5601 = vmatprep.subr.mxu0 0.0
        %5602 = vmatpush2.msra.mxu0 0.0
        %5603 = vmatprep.subr.mxu0 0.0
        %5604 = vmatpush2.msra.mxu0 0.0
        %5605 = vmatprep.subr.mxu0 0.0
        %5606 = vmatpush2.msra.mxu0 0.0
        %5607 = vmatprep.subr.mxu0 0.0
        %5608 = vmatpush2.msra.mxu0 0.0
        %5609 = vmatprep.subr.mxu0 0.0
        %5610 = vmatpush2.msra.mxu0 0.0
        %5611 = vmatprep.subr.mxu0 0.0
        %5612 = vmatpush2.msra.mxu0 0.0
        %5613 = vmatprep.subr.mxu0 0.0
        %5614 = vmatpush2.msra.mxu0 0.0
        %5615 = vmatprep.subr.mxu0 0.0
        %5616 = vmatpush2.msra.mxu0 0.0
        %5617 = vmatprep.mubr.f32.mxu0 0.0
        %5618 = vmatmul.mubr.f32.gmra.mxu0 %v5551
        %v5619 = vpop.f32.mrf.mxu0
        %v5620 = vadd.f32 0.0, %v5619
        %v5621 = vpop.f32.mrf.mxu0
        %5622 = vdwg.mxu0
        %v5623 = vld [vmem:[%s61] sm:$0xff]
        %s5624 = scalar_lea.vmem %s49, 32
        %v5625 = vld [vmem:[%s5624] sm:$0xff]
        %v5626 = vld [vmem:[%s5624 + $0x8] sm:$0xff]
        %v5627 = vld [vmem:[%s5624 + $0x10] sm:$0xff]
        %v5628 = vld [vmem:[%s5624 + $0x18] sm:$0xff]
        %s5629 = scalar_lea.vmem %s55, 1
        %v5630 = vld [vmem:[%s5629] sm:$0x1]
        %v5632 = vlaneseq
        %v5633 = vshrl.u32 %v5632, 7
        %v5634 = vsub.s32 0, %v5633
        %v5635 = vrot.slane %v5630, %v5634
        %5637 = vmatprep.subr.mxu0 0.0
        %5638 = vmatpush1.msra.mxu0 0.0
        %5639 = vmatprep.subr.mxu0 0.0
        %5640 = vmatpush1.msra.mxu0 0.0
        %5641 = vmatprep.subr.mxu0 0.0
        %5642 = vmatpush1.msra.mxu0 0.0
        %5643 = vmatprep.subr.mxu0 0.0
        %5644 = vmatpush1.msra.mxu0 0.0
        %5645 = vmatprep.subr.mxu0 0.0
        %5646 = vmatpush1.msra.mxu0 0.0
        %5647 = vmatprep.subr.mxu0 0.0
        %5648 = vmatpush1.msra.mxu0 0.0
        %5649 = vmatprep.subr.mxu0 0.0
        %5650 = vmatpush1.msra.mxu0 0.0
        %5651 = vmatprep.subr.mxu0 0.0
        %5652 = vmatpush1.msra.mxu0 0.0
        %5653 = vmatprep.subr.mxu0 0.0
        %5654 = vmatpush1.msra.mxu0 0.0
        %5655 = vmatprep.subr.mxu0 0.0
        %5656 = vmatpush1.msra.mxu0 0.0
        %5657 = vmatprep.subr.mxu0 0.0
        %5658 = vmatpush1.msra.mxu0 0.0
        %5659 = vmatprep.subr.mxu0 0.0
        %5660 = vmatpush1.msra.mxu0 0.0
        %5661 = vmatprep.subr.mxu0 0.0
        %5662 = vmatpush1.msra.mxu0 %v5628
        %5663 = vmatprep.subr.mxu0 0.0
        %5664 = vmatpush1.msra.mxu0 %v5627
        %5665 = vmatprep.subr.mxu0 0.0
        %5666 = vmatpush1.msra.mxu0 %v5626
        %5667 = vmatprep.subr.mxu0 0.0
        %5668 = vmatpush1.msra.mxu0 %v5625
        %5669 = vmatprep.subr.mxu0 0.0
        %5670 = vmatpush2.msra.mxu0 0.0
        %5671 = vmatprep.subr.mxu0 0.0
        %5672 = vmatpush2.msra.mxu0 0.0
        %5673 = vmatprep.subr.mxu0 0.0
        %5674 = vmatpush2.msra.mxu0 0.0
        %5675 = vmatprep.subr.mxu0 0.0
        %5676 = vmatpush2.msra.mxu0 0.0
        %5677 = vmatprep.subr.mxu0 0.0
        %5678 = vmatpush2.msra.mxu0 0.0
        %5679 = vmatprep.subr.mxu0 0.0
        %5680 = vmatpush2.msra.mxu0 0.0
        %5681 = vmatprep.subr.mxu0 0.0
        %5682 = vmatpush2.msra.mxu0 0.0
        %5683 = vmatprep.subr.mxu0 0.0
        %5684 = vmatpush2.msra.mxu0 0.0
        %5685 = vmatprep.subr.mxu0 0.0
        %5686 = vmatpush2.msra.mxu0 0.0
        %5687 = vmatprep.subr.mxu0 0.0
        %5688 = vmatpush2.msra.mxu0 0.0
        %5689 = vmatprep.subr.mxu0 0.0
        %5690 = vmatpush2.msra.mxu0 0.0
        %5691 = vmatprep.subr.mxu0 0.0
        %5692 = vmatpush2.msra.mxu0 0.0
        %5693 = vmatprep.subr.mxu0 0.0
        %5694 = vmatpush2.msra.mxu0 0.0
        %5695 = vmatprep.subr.mxu0 0.0
        %5696 = vmatpush2.msra.mxu0 0.0
        %5697 = vmatprep.subr.mxu0 0.0
        %5698 = vmatpush2.msra.mxu0 0.0
        %5699 = vmatprep.subr.mxu0 0.0
        %5700 = vmatpush2.msra.mxu0 0.0
        %5701 = vmatprep.mubr.f32.mxu0 0.0
        %5702 = vmatmul.mubr.f32.gmra.mxu0 %v5228
        %v5703 = vpop.f32.mrf.mxu0
        %v5704 = vadd.f32 %v5635, %v5703
        %v5705 = vpop.f32.mrf.mxu0
        %5706 = vdwg.mxu0
        %s5707 = scalar_lea.vmem %s51, 32
        %v5708 = vld [vmem:[%s5707] sm:$0xff]
        %v5709 = vld [vmem:[%s5707 + $0x8] sm:$0xff]
        %v5710 = vld [vmem:[%s5707 + $0x10] sm:$0xff]
        %v5711 = vld [vmem:[%s5707 + $0x18] sm:$0xff]
        %s5712 = scalar_lea.vmem %s57, 1
        %v5713 = vld [vmem:[%s5712] sm:$0x1]
        %v5715 = vlaneseq
        %v5716 = vshrl.u32 %v5715, 7
        %v5717 = vsub.s32 0, %v5716
        %v5718 = vrot.slane %v5713, %v5717
        %5720 = vmatprep.subr.mxu0 0.0
        %5721 = vmatpush1.msra.mxu0 0.0
        %5722 = vmatprep.subr.mxu0 0.0
        %5723 = vmatpush1.msra.mxu0 0.0
        %5724 = vmatprep.subr.mxu0 0.0
        %5725 = vmatpush1.msra.mxu0 0.0
        %5726 = vmatprep.subr.mxu0 0.0
        %5727 = vmatpush1.msra.mxu0 0.0
        %5728 = vmatprep.subr.mxu0 0.0
        %5729 = vmatpush1.msra.mxu0 0.0
        %5730 = vmatprep.subr.mxu0 0.0
        %5731 = vmatpush1.msra.mxu0 0.0
        %5732 = vmatprep.subr.mxu0 0.0
        %5733 = vmatpush1.msra.mxu0 0.0
        %5734 = vmatprep.subr.mxu0 0.0
        %5735 = vmatpush1.msra.mxu0 0.0
        %5736 = vmatprep.subr.mxu0 0.0
        %5737 = vmatpush1.msra.mxu0 0.0
        %5738 = vmatprep.subr.mxu0 0.0
        %5739 = vmatpush1.msra.mxu0 0.0
        %5740 = vmatprep.subr.mxu0 0.0
        %5741 = vmatpush1.msra.mxu0 0.0
        %5742 = vmatprep.subr.mxu0 0.0
        %5743 = vmatpush1.msra.mxu0 0.0
        %5744 = vmatprep.subr.mxu0 0.0
        %5745 = vmatpush1.msra.mxu0 %v5711
        %5746 = vmatprep.subr.mxu0 0.0
        %5747 = vmatpush1.msra.mxu0 %v5710
        %5748 = vmatprep.subr.mxu0 0.0
        %5749 = vmatpush1.msra.mxu0 %v5709
        %5750 = vmatprep.subr.mxu0 0.0
        %5751 = vmatpush1.msra.mxu0 %v5708
        %5752 = vmatprep.subr.mxu0 0.0
        %5753 = vmatpush2.msra.mxu0 0.0
        %5754 = vmatprep.subr.mxu0 0.0
        %5755 = vmatpush2.msra.mxu0 0.0
        %5756 = vmatprep.subr.mxu0 0.0
        %5757 = vmatpush2.msra.mxu0 0.0
        %5758 = vmatprep.subr.mxu0 0.0
        %5759 = vmatpush2.msra.mxu0 0.0
        %5760 = vmatprep.subr.mxu0 0.0
        %5761 = vmatpush2.msra.mxu0 0.0
        %5762 = vmatprep.subr.mxu0 0.0
        %5763 = vmatpush2.msra.mxu0 0.0
        %5764 = vmatprep.subr.mxu0 0.0
        %5765 = vmatpush2.msra.mxu0 0.0
        %5766 = vmatprep.subr.mxu0 0.0
        %5767 = vmatpush2.msra.mxu0 0.0
        %5768 = vmatprep.subr.mxu0 0.0
        %5769 = vmatpush2.msra.mxu0 0.0
        %5770 = vmatprep.subr.mxu0 0.0
        %5771 = vmatpush2.msra.mxu0 0.0
        %5772 = vmatprep.subr.mxu0 0.0
        %5773 = vmatpush2.msra.mxu0 0.0
        %5774 = vmatprep.subr.mxu0 0.0
        %5775 = vmatpush2.msra.mxu0 0.0
        %5776 = vmatprep.subr.mxu0 0.0
        %5777 = vmatpush2.msra.mxu0 0.0
        %5778 = vmatprep.subr.mxu0 0.0
        %5779 = vmatpush2.msra.mxu0 0.0
        %5780 = vmatprep.subr.mxu0 0.0
        %5781 = vmatpush2.msra.mxu0 0.0
        %5782 = vmatprep.subr.mxu0 0.0
        %5783 = vmatpush2.msra.mxu0 0.0
        %5784 = vmatprep.mubr.f32.mxu0 0.0
        %5785 = vmatmul.mubr.f32.gmra.mxu0 %v5228
        %v5786 = vpop.f32.mrf.mxu0
        %v5787 = vadd.f32 %v5718, %v5786
        %v5788 = vpop.f32.mrf.mxu0
        %5789 = vdwg.mxu0
        %s5790 = scalar_lea.vmem %s53, 32
        %v5791 = vld [vmem:[%s5790] sm:$0xff]
        %v5792 = vld [vmem:[%s5790 + $0x8] sm:$0xff]
        %v5793 = vld [vmem:[%s5790 + $0x10] sm:$0xff]
        %v5794 = vld [vmem:[%s5790 + $0x18] sm:$0xff]
        %s5795 = scalar_lea.vmem %s59, 1
        %v5796 = vld [vmem:[%s5795] sm:$0x1]
        %v5798 = vlaneseq
        %v5799 = vshrl.u32 %v5798, 7
        %v5800 = vsub.s32 0, %v5799
        %v5801 = vrot.slane %v5796, %v5800
        %5803 = vmatprep.subr.mxu0 0.0
        %5804 = vmatpush1.msra.mxu0 0.0
        %5805 = vmatprep.subr.mxu0 0.0
        %5806 = vmatpush1.msra.mxu0 0.0
        %5807 = vmatprep.subr.mxu0 0.0
        %5808 = vmatpush1.msra.mxu0 0.0
        %5809 = vmatprep.subr.mxu0 0.0
        %5810 = vmatpush1.msra.mxu0 0.0
        %5811 = vmatprep.subr.mxu0 0.0
        %5812 = vmatpush1.msra.mxu0 0.0
        %5813 = vmatprep.subr.mxu0 0.0
        %5814 = vmatpush1.msra.mxu0 0.0
        %5815 = vmatprep.subr.mxu0 0.0
        %5816 = vmatpush1.msra.mxu0 0.0
        %5817 = vmatprep.subr.mxu0 0.0
        %5818 = vmatpush1.msra.mxu0 0.0
        %5819 = vmatprep.subr.mxu0 0.0
        %5820 = vmatpush1.msra.mxu0 0.0
        %5821 = vmatprep.subr.mxu0 0.0
        %5822 = vmatpush1.msra.mxu0 0.0
        %5823 = vmatprep.subr.mxu0 0.0
        %5824 = vmatpush1.msra.mxu0 0.0
        %5825 = vmatprep.subr.mxu0 0.0
        %5826 = vmatpush1.msra.mxu0 0.0
        %5827 = vmatprep.subr.mxu0 0.0
        %5828 = vmatpush1.msra.mxu0 %v5794
        %5829 = vmatprep.subr.mxu0 0.0
        %5830 = vmatpush1.msra.mxu0 %v5793
        %5831 = vmatprep.subr.mxu0 0.0
        %5832 = vmatpush1.msra.mxu0 %v5792
        %5833 = vmatprep.subr.mxu0 0.0
        %5834 = vmatpush1.msra.mxu0 %v5791
        %5835 = vmatprep.subr.mxu0 0.0
        %5836 = vmatpush2.msra.mxu0 0.0
        %5837 = vmatprep.subr.mxu0 0.0
        %5838 = vmatpush2.msra.mxu0 0.0
        %5839 = vmatprep.subr.mxu0 0.0
        %5840 = vmatpush2.msra.mxu0 0.0
        %5841 = vmatprep.subr.mxu0 0.0
        %5842 = vmatpush2.msra.mxu0 0.0
        %5843 = vmatprep.subr.mxu0 0.0
        %5844 = vmatpush2.msra.mxu0 0.0
        %5845 = vmatprep.subr.mxu0 0.0
        %5846 = vmatpush2.msra.mxu0 0.0
        %5847 = vmatprep.subr.mxu0 0.0
        %5848 = vmatpush2.msra.mxu0 0.0
        %5849 = vmatprep.subr.mxu0 0.0
        %5850 = vmatpush2.msra.mxu0 0.0
        %5851 = vmatprep.subr.mxu0 0.0
        %5852 = vmatpush2.msra.mxu0 0.0
        %5853 = vmatprep.subr.mxu0 0.0
        %5854 = vmatpush2.msra.mxu0 0.0
        %5855 = vmatprep.subr.mxu0 0.0
        %5856 = vmatpush2.msra.mxu0 0.0
        %5857 = vmatprep.subr.mxu0 0.0
        %5858 = vmatpush2.msra.mxu0 0.0
        %5859 = vmatprep.subr.mxu0 0.0
        %5860 = vmatpush2.msra.mxu0 0.0
        %5861 = vmatprep.subr.mxu0 0.0
        %5862 = vmatpush2.msra.mxu0 0.0
        %5863 = vmatprep.subr.mxu0 0.0
        %5864 = vmatpush2.msra.mxu0 0.0
        %5865 = vmatprep.subr.mxu0 0.0
        %5866 = vmatpush2.msra.mxu0 0.0
        %5867 = vmatprep.mubr.f32.mxu0 0.0
        %5868 = vmatmul.mubr.f32.gmra.mxu0 %v5228
        %v5869 = vpop.f32.mrf.mxu0
        %v5870 = vadd.f32 %v5801, %v5869
        %v5871 = vpop.f32.mrf.mxu0
        %5872 = vdwg.mxu0
        %v5874 = vsel %vm1706, %v5704, 0
        %v5877 = vsel %vm1706, %v5787, 0
        %5879 = vmatprep.subr.mxu0 0.0
        %5880 = vmatpush1.xpose.msra.mxu0 0.0
        %5881 = vmatprep.subr.mxu0 0.0
        %5882 = vmatpush1.xpose.msra.mxu0 0.0
        %5883 = vmatprep.subr.mxu0 0.0
        %5884 = vmatpush1.xpose.msra.mxu0 0.0
        %5885 = vmatprep.subr.mxu0 0.0
        %5886 = vmatpush1.xpose.msra.mxu0 0.0
        %5887 = vmatprep.subr.mxu0 0.0
        %5888 = vmatpush1.xpose.msra.mxu0 0.0
        %5889 = vmatprep.subr.mxu0 0.0
        %5890 = vmatpush1.xpose.msra.mxu0 0.0
        %5891 = vmatprep.subr.mxu0 0.0
        %5892 = vmatpush1.xpose.msra.mxu0 0.0
        %5893 = vmatprep.subr.mxu0 0.0
        %5894 = vmatpush1.xpose.msra.mxu0 0.0
        %5895 = vmatprep.subr.mxu0 0.0
        %5896 = vmatpush1.xpose.msra.mxu0 0.0
        %5897 = vmatprep.subr.mxu0 0.0
        %5898 = vmatpush1.xpose.msra.mxu0 0.0
        %5899 = vmatprep.subr.mxu0 0.0
        %5900 = vmatpush1.xpose.msra.mxu0 0.0
        %5901 = vmatprep.subr.mxu0 0.0
        %5902 = vmatpush1.xpose.msra.mxu0 0.0
        %5903 = vmatprep.subr.mxu0 0.0
        %5904 = vmatpush1.xpose.msra.mxu0 0.0
        %5905 = vmatprep.subr.mxu0 0.0
        %5906 = vmatpush1.xpose.msra.mxu0 0.0
        %5907 = vmatprep.subr.mxu0 0.0
        %5908 = vmatpush1.xpose.msra.mxu0 0.0
        %5909 = vmatprep.subr.mxu0 0.0
        %5910 = vmatpush1.xpose.msra.mxu0 %v5877
        %5911 = vmatprep.subr.mxu0 0.0
        %5912 = vmatpush2.xpose.msra.mxu0 0.0
        %5913 = vmatprep.subr.mxu0 0.0
        %5914 = vmatpush2.xpose.msra.mxu0 0.0
        %5915 = vmatprep.subr.mxu0 0.0
        %5916 = vmatpush2.xpose.msra.mxu0 0.0
        %5917 = vmatprep.subr.mxu0 0.0
        %5918 = vmatpush2.xpose.msra.mxu0 0.0
        %5919 = vmatprep.subr.mxu0 0.0
        %5920 = vmatpush2.xpose.msra.mxu0 0.0
        %5921 = vmatprep.subr.mxu0 0.0
        %5922 = vmatpush2.xpose.msra.mxu0 0.0
        %5923 = vmatprep.subr.mxu0 0.0
        %5924 = vmatpush2.xpose.msra.mxu0 0.0
        %5925 = vmatprep.subr.mxu0 0.0
        %5926 = vmatpush2.xpose.msra.mxu0 0.0
        %5927 = vmatprep.subr.mxu0 0.0
        %5928 = vmatpush2.xpose.msra.mxu0 0.0
        %5929 = vmatprep.subr.mxu0 0.0
        %5930 = vmatpush2.xpose.msra.mxu0 0.0
        %5931 = vmatprep.subr.mxu0 0.0
        %5932 = vmatpush2.xpose.msra.mxu0 0.0
        %5933 = vmatprep.subr.mxu0 0.0
        %5934 = vmatpush2.xpose.msra.mxu0 0.0
        %5935 = vmatprep.subr.mxu0 0.0
        %5936 = vmatpush2.xpose.msra.mxu0 0.0
        %5937 = vmatprep.subr.mxu0 0.0
        %5938 = vmatpush2.xpose.msra.mxu0 0.0
        %5939 = vmatprep.subr.mxu0 0.0
        %5940 = vmatpush2.xpose.msra.mxu0 0.0
        %5941 = vmatprep.subr.mxu0 0.0
        %5942 = vmatpush2.xpose.msra.mxu0 0.0
        %5943 = vmatprep.mubr.f32.mxu0 0.0
        %5944 = vmatmul.mubr.f32.gmra.mxu0 %v5874
        %v5945 = vpop.f32.mrf.mxu0
        %v5946 = vadd.f32 0.0, %v5945
        %v5947 = vpop.f32.mrf.mxu0
        %5948 = vdwg.mxu0
        %v5949 = vmul.f32 %v5946, 0.35355338
        %v5950 = vsel %vm1706, %v5949, -inf
        %5951 = vmax.xlane.f32.xlu0 %v5950
        %v5952 = vpop.xlane.xlu0 %5951
        %v5953 = vsub.f32 %v5949, %v5952
        %v5954 = vmul.f32 %v5953, 1.442695
        %v5955 = vpow.pop %v5954
        %v5956 = vsel %vm1706, %v5955, 0.0
        %5957 = vadd.xlane.f32.xlu0 %v5956
        %v5958 = vpop.xlane.xlu0 %5957
        %v5959 = vrcp.pop %v5958
        %v5960 = vmul.f32 %v5955, %v5959
        %v5962 = vsel %vm1706, %v5960, 0
        %5964 = vmatprep.subr.mxu0 0.0
        %5965 = vmatpush1.msra.mxu0 0.0
        %5966 = vmatprep.subr.mxu0 0.0
        %5967 = vmatpush1.msra.mxu0 0.0
        %5968 = vmatprep.subr.mxu0 0.0
        %5969 = vmatpush1.msra.mxu0 0.0
        %5970 = vmatprep.subr.mxu0 0.0
        %5971 = vmatpush1.msra.mxu0 0.0
        %5972 = vmatprep.subr.mxu0 0.0
        %5973 = vmatpush1.msra.mxu0 0.0
        %5974 = vmatprep.subr.mxu0 0.0
        %5975 = vmatpush1.msra.mxu0 0.0
        %5976 = vmatprep.subr.mxu0 0.0
        %5977 = vmatpush1.msra.mxu0 0.0
        %5978 = vmatprep.subr.mxu0 0.0
        %5979 = vmatpush1.msra.mxu0 0.0
        %5980 = vmatprep.subr.mxu0 0.0
        %5981 = vmatpush1.msra.mxu0 0.0
        %5982 = vmatprep.subr.mxu0 0.0
        %5983 = vmatpush1.msra.mxu0 0.0
        %5984 = vmatprep.subr.mxu0 0.0
        %5985 = vmatpush1.msra.mxu0 0.0
        %5986 = vmatprep.subr.mxu0 0.0
        %5987 = vmatpush1.msra.mxu0 0.0
        %5988 = vmatprep.subr.mxu0 0.0
        %5989 = vmatpush1.msra.mxu0 0.0
        %5990 = vmatprep.subr.mxu0 0.0
        %5991 = vmatpush1.msra.mxu0 0.0
        %5992 = vmatprep.subr.mxu0 0.0
        %5993 = vmatpush1.msra.mxu0 0.0
        %5994 = vmatprep.subr.mxu0 0.0
        %5995 = vmatpush1.msra.mxu0 %v5870
        %5996 = vmatprep.subr.mxu0 0.0
        %5997 = vmatpush2.msra.mxu0 0.0
        %5998 = vmatprep.subr.mxu0 0.0
        %5999 = vmatpush2.msra.mxu0 0.0
        %6000 = vmatprep.subr.mxu0 0.0
        %6001 = vmatpush2.msra.mxu0 0.0
        %6002 = vmatprep.subr.mxu0 0.0
        %6003 = vmatpush2.msra.mxu0 0.0
        %6004 = vmatprep.subr.mxu0 0.0
        %6005 = vmatpush2.msra.mxu0 0.0
        %6006 = vmatprep.subr.mxu0 0.0
        %6007 = vmatpush2.msra.mxu0 0.0
        %6008 = vmatprep.subr.mxu0 0.0
        %6009 = vmatpush2.msra.mxu0 0.0
        %6010 = vmatprep.subr.mxu0 0.0
        %6011 = vmatpush2.msra.mxu0 0.0
        %6012 = vmatprep.subr.mxu0 0.0
        %6013 = vmatpush2.msra.mxu0 0.0
        %6014 = vmatprep.subr.mxu0 0.0
        %6015 = vmatpush2.msra.mxu0 0.0
        %6016 = vmatprep.subr.mxu0 0.0
        %6017 = vmatpush2.msra.mxu0 0.0
        %6018 = vmatprep.subr.mxu0 0.0
        %6019 = vmatpush2.msra.mxu0 0.0
        %6020 = vmatprep.subr.mxu0 0.0
        %6021 = vmatpush2.msra.mxu0 0.0
        %6022 = vmatprep.subr.mxu0 0.0
        %6023 = vmatpush2.msra.mxu0 0.0
        %6024 = vmatprep.subr.mxu0 0.0
        %6025 = vmatpush2.msra.mxu0 0.0
        %6026 = vmatprep.subr.mxu0 0.0
        %6027 = vmatpush2.msra.mxu0 0.0
        %6028 = vmatprep.mubr.f32.mxu0 0.0
        %6029 = vmatmul.mubr.f32.gmra.mxu0 %v5962
        %v6030 = vpop.f32.mrf.mxu0
        %v6031 = vadd.f32 0.0, %v6030
        %v6032 = vpop.f32.mrf.mxu0
        %6033 = vdwg.mxu0
        %s6034 = scalar_lea.vmem %s61, 8
        %v6035 = vld [vmem:[%s6034] sm:$0xff]
        %v6037 = vsel %vm1706, %v6031, 0
        %6039 = vmatprep.subr.mxu0 0.0
        %6040 = vmatpush1.msra.mxu0 0.0
        %6041 = vmatprep.subr.mxu0 0.0
        %6042 = vmatpush1.msra.mxu0 0.0
        %6043 = vmatprep.subr.mxu0 0.0
        %6044 = vmatpush1.msra.mxu0 0.0
        %6045 = vmatprep.subr.mxu0 0.0
        %6046 = vmatpush1.msra.mxu0 0.0
        %6047 = vmatprep.subr.mxu0 0.0
        %6048 = vmatpush1.msra.mxu0 0.0
        %6049 = vmatprep.subr.mxu0 0.0
        %6050 = vmatpush1.msra.mxu0 0.0
        %6051 = vmatprep.subr.mxu0 0.0
        %6052 = vmatpush1.msra.mxu0 0.0
        %6053 = vmatprep.subr.mxu0 0.0
        %6054 = vmatpush1.msra.mxu0 0.0
        %6055 = vmatprep.subr.mxu0 0.0
        %6056 = vmatpush1.msra.mxu0 0.0
        %6057 = vmatprep.subr.mxu0 0.0
        %6058 = vmatpush1.msra.mxu0 0.0
        %6059 = vmatprep.subr.mxu0 0.0
        %6060 = vmatpush1.msra.mxu0 0.0
        %6061 = vmatprep.subr.mxu0 0.0
        %6062 = vmatpush1.msra.mxu0 0.0
        %6063 = vmatprep.subr.mxu0 0.0
        %6064 = vmatpush1.msra.mxu0 0.0
        %6065 = vmatprep.subr.mxu0 0.0
        %6066 = vmatpush1.msra.mxu0 0.0
        %6067 = vmatprep.subr.mxu0 0.0
        %6068 = vmatpush1.msra.mxu0 0.0
        %6069 = vmatprep.subr.mxu0 0.0
        %6070 = vmatpush1.msra.mxu0 %v6035
        %6071 = vmatprep.subr.mxu0 0.0
        %6072 = vmatpush2.msra.mxu0 0.0
        %6073 = vmatprep.subr.mxu0 0.0
        %6074 = vmatpush2.msra.mxu0 0.0
        %6075 = vmatprep.subr.mxu0 0.0
        %6076 = vmatpush2.msra.mxu0 0.0
        %6077 = vmatprep.subr.mxu0 0.0
        %6078 = vmatpush2.msra.mxu0 0.0
        %6079 = vmatprep.subr.mxu0 0.0
        %6080 = vmatpush2.msra.mxu0 0.0
        %6081 = vmatprep.subr.mxu0 0.0
        %6082 = vmatpush2.msra.mxu0 0.0
        %6083 = vmatprep.subr.mxu0 0.0
        %6084 = vmatpush2.msra.mxu0 0.0
        %6085 = vmatprep.subr.mxu0 0.0
        %6086 = vmatpush2.msra.mxu0 0.0
        %6087 = vmatprep.subr.mxu0 0.0
        %6088 = vmatpush2.msra.mxu0 0.0
        %6089 = vmatprep.subr.mxu0 0.0
        %6090 = vmatpush2.msra.mxu0 0.0
        %6091 = vmatprep.subr.mxu0 0.0
        %6092 = vmatpush2.msra.mxu0 0.0
        %6093 = vmatprep.subr.mxu0 0.0
        %6094 = vmatpush2.msra.mxu0 0.0
        %6095 = vmatprep.subr.mxu0 0.0
        %6096 = vmatpush2.msra.mxu0 0.0
        %6097 = vmatprep.subr.mxu0 0.0
        %6098 = vmatpush2.msra.mxu0 0.0
        %6099 = vmatprep.subr.mxu0 0.0
        %6100 = vmatpush2.msra.mxu0 0.0
        %6101 = vmatprep.subr.mxu0 0.0
        %6102 = vmatpush2.msra.mxu0 0.0
        %6103 = vmatprep.mubr.f32.mxu0 0.0
        %6104 = vmatmul.mubr.f32.gmra.mxu0 %v6037
        %v6105 = vpop.f32.mrf.mxu0
        %v6106 = vadd.f32 0.0, %v6105
        %v6107 = vpop.f32.mrf.mxu0
        %6108 = vdwg.mxu0
        %v6110 = vsel %vm1706, %v5620, 0
        %6112 = vmatprep.subr.mxu0 0.0
        %6113 = vmatpush1.msra.mxu0 0.0
        %6114 = vmatprep.subr.mxu0 0.0
        %6115 = vmatpush1.msra.mxu0 0.0
        %6116 = vmatprep.subr.mxu0 0.0
        %6117 = vmatpush1.msra.mxu0 0.0
        %6118 = vmatprep.subr.mxu0 0.0
        %6119 = vmatpush1.msra.mxu0 0.0
        %6120 = vmatprep.subr.mxu0 0.0
        %6121 = vmatpush1.msra.mxu0 0.0
        %6122 = vmatprep.subr.mxu0 0.0
        %6123 = vmatpush1.msra.mxu0 0.0
        %6124 = vmatprep.subr.mxu0 0.0
        %6125 = vmatpush1.msra.mxu0 0.0
        %6126 = vmatprep.subr.mxu0 0.0
        %6127 = vmatpush1.msra.mxu0 0.0
        %6128 = vmatprep.subr.mxu0 0.0
        %6129 = vmatpush1.msra.mxu0 0.0
        %6130 = vmatprep.subr.mxu0 0.0
        %6131 = vmatpush1.msra.mxu0 0.0
        %6132 = vmatprep.subr.mxu0 0.0
        %6133 = vmatpush1.msra.mxu0 0.0
        %6134 = vmatprep.subr.mxu0 0.0
        %6135 = vmatpush1.msra.mxu0 0.0
        %6136 = vmatprep.subr.mxu0 0.0
        %6137 = vmatpush1.msra.mxu0 0.0
        %6138 = vmatprep.subr.mxu0 0.0
        %6139 = vmatpush1.msra.mxu0 0.0
        %6140 = vmatprep.subr.mxu0 0.0
        %6141 = vmatpush1.msra.mxu0 0.0
        %6142 = vmatprep.subr.mxu0 0.0
        %6143 = vmatpush1.msra.mxu0 %v5623
        %6144 = vmatprep.subr.mxu0 0.0
        %6145 = vmatpush2.msra.mxu0 0.0
        %6146 = vmatprep.subr.mxu0 0.0
        %6147 = vmatpush2.msra.mxu0 0.0
        %6148 = vmatprep.subr.mxu0 0.0
        %6149 = vmatpush2.msra.mxu0 0.0
        %6150 = vmatprep.subr.mxu0 0.0
        %6151 = vmatpush2.msra.mxu0 0.0
        %6152 = vmatprep.subr.mxu0 0.0
        %6153 = vmatpush2.msra.mxu0 0.0
        %6154 = vmatprep.subr.mxu0 0.0
        %6155 = vmatpush2.msra.mxu0 0.0
        %6156 = vmatprep.subr.mxu0 0.0
        %6157 = vmatpush2.msra.mxu0 0.0
        %6158 = vmatprep.subr.mxu0 0.0
        %6159 = vmatpush2.msra.mxu0 0.0
        %6160 = vmatprep.subr.mxu0 0.0
        %6161 = vmatpush2.msra.mxu0 0.0
        %6162 = vmatprep.subr.mxu0 0.0
        %6163 = vmatpush2.msra.mxu0 0.0
        %6164 = vmatprep.subr.mxu0 0.0
        %6165 = vmatpush2.msra.mxu0 0.0
        %6166 = vmatprep.subr.mxu0 0.0
        %6167 = vmatpush2.msra.mxu0 0.0
        %6168 = vmatprep.subr.mxu0 0.0
        %6169 = vmatpush2.msra.mxu0 0.0
        %6170 = vmatprep.subr.mxu0 0.0
        %6171 = vmatpush2.msra.mxu0 0.0
        %6172 = vmatprep.subr.mxu0 0.0
        %6173 = vmatpush2.msra.mxu0 0.0
        %6174 = vmatprep.subr.mxu0 0.0
        %6175 = vmatpush2.msra.mxu0 0.0
        %6176 = vmatprep.mubr.f32.mxu0 0.0
        %6177 = vmatmul.mubr.f32.gmra.mxu0 %v6110
        %v6178 = vpop.f32.mrf.mxu0
        %v6179 = vadd.f32 %v6106, %v6178
        %v6180 = vpop.f32.mrf.mxu0
        %6181 = vdwg.mxu0
        %s6182 = scalar_lea.vmem %s49, 64
        %v6183 = vld [vmem:[%s6182] sm:$0xff]
        %v6184 = vld [vmem:[%s6182 + $0x8] sm:$0xff]
        %v6185 = vld [vmem:[%s6182 + $0x10] sm:$0xff]
        %v6186 = vld [vmem:[%s6182 + $0x18] sm:$0xff]
        %s6187 = scalar_lea.vmem %s55, 2
        %v6188 = vld [vmem:[%s6187] sm:$0x1]
        %v6190 = vlaneseq
        %v6191 = vshrl.u32 %v6190, 7
        %v6192 = vsub.s32 0, %v6191
        %v6193 = vrot.slane %v6188, %v6192
        %6195 = vmatprep.subr.mxu0 0.0
        %6196 = vmatpush1.msra.mxu0 0.0
        %6197 = vmatprep.subr.mxu0 0.0
        %6198 = vmatpush1.msra.mxu0 0.0
        %6199 = vmatprep.subr.mxu0 0.0
        %6200 = vmatpush1.msra.mxu0 0.0
        %6201 = vmatprep.subr.mxu0 0.0
        %6202 = vmatpush1.msra.mxu0 0.0
        %6203 = vmatprep.subr.mxu0 0.0
        %6204 = vmatpush1.msra.mxu0 0.0
        %6205 = vmatprep.subr.mxu0 0.0
        %6206 = vmatpush1.msra.mxu0 0.0
        %6207 = vmatprep.subr.mxu0 0.0
        %6208 = vmatpush1.msra.mxu0 0.0
        %6209 = vmatprep.subr.mxu0 0.0
        %6210 = vmatpush1.msra.mxu0 0.0
        %6211 = vmatprep.subr.mxu0 0.0
        %6212 = vmatpush1.msra.mxu0 0.0
        %6213 = vmatprep.subr.mxu0 0.0
        %6214 = vmatpush1.msra.mxu0 0.0
        %6215 = vmatprep.subr.mxu0 0.0
        %6216 = vmatpush1.msra.mxu0 0.0
        %6217 = vmatprep.subr.mxu0 0.0
        %6218 = vmatpush1.msra.mxu0 0.0
        %6219 = vmatprep.subr.mxu0 0.0
        %6220 = vmatpush1.msra.mxu0 %v6186
        %6221 = vmatprep.subr.mxu0 0.0
        %6222 = vmatpush1.msra.mxu0 %v6185
        %6223 = vmatprep.subr.mxu0 0.0
        %6224 = vmatpush1.msra.mxu0 %v6184
        %6225 = vmatprep.subr.mxu0 0.0
        %6226 = vmatpush1.msra.mxu0 %v6183
        %6227 = vmatprep.subr.mxu0 0.0
        %6228 = vmatpush2.msra.mxu0 0.0
        %6229 = vmatprep.subr.mxu0 0.0
        %6230 = vmatpush2.msra.mxu0 0.0
        %6231 = vmatprep.subr.mxu0 0.0
        %6232 = vmatpush2.msra.mxu0 0.0
        %6233 = vmatprep.subr.mxu0 0.0
        %6234 = vmatpush2.msra.mxu0 0.0
        %6235 = vmatprep.subr.mxu0 0.0
        %6236 = vmatpush2.msra.mxu0 0.0
        %6237 = vmatprep.subr.mxu0 0.0
        %6238 = vmatpush2.msra.mxu0 0.0
        %6239 = vmatprep.subr.mxu0 0.0
        %6240 = vmatpush2.msra.mxu0 0.0
        %6241 = vmatprep.subr.mxu0 0.0
        %6242 = vmatpush2.msra.mxu0 0.0
        %6243 = vmatprep.subr.mxu0 0.0
        %6244 = vmatpush2.msra.mxu0 0.0
        %6245 = vmatprep.subr.mxu0 0.0
        %6246 = vmatpush2.msra.mxu0 0.0
        %6247 = vmatprep.subr.mxu0 0.0
        %6248 = vmatpush2.msra.mxu0 0.0
        %6249 = vmatprep.subr.mxu0 0.0
        %6250 = vmatpush2.msra.mxu0 0.0
        %6251 = vmatprep.subr.mxu0 0.0
        %6252 = vmatpush2.msra.mxu0 0.0
        %6253 = vmatprep.subr.mxu0 0.0
        %6254 = vmatpush2.msra.mxu0 0.0
        %6255 = vmatprep.subr.mxu0 0.0
        %6256 = vmatpush2.msra.mxu0 0.0
        %6257 = vmatprep.subr.mxu0 0.0
        %6258 = vmatpush2.msra.mxu0 0.0
        %6259 = vmatprep.mubr.f32.mxu0 0.0
        %6260 = vmatmul.mubr.f32.gmra.mxu0 %v5228
        %v6261 = vpop.f32.mrf.mxu0
        %v6262 = vadd.f32 %v6193, %v6261
        %v6263 = vpop.f32.mrf.mxu0
        %6264 = vdwg.mxu0
        %s6265 = scalar_lea.vmem %s51, 64
        %v6266 = vld [vmem:[%s6265] sm:$0xff]
        %v6267 = vld [vmem:[%s6265 + $0x8] sm:$0xff]
        %v6268 = vld [vmem:[%s6265 + $0x10] sm:$0xff]
        %v6269 = vld [vmem:[%s6265 + $0x18] sm:$0xff]
        %s6270 = scalar_lea.vmem %s57, 2
        %v6271 = vld [vmem:[%s6270] sm:$0x1]
        %v6273 = vlaneseq
        %v6274 = vshrl.u32 %v6273, 7
        %v6275 = vsub.s32 0, %v6274
        %v6276 = vrot.slane %v6271, %v6275
        %6278 = vmatprep.subr.mxu0 0.0
        %6279 = vmatpush1.msra.mxu0 0.0
        %6280 = vmatprep.subr.mxu0 0.0
        %6281 = vmatpush1.msra.mxu0 0.0
        %6282 = vmatprep.subr.mxu0 0.0
        %6283 = vmatpush1.msra.mxu0 0.0
        %6284 = vmatprep.subr.mxu0 0.0
        %6285 = vmatpush1.msra.mxu0 0.0
        %6286 = vmatprep.subr.mxu0 0.0
        %6287 = vmatpush1.msra.mxu0 0.0
        %6288 = vmatprep.subr.mxu0 0.0
        %6289 = vmatpush1.msra.mxu0 0.0
        %6290 = vmatprep.subr.mxu0 0.0
        %6291 = vmatpush1.msra.mxu0 0.0
        %6292 = vmatprep.subr.mxu0 0.0
        %6293 = vmatpush1.msra.mxu0 0.0
        %6294 = vmatprep.subr.mxu0 0.0
        %6295 = vmatpush1.msra.mxu0 0.0
        %6296 = vmatprep.subr.mxu0 0.0
        %6297 = vmatpush1.msra.mxu0 0.0
        %6298 = vmatprep.subr.mxu0 0.0
        %6299 = vmatpush1.msra.mxu0 0.0
        %6300 = vmatprep.subr.mxu0 0.0
        %6301 = vmatpush1.msra.mxu0 0.0
        %6302 = vmatprep.subr.mxu0 0.0
        %6303 = vmatpush1.msra.mxu0 %v6269
        %6304 = vmatprep.subr.mxu0 0.0
        %6305 = vmatpush1.msra.mxu0 %v6268
        %6306 = vmatprep.subr.mxu0 0.0
        %6307 = vmatpush1.msra.mxu0 %v6267
        %6308 = vmatprep.subr.mxu0 0.0
        %6309 = vmatpush1.msra.mxu0 %v6266
        %6310 = vmatprep.subr.mxu0 0.0
        %6311 = vmatpush2.msra.mxu0 0.0
        %6312 = vmatprep.subr.mxu0 0.0
        %6313 = vmatpush2.msra.mxu0 0.0
        %6314 = vmatprep.subr.mxu0 0.0
        %6315 = vmatpush2.msra.mxu0 0.0
        %6316 = vmatprep.subr.mxu0 0.0
        %6317 = vmatpush2.msra.mxu0 0.0
        %6318 = vmatprep.subr.mxu0 0.0
        %6319 = vmatpush2.msra.mxu0 0.0
        %6320 = vmatprep.subr.mxu0 0.0
        %6321 = vmatpush2.msra.mxu0 0.0
        %6322 = vmatprep.subr.mxu0 0.0
        %6323 = vmatpush2.msra.mxu0 0.0
        %6324 = vmatprep.subr.mxu0 0.0
        %6325 = vmatpush2.msra.mxu0 0.0
        %6326 = vmatprep.subr.mxu0 0.0
        %6327 = vmatpush2.msra.mxu0 0.0
        %6328 = vmatprep.subr.mxu0 0.0
        %6329 = vmatpush2.msra.mxu0 0.0
        %6330 = vmatprep.subr.mxu0 0.0
        %6331 = vmatpush2.msra.mxu0 0.0
        %6332 = vmatprep.subr.mxu0 0.0
        %6333 = vmatpush2.msra.mxu0 0.0
        %6334 = vmatprep.subr.mxu0 0.0
        %6335 = vmatpush2.msra.mxu0 0.0
        %6336 = vmatprep.subr.mxu0 0.0
        %6337 = vmatpush2.msra.mxu0 0.0
        %6338 = vmatprep.subr.mxu0 0.0
        %6339 = vmatpush2.msra.mxu0 0.0
        %6340 = vmatprep.subr.mxu0 0.0
        %6341 = vmatpush2.msra.mxu0 0.0
        %6342 = vmatprep.mubr.f32.mxu0 0.0
        %6343 = vmatmul.mubr.f32.gmra.mxu0 %v5228
        %v6344 = vpop.f32.mrf.mxu0
        %v6345 = vadd.f32 %v6276, %v6344
        %v6346 = vpop.f32.mrf.mxu0
        %6347 = vdwg.mxu0
        %s6348 = scalar_lea.vmem %s53, 64
        %v6349 = vld [vmem:[%s6348] sm:$0xff]
        %v6350 = vld [vmem:[%s6348 + $0x8] sm:$0xff]
        %v6351 = vld [vmem:[%s6348 + $0x10] sm:$0xff]
        %v6352 = vld [vmem:[%s6348 + $0x18] sm:$0xff]
        %s6353 = scalar_lea.vmem %s59, 2
        %v6354 = vld [vmem:[%s6353] sm:$0x1]
        %v6356 = vlaneseq
        %v6357 = vshrl.u32 %v6356, 7
        %v6358 = vsub.s32 0, %v6357
        %v6359 = vrot.slane %v6354, %v6358
        %6361 = vmatprep.subr.mxu0 0.0
        %6362 = vmatpush1.msra.mxu0 0.0
        %6363 = vmatprep.subr.mxu0 0.0
        %6364 = vmatpush1.msra.mxu0 0.0
        %6365 = vmatprep.subr.mxu0 0.0
        %6366 = vmatpush1.msra.mxu0 0.0
        %6367 = vmatprep.subr.mxu0 0.0
        %6368 = vmatpush1.msra.mxu0 0.0
        %6369 = vmatprep.subr.mxu0 0.0
        %6370 = vmatpush1.msra.mxu0 0.0
        %6371 = vmatprep.subr.mxu0 0.0
        %6372 = vmatpush1.msra.mxu0 0.0
        %6373 = vmatprep.subr.mxu0 0.0
        %6374 = vmatpush1.msra.mxu0 0.0
        %6375 = vmatprep.subr.mxu0 0.0
        %6376 = vmatpush1.msra.mxu0 0.0
        %6377 = vmatprep.subr.mxu0 0.0
        %6378 = vmatpush1.msra.mxu0 0.0
        %6379 = vmatprep.subr.mxu0 0.0
        %6380 = vmatpush1.msra.mxu0 0.0
        %6381 = vmatprep.subr.mxu0 0.0
        %6382 = vmatpush1.msra.mxu0 0.0
        %6383 = vmatprep.subr.mxu0 0.0
        %6384 = vmatpush1.msra.mxu0 0.0
        %6385 = vmatprep.subr.mxu0 0.0
        %6386 = vmatpush1.msra.mxu0 %v6352
        %6387 = vmatprep.subr.mxu0 0.0
        %6388 = vmatpush1.msra.mxu0 %v6351
        %6389 = vmatprep.subr.mxu0 0.0
        %6390 = vmatpush1.msra.mxu0 %v6350
        %6391 = vmatprep.subr.mxu0 0.0
        %6392 = vmatpush1.msra.mxu0 %v6349
        %6393 = vmatprep.subr.mxu0 0.0
        %6394 = vmatpush2.msra.mxu0 0.0
        %6395 = vmatprep.subr.mxu0 0.0
        %6396 = vmatpush2.msra.mxu0 0.0
        %6397 = vmatprep.subr.mxu0 0.0
        %6398 = vmatpush2.msra.mxu0 0.0
        %6399 = vmatprep.subr.mxu0 0.0
        %6400 = vmatpush2.msra.mxu0 0.0
        %6401 = vmatprep.subr.mxu0 0.0
        %6402 = vmatpush2.msra.mxu0 0.0
        %6403 = vmatprep.subr.mxu0 0.0
        %6404 = vmatpush2.msra.mxu0 0.0
        %6405 = vmatprep.subr.mxu0 0.0
        %6406 = vmatpush2.msra.mxu0 0.0
        %6407 = vmatprep.subr.mxu0 0.0
        %6408 = vmatpush2.msra.mxu0 0.0
        %6409 = vmatprep.subr.mxu0 0.0
        %6410 = vmatpush2.msra.mxu0 0.0
        %6411 = vmatprep.subr.mxu0 0.0
        %6412 = vmatpush2.msra.mxu0 0.0
        %6413 = vmatprep.subr.mxu0 0.0
        %6414 = vmatpush2.msra.mxu0 0.0
        %6415 = vmatprep.subr.mxu0 0.0
        %6416 = vmatpush2.msra.mxu0 0.0
        %6417 = vmatprep.subr.mxu0 0.0
        %6418 = vmatpush2.msra.mxu0 0.0
        %6419 = vmatprep.subr.mxu0 0.0
        %6420 = vmatpush2.msra.mxu0 0.0
        %6421 = vmatprep.subr.mxu0 0.0
        %6422 = vmatpush2.msra.mxu0 0.0
        %6423 = vmatprep.subr.mxu0 0.0
        %6424 = vmatpush2.msra.mxu0 0.0
        %6425 = vmatprep.mubr.f32.mxu0 0.0
        %6426 = vmatmul.mubr.f32.gmra.mxu0 %v5228
        %v6427 = vpop.f32.mrf.mxu0
        %v6428 = vadd.f32 %v6359, %v6427
        %v6429 = vpop.f32.mrf.mxu0
        %6430 = vdwg.mxu0
        %v6432 = vsel %vm1706, %v6262, 0
        %v6435 = vsel %vm1706, %v6345, 0
        %6437 = vmatprep.subr.mxu0 0.0
        %6438 = vmatpush1.xpose.msra.mxu0 0.0
        %6439 = vmatprep.subr.mxu0 0.0
        %6440 = vmatpush1.xpose.msra.mxu0 0.0
        %6441 = vmatprep.subr.mxu0 0.0
        %6442 = vmatpush1.xpose.msra.mxu0 0.0
        %6443 = vmatprep.subr.mxu0 0.0
        %6444 = vmatpush1.xpose.msra.mxu0 0.0
        %6445 = vmatprep.subr.mxu0 0.0
        %6446 = vmatpush1.xpose.msra.mxu0 0.0
        %6447 = vmatprep.subr.mxu0 0.0
        %6448 = vmatpush1.xpose.msra.mxu0 0.0
        %6449 = vmatprep.subr.mxu0 0.0
        %6450 = vmatpush1.xpose.msra.mxu0 0.0
        %6451 = vmatprep.subr.mxu0 0.0
        %6452 = vmatpush1.xpose.msra.mxu0 0.0
        %6453 = vmatprep.subr.mxu0 0.0
        %6454 = vmatpush1.xpose.msra.mxu0 0.0
        %6455 = vmatprep.subr.mxu0 0.0
        %6456 = vmatpush1.xpose.msra.mxu0 0.0
        %6457 = vmatprep.subr.mxu0 0.0
        %6458 = vmatpush1.xpose.msra.mxu0 0.0
        %6459 = vmatprep.subr.mxu0 0.0
        %6460 = vmatpush1.xpose.msra.mxu0 0.0
        %6461 = vmatprep.subr.mxu0 0.0
        %6462 = vmatpush1.xpose.msra.mxu0 0.0
        %6463 = vmatprep.subr.mxu0 0.0
        %6464 = vmatpush1.xpose.msra.mxu0 0.0
        %6465 = vmatprep.subr.mxu0 0.0
        %6466 = vmatpush1.xpose.msra.mxu0 0.0
        %6467 = vmatprep.subr.mxu0 0.0
        %6468 = vmatpush1.xpose.msra.mxu0 %v6435
        %6469 = vmatprep.subr.mxu0 0.0
        %6470 = vmatpush2.xpose.msra.mxu0 0.0
        %6471 = vmatprep.subr.mxu0 0.0
        %6472 = vmatpush2.xpose.msra.mxu0 0.0
        %6473 = vmatprep.subr.mxu0 0.0
        %6474 = vmatpush2.xpose.msra.mxu0 0.0
        %6475 = vmatprep.subr.mxu0 0.0
        %6476 = vmatpush2.xpose.msra.mxu0 0.0
        %6477 = vmatprep.subr.mxu0 0.0
        %6478 = vmatpush2.xpose.msra.mxu0 0.0
        %6479 = vmatprep.subr.mxu0 0.0
        %6480 = vmatpush2.xpose.msra.mxu0 0.0
        %6481 = vmatprep.subr.mxu0 0.0
        %6482 = vmatpush2.xpose.msra.mxu0 0.0
        %6483 = vmatprep.subr.mxu0 0.0
        %6484 = vmatpush2.xpose.msra.mxu0 0.0
        %6485 = vmatprep.subr.mxu0 0.0
        %6486 = vmatpush2.xpose.msra.mxu0 0.0
        %6487 = vmatprep.subr.mxu0 0.0
        %6488 = vmatpush2.xpose.msra.mxu0 0.0
        %6489 = vmatprep.subr.mxu0 0.0
        %6490 = vmatpush2.xpose.msra.mxu0 0.0
        %6491 = vmatprep.subr.mxu0 0.0
        %6492 = vmatpush2.xpose.msra.mxu0 0.0
        %6493 = vmatprep.subr.mxu0 0.0
        %6494 = vmatpush2.xpose.msra.mxu0 0.0
        %6495 = vmatprep.subr.mxu0 0.0
        %6496 = vmatpush2.xpose.msra.mxu0 0.0
        %6497 = vmatprep.subr.mxu0 0.0
        %6498 = vmatpush2.xpose.msra.mxu0 0.0
        %6499 = vmatprep.subr.mxu0 0.0
        %6500 = vmatpush2.xpose.msra.mxu0 0.0
        %6501 = vmatprep.mubr.f32.mxu0 0.0
        %6502 = vmatmul.mubr.f32.gmra.mxu0 %v6432
        %v6503 = vpop.f32.mrf.mxu0
        %v6504 = vadd.f32 0.0, %v6503
        %v6505 = vpop.f32.mrf.mxu0
        %6506 = vdwg.mxu0
        %v6507 = vmul.f32 %v6504, 0.35355338
        %v6508 = vsel %vm1706, %v6507, -inf
        %6509 = vmax.xlane.f32.xlu0 %v6508
        %v6510 = vpop.xlane.xlu0 %6509
        %v6511 = vsub.f32 %v6507, %v6510
        %v6512 = vmul.f32 %v6511, 1.442695
        %v6513 = vpow.pop %v6512
        %v6514 = vsel %vm1706, %v6513, 0.0
        %6515 = vadd.xlane.f32.xlu0 %v6514
        %v6516 = vpop.xlane.xlu0 %6515
        %v6517 = vrcp.pop %v6516
        %v6518 = vmul.f32 %v6513, %v6517
        %v6520 = vsel %vm1706, %v6518, 0
        %6522 = vmatprep.subr.mxu0 0.0
        %6523 = vmatpush1.msra.mxu0 0.0
        %6524 = vmatprep.subr.mxu0 0.0
        %6525 = vmatpush1.msra.mxu0 0.0
        %6526 = vmatprep.subr.mxu0 0.0
        %6527 = vmatpush1.msra.mxu0 0.0
        %6528 = vmatprep.subr.mxu0 0.0
        %6529 = vmatpush1.msra.mxu0 0.0
        %6530 = vmatprep.subr.mxu0 0.0
        %6531 = vmatpush1.msra.mxu0 0.0
        %6532 = vmatprep.subr.mxu0 0.0
        %6533 = vmatpush1.msra.mxu0 0.0
        %6534 = vmatprep.subr.mxu0 0.0
        %6535 = vmatpush1.msra.mxu0 0.0
        %6536 = vmatprep.subr.mxu0 0.0
        %6537 = vmatpush1.msra.mxu0 0.0
        %6538 = vmatprep.subr.mxu0 0.0
        %6539 = vmatpush1.msra.mxu0 0.0
        %6540 = vmatprep.subr.mxu0 0.0
        %6541 = vmatpush1.msra.mxu0 0.0
        %6542 = vmatprep.subr.mxu0 0.0
        %6543 = vmatpush1.msra.mxu0 0.0
        %6544 = vmatprep.subr.mxu0 0.0
        %6545 = vmatpush1.msra.mxu0 0.0
        %6546 = vmatprep.subr.mxu0 0.0
        %6547 = vmatpush1.msra.mxu0 0.0
        %6548 = vmatprep.subr.mxu0 0.0
        %6549 = vmatpush1.msra.mxu0 0.0
        %6550 = vmatprep.subr.mxu0 0.0
        %6551 = vmatpush1.msra.mxu0 0.0
        %6552 = vmatprep.subr.mxu0 0.0
        %6553 = vmatpush1.msra.mxu0 %v6428
        %6554 = vmatprep.subr.mxu0 0.0
        %6555 = vmatpush2.msra.mxu0 0.0
        %6556 = vmatprep.subr.mxu0 0.0
        %6557 = vmatpush2.msra.mxu0 0.0
        %6558 = vmatprep.subr.mxu0 0.0
        %6559 = vmatpush2.msra.mxu0 0.0
        %6560 = vmatprep.subr.mxu0 0.0
        %6561 = vmatpush2.msra.mxu0 0.0
        %6562 = vmatprep.subr.mxu0 0.0
        %6563 = vmatpush2.msra.mxu0 0.0
        %6564 = vmatprep.subr.mxu0 0.0
        %6565 = vmatpush2.msra.mxu0 0.0
        %6566 = vmatprep.subr.mxu0 0.0
        %6567 = vmatpush2.msra.mxu0 0.0
        %6568 = vmatprep.subr.mxu0 0.0
        %6569 = vmatpush2.msra.mxu0 0.0
        %6570 = vmatprep.subr.mxu0 0.0
        %6571 = vmatpush2.msra.mxu0 0.0
        %6572 = vmatprep.subr.mxu0 0.0
        %6573 = vmatpush2.msra.mxu0 0.0
        %6574 = vmatprep.subr.mxu0 0.0
        %6575 = vmatpush2.msra.mxu0 0.0
        %6576 = vmatprep.subr.mxu0 0.0
        %6577 = vmatpush2.msra.mxu0 0.0
        %6578 = vmatprep.subr.mxu0 0.0
        %6579 = vmatpush2.msra.mxu0 0.0
        %6580 = vmatprep.subr.mxu0 0.0
        %6581 = vmatpush2.msra.mxu0 0.0
        %6582 = vmatprep.subr.mxu0 0.0
        %6583 = vmatpush2.msra.mxu0 0.0
        %6584 = vmatprep.subr.mxu0 0.0
        %6585 = vmatpush2.msra.mxu0 0.0
        %6586 = vmatprep.mubr.f32.mxu0 0.0
        %6587 = vmatmul.mubr.f32.gmra.mxu0 %v6520
        %v6588 = vpop.f32.mrf.mxu0
        %v6589 = vadd.f32 0.0, %v6588
        %v6590 = vpop.f32.mrf.mxu0
        %6591 = vdwg.mxu0
        %s6592 = scalar_lea.vmem %s61, 16
        %v6593 = vld [vmem:[%s6592] sm:$0xff]
        %v6595 = vsel %vm1706, %v6589, 0
        %6597 = vmatprep.subr.mxu0 0.0
        %6598 = vmatpush1.msra.mxu0 0.0
        %6599 = vmatprep.subr.mxu0 0.0
        %6600 = vmatpush1.msra.mxu0 0.0
        %6601 = vmatprep.subr.mxu0 0.0
        %6602 = vmatpush1.msra.mxu0 0.0
        %6603 = vmatprep.subr.mxu0 0.0
        %6604 = vmatpush1.msra.mxu0 0.0
        %6605 = vmatprep.subr.mxu0 0.0
        %6606 = vmatpush1.msra.mxu0 0.0
        %6607 = vmatprep.subr.mxu0 0.0
        %6608 = vmatpush1.msra.mxu0 0.0
        %6609 = vmatprep.subr.mxu0 0.0
        %6610 = vmatpush1.msra.mxu0 0.0
        %6611 = vmatprep.subr.mxu0 0.0
        %6612 = vmatpush1.msra.mxu0 0.0
        %6613 = vmatprep.subr.mxu0 0.0
        %6614 = vmatpush1.msra.mxu0 0.0
        %6615 = vmatprep.subr.mxu0 0.0
        %6616 = vmatpush1.msra.mxu0 0.0
        %6617 = vmatprep.subr.mxu0 0.0
        %6618 = vmatpush1.msra.mxu0 0.0
        %6619 = vmatprep.subr.mxu0 0.0
        %6620 = vmatpush1.msra.mxu0 0.0
        %6621 = vmatprep.subr.mxu0 0.0
        %6622 = vmatpush1.msra.mxu0 0.0
        %6623 = vmatprep.subr.mxu0 0.0
        %6624 = vmatpush1.msra.mxu0 0.0
        %6625 = vmatprep.subr.mxu0 0.0
        %6626 = vmatpush1.msra.mxu0 0.0
        %6627 = vmatprep.subr.mxu0 0.0
        %6628 = vmatpush1.msra.mxu0 %v6593
        %6629 = vmatprep.subr.mxu0 0.0
        %6630 = vmatpush2.msra.mxu0 0.0
        %6631 = vmatprep.subr.mxu0 0.0
        %6632 = vmatpush2.msra.mxu0 0.0
        %6633 = vmatprep.subr.mxu0 0.0
        %6634 = vmatpush2.msra.mxu0 0.0
        %6635 = vmatprep.subr.mxu0 0.0
        %6636 = vmatpush2.msra.mxu0 0.0
        %6637 = vmatprep.subr.mxu0 0.0
        %6638 = vmatpush2.msra.mxu0 0.0
        %6639 = vmatprep.subr.mxu0 0.0
        %6640 = vmatpush2.msra.mxu0 0.0
        %6641 = vmatprep.subr.mxu0 0.0
        %6642 = vmatpush2.msra.mxu0 0.0
        %6643 = vmatprep.subr.mxu0 0.0
        %6644 = vmatpush2.msra.mxu0 0.0
        %6645 = vmatprep.subr.mxu0 0.0
        %6646 = vmatpush2.msra.mxu0 0.0
        %6647 = vmatprep.subr.mxu0 0.0
        %6648 = vmatpush2.msra.mxu0 0.0
        %6649 = vmatprep.subr.mxu0 0.0
        %6650 = vmatpush2.msra.mxu0 0.0
        %6651 = vmatprep.subr.mxu0 0.0
        %6652 = vmatpush2.msra.mxu0 0.0
        %6653 = vmatprep.subr.mxu0 0.0
        %6654 = vmatpush2.msra.mxu0 0.0
        %6655 = vmatprep.subr.mxu0 0.0
        %6656 = vmatpush2.msra.mxu0 0.0
        %6657 = vmatprep.subr.mxu0 0.0
        %6658 = vmatpush2.msra.mxu0 0.0
        %6659 = vmatprep.subr.mxu0 0.0
        %6660 = vmatpush2.msra.mxu0 0.0
        %6661 = vmatprep.mubr.f32.mxu0 0.0
        %6662 = vmatmul.mubr.f32.gmra.mxu0 %v6595
        %v6663 = vpop.f32.mrf.mxu0
        %v6664 = vadd.f32 0.0, %v6663
        %v6665 = vpop.f32.mrf.mxu0
        %6666 = vdwg.mxu0
        %v6667 = vadd.f32 %v6179, %v6664
        %s6668 = scalar_lea.vmem %s49, 96
        %v6669 = vld [vmem:[%s6668] sm:$0xff]
        %v6670 = vld [vmem:[%s6668 + $0x8] sm:$0xff]
        %v6671 = vld [vmem:[%s6668 + $0x10] sm:$0xff]
        %v6672 = vld [vmem:[%s6668 + $0x18] sm:$0xff]
        %s6673 = scalar_lea.vmem %s55, 3
        %v6674 = vld [vmem:[%s6673] sm:$0x1]
        %v6676 = vlaneseq
        %v6677 = vshrl.u32 %v6676, 7
        %v6678 = vsub.s32 0, %v6677
        %v6679 = vrot.slane %v6674, %v6678
        %6681 = vmatprep.subr.mxu0 0.0
        %6682 = vmatpush1.msra.mxu0 0.0
        %6683 = vmatprep.subr.mxu0 0.0
        %6684 = vmatpush1.msra.mxu0 0.0
        %6685 = vmatprep.subr.mxu0 0.0
        %6686 = vmatpush1.msra.mxu0 0.0
        %6687 = vmatprep.subr.mxu0 0.0
        %6688 = vmatpush1.msra.mxu0 0.0
        %6689 = vmatprep.subr.mxu0 0.0
        %6690 = vmatpush1.msra.mxu0 0.0
        %6691 = vmatprep.subr.mxu0 0.0
        %6692 = vmatpush1.msra.mxu0 0.0
        %6693 = vmatprep.subr.mxu0 0.0
        %6694 = vmatpush1.msra.mxu0 0.0
        %6695 = vmatprep.subr.mxu0 0.0
        %6696 = vmatpush1.msra.mxu0 0.0
        %6697 = vmatprep.subr.mxu0 0.0
        %6698 = vmatpush1.msra.mxu0 0.0
        %6699 = vmatprep.subr.mxu0 0.0
        %6700 = vmatpush1.msra.mxu0 0.0
        %6701 = vmatprep.subr.mxu0 0.0
        %6702 = vmatpush1.msra.mxu0 0.0
        %6703 = vmatprep.subr.mxu0 0.0
        %6704 = vmatpush1.msra.mxu0 0.0
        %6705 = vmatprep.subr.mxu0 0.0
        %6706 = vmatpush1.msra.mxu0 %v6672
        %6707 = vmatprep.subr.mxu0 0.0
        %6708 = vmatpush1.msra.mxu0 %v6671
        %6709 = vmatprep.subr.mxu0 0.0
        %6710 = vmatpush1.msra.mxu0 %v6670
        %6711 = vmatprep.subr.mxu0 0.0
        %6712 = vmatpush1.msra.mxu0 %v6669
        %6713 = vmatprep.subr.mxu0 0.0
        %6714 = vmatpush2.msra.mxu0 0.0
        %6715 = vmatprep.subr.mxu0 0.0
        %6716 = vmatpush2.msra.mxu0 0.0
        %6717 = vmatprep.subr.mxu0 0.0
        %6718 = vmatpush2.msra.mxu0 0.0
        %6719 = vmatprep.subr.mxu0 0.0
        %6720 = vmatpush2.msra.mxu0 0.0
        %6721 = vmatprep.subr.mxu0 0.0
        %6722 = vmatpush2.msra.mxu0 0.0
        %6723 = vmatprep.subr.mxu0 0.0
        %6724 = vmatpush2.msra.mxu0 0.0
        %6725 = vmatprep.subr.mxu0 0.0
        %6726 = vmatpush2.msra.mxu0 0.0
        %6727 = vmatprep.subr.mxu0 0.0
        %6728 = vmatpush2.msra.mxu0 0.0
        %6729 = vmatprep.subr.mxu0 0.0
        %6730 = vmatpush2.msra.mxu0 0.0
        %6731 = vmatprep.subr.mxu0 0.0
        %6732 = vmatpush2.msra.mxu0 0.0
        %6733 = vmatprep.subr.mxu0 0.0
        %6734 = vmatpush2.msra.mxu0 0.0
        %6735 = vmatprep.subr.mxu0 0.0
        %6736 = vmatpush2.msra.mxu0 0.0
        %6737 = vmatprep.subr.mxu0 0.0
        %6738 = vmatpush2.msra.mxu0 0.0
        %6739 = vmatprep.subr.mxu0 0.0
        %6740 = vmatpush2.msra.mxu0 0.0
        %6741 = vmatprep.subr.mxu0 0.0
        %6742 = vmatpush2.msra.mxu0 0.0
        %6743 = vmatprep.subr.mxu0 0.0
        %6744 = vmatpush2.msra.mxu0 0.0
        %6745 = vmatprep.mubr.f32.mxu0 0.0
        %6746 = vmatmul.mubr.f32.gmra.mxu0 %v5228
        %v6747 = vpop.f32.mrf.mxu0
        %v6748 = vadd.f32 %v6679, %v6747
        %v6749 = vpop.f32.mrf.mxu0
        %6750 = vdwg.mxu0
        %s6751 = scalar_lea.vmem %s51, 96
        %v6752 = vld [vmem:[%s6751] sm:$0xff]
        %v6753 = vld [vmem:[%s6751 + $0x8] sm:$0xff]
        %v6754 = vld [vmem:[%s6751 + $0x10] sm:$0xff]
        %v6755 = vld [vmem:[%s6751 + $0x18] sm:$0xff]
        %s6756 = scalar_lea.vmem %s57, 3
        %v6757 = vld [vmem:[%s6756] sm:$0x1]
        %v6759 = vlaneseq
        %v6760 = vshrl.u32 %v6759, 7
        %v6761 = vsub.s32 0, %v6760
        %v6762 = vrot.slane %v6757, %v6761
        %6764 = vmatprep.subr.mxu0 0.0
        %6765 = vmatpush1.msra.mxu0 0.0
        %6766 = vmatprep.subr.mxu0 0.0
        %6767 = vmatpush1.msra.mxu0 0.0
        %6768 = vmatprep.subr.mxu0 0.0
        %6769 = vmatpush1.msra.mxu0 0.0
        %6770 = vmatprep.subr.mxu0 0.0
        %6771 = vmatpush1.msra.mxu0 0.0
        %6772 = vmatprep.subr.mxu0 0.0
        %6773 = vmatpush1.msra.mxu0 0.0
        %6774 = vmatprep.subr.mxu0 0.0
        %6775 = vmatpush1.msra.mxu0 0.0
        %6776 = vmatprep.subr.mxu0 0.0
        %6777 = vmatpush1.msra.mxu0 0.0
        %6778 = vmatprep.subr.mxu0 0.0
        %6779 = vmatpush1.msra.mxu0 0.0
        %6780 = vmatprep.subr.mxu0 0.0
        %6781 = vmatpush1.msra.mxu0 0.0
        %6782 = vmatprep.subr.mxu0 0.0
        %6783 = vmatpush1.msra.mxu0 0.0
        %6784 = vmatprep.subr.mxu0 0.0
        %6785 = vmatpush1.msra.mxu0 0.0
        %6786 = vmatprep.subr.mxu0 0.0
        %6787 = vmatpush1.msra.mxu0 0.0
        %6788 = vmatprep.subr.mxu0 0.0
        %6789 = vmatpush1.msra.mxu0 %v6755
        %6790 = vmatprep.subr.mxu0 0.0
        %6791 = vmatpush1.msra.mxu0 %v6754
        %6792 = vmatprep.subr.mxu0 0.0
        %6793 = vmatpush1.msra.mxu0 %v6753
        %6794 = vmatprep.subr.mxu0 0.0
        %6795 = vmatpush1.msra.mxu0 %v6752
        %6796 = vmatprep.subr.mxu0 0.0
        %6797 = vmatpush2.msra.mxu0 0.0
        %6798 = vmatprep.subr.mxu0 0.0
        %6799 = vmatpush2.msra.mxu0 0.0
        %6800 = vmatprep.subr.mxu0 0.0
        %6801 = vmatpush2.msra.mxu0 0.0
        %6802 = vmatprep.subr.mxu0 0.0
        %6803 = vmatpush2.msra.mxu0 0.0
        %6804 = vmatprep.subr.mxu0 0.0
        %6805 = vmatpush2.msra.mxu0 0.0
        %6806 = vmatprep.subr.mxu0 0.0
        %6807 = vmatpush2.msra.mxu0 0.0
        %6808 = vmatprep.subr.mxu0 0.0
        %6809 = vmatpush2.msra.mxu0 0.0
        %6810 = vmatprep.subr.mxu0 0.0
        %6811 = vmatpush2.msra.mxu0 0.0
        %6812 = vmatprep.subr.mxu0 0.0
        %6813 = vmatpush2.msra.mxu0 0.0
        %6814 = vmatprep.subr.mxu0 0.0
        %6815 = vmatpush2.msra.mxu0 0.0
        %6816 = vmatprep.subr.mxu0 0.0
        %6817 = vmatpush2.msra.mxu0 0.0
        %6818 = vmatprep.subr.mxu0 0.0
        %6819 = vmatpush2.msra.mxu0 0.0
        %6820 = vmatprep.subr.mxu0 0.0
        %6821 = vmatpush2.msra.mxu0 0.0
        %6822 = vmatprep.subr.mxu0 0.0
        %6823 = vmatpush2.msra.mxu0 0.0
        %6824 = vmatprep.subr.mxu0 0.0
        %6825 = vmatpush2.msra.mxu0 0.0
        %6826 = vmatprep.subr.mxu0 0.0
        %6827 = vmatpush2.msra.mxu0 0.0
        %6828 = vmatprep.mubr.f32.mxu0 0.0
        %6829 = vmatmul.mubr.f32.gmra.mxu0 %v5228
        %v6830 = vpop.f32.mrf.mxu0
        %v6831 = vadd.f32 %v6762, %v6830
        %v6832 = vpop.f32.mrf.mxu0
        %6833 = vdwg.mxu0
        %s6834 = scalar_lea.vmem %s53, 96
        %v6835 = vld [vmem:[%s6834] sm:$0xff]
        %v6836 = vld [vmem:[%s6834 + $0x8] sm:$0xff]
        %v6837 = vld [vmem:[%s6834 + $0x10] sm:$0xff]
        %v6838 = vld [vmem:[%s6834 + $0x18] sm:$0xff]
        %s6839 = scalar_lea.vmem %s59, 3
        %v6840 = vld [vmem:[%s6839] sm:$0x1]
        %v6842 = vlaneseq
        %v6843 = vshrl.u32 %v6842, 7
        %v6844 = vsub.s32 0, %v6843
        %v6845 = vrot.slane %v6840, %v6844
        %6847 = vmatprep.subr.mxu0 0.0
        %6848 = vmatpush1.msra.mxu0 0.0
        %6849 = vmatprep.subr.mxu0 0.0
        %6850 = vmatpush1.msra.mxu0 0.0
        %6851 = vmatprep.subr.mxu0 0.0
        %6852 = vmatpush1.msra.mxu0 0.0
        %6853 = vmatprep.subr.mxu0 0.0
        %6854 = vmatpush1.msra.mxu0 0.0
        %6855 = vmatprep.subr.mxu0 0.0
        %6856 = vmatpush1.msra.mxu0 0.0
        %6857 = vmatprep.subr.mxu0 0.0
        %6858 = vmatpush1.msra.mxu0 0.0
        %6859 = vmatprep.subr.mxu0 0.0
        %6860 = vmatpush1.msra.mxu0 0.0
        %6861 = vmatprep.subr.mxu0 0.0
        %6862 = vmatpush1.msra.mxu0 0.0
        %6863 = vmatprep.subr.mxu0 0.0
        %6864 = vmatpush1.msra.mxu0 0.0
        %6865 = vmatprep.subr.mxu0 0.0
        %6866 = vmatpush1.msra.mxu0 0.0
        %6867 = vmatprep.subr.mxu0 0.0
        %6868 = vmatpush1.msra.mxu0 0.0
        %6869 = vmatprep.subr.mxu0 0.0
        %6870 = vmatpush1.msra.mxu0 0.0
        %6871 = vmatprep.subr.mxu0 0.0
        %6872 = vmatpush1.msra.mxu0 %v6838
        %6873 = vmatprep.subr.mxu0 0.0
        %6874 = vmatpush1.msra.mxu0 %v6837
        %6875 = vmatprep.subr.mxu0 0.0
        %6876 = vmatpush1.msra.mxu0 %v6836
        %6877 = vmatprep.subr.mxu0 0.0
        %6878 = vmatpush1.msra.mxu0 %v6835
        %6879 = vmatprep.subr.mxu0 0.0
        %6880 = vmatpush2.msra.mxu0 0.0
        %6881 = vmatprep.subr.mxu0 0.0
        %6882 = vmatpush2.msra.mxu0 0.0
        %6883 = vmatprep.subr.mxu0 0.0
        %6884 = vmatpush2.msra.mxu0 0.0
        %6885 = vmatprep.subr.mxu0 0.0
        %6886 = vmatpush2.msra.mxu0 0.0
        %6887 = vmatprep.subr.mxu0 0.0
        %6888 = vmatpush2.msra.mxu0 0.0
        %6889 = vmatprep.subr.mxu0 0.0
        %6890 = vmatpush2.msra.mxu0 0.0
        %6891 = vmatprep.subr.mxu0 0.0
        %6892 = vmatpush2.msra.mxu0 0.0
        %6893 = vmatprep.subr.mxu0 0.0
        %6894 = vmatpush2.msra.mxu0 0.0
        %6895 = vmatprep.subr.mxu0 0.0
        %6896 = vmatpush2.msra.mxu0 0.0
        %6897 = vmatprep.subr.mxu0 0.0
        %6898 = vmatpush2.msra.mxu0 0.0
        %6899 = vmatprep.subr.mxu0 0.0
        %6900 = vmatpush2.msra.mxu0 0.0
        %6901 = vmatprep.subr.mxu0 0.0
        %6902 = vmatpush2.msra.mxu0 0.0
        %6903 = vmatprep.subr.mxu0 0.0
        %6904 = vmatpush2.msra.mxu0 0.0
        %6905 = vmatprep.subr.mxu0 0.0
        %6906 = vmatpush2.msra.mxu0 0.0
        %6907 = vmatprep.subr.mxu0 0.0
        %6908 = vmatpush2.msra.mxu0 0.0
        %6909 = vmatprep.subr.mxu0 0.0
        %6910 = vmatpush2.msra.mxu0 0.0
        %6911 = vmatprep.mubr.f32.mxu0 0.0
        %6912 = vmatmul.mubr.f32.gmra.mxu0 %v5228
        %v6913 = vpop.f32.mrf.mxu0
        %v6914 = vadd.f32 %v6845, %v6913
        %v6915 = vpop.f32.mrf.mxu0
        %6916 = vdwg.mxu0
        %v6918 = vsel %vm1706, %v6748, 0
        %v6921 = vsel %vm1706, %v6831, 0
        %6923 = vmatprep.subr.mxu0 0.0
        %6924 = vmatpush1.xpose.msra.mxu0 0.0
        %6925 = vmatprep.subr.mxu0 0.0
        %6926 = vmatpush1.xpose.msra.mxu0 0.0
        %6927 = vmatprep.subr.mxu0 0.0
        %6928 = vmatpush1.xpose.msra.mxu0 0.0
        %6929 = vmatprep.subr.mxu0 0.0
        %6930 = vmatpush1.xpose.msra.mxu0 0.0
        %6931 = vmatprep.subr.mxu0 0.0
        %6932 = vmatpush1.xpose.msra.mxu0 0.0
        %6933 = vmatprep.subr.mxu0 0.0
        %6934 = vmatpush1.xpose.msra.mxu0 0.0
        %6935 = vmatprep.subr.mxu0 0.0
        %6936 = vmatpush1.xpose.msra.mxu0 0.0
        %6937 = vmatprep.subr.mxu0 0.0
        %6938 = vmatpush1.xpose.msra.mxu0 0.0
        %6939 = vmatprep.subr.mxu0 0.0
        %6940 = vmatpush1.xpose.msra.mxu0 0.0
        %6941 = vmatprep.subr.mxu0 0.0
        %6942 = vmatpush1.xpose.msra.mxu0 0.0
        %6943 = vmatprep.subr.mxu0 0.0
        %6944 = vmatpush1.xpose.msra.mxu0 0.0
        %6945 = vmatprep.subr.mxu0 0.0
        %6946 = vmatpush1.xpose.msra.mxu0 0.0
        %6947 = vmatprep.subr.mxu0 0.0
        %6948 = vmatpush1.xpose.msra.mxu0 0.0
        %6949 = vmatprep.subr.mxu0 0.0
        %6950 = vmatpush1.xpose.msra.mxu0 0.0
        %6951 = vmatprep.subr.mxu0 0.0
        %6952 = vmatpush1.xpose.msra.mxu0 0.0
        %6953 = vmatprep.subr.mxu0 0.0
        %6954 = vmatpush1.xpose.msra.mxu0 %v6921
        %6955 = vmatprep.subr.mxu0 0.0
        %6956 = vmatpush2.xpose.msra.mxu0 0.0
        %6957 = vmatprep.subr.mxu0 0.0
        %6958 = vmatpush2.xpose.msra.mxu0 0.0
        %6959 = vmatprep.subr.mxu0 0.0
        %6960 = vmatpush2.xpose.msra.mxu0 0.0
        %6961 = vmatprep.subr.mxu0 0.0
        %6962 = vmatpush2.xpose.msra.mxu0 0.0
        %6963 = vmatprep.subr.mxu0 0.0
        %6964 = vmatpush2.xpose.msra.mxu0 0.0
        %6965 = vmatprep.subr.mxu0 0.0
        %6966 = vmatpush2.xpose.msra.mxu0 0.0
        %6967 = vmatprep.subr.mxu0 0.0
        %6968 = vmatpush2.xpose.msra.mxu0 0.0
        %6969 = vmatprep.subr.mxu0 0.0
        %6970 = vmatpush2.xpose.msra.mxu0 0.0
        %6971 = vmatprep.subr.mxu0 0.0
        %6972 = vmatpush2.xpose.msra.mxu0 0.0
        %6973 = vmatprep.subr.mxu0 0.0
        %6974 = vmatpush2.xpose.msra.mxu0 0.0
        %6975 = vmatprep.subr.mxu0 0.0
        %6976 = vmatpush2.xpose.msra.mxu0 0.0
        %6977 = vmatprep.subr.mxu0 0.0
        %6978 = vmatpush2.xpose.msra.mxu0 0.0
        %6979 = vmatprep.subr.mxu0 0.0
        %6980 = vmatpush2.xpose.msra.mxu0 0.0
        %6981 = vmatprep.subr.mxu0 0.0
        %6982 = vmatpush2.xpose.msra.mxu0 0.0
        %6983 = vmatprep.subr.mxu0 0.0
        %6984 = vmatpush2.xpose.msra.mxu0 0.0
        %6985 = vmatprep.subr.mxu0 0.0
        %6986 = vmatpush2.xpose.msra.mxu0 0.0
        %6987 = vmatprep.mubr.f32.mxu0 0.0
        %6988 = vmatmul.mubr.f32.gmra.mxu0 %v6918
        %v6989 = vpop.f32.mrf.mxu0
        %v6990 = vadd.f32 0.0, %v6989
        %v6991 = vpop.f32.mrf.mxu0
        %6992 = vdwg.mxu0
        %v6993 = vmul.f32 %v6990, 0.35355338
        %v6994 = vsel %vm1706, %v6993, -inf
        %6995 = vmax.xlane.f32.xlu0 %v6994
        %v6996 = vpop.xlane.xlu0 %6995
        %v6997 = vsub.f32 %v6993, %v6996
        %v6998 = vmul.f32 %v6997, 1.442695
        %v6999 = vpow.pop %v6998
        %v7000 = vsel %vm1706, %v6999, 0.0
        %7001 = vadd.xlane.f32.xlu0 %v7000
        %v7002 = vpop.xlane.xlu0 %7001
        %v7003 = vrcp.pop %v7002
        %v7004 = vmul.f32 %v6999, %v7003
        %v7006 = vsel %vm1706, %v7004, 0
        %7008 = vmatprep.subr.mxu0 0.0
        %7009 = vmatpush1.msra.mxu0 0.0
        %7010 = vmatprep.subr.mxu0 0.0
        %7011 = vmatpush1.msra.mxu0 0.0
        %7012 = vmatprep.subr.mxu0 0.0
        %7013 = vmatpush1.msra.mxu0 0.0
        %7014 = vmatprep.subr.mxu0 0.0
        %7015 = vmatpush1.msra.mxu0 0.0
        %7016 = vmatprep.subr.mxu0 0.0
        %7017 = vmatpush1.msra.mxu0 0.0
        %7018 = vmatprep.subr.mxu0 0.0
        %7019 = vmatpush1.msra.mxu0 0.0
        %7020 = vmatprep.subr.mxu0 0.0
        %7021 = vmatpush1.msra.mxu0 0.0
        %7022 = vmatprep.subr.mxu0 0.0
        %7023 = vmatpush1.msra.mxu0 0.0
        %7024 = vmatprep.subr.mxu0 0.0
        %7025 = vmatpush1.msra.mxu0 0.0
        %7026 = vmatprep.subr.mxu0 0.0
        %7027 = vmatpush1.msra.mxu0 0.0
        %7028 = vmatprep.subr.mxu0 0.0
        %7029 = vmatpush1.msra.mxu0 0.0
        %7030 = vmatprep.subr.mxu0 0.0
        %7031 = vmatpush1.msra.mxu0 0.0
        %7032 = vmatprep.subr.mxu0 0.0
        %7033 = vmatpush1.msra.mxu0 0.0
        %7034 = vmatprep.subr.mxu0 0.0
        %7035 = vmatpush1.msra.mxu0 0.0
        %7036 = vmatprep.subr.mxu0 0.0
        %7037 = vmatpush1.msra.mxu0 0.0
        %7038 = vmatprep.subr.mxu0 0.0
        %7039 = vmatpush1.msra.mxu0 %v6914
        %7040 = vmatprep.subr.mxu0 0.0
        %7041 = vmatpush2.msra.mxu0 0.0
        %7042 = vmatprep.subr.mxu0 0.0
        %7043 = vmatpush2.msra.mxu0 0.0
        %7044 = vmatprep.subr.mxu0 0.0
        %7045 = vmatpush2.msra.mxu0 0.0
        %7046 = vmatprep.subr.mxu0 0.0
        %7047 = vmatpush2.msra.mxu0 0.0
        %7048 = vmatprep.subr.mxu0 0.0
        %7049 = vmatpush2.msra.mxu0 0.0
        %7050 = vmatprep.subr.mxu0 0.0
        %7051 = vmatpush2.msra.mxu0 0.0
        %7052 = vmatprep.subr.mxu0 0.0
        %7053 = vmatpush2.msra.mxu0 0.0
        %7054 = vmatprep.subr.mxu0 0.0
        %7055 = vmatpush2.msra.mxu0 0.0
        %7056 = vmatprep.subr.mxu0 0.0
        %7057 = vmatpush2.msra.mxu0 0.0
        %7058 = vmatprep.subr.mxu0 0.0
        %7059 = vmatpush2.msra.mxu0 0.0
        %7060 = vmatprep.subr.mxu0 0.0
        %7061 = vmatpush2.msra.mxu0 0.0
        %7062 = vmatprep.subr.mxu0 0.0
        %7063 = vmatpush2.msra.mxu0 0.0
        %7064 = vmatprep.subr.mxu0 0.0
        %7065 = vmatpush2.msra.mxu0 0.0
        %7066 = vmatprep.subr.mxu0 0.0
        %7067 = vmatpush2.msra.mxu0 0.0
        %7068 = vmatprep.subr.mxu0 0.0
        %7069 = vmatpush2.msra.mxu0 0.0
        %7070 = vmatprep.subr.mxu0 0.0
        %7071 = vmatpush2.msra.mxu0 0.0
        %7072 = vmatprep.mubr.f32.mxu0 0.0
        %7073 = vmatmul.mubr.f32.gmra.mxu0 %v7006
        %v7074 = vpop.f32.mrf.mxu0
        %v7075 = vadd.f32 0.0, %v7074
        %v7076 = vpop.f32.mrf.mxu0
        %7077 = vdwg.mxu0
        %s7078 = scalar_lea.vmem %s61, 24
        %v7079 = vld [vmem:[%s7078] sm:$0xff]
        %v7081 = vsel %vm1706, %v7075, 0
        %7083 = vmatprep.subr.mxu0 0.0
        %7084 = vmatpush1.msra.mxu0 0.0
        %7085 = vmatprep.subr.mxu0 0.0
        %7086 = vmatpush1.msra.mxu0 0.0
        %7087 = vmatprep.subr.mxu0 0.0
        %7088 = vmatpush1.msra.mxu0 0.0
        %7089 = vmatprep.subr.mxu0 0.0
        %7090 = vmatpush1.msra.mxu0 0.0
        %7091 = vmatprep.subr.mxu0 0.0
        %7092 = vmatpush1.msra.mxu0 0.0
        %7093 = vmatprep.subr.mxu0 0.0
        %7094 = vmatpush1.msra.mxu0 0.0
        %7095 = vmatprep.subr.mxu0 0.0
        %7096 = vmatpush1.msra.mxu0 0.0
        %7097 = vmatprep.subr.mxu0 0.0
        %7098 = vmatpush1.msra.mxu0 0.0
        %7099 = vmatprep.subr.mxu0 0.0
        %7100 = vmatpush1.msra.mxu0 0.0
        %7101 = vmatprep.subr.mxu0 0.0
        %7102 = vmatpush1.msra.mxu0 0.0
        %7103 = vmatprep.subr.mxu0 0.0
        %7104 = vmatpush1.msra.mxu0 0.0
        %7105 = vmatprep.subr.mxu0 0.0
        %7106 = vmatpush1.msra.mxu0 0.0
        %7107 = vmatprep.subr.mxu0 0.0
        %7108 = vmatpush1.msra.mxu0 0.0
        %7109 = vmatprep.subr.mxu0 0.0
        %7110 = vmatpush1.msra.mxu0 0.0
        %7111 = vmatprep.subr.mxu0 0.0
        %7112 = vmatpush1.msra.mxu0 0.0
        %7113 = vmatprep.subr.mxu0 0.0
        %7114 = vmatpush1.msra.mxu0 %v7079
        %7115 = vmatprep.subr.mxu0 0.0
        %7116 = vmatpush2.msra.mxu0 0.0
        %7117 = vmatprep.subr.mxu0 0.0
        %7118 = vmatpush2.msra.mxu0 0.0
        %7119 = vmatprep.subr.mxu0 0.0
        %7120 = vmatpush2.msra.mxu0 0.0
        %7121 = vmatprep.subr.mxu0 0.0
        %7122 = vmatpush2.msra.mxu0 0.0
        %7123 = vmatprep.subr.mxu0 0.0
        %7124 = vmatpush2.msra.mxu0 0.0
        %7125 = vmatprep.subr.mxu0 0.0
        %7126 = vmatpush2.msra.mxu0 0.0
        %7127 = vmatprep.subr.mxu0 0.0
        %7128 = vmatpush2.msra.mxu0 0.0
        %7129 = vmatprep.subr.mxu0 0.0
        %7130 = vmatpush2.msra.mxu0 0.0
        %7131 = vmatprep.subr.mxu0 0.0
        %7132 = vmatpush2.msra.mxu0 0.0
        %7133 = vmatprep.subr.mxu0 0.0
        %7134 = vmatpush2.msra.mxu0 0.0
        %7135 = vmatprep.subr.mxu0 0.0
        %7136 = vmatpush2.msra.mxu0 0.0
        %7137 = vmatprep.subr.mxu0 0.0
        %7138 = vmatpush2.msra.mxu0 0.0
        %7139 = vmatprep.subr.mxu0 0.0
        %7140 = vmatpush2.msra.mxu0 0.0
        %7141 = vmatprep.subr.mxu0 0.0
        %7142 = vmatpush2.msra.mxu0 0.0
        %7143 = vmatprep.subr.mxu0 0.0
        %7144 = vmatpush2.msra.mxu0 0.0
        %7145 = vmatprep.subr.mxu0 0.0
        %7146 = vmatpush2.msra.mxu0 0.0
        %7147 = vmatprep.mubr.f32.mxu0 0.0
        %7148 = vmatmul.mubr.f32.gmra.mxu0 %v7081
        %v7149 = vpop.f32.mrf.mxu0
        %v7150 = vadd.f32 0.0, %v7149
        %v7151 = vpop.f32.mrf.mxu0
        %7152 = vdwg.mxu0
        %v7153 = vadd.f32 %v6667, %v7150
        %v7154 = vld [vmem:[%s63] sm:$0x1]
        %v7156 = vlaneseq
        %v7157 = vshrl.u32 %v7156, 7
        %v7158 = vsub.s32 0, %v7157
        %v7159 = vrot.slane %v7154, %v7158
        %v7161 = vadd.f32 %v7153, %v7159
        %v7162 = vadd.f32 %v5215, %v7161
        %v7163 = vld [vmem:[%s73] sm:$0x1]
        %v7164 = vld [vmem:[%s75] sm:$0x1]
        %v7165 = vsel %vm1470, %v7162, 0.0
        %7166 = vadd.xlane.f32.xlu0 %v7165
        %v7167 = vpop.xlane.xlu0 %7166
        %v7168 = vmul.f32 %v7167, %v3413
        %v7169 = vsub.f32 %v7162, %v7168
        %v7170 = vmul.f32 %v7169, %v7169
        %v7171 = vsel %vm1470, %v7170, 0.0
        %7172 = vadd.xlane.f32.xlu0 %v7171
        %v7173 = vpop.xlane.xlu0 %7172
        %v7174 = vmul.f32 %v7173, %v3413
        %v7175 = vadd.f32 %v7174, 1e-05
        %v7176 = vrsqrt.pop %v7175
        %v7177 = vmul.f32 %v7169, %v7176
        %v7179 = vlaneseq
        %v7180 = vshrl.u32 %v7179, 7
        %v7181 = vsub.s32 0, %v7180
        %v7182 = vrot.slane %v7163, %v7181
        %v7184 = vmul.f32 %v7177, %v7182
        %v7186 = vlaneseq
        %v7187 = vshrl.u32 %v7186, 7
        %v7188 = vsub.s32 0, %v7187
        %v7189 = vrot.slane %v7164, %v7188
        %v7191 = vadd.f32 %v7184, %v7189
        %v7192 = vld [vmem:[%s65] sm:$0xff]
        %v7193 = vld [vmem:[%s65 + $0x8] sm:$0xff]
        %v7194 = vld [vmem:[%s65 + $0x10] sm:$0xff]
        %v7195 = vld [vmem:[%s65 + $0x18] sm:$0xff]
        %v7196 = vld [vmem:[%s67] sm:$0x1]
        %7197 = vmatprep.subr.mxu0 0.0
        %7198 = vmatpush1.msra.mxu0 0.0
        %7199 = vmatprep.subr.mxu0 0.0
        %7200 = vmatpush1.msra.mxu0 0.0
        %7201 = vmatprep.subr.mxu0 0.0
        %7202 = vmatpush1.msra.mxu0 0.0
        %7203 = vmatprep.subr.mxu0 0.0
        %7204 = vmatpush1.msra.mxu0 0.0
        %7205 = vmatprep.subr.mxu0 0.0
        %7206 = vmatpush1.msra.mxu0 0.0
        %7207 = vmatprep.subr.mxu0 0.0
        %7208 = vmatpush1.msra.mxu0 0.0
        %7209 = vmatprep.subr.mxu0 0.0
        %7210 = vmatpush1.msra.mxu0 0.0
        %7211 = vmatprep.subr.mxu0 0.0
        %7212 = vmatpush1.msra.mxu0 0.0
        %7213 = vmatprep.subr.mxu0 0.0
        %7214 = vmatpush1.msra.mxu0 0.0
        %7215 = vmatprep.subr.mxu0 0.0
        %7216 = vmatpush1.msra.mxu0 0.0
        %7217 = vmatprep.subr.mxu0 0.0
        %7218 = vmatpush1.msra.mxu0 0.0
        %7219 = vmatprep.subr.mxu0 0.0
        %7220 = vmatpush1.msra.mxu0 0.0
        %7221 = vmatprep.subr.mxu0 0.0
        %7222 = vmatpush1.msra.mxu0 %v7195
        %7223 = vmatprep.subr.mxu0 0.0
        %7224 = vmatpush1.msra.mxu0 %v7194
        %7225 = vmatprep.subr.mxu0 0.0
        %7226 = vmatpush1.msra.mxu0 %v7193
        %7227 = vmatprep.subr.mxu0 0.0
        %7228 = vmatpush1.msra.mxu0 %v7192
        %7229 = vmatprep.subr.mxu0 0.0
        %7230 = vmatpush2.msra.mxu0 0.0
        %7231 = vmatprep.subr.mxu0 0.0
        %7232 = vmatpush2.msra.mxu0 0.0
        %7233 = vmatprep.subr.mxu0 0.0
        %7234 = vmatpush2.msra.mxu0 0.0
        %7235 = vmatprep.subr.mxu0 0.0
        %7236 = vmatpush2.msra.mxu0 0.0
        %7237 = vmatprep.subr.mxu0 0.0
        %7238 = vmatpush2.msra.mxu0 0.0
        %7239 = vmatprep.subr.mxu0 0.0
        %7240 = vmatpush2.msra.mxu0 0.0
        %7241 = vmatprep.subr.mxu0 0.0
        %7242 = vmatpush2.msra.mxu0 0.0
        %7243 = vmatprep.subr.mxu0 0.0
        %7244 = vmatpush2.msra.mxu0 0.0
        %7245 = vmatprep.subr.mxu0 0.0
        %7246 = vmatpush2.msra.mxu0 0.0
        %7247 = vmatprep.subr.mxu0 0.0
        %7248 = vmatpush2.msra.mxu0 0.0
        %7249 = vmatprep.subr.mxu0 0.0
        %7250 = vmatpush2.msra.mxu0 0.0
        %7251 = vmatprep.subr.mxu0 0.0
        %7252 = vmatpush2.msra.mxu0 0.0
        %7253 = vmatprep.subr.mxu0 0.0
        %7254 = vmatpush2.msra.mxu0 0.0
        %7255 = vmatprep.subr.mxu0 0.0
        %7256 = vmatpush2.msra.mxu0 0.0
        %7257 = vmatprep.subr.mxu0 0.0
        %7258 = vmatpush2.msra.mxu0 0.0
        %7259 = vmatprep.subr.mxu0 0.0
        %7260 = vmatpush2.msra.mxu0 0.0
        %7261 = vmatprep.mubr.f32.mxu0 0.0
        %7262 = vmatmul.mubr.f32.gmra.mxu0 %v3444
        %v7263 = vpop.f32.mrf.mxu0
        %v7264 = vadd.f32 %v7196, %v7263
        %v7265 = vpop.f32.mrf.mxu0
        %7266 = vdwg.mxu0
        %v7267 = vld [vmem:[%s69] sm:$0xff]
        %v7268 = vld [vmem:[%s69 + $0x8] sm:$0xff]
        %v7269 = vld [vmem:[%s69 + $0x10] sm:$0xff]
        %v7270 = vld [vmem:[%s69 + $0x18] sm:$0xff]
        %v7271 = vld [vmem:[%s71] sm:$0x1]
        %v7273 = vsel %vm1470, %v7264, 0
        %7275 = vmatprep.subr.mxu0 0.0
        %7276 = vmatpush1.msra.mxu0 0.0
        %7277 = vmatprep.subr.mxu0 0.0
        %7278 = vmatpush1.msra.mxu0 0.0
        %7279 = vmatprep.subr.mxu0 0.0
        %7280 = vmatpush1.msra.mxu0 0.0
        %7281 = vmatprep.subr.mxu0 0.0
        %7282 = vmatpush1.msra.mxu0 0.0
        %7283 = vmatprep.subr.mxu0 0.0
        %7284 = vmatpush1.msra.mxu0 0.0
        %7285 = vmatprep.subr.mxu0 0.0
        %7286 = vmatpush1.msra.mxu0 0.0
        %7287 = vmatprep.subr.mxu0 0.0
        %7288 = vmatpush1.msra.mxu0 0.0
        %7289 = vmatprep.subr.mxu0 0.0
        %7290 = vmatpush1.msra.mxu0 0.0
        %7291 = vmatprep.subr.mxu0 0.0
        %7292 = vmatpush1.msra.mxu0 0.0
        %7293 = vmatprep.subr.mxu0 0.0
        %7294 = vmatpush1.msra.mxu0 0.0
        %7295 = vmatprep.subr.mxu0 0.0
        %7296 = vmatpush1.msra.mxu0 0.0
        %7297 = vmatprep.subr.mxu0 0.0
        %7298 = vmatpush1.msra.mxu0 0.0
        %7299 = vmatprep.subr.mxu0 0.0
        %7300 = vmatpush1.msra.mxu0 %v7270
        %7301 = vmatprep.subr.mxu0 0.0
        %7302 = vmatpush1.msra.mxu0 %v7269
        %7303 = vmatprep.subr.mxu0 0.0
        %7304 = vmatpush1.msra.mxu0 %v7268
        %7305 = vmatprep.subr.mxu0 0.0
        %7306 = vmatpush1.msra.mxu0 %v7267
        %7307 = vmatprep.subr.mxu0 0.0
        %7308 = vmatpush2.msra.mxu0 0.0
        %7309 = vmatprep.subr.mxu0 0.0
        %7310 = vmatpush2.msra.mxu0 0.0
        %7311 = vmatprep.subr.mxu0 0.0
        %7312 = vmatpush2.msra.mxu0 0.0
        %7313 = vmatprep.subr.mxu0 0.0
        %7314 = vmatpush2.msra.mxu0 0.0
        %7315 = vmatprep.subr.mxu0 0.0
        %7316 = vmatpush2.msra.mxu0 0.0
        %7317 = vmatprep.subr.mxu0 0.0
        %7318 = vmatpush2.msra.mxu0 0.0
        %7319 = vmatprep.subr.mxu0 0.0
        %7320 = vmatpush2.msra.mxu0 0.0
        %7321 = vmatprep.subr.mxu0 0.0
        %7322 = vmatpush2.msra.mxu0 0.0
        %7323 = vmatprep.subr.mxu0 0.0
        %7324 = vmatpush2.msra.mxu0 0.0
        %7325 = vmatprep.subr.mxu0 0.0
        %7326 = vmatpush2.msra.mxu0 0.0
        %7327 = vmatprep.subr.mxu0 0.0
        %7328 = vmatpush2.msra.mxu0 0.0
        %7329 = vmatprep.subr.mxu0 0.0
        %7330 = vmatpush2.msra.mxu0 0.0
        %7331 = vmatprep.subr.mxu0 0.0
        %7332 = vmatpush2.msra.mxu0 0.0
        %7333 = vmatprep.subr.mxu0 0.0
        %7334 = vmatpush2.msra.mxu0 0.0
        %7335 = vmatprep.subr.mxu0 0.0
        %7336 = vmatpush2.msra.mxu0 0.0
        %7337 = vmatprep.subr.mxu0 0.0
        %7338 = vmatpush2.msra.mxu0 0.0
        %7339 = vmatprep.mubr.f32.mxu0 0.0
        %7340 = vmatmul.mubr.f32.gmra.mxu0 %v7273
        %v7341 = vpop.f32.mrf.mxu0
        %v7342 = vadd.f32 %v7271, %v7341
        %v7343 = vpop.f32.mrf.mxu0
        %7344 = vdwg.mxu0
        %v7345 = vlaneseq
        %v7346 = vshrl.u32 %v7345, 7
        %v7347 = vsub.s32 0, %v7346
        %v7348 = vrot.slane %v7342, %v7347
        %v7349 = vadd.f32 %v7191, %v7348
        %v7350 = vld [vmem:[%s77] sm:$0x1]
        %v7351 = vld [vmem:[%s79] sm:$0x1]
        %v7352 = vsel %vm1470, %v7349, 0.0
        %7353 = vadd.xlane.f32.xlu0 %v7352
        %v7354 = vpop.xlane.xlu0 %7353
        %v7355 = vmul.f32 %v7354, %v3413
        %v7356 = vsub.f32 %v7349, %v7355
        %v7357 = vmul.f32 %v7356, %v7356
        %v7358 = vsel %vm1470, %v7357, 0.0
        %7359 = vadd.xlane.f32.xlu0 %v7358
        %v7360 = vpop.xlane.xlu0 %7359
        %v7361 = vmul.f32 %v7360, %v3413
        %v7362 = vadd.f32 %v7361, 1e-05
        %v7363 = vrsqrt.pop %v7362
        %v7364 = vmul.f32 %v7356, %v7363
        %v7366 = vlaneseq
        %v7367 = vshrl.u32 %v7366, 7
        %v7368 = vsub.s32 0, %v7367
        %v7369 = vrot.slane %v7350, %v7368
        %v7371 = vmul.f32 %v7364, %v7369
        %v7373 = vlaneseq
        %v7374 = vshrl.u32 %v7373, 7
        %v7375 = vsub.s32 0, %v7374
        %v7376 = vrot.slane %v7351, %v7375
        %v7378 = vadd.f32 %v7371, %v7376
        %v7379 = vld [vmem:[%s85] sm:$0xff]
        %v7380 = vld [vmem:[%s85 + $0x8] sm:$0xff]
        %v7381 = vld [vmem:[%s85 + $0x10] sm:$0xff]
        %v7382 = vld [vmem:[%s85 + $0x18] sm:$0xff]
        %v7383 = vld [vmem:[%s85 + $0x20] sm:$0xff]
        %v7384 = vld [vmem:[%s85 + $0x28] sm:$0xff]
        %v7385 = vld [vmem:[%s85 + $0x30] sm:$0xff]
        %v7386 = vld [vmem:[%s85 + $0x38] sm:$0xff]
        %v7387 = vld [vmem:[%s85 + $0x40] sm:$0xff]
        %v7388 = vld [vmem:[%s85 + $0x48] sm:$0xff]
        %v7389 = vld [vmem:[%s85 + $0x50] sm:$0xff]
        %v7390 = vld [vmem:[%s85 + $0x58] sm:$0xff]
        %v7391 = vld [vmem:[%s85 + $0x60] sm:$0xff]
        %v7392 = vld [vmem:[%s85 + $0x68] sm:$0xff]
        %v7393 = vld [vmem:[%s85 + $0x70] sm:$0xff]
        %v7394 = vld [vmem:[%s85 + $0x78] sm:$0xff]
        %v7395 = vld [vmem:[%s85 + $0x80] sm:$0xff]
        %v7396 = vld [vmem:[%s85 + $0x88] sm:$0xff]
        %v7397 = vld [vmem:[%s85 + $0x90] sm:$0xff]
        %v7398 = vld [vmem:[%s85 + $0x98] sm:$0xff]
        %v7399 = vld [vmem:[%s85 + $0xa0] sm:$0xff]
        %v7400 = vld [vmem:[%s85 + $0xa8] sm:$0xff]
        %v7401 = vld [vmem:[%s85 + $0xb0] sm:$0xff]
        %v7402 = vld [vmem:[%s85 + $0xb8] sm:$0xff]
        %v7403 = vld [vmem:[%s85 + $0xc0] sm:$0xff]
        %v7404 = vld [vmem:[%s85 + $0xc8] sm:$0xff]
        %v7405 = vld [vmem:[%s85 + $0xd0] sm:$0xff]
        %v7406 = vld [vmem:[%s85 + $0xd8] sm:$0xff]
        %v7407 = vld [vmem:[%s85 + $0xe0] sm:$0xff]
        %v7408 = vld [vmem:[%s85 + $0xe8] sm:$0xff]
        %v7409 = vld [vmem:[%s85 + $0xf0] sm:$0xff]
        %v7410 = vld [vmem:[%s85 + $0xf8] sm:$0xff]
        %v7411 = vld [vmem:[%s85 + $0x100] sm:$0xff]
        %v7412 = vld [vmem:[%s85 + $0x108] sm:$0xff]
        %v7413 = vld [vmem:[%s85 + $0x110] sm:$0xff]
        %v7414 = vld [vmem:[%s85 + $0x118] sm:$0xff]
        %v7415 = vld [vmem:[%s85 + $0x120] sm:$0xff]
        %v7416 = vld [vmem:[%s85 + $0x128] sm:$0xff]
        %v7417 = vld [vmem:[%s85 + $0x130] sm:$0xff]
        %v7418 = vld [vmem:[%s85 + $0x138] sm:$0xff]
        %v7419 = vld [vmem:[%s85 + $0x140] sm:$0xff]
        %v7420 = vld [vmem:[%s85 + $0x148] sm:$0xff]
        %v7421 = vld [vmem:[%s85 + $0x150] sm:$0xff]
        %v7422 = vld [vmem:[%s85 + $0x158] sm:$0xff]
        %v7423 = vld [vmem:[%s85 + $0x160] sm:$0xff]
        %v7424 = vld [vmem:[%s85 + $0x168] sm:$0xff]
        %v7425 = vld [vmem:[%s85 + $0x170] sm:$0xff]
        %v7426 = vld [vmem:[%s85 + $0x178] sm:$0xff]
        %v7427 = vld [vmem:[%s85 + $0x180] sm:$0xff]
        %v7428 = vld [vmem:[%s85 + $0x188] sm:$0xff]
        %v7429 = vld [vmem:[%s85 + $0x190] sm:$0xff]
        %v7430 = vld [vmem:[%s85 + $0x198] sm:$0xff]
        %v7431 = vld [vmem:[%s85 + $0x1a0] sm:$0xff]
        %v7432 = vld [vmem:[%s85 + $0x1a8] sm:$0xff]
        %v7433 = vld [vmem:[%s85 + $0x1b0] sm:$0xff]
        %v7434 = vld [vmem:[%s85 + $0x1b8] sm:$0xff]
        %v7435 = vld [vmem:[%s85 + $0x1c0] sm:$0xff]
        %v7436 = vld [vmem:[%s85 + $0x1c8] sm:$0xff]
        %v7437 = vld [vmem:[%s85 + $0x1d0] sm:$0xff]
        %v7438 = vld [vmem:[%s85 + $0x1d8] sm:$0xff]
        %v7439 = vld [vmem:[%s85 + $0x1e0] sm:$0xff]
        %v7440 = vld [vmem:[%s85 + $0x1e8] sm:$0xff]
        %v7441 = vld [vmem:[%s85 + $0x1f0] sm:$0xff]
        %v7442 = vld [vmem:[%s85 + $0x1f8] sm:$0xff]
        %v7443 = vld [vmem:[%s87] sm:$0xff]
        %v7444 = vld [vmem:[%s87 + $0x8] sm:$0xff]
        %v7447 = vlaneseq
        %v7448 = vshrl.u32 %v7447, 7
        %v7449 = vsub.s32 0, %v7448
        %v7450 = vrot.slane %v7443, %v7449
        %v7451 = vlaneseq
        %v7452 = vshrl.u32 %v7451, 7
        %v7453 = vsub.s32 1, %v7452
        %v7454 = vrot.slane %v7443, %v7453
        %v7455 = vlaneseq
        %v7456 = vshrl.u32 %v7455, 7
        %v7457 = vsub.s32 2, %v7456
        %v7458 = vrot.slane %v7443, %v7457
        %v7459 = vlaneseq
        %v7460 = vshrl.u32 %v7459, 7
        %v7461 = vsub.s32 3, %v7460
        %v7462 = vrot.slane %v7443, %v7461
        %v7463 = vlaneseq
        %v7464 = vshrl.u32 %v7463, 7
        %v7465 = vsub.s32 4, %v7464
        %v7466 = vrot.slane %v7443, %v7465
        %v7467 = vlaneseq
        %v7468 = vshrl.u32 %v7467, 7
        %v7469 = vsub.s32 5, %v7468
        %v7470 = vrot.slane %v7443, %v7469
        %v7471 = vlaneseq
        %v7472 = vshrl.u32 %v7471, 7
        %v7473 = vsub.s32 6, %v7472
        %v7474 = vrot.slane %v7443, %v7473
        %v7475 = vlaneseq
        %v7476 = vshrl.u32 %v7475, 7
        %v7477 = vsub.s32 7, %v7476
        %v7478 = vrot.slane %v7443, %v7477
        %v7479 = vlaneseq
        %v7480 = vshrl.u32 %v7479, 7
        %v7481 = vsub.s32 0, %v7480
        %v7482 = vrot.slane %v7444, %v7481
        %v7483 = vlaneseq
        %v7484 = vshrl.u32 %v7483, 7
        %v7485 = vsub.s32 1, %v7484
        %v7486 = vrot.slane %v7444, %v7485
        %v7487 = vlaneseq
        %v7488 = vshrl.u32 %v7487, 7
        %v7489 = vsub.s32 2, %v7488
        %v7490 = vrot.slane %v7444, %v7489
        %v7491 = vlaneseq
        %v7492 = vshrl.u32 %v7491, 7
        %v7493 = vsub.s32 3, %v7492
        %v7494 = vrot.slane %v7444, %v7493
        %v7495 = vlaneseq
        %v7496 = vshrl.u32 %v7495, 7
        %v7497 = vsub.s32 4, %v7496
        %v7498 = vrot.slane %v7444, %v7497
        %v7499 = vlaneseq
        %v7500 = vshrl.u32 %v7499, 7
        %v7501 = vsub.s32 5, %v7500
        %v7502 = vrot.slane %v7444, %v7501
        %v7503 = vlaneseq
        %v7504 = vshrl.u32 %v7503, 7
        %v7505 = vsub.s32 6, %v7504
        %v7506 = vrot.slane %v7444, %v7505
        %v7507 = vlaneseq
        %v7508 = vshrl.u32 %v7507, 7
        %v7509 = vsub.s32 7, %v7508
        %v7510 = vrot.slane %v7444, %v7509
        %v7528 = vsel %vm1470, %v7378, 0
        %7530 = vmatprep.subr.mxu0 0.0
        %7531 = vmatpush1.msra.mxu0 0.0
        %7532 = vmatprep.subr.mxu0 0.0
        %7533 = vmatpush1.msra.mxu0 0.0
        %7534 = vmatprep.subr.mxu0 0.0
        %7535 = vmatpush1.msra.mxu0 0.0
        %7536 = vmatprep.subr.mxu0 0.0
        %7537 = vmatpush1.msra.mxu0 0.0
        %7538 = vmatprep.subr.mxu0 0.0
        %7539 = vmatpush1.msra.mxu0 0.0
        %7540 = vmatprep.subr.mxu0 0.0
        %7541 = vmatpush1.msra.mxu0 0.0
        %7542 = vmatprep.subr.mxu0 0.0
        %7543 = vmatpush1.msra.mxu0 0.0
        %7544 = vmatprep.subr.mxu0 0.0
        %7545 = vmatpush1.msra.mxu0 0.0
        %7546 = vmatprep.subr.mxu0 0.0
        %7547 = vmatpush1.msra.mxu0 0.0
        %7548 = vmatprep.subr.mxu0 0.0
        %7549 = vmatpush1.msra.mxu0 0.0
        %7550 = vmatprep.subr.mxu0 0.0
        %7551 = vmatpush1.msra.mxu0 0.0
        %7552 = vmatprep.subr.mxu0 0.0
        %7553 = vmatpush1.msra.mxu0 0.0
        %7554 = vmatprep.subr.mxu0 %v7428
        %7555 = vmatpush1.msra.mxu0 %v7427
        %7556 = vmatprep.subr.mxu0 %v7412
        %7557 = vmatpush1.msra.mxu0 %v7411
        %7558 = vmatprep.subr.mxu0 %v7396
        %7559 = vmatpush1.msra.mxu0 %v7395
        %7560 = vmatprep.subr.mxu0 %v7380
        %7561 = vmatpush1.msra.mxu0 %v7379
        %7562 = vmatprep.subr.mxu0 0.0
        %7563 = vmatpush2.msra.mxu0 0.0
        %7564 = vmatprep.subr.mxu0 0.0
        %7565 = vmatpush2.msra.mxu0 0.0
        %7566 = vmatprep.subr.mxu0 0.0
        %7567 = vmatpush2.msra.mxu0 0.0
        %7568 = vmatprep.subr.mxu0 0.0
        %7569 = vmatpush2.msra.mxu0 0.0
        %7570 = vmatprep.subr.mxu0 0.0
        %7571 = vmatpush2.msra.mxu0 0.0
        %7572 = vmatprep.subr.mxu0 0.0
        %7573 = vmatpush2.msra.mxu0 0.0
        %7574 = vmatprep.subr.mxu0 0.0
        %7575 = vmatpush2.msra.mxu0 0.0
        %7576 = vmatprep.subr.mxu0 0.0
        %7577 = vmatpush2.msra.mxu0 0.0
        %7578 = vmatprep.subr.mxu0 0.0
        %7579 = vmatpush2.msra.mxu0 0.0
        %7580 = vmatprep.subr.mxu0 0.0
        %7581 = vmatpush2.msra.mxu0 0.0
        %7582 = vmatprep.subr.mxu0 0.0
        %7583 = vmatpush2.msra.mxu0 0.0
        %7584 = vmatprep.subr.mxu0 0.0
        %7585 = vmatpush2.msra.mxu0 0.0
        %7586 = vmatprep.subr.mxu0 0.0
        %7587 = vmatpush2.msra.mxu0 0.0
        %7588 = vmatprep.subr.mxu0 0.0
        %7589 = vmatpush2.msra.mxu0 0.0
        %7590 = vmatprep.subr.mxu0 0.0
        %7591 = vmatpush2.msra.mxu0 0.0
        %7592 = vmatprep.subr.mxu0 0.0
        %7593 = vmatpush2.msra.mxu0 0.0
        %7594 = vmatprep.mubr.f32.mxu0 0.0
        %7595 = vmatmul.mubr.f32.gmra.mxu0 %v7528
        %v7596 = vpop.f32.mrf.mxu0
        %v7597 = vadd.f32 %v7450, %v7596
        %v7598 = vpop.f32.mrf.mxu0
        %v7599 = vadd.f32 %v7454, %v7598
        %7600 = vdwg.mxu0
        %7601 = vmatprep.subr.mxu0 0.0
        %7602 = vmatpush1.msra.mxu0 0.0
        %7603 = vmatprep.subr.mxu0 0.0
        %7604 = vmatpush1.msra.mxu0 0.0
        %7605 = vmatprep.subr.mxu0 0.0
        %7606 = vmatpush1.msra.mxu0 0.0
        %7607 = vmatprep.subr.mxu0 0.0
        %7608 = vmatpush1.msra.mxu0 0.0
        %7609 = vmatprep.subr.mxu0 0.0
        %7610 = vmatpush1.msra.mxu0 0.0
        %7611 = vmatprep.subr.mxu0 0.0
        %7612 = vmatpush1.msra.mxu0 0.0
        %7613 = vmatprep.subr.mxu0 0.0
        %7614 = vmatpush1.msra.mxu0 0.0
        %7615 = vmatprep.subr.mxu0 0.0
        %7616 = vmatpush1.msra.mxu0 0.0
        %7617 = vmatprep.subr.mxu0 0.0
        %7618 = vmatpush1.msra.mxu0 0.0
        %7619 = vmatprep.subr.mxu0 0.0
        %7620 = vmatpush1.msra.mxu0 0.0
        %7621 = vmatprep.subr.mxu0 0.0
        %7622 = vmatpush1.msra.mxu0 0.0
        %7623 = vmatprep.subr.mxu0 0.0
        %7624 = vmatpush1.msra.mxu0 0.0
        %7625 = vmatprep.subr.mxu0 %v7430
        %7626 = vmatpush1.msra.mxu0 %v7429
        %7627 = vmatprep.subr.mxu0 %v7414
        %7628 = vmatpush1.msra.mxu0 %v7413
        %7629 = vmatprep.subr.mxu0 %v7398
        %7630 = vmatpush1.msra.mxu0 %v7397
        %7631 = vmatprep.subr.mxu0 %v7382
        %7632 = vmatpush1.msra.mxu0 %v7381
        %7633 = vmatprep.subr.mxu0 0.0
        %7634 = vmatpush2.msra.mxu0 0.0
        %7635 = vmatprep.subr.mxu0 0.0
        %7636 = vmatpush2.msra.mxu0 0.0
        %7637 = vmatprep.subr.mxu0 0.0
        %7638 = vmatpush2.msra.mxu0 0.0
        %7639 = vmatprep.subr.mxu0 0.0
        %7640 = vmatpush2.msra.mxu0 0.0
        %7641 = vmatprep.subr.mxu0 0.0
        %7642 = vmatpush2.msra.mxu0 0.0
        %7643 = vmatprep.subr.mxu0 0.0
        %7644 = vmatpush2.msra.mxu0 0.0
        %7645 = vmatprep.subr.mxu0 0.0
        %7646 = vmatpush2.msra.mxu0 0.0
        %7647 = vmatprep.subr.mxu0 0.0
        %7648 = vmatpush2.msra.mxu0 0.0
        %7649 = vmatprep.subr.mxu0 0.0
        %7650 = vmatpush2.msra.mxu0 0.0
        %7651 = vmatprep.subr.mxu0 0.0
        %7652 = vmatpush2.msra.mxu0 0.0
        %7653 = vmatprep.subr.mxu0 0.0
        %7654 = vmatpush2.msra.mxu0 0.0
        %7655 = vmatprep.subr.mxu0 0.0
        %7656 = vmatpush2.msra.mxu0 0.0
        %7657 = vmatprep.subr.mxu0 0.0
        %7658 = vmatpush2.msra.mxu0 0.0
        %7659 = vmatprep.subr.mxu0 0.0
        %7660 = vmatpush2.msra.mxu0 0.0
        %7661 = vmatprep.subr.mxu0 0.0
        %7662 = vmatpush2.msra.mxu0 0.0
        %7663 = vmatprep.subr.mxu0 0.0
        %7664 = vmatpush2.msra.mxu0 0.0
        %7665 = vmatprep.mubr.f32.mxu0 0.0
        %7666 = vmatmul.mubr.f32.gmra.mxu0 %v7528
        %v7667 = vpop.f32.mrf.mxu0
        %v7668 = vadd.f32 %v7458, %v7667
        %v7669 = vpop.f32.mrf.mxu0
        %v7670 = vadd.f32 %v7462, %v7669
        %7671 = vdwg.mxu0
        %7672 = vmatprep.subr.mxu0 0.0
        %7673 = vmatpush1.msra.mxu0 0.0
        %7674 = vmatprep.subr.mxu0 0.0
        %7675 = vmatpush1.msra.mxu0 0.0
        %7676 = vmatprep.subr.mxu0 0.0
        %7677 = vmatpush1.msra.mxu0 0.0
        %7678 = vmatprep.subr.mxu0 0.0
        %7679 = vmatpush1.msra.mxu0 0.0
        %7680 = vmatprep.subr.mxu0 0.0
        %7681 = vmatpush1.msra.mxu0 0.0
        %7682 = vmatprep.subr.mxu0 0.0
        %7683 = vmatpush1.msra.mxu0 0.0
        %7684 = vmatprep.subr.mxu0 0.0
        %7685 = vmatpush1.msra.mxu0 0.0
        %7686 = vmatprep.subr.mxu0 0.0
        %7687 = vmatpush1.msra.mxu0 0.0
        %7688 = vmatprep.subr.mxu0 0.0
        %7689 = vmatpush1.msra.mxu0 0.0
        %7690 = vmatprep.subr.mxu0 0.0
        %7691 = vmatpush1.msra.mxu0 0.0
        %7692 = vmatprep.subr.mxu0 0.0
        %7693 = vmatpush1.msra.mxu0 0.0
        %7694 = vmatprep.subr.mxu0 0.0
        %7695 = vmatpush1.msra.mxu0 0.0
        %7696 = vmatprep.subr.mxu0 %v7432
        %7697 = vmatpush1.msra.mxu0 %v7431
        %7698 = vmatprep.subr.mxu0 %v7416
        %7699 = vmatpush1.msra.mxu0 %v7415
        %7700 = vmatprep.subr.mxu0 %v7400
        %7701 = vmatpush1.msra.mxu0 %v7399
        %7702 = vmatprep.subr.mxu0 %v7384
        %7703 = vmatpush1.msra.mxu0 %v7383
        %7704 = vmatprep.subr.mxu0 0.0
        %7705 = vmatpush2.msra.mxu0 0.0
        %7706 = vmatprep.subr.mxu0 0.0
        %7707 = vmatpush2.msra.mxu0 0.0
        %7708 = vmatprep.subr.mxu0 0.0
        %7709 = vmatpush2.msra.mxu0 0.0
        %7710 = vmatprep.subr.mxu0 0.0
        %7711 = vmatpush2.msra.mxu0 0.0
        %7712 = vmatprep.subr.mxu0 0.0
        %7713 = vmatpush2.msra.mxu0 0.0
        %7714 = vmatprep.subr.mxu0 0.0
        %7715 = vmatpush2.msra.mxu0 0.0
        %7716 = vmatprep.subr.mxu0 0.0
        %7717 = vmatpush2.msra.mxu0 0.0
        %7718 = vmatprep.subr.mxu0 0.0
        %7719 = vmatpush2.msra.mxu0 0.0
        %7720 = vmatprep.subr.mxu0 0.0
        %7721 = vmatpush2.msra.mxu0 0.0
        %7722 = vmatprep.subr.mxu0 0.0
        %7723 = vmatpush2.msra.mxu0 0.0
        %7724 = vmatprep.subr.mxu0 0.0
        %7725 = vmatpush2.msra.mxu0 0.0
        %7726 = vmatprep.subr.mxu0 0.0
        %7727 = vmatpush2.msra.mxu0 0.0
        %7728 = vmatprep.subr.mxu0 0.0
        %7729 = vmatpush2.msra.mxu0 0.0
        %7730 = vmatprep.subr.mxu0 0.0
        %7731 = vmatpush2.msra.mxu0 0.0
        %7732 = vmatprep.subr.mxu0 0.0
        %7733 = vmatpush2.msra.mxu0 0.0
        %7734 = vmatprep.subr.mxu0 0.0
        %7735 = vmatpush2.msra.mxu0 0.0
        %7736 = vmatprep.mubr.f32.mxu0 0.0
        %7737 = vmatmul.mubr.f32.gmra.mxu0 %v7528
        %v7738 = vpop.f32.mrf.mxu0
        %v7739 = vadd.f32 %v7466, %v7738
        %v7740 = vpop.f32.mrf.mxu0
        %v7741 = vadd.f32 %v7470, %v7740
        %7742 = vdwg.mxu0
        %7743 = vmatprep.subr.mxu0 0.0
        %7744 = vmatpush1.msra.mxu0 0.0
        %7745 = vmatprep.subr.mxu0 0.0
        %7746 = vmatpush1.msra.mxu0 0.0
        %7747 = vmatprep.subr.mxu0 0.0
        %7748 = vmatpush1.msra.mxu0 0.0
        %7749 = vmatprep.subr.mxu0 0.0
        %7750 = vmatpush1.msra.mxu0 0.0
        %7751 = vmatprep.subr.mxu0 0.0
        %7752 = vmatpush1.msra.mxu0 0.0
        %7753 = vmatprep.subr.mxu0 0.0
        %7754 = vmatpush1.msra.mxu0 0.0
        %7755 = vmatprep.subr.mxu0 0.0
        %7756 = vmatpush1.msra.mxu0 0.0
        %7757 = vmatprep.subr.mxu0 0.0
        %7758 = vmatpush1.msra.mxu0 0.0
        %7759 = vmatprep.subr.mxu0 0.0
        %7760 = vmatpush1.msra.mxu0 0.0
        %7761 = vmatprep.subr.mxu0 0.0
        %7762 = vmatpush1.msra.mxu0 0.0
        %7763 = vmatprep.subr.mxu0 0.0
        %7764 = vmatpush1.msra.mxu0 0.0
        %7765 = vmatprep.subr.mxu0 0.0
        %7766 = vmatpush1.msra.mxu0 0.0
        %7767 = vmatprep.subr.mxu0 %v7434
        %7768 = vmatpush1.msra.mxu0 %v7433
        %7769 = vmatprep.subr.mxu0 %v7418
        %7770 = vmatpush1.msra.mxu0 %v7417
        %7771 = vmatprep.subr.mxu0 %v7402
        %7772 = vmatpush1.msra.mxu0 %v7401
        %7773 = vmatprep.subr.mxu0 %v7386
        %7774 = vmatpush1.msra.mxu0 %v7385
        %7775 = vmatprep.subr.mxu0 0.0
        %7776 = vmatpush2.msra.mxu0 0.0
        %7777 = vmatprep.subr.mxu0 0.0
        %7778 = vmatpush2.msra.mxu0 0.0
        %7779 = vmatprep.subr.mxu0 0.0
        %7780 = vmatpush2.msra.mxu0 0.0
        %7781 = vmatprep.subr.mxu0 0.0
        %7782 = vmatpush2.msra.mxu0 0.0
        %7783 = vmatprep.subr.mxu0 0.0
        %7784 = vmatpush2.msra.mxu0 0.0
        %7785 = vmatprep.subr.mxu0 0.0
        %7786 = vmatpush2.msra.mxu0 0.0
        %7787 = vmatprep.subr.mxu0 0.0
        %7788 = vmatpush2.msra.mxu0 0.0
        %7789 = vmatprep.subr.mxu0 0.0
        %7790 = vmatpush2.msra.mxu0 0.0
        %7791 = vmatprep.subr.mxu0 0.0
        %7792 = vmatpush2.msra.mxu0 0.0
        %7793 = vmatprep.subr.mxu0 0.0
        %7794 = vmatpush2.msra.mxu0 0.0
        %7795 = vmatprep.subr.mxu0 0.0
        %7796 = vmatpush2.msra.mxu0 0.0
        %7797 = vmatprep.subr.mxu0 0.0
        %7798 = vmatpush2.msra.mxu0 0.0
        %7799 = vmatprep.subr.mxu0 0.0
        %7800 = vmatpush2.msra.mxu0 0.0
        %7801 = vmatprep.subr.mxu0 0.0
        %7802 = vmatpush2.msra.mxu0 0.0
        %7803 = vmatprep.subr.mxu0 0.0
        %7804 = vmatpush2.msra.mxu0 0.0
        %7805 = vmatprep.subr.mxu0 0.0
        %7806 = vmatpush2.msra.mxu0 0.0
        %7807 = vmatprep.mubr.f32.mxu0 0.0
        %7808 = vmatmul.mubr.f32.gmra.mxu0 %v7528
        %v7809 = vpop.f32.mrf.mxu0
        %v7810 = vadd.f32 %v7474, %v7809
        %v7811 = vpop.f32.mrf.mxu0
        %v7812 = vadd.f32 %v7478, %v7811
        %7813 = vdwg.mxu0
        %7814 = vmatprep.subr.mxu0 0.0
        %7815 = vmatpush1.msra.mxu0 0.0
        %7816 = vmatprep.subr.mxu0 0.0
        %7817 = vmatpush1.msra.mxu0 0.0
        %7818 = vmatprep.subr.mxu0 0.0
        %7819 = vmatpush1.msra.mxu0 0.0
        %7820 = vmatprep.subr.mxu0 0.0
        %7821 = vmatpush1.msra.mxu0 0.0
        %7822 = vmatprep.subr.mxu0 0.0
        %7823 = vmatpush1.msra.mxu0 0.0
        %7824 = vmatprep.subr.mxu0 0.0
        %7825 = vmatpush1.msra.mxu0 0.0
        %7826 = vmatprep.subr.mxu0 0.0
        %7827 = vmatpush1.msra.mxu0 0.0
        %7828 = vmatprep.subr.mxu0 0.0
        %7829 = vmatpush1.msra.mxu0 0.0
        %7830 = vmatprep.subr.mxu0 0.0
        %7831 = vmatpush1.msra.mxu0 0.0
        %7832 = vmatprep.subr.mxu0 0.0
        %7833 = vmatpush1.msra.mxu0 0.0
        %7834 = vmatprep.subr.mxu0 0.0
        %7835 = vmatpush1.msra.mxu0 0.0
        %7836 = vmatprep.subr.mxu0 0.0
        %7837 = vmatpush1.msra.mxu0 0.0
        %7838 = vmatprep.subr.mxu0 %v7436
        %7839 = vmatpush1.msra.mxu0 %v7435
        %7840 = vmatprep.subr.mxu0 %v7420
        %7841 = vmatpush1.msra.mxu0 %v7419
        %7842 = vmatprep.subr.mxu0 %v7404
        %7843 = vmatpush1.msra.mxu0 %v7403
        %7844 = vmatprep.subr.mxu0 %v7388
        %7845 = vmatpush1.msra.mxu0 %v7387
        %7846 = vmatprep.subr.mxu0 0.0
        %7847 = vmatpush2.msra.mxu0 0.0
        %7848 = vmatprep.subr.mxu0 0.0
        %7849 = vmatpush2.msra.mxu0 0.0
        %7850 = vmatprep.subr.mxu0 0.0
        %7851 = vmatpush2.msra.mxu0 0.0
        %7852 = vmatprep.subr.mxu0 0.0
        %7853 = vmatpush2.msra.mxu0 0.0
        %7854 = vmatprep.subr.mxu0 0.0
        %7855 = vmatpush2.msra.mxu0 0.0
        %7856 = vmatprep.subr.mxu0 0.0
        %7857 = vmatpush2.msra.mxu0 0.0
        %7858 = vmatprep.subr.mxu0 0.0
        %7859 = vmatpush2.msra.mxu0 0.0
        %7860 = vmatprep.subr.mxu0 0.0
        %7861 = vmatpush2.msra.mxu0 0.0
        %7862 = vmatprep.subr.mxu0 0.0
        %7863 = vmatpush2.msra.mxu0 0.0
        %7864 = vmatprep.subr.mxu0 0.0
        %7865 = vmatpush2.msra.mxu0 0.0
        %7866 = vmatprep.subr.mxu0 0.0
        %7867 = vmatpush2.msra.mxu0 0.0
        %7868 = vmatprep.subr.mxu0 0.0
        %7869 = vmatpush2.msra.mxu0 0.0
        %7870 = vmatprep.subr.mxu0 0.0
        %7871 = vmatpush2.msra.mxu0 0.0
        %7872 = vmatprep.subr.mxu0 0.0
        %7873 = vmatpush2.msra.mxu0 0.0
        %7874 = vmatprep.subr.mxu0 0.0
        %7875 = vmatpush2.msra.mxu0 0.0
        %7876 = vmatprep.subr.mxu0 0.0
        %7877 = vmatpush2.msra.mxu0 0.0
        %7878 = vmatprep.mubr.f32.mxu0 0.0
        %7879 = vmatmul.mubr.f32.gmra.mxu0 %v7528
        %v7880 = vpop.f32.mrf.mxu0
        %v7881 = vadd.f32 %v7482, %v7880
        %v7882 = vpop.f32.mrf.mxu0
        %v7883 = vadd.f32 %v7486, %v7882
        %7884 = vdwg.mxu0
        %7885 = vmatprep.subr.mxu0 0.0
        %7886 = vmatpush1.msra.mxu0 0.0
        %7887 = vmatprep.subr.mxu0 0.0
        %7888 = vmatpush1.msra.mxu0 0.0
        %7889 = vmatprep.subr.mxu0 0.0
        %7890 = vmatpush1.msra.mxu0 0.0
        %7891 = vmatprep.subr.mxu0 0.0
        %7892 = vmatpush1.msra.mxu0 0.0
        %7893 = vmatprep.subr.mxu0 0.0
        %7894 = vmatpush1.msra.mxu0 0.0
        %7895 = vmatprep.subr.mxu0 0.0
        %7896 = vmatpush1.msra.mxu0 0.0
        %7897 = vmatprep.subr.mxu0 0.0
        %7898 = vmatpush1.msra.mxu0 0.0
        %7899 = vmatprep.subr.mxu0 0.0
        %7900 = vmatpush1.msra.mxu0 0.0
        %7901 = vmatprep.subr.mxu0 0.0
        %7902 = vmatpush1.msra.mxu0 0.0
        %7903 = vmatprep.subr.mxu0 0.0
        %7904 = vmatpush1.msra.mxu0 0.0
        %7905 = vmatprep.subr.mxu0 0.0
        %7906 = vmatpush1.msra.mxu0 0.0
        %7907 = vmatprep.subr.mxu0 0.0
        %7908 = vmatpush1.msra.mxu0 0.0
        %7909 = vmatprep.subr.mxu0 %v7438
        %7910 = vmatpush1.msra.mxu0 %v7437
        %7911 = vmatprep.subr.mxu0 %v7422
        %7912 = vmatpush1.msra.mxu0 %v7421
        %7913 = vmatprep.subr.mxu0 %v7406
        %7914 = vmatpush1.msra.mxu0 %v7405
        %7915 = vmatprep.subr.mxu0 %v7390
        %7916 = vmatpush1.msra.mxu0 %v7389
        %7917 = vmatprep.subr.mxu0 0.0
        %7918 = vmatpush2.msra.mxu0 0.0
        %7919 = vmatprep.subr.mxu0 0.0
        %7920 = vmatpush2.msra.mxu0 0.0
        %7921 = vmatprep.subr.mxu0 0.0
        %7922 = vmatpush2.msra.mxu0 0.0
        %7923 = vmatprep.subr.mxu0 0.0
        %7924 = vmatpush2.msra.mxu0 0.0
        %7925 = vmatprep.subr.mxu0 0.0
        %7926 = vmatpush2.msra.mxu0 0.0
        %7927 = vmatprep.subr.mxu0 0.0
        %7928 = vmatpush2.msra.mxu0 0.0
        %7929 = vmatprep.subr.mxu0 0.0
        %7930 = vmatpush2.msra.mxu0 0.0
        %7931 = vmatprep.subr.mxu0 0.0
        %7932 = vmatpush2.msra.mxu0 0.0
        %7933 = vmatprep.subr.mxu0 0.0
        %7934 = vmatpush2.msra.mxu0 0.0
        %7935 = vmatprep.subr.mxu0 0.0
        %7936 = vmatpush2.msra.mxu0 0.0
        %7937 = vmatprep.subr.mxu0 0.0
        %7938 = vmatpush2.msra.mxu0 0.0
        %7939 = vmatprep.subr.mxu0 0.0
        %7940 = vmatpush2.msra.mxu0 0.0
        %7941 = vmatprep.subr.mxu0 0.0
        %7942 = vmatpush2.msra.mxu0 0.0
        %7943 = vmatprep.subr.mxu0 0.0
        %7944 = vmatpush2.msra.mxu0 0.0
        %7945 = vmatprep.subr.mxu0 0.0
        %7946 = vmatpush2.msra.mxu0 0.0
        %7947 = vmatprep.subr.mxu0 0.0
        %7948 = vmatpush2.msra.mxu0 0.0
        %7949 = vmatprep.mubr.f32.mxu0 0.0
        %7950 = vmatmul.mubr.f32.gmra.mxu0 %v7528
        %v7951 = vpop.f32.mrf.mxu0
        %v7952 = vadd.f32 %v7490, %v7951
        %v7953 = vpop.f32.mrf.mxu0
        %v7954 = vadd.f32 %v7494, %v7953
        %7955 = vdwg.mxu0
        %7956 = vmatprep.subr.mxu0 0.0
        %7957 = vmatpush1.msra.mxu0 0.0
        %7958 = vmatprep.subr.mxu0 0.0
        %7959 = vmatpush1.msra.mxu0 0.0
        %7960 = vmatprep.subr.mxu0 0.0
        %7961 = vmatpush1.msra.mxu0 0.0
        %7962 = vmatprep.subr.mxu0 0.0
        %7963 = vmatpush1.msra.mxu0 0.0
        %7964 = vmatprep.subr.mxu0 0.0
        %7965 = vmatpush1.msra.mxu0 0.0
        %7966 = vmatprep.subr.mxu0 0.0
        %7967 = vmatpush1.msra.mxu0 0.0
        %7968 = vmatprep.subr.mxu0 0.0
        %7969 = vmatpush1.msra.mxu0 0.0
        %7970 = vmatprep.subr.mxu0 0.0
        %7971 = vmatpush1.msra.mxu0 0.0
        %7972 = vmatprep.subr.mxu0 0.0
        %7973 = vmatpush1.msra.mxu0 0.0
        %7974 = vmatprep.subr.mxu0 0.0
        %7975 = vmatpush1.msra.mxu0 0.0
        %7976 = vmatprep.subr.mxu0 0.0
        %7977 = vmatpush1.msra.mxu0 0.0
        %7978 = vmatprep.subr.mxu0 0.0
        %7979 = vmatpush1.msra.mxu0 0.0
        %7980 = vmatprep.subr.mxu0 %v7440
        %7981 = vmatpush1.msra.mxu0 %v7439
        %7982 = vmatprep.subr.mxu0 %v7424
        %7983 = vmatpush1.msra.mxu0 %v7423
        %7984 = vmatprep.subr.mxu0 %v7408
        %7985 = vmatpush1.msra.mxu0 %v7407
        %7986 = vmatprep.subr.mxu0 %v7392
        %7987 = vmatpush1.msra.mxu0 %v7391
        %7988 = vmatprep.subr.mxu0 0.0
        %7989 = vmatpush2.msra.mxu0 0.0
        %7990 = vmatprep.subr.mxu0 0.0
        %7991 = vmatpush2.msra.mxu0 0.0
        %7992 = vmatprep.subr.mxu0 0.0
        %7993 = vmatpush2.msra.mxu0 0.0
        %7994 = vmatprep.subr.mxu0 0.0
        %7995 = vmatpush2.msra.mxu0 0.0
        %7996 = vmatprep.subr.mxu0 0.0
        %7997 = vmatpush2.msra.mxu0 0.0
        %7998 = vmatprep.subr.mxu0 0.0
        %7999 = vmatpush2.msra.mxu0 0.0
        %8000 = vmatprep.subr.mxu0 0.0
        %8001 = vmatpush2.msra.mxu0 0.0
        %8002 = vmatprep.subr.mxu0 0.0
        %8003 = vmatpush2.msra.mxu0 0.0
        %8004 = vmatprep.subr.mxu0 0.0
        %8005 = vmatpush2.msra.mxu0 0.0
        %8006 = vmatprep.subr.mxu0 0.0
        %8007 = vmatpush2.msra.mxu0 0.0
        %8008 = vmatprep.subr.mxu0 0.0
        %8009 = vmatpush2.msra.mxu0 0.0
        %8010 = vmatprep.subr.mxu0 0.0
        %8011 = vmatpush2.msra.mxu0 0.0
        %8012 = vmatprep.subr.mxu0 0.0
        %8013 = vmatpush2.msra.mxu0 0.0
        %8014 = vmatprep.subr.mxu0 0.0
        %8015 = vmatpush2.msra.mxu0 0.0
        %8016 = vmatprep.subr.mxu0 0.0
        %8017 = vmatpush2.msra.mxu0 0.0
        %8018 = vmatprep.subr.mxu0 0.0
        %8019 = vmatpush2.msra.mxu0 0.0
        %8020 = vmatprep.mubr.f32.mxu0 0.0
        %8021 = vmatmul.mubr.f32.gmra.mxu0 %v7528
        %v8022 = vpop.f32.mrf.mxu0
        %v8023 = vadd.f32 %v7498, %v8022
        %v8024 = vpop.f32.mrf.mxu0
        %v8025 = vadd.f32 %v7502, %v8024
        %8026 = vdwg.mxu0
        %8027 = vmatprep.subr.mxu0 0.0
        %8028 = vmatpush1.msra.mxu0 0.0
        %8029 = vmatprep.subr.mxu0 0.0
        %8030 = vmatpush1.msra.mxu0 0.0
        %8031 = vmatprep.subr.mxu0 0.0
        %8032 = vmatpush1.msra.mxu0 0.0
        %8033 = vmatprep.subr.mxu0 0.0
        %8034 = vmatpush1.msra.mxu0 0.0
        %8035 = vmatprep.subr.mxu0 0.0
        %8036 = vmatpush1.msra.mxu0 0.0
        %8037 = vmatprep.subr.mxu0 0.0
        %8038 = vmatpush1.msra.mxu0 0.0
        %8039 = vmatprep.subr.mxu0 0.0
        %8040 = vmatpush1.msra.mxu0 0.0
        %8041 = vmatprep.subr.mxu0 0.0
        %8042 = vmatpush1.msra.mxu0 0.0
        %8043 = vmatprep.subr.mxu0 0.0
        %8044 = vmatpush1.msra.mxu0 0.0
        %8045 = vmatprep.subr.mxu0 0.0
        %8046 = vmatpush1.msra.mxu0 0.0
        %8047 = vmatprep.subr.mxu0 0.0
        %8048 = vmatpush1.msra.mxu0 0.0
        %8049 = vmatprep.subr.mxu0 0.0
        %8050 = vmatpush1.msra.mxu0 0.0
        %8051 = vmatprep.subr.mxu0 %v7442
        %8052 = vmatpush1.msra.mxu0 %v7441
        %8053 = vmatprep.subr.mxu0 %v7426
        %8054 = vmatpush1.msra.mxu0 %v7425
        %8055 = vmatprep.subr.mxu0 %v7410
        %8056 = vmatpush1.msra.mxu0 %v7409
        %8057 = vmatprep.subr.mxu0 %v7394
        %8058 = vmatpush1.msra.mxu0 %v7393
        %8059 = vmatprep.subr.mxu0 0.0
        %8060 = vmatpush2.msra.mxu0 0.0
        %8061 = vmatprep.subr.mxu0 0.0
        %8062 = vmatpush2.msra.mxu0 0.0
        %8063 = vmatprep.subr.mxu0 0.0
        %8064 = vmatpush2.msra.mxu0 0.0
        %8065 = vmatprep.subr.mxu0 0.0
        %8066 = vmatpush2.msra.mxu0 0.0
        %8067 = vmatprep.subr.mxu0 0.0
        %8068 = vmatpush2.msra.mxu0 0.0
        %8069 = vmatprep.subr.mxu0 0.0
        %8070 = vmatpush2.msra.mxu0 0.0
        %8071 = vmatprep.subr.mxu0 0.0
        %8072 = vmatpush2.msra.mxu0 0.0
        %8073 = vmatprep.subr.mxu0 0.0
        %8074 = vmatpush2.msra.mxu0 0.0
        %8075 = vmatprep.subr.mxu0 0.0
        %8076 = vmatpush2.msra.mxu0 0.0
        %8077 = vmatprep.subr.mxu0 0.0
        %8078 = vmatpush2.msra.mxu0 0.0
        %8079 = vmatprep.subr.mxu0 0.0
        %8080 = vmatpush2.msra.mxu0 0.0
        %8081 = vmatprep.subr.mxu0 0.0
        %8082 = vmatpush2.msra.mxu0 0.0
        %8083 = vmatprep.subr.mxu0 0.0
        %8084 = vmatpush2.msra.mxu0 0.0
        %8085 = vmatprep.subr.mxu0 0.0
        %8086 = vmatpush2.msra.mxu0 0.0
        %8087 = vmatprep.subr.mxu0 0.0
        %8088 = vmatpush2.msra.mxu0 0.0
        %8089 = vmatprep.subr.mxu0 0.0
        %8090 = vmatpush2.msra.mxu0 0.0
        %8091 = vmatprep.mubr.f32.mxu0 0.0
        %8092 = vmatmul.mubr.f32.gmra.mxu0 %v7528
        %v8093 = vpop.f32.mrf.mxu0
        %v8094 = vadd.f32 %v7506, %v8093
        %v8095 = vpop.f32.mrf.mxu0
        %v8096 = vadd.f32 %v7510, %v8095
        %8097 = vdwg.mxu0
        %v8098 = vmax.f32 %v7597, 0.0
        %v8099 = vmax.f32 %v7599, 0.0
        %v8100 = vmax.f32 %v7668, 0.0
        %v8101 = vmax.f32 %v7670, 0.0
        %v8102 = vmax.f32 %v7739, 0.0
        %v8103 = vmax.f32 %v7741, 0.0
        %v8104 = vmax.f32 %v7810, 0.0
        %v8105 = vmax.f32 %v7812, 0.0
        %v8106 = vmax.f32 %v7881, 0.0
        %v8107 = vmax.f32 %v7883, 0.0
        %v8108 = vmax.f32 %v7952, 0.0
        %v8109 = vmax.f32 %v7954, 0.0
        %v8110 = vmax.f32 %v8023, 0.0
        %v8111 = vmax.f32 %v8025, 0.0
        %v8112 = vmax.f32 %v8094, 0.0
        %v8113 = vmax.f32 %v8096, 0.0
        %v8114 = vld [vmem:[%s89] sm:$0xff]
        %v8115 = vld [vmem:[%s89 + $0x8] sm:$0xff]
        %v8116 = vld [vmem:[%s89 + $0x10] sm:$0xff]
        %v8117 = vld [vmem:[%s89 + $0x18] sm:$0xff]
        %v8118 = vld [vmem:[%s89 + $0x20] sm:$0xff]
        %v8119 = vld [vmem:[%s89 + $0x28] sm:$0xff]
        %v8120 = vld [vmem:[%s89 + $0x30] sm:$0xff]
        %v8121 = vld [vmem:[%s89 + $0x38] sm:$0xff]
        %v8122 = vld [vmem:[%s89 + $0x40] sm:$0xff]
        %v8123 = vld [vmem:[%s89 + $0x48] sm:$0xff]
        %v8124 = vld [vmem:[%s89 + $0x50] sm:$0xff]
        %v8125 = vld [vmem:[%s89 + $0x58] sm:$0xff]
        %v8126 = vld [vmem:[%s89 + $0x60] sm:$0xff]
        %v8127 = vld [vmem:[%s89 + $0x68] sm:$0xff]
        %v8128 = vld [vmem:[%s89 + $0x70] sm:$0xff]
        %v8129 = vld [vmem:[%s89 + $0x78] sm:$0xff]
        %v8130 = vld [vmem:[%s89 + $0x80] sm:$0xff]
        %v8131 = vld [vmem:[%s89 + $0x88] sm:$0xff]
        %v8132 = vld [vmem:[%s89 + $0x90] sm:$0xff]
        %v8133 = vld [vmem:[%s89 + $0x98] sm:$0xff]
        %v8134 = vld [vmem:[%s89 + $0xa0] sm:$0xff]
        %v8135 = vld [vmem:[%s89 + $0xa8] sm:$0xff]
        %v8136 = vld [vmem:[%s89 + $0xb0] sm:$0xff]
        %v8137 = vld [vmem:[%s89 + $0xb8] sm:$0xff]
        %v8138 = vld [vmem:[%s89 + $0xc0] sm:$0xff]
        %v8139 = vld [vmem:[%s89 + $0xc8] sm:$0xff]
        %v8140 = vld [vmem:[%s89 + $0xd0] sm:$0xff]
        %v8141 = vld [vmem:[%s89 + $0xd8] sm:$0xff]
        %v8142 = vld [vmem:[%s89 + $0xe0] sm:$0xff]
        %v8143 = vld [vmem:[%s89 + $0xe8] sm:$0xff]
        %v8144 = vld [vmem:[%s89 + $0xf0] sm:$0xff]
        %v8145 = vld [vmem:[%s89 + $0xf8] sm:$0xff]
        %v8146 = vld [vmem:[%s89 + $0x100] sm:$0xff]
        %v8147 = vld [vmem:[%s89 + $0x108] sm:$0xff]
        %v8148 = vld [vmem:[%s89 + $0x110] sm:$0xff]
        %v8149 = vld [vmem:[%s89 + $0x118] sm:$0xff]
        %v8150 = vld [vmem:[%s89 + $0x120] sm:$0xff]
        %v8151 = vld [vmem:[%s89 + $0x128] sm:$0xff]
        %v8152 = vld [vmem:[%s89 + $0x130] sm:$0xff]
        %v8153 = vld [vmem:[%s89 + $0x138] sm:$0xff]
        %v8154 = vld [vmem:[%s89 + $0x140] sm:$0xff]
        %v8155 = vld [vmem:[%s89 + $0x148] sm:$0xff]
        %v8156 = vld [vmem:[%s89 + $0x150] sm:$0xff]
        %v8157 = vld [vmem:[%s89 + $0x158] sm:$0xff]
        %v8158 = vld [vmem:[%s89 + $0x160] sm:$0xff]
        %v8159 = vld [vmem:[%s89 + $0x168] sm:$0xff]
        %v8160 = vld [vmem:[%s89 + $0x170] sm:$0xff]
        %v8161 = vld [vmem:[%s89 + $0x178] sm:$0xff]
        %v8162 = vld [vmem:[%s89 + $0x180] sm:$0xff]
        %v8163 = vld [vmem:[%s89 + $0x188] sm:$0xff]
        %v8164 = vld [vmem:[%s89 + $0x190] sm:$0xff]
        %v8165 = vld [vmem:[%s89 + $0x198] sm:$0xff]
        %v8166 = vld [vmem:[%s89 + $0x1a0] sm:$0xff]
        %v8167 = vld [vmem:[%s89 + $0x1a8] sm:$0xff]
        %v8168 = vld [vmem:[%s89 + $0x1b0] sm:$0xff]
        %v8169 = vld [vmem:[%s89 + $0x1b8] sm:$0xff]
        %v8170 = vld [vmem:[%s89 + $0x1c0] sm:$0xff]
        %v8171 = vld [vmem:[%s89 + $0x1c8] sm:$0xff]
        %v8172 = vld [vmem:[%s89 + $0x1d0] sm:$0xff]
        %v8173 = vld [vmem:[%s89 + $0x1d8] sm:$0xff]
        %v8174 = vld [vmem:[%s89 + $0x1e0] sm:$0xff]
        %v8175 = vld [vmem:[%s89 + $0x1e8] sm:$0xff]
        %v8176 = vld [vmem:[%s89 + $0x1f0] sm:$0xff]
        %v8177 = vld [vmem:[%s89 + $0x1f8] sm:$0xff]
        %v8178 = vld [vmem:[%s89 + $0x200] sm:$0xff]
        %v8179 = vld [vmem:[%s89 + $0x208] sm:$0xff]
        %v8180 = vld [vmem:[%s89 + $0x210] sm:$0xff]
        %v8181 = vld [vmem:[%s89 + $0x218] sm:$0xff]
        %v8182 = vld [vmem:[%s89 + $0x220] sm:$0xff]
        %v8183 = vld [vmem:[%s89 + $0x228] sm:$0xff]
        %v8184 = vld [vmem:[%s89 + $0x230] sm:$0xff]
        %v8185 = vld [vmem:[%s89 + $0x238] sm:$0xff]
        %v8186 = vld [vmem:[%s89 + $0x240] sm:$0xff]
        %v8187 = vld [vmem:[%s89 + $0x248] sm:$0xff]
        %v8188 = vld [vmem:[%s89 + $0x250] sm:$0xff]
        %v8189 = vld [vmem:[%s89 + $0x258] sm:$0xff]
        %v8190 = vld [vmem:[%s89 + $0x260] sm:$0xff]
        %v8191 = vld [vmem:[%s89 + $0x268] sm:$0xff]
        %v8192 = vld [vmem:[%s89 + $0x270] sm:$0xff]
        %v8193 = vld [vmem:[%s89 + $0x278] sm:$0xff]
        %v8194 = vld [vmem:[%s89 + $0x280] sm:$0xff]
        %v8195 = vld [vmem:[%s89 + $0x288] sm:$0xff]
        %v8196 = vld [vmem:[%s89 + $0x290] sm:$0xff]
        %v8197 = vld [vmem:[%s89 + $0x298] sm:$0xff]
        %v8198 = vld [vmem:[%s89 + $0x2a0] sm:$0xff]
        %v8199 = vld [vmem:[%s89 + $0x2a8] sm:$0xff]
        %v8200 = vld [vmem:[%s89 + $0x2b0] sm:$0xff]
        %v8201 = vld [vmem:[%s89 + $0x2b8] sm:$0xff]
        %v8202 = vld [vmem:[%s89 + $0x2c0] sm:$0xff]
        %v8203 = vld [vmem:[%s89 + $0x2c8] sm:$0xff]
        %v8204 = vld [vmem:[%s89 + $0x2d0] sm:$0xff]
        %v8205 = vld [vmem:[%s89 + $0x2d8] sm:$0xff]
        %v8206 = vld [vmem:[%s89 + $0x2e0] sm:$0xff]
        %v8207 = vld [vmem:[%s89 + $0x2e8] sm:$0xff]
        %v8208 = vld [vmem:[%s89 + $0x2f0] sm:$0xff]
        %v8209 = vld [vmem:[%s89 + $0x2f8] sm:$0xff]
        %v8210 = vld [vmem:[%s89 + $0x300] sm:$0xff]
        %v8211 = vld [vmem:[%s89 + $0x308] sm:$0xff]
        %v8212 = vld [vmem:[%s89 + $0x310] sm:$0xff]
        %v8213 = vld [vmem:[%s89 + $0x318] sm:$0xff]
        %v8214 = vld [vmem:[%s89 + $0x320] sm:$0xff]
        %v8215 = vld [vmem:[%s89 + $0x328] sm:$0xff]
        %v8216 = vld [vmem:[%s89 + $0x330] sm:$0xff]
        %v8217 = vld [vmem:[%s89 + $0x338] sm:$0xff]
        %v8218 = vld [vmem:[%s89 + $0x340] sm:$0xff]
        %v8219 = vld [vmem:[%s89 + $0x348] sm:$0xff]
        %v8220 = vld [vmem:[%s89 + $0x350] sm:$0xff]
        %v8221 = vld [vmem:[%s89 + $0x358] sm:$0xff]
        %v8222 = vld [vmem:[%s89 + $0x360] sm:$0xff]
        %v8223 = vld [vmem:[%s89 + $0x368] sm:$0xff]
        %v8224 = vld [vmem:[%s89 + $0x370] sm:$0xff]
        %v8225 = vld [vmem:[%s89 + $0x378] sm:$0xff]
        %v8226 = vld [vmem:[%s89 + $0x380] sm:$0xff]
        %v8227 = vld [vmem:[%s89 + $0x388] sm:$0xff]
        %v8228 = vld [vmem:[%s89 + $0x390] sm:$0xff]
        %v8229 = vld [vmem:[%s89 + $0x398] sm:$0xff]
        %v8230 = vld [vmem:[%s89 + $0x3a0] sm:$0xff]
        %v8231 = vld [vmem:[%s89 + $0x3a8] sm:$0xff]
        %v8232 = vld [vmem:[%s89 + $0x3b0] sm:$0xff]
        %v8233 = vld [vmem:[%s89 + $0x3b8] sm:$0xff]
        %v8234 = vld [vmem:[%s89 + $0x3c0] sm:$0xff]
        %v8235 = vld [vmem:[%s89 + $0x3c8] sm:$0xff]
        %v8236 = vld [vmem:[%s89 + $0x3d0] sm:$0xff]
        %v8237 = vld [vmem:[%s89 + $0x3d8] sm:$0xff]
        %v8238 = vld [vmem:[%s89 + $0x3e0] sm:$0xff]
        %v8239 = vld [vmem:[%s89 + $0x3e8] sm:$0xff]
        %v8240 = vld [vmem:[%s89 + $0x3f0] sm:$0xff]
        %v8241 = vld [vmem:[%s89 + $0x3f8] sm:$0xff]
        %v8242 = vld [vmem:[%s89 + $0x400] sm:$0xff]
        %v8243 = vld [vmem:[%s89 + $0x408] sm:$0xff]
        %v8244 = vld [vmem:[%s89 + $0x410] sm:$0xff]
        %v8245 = vld [vmem:[%s89 + $0x418] sm:$0xff]
        %v8246 = vld [vmem:[%s89 + $0x420] sm:$0xff]
        %v8247 = vld [vmem:[%s89 + $0x428] sm:$0xff]
        %v8248 = vld [vmem:[%s89 + $0x430] sm:$0xff]
        %v8249 = vld [vmem:[%s89 + $0x438] sm:$0xff]
        %v8250 = vld [vmem:[%s89 + $0x440] sm:$0xff]
        %v8251 = vld [vmem:[%s89 + $0x448] sm:$0xff]
        %v8252 = vld [vmem:[%s89 + $0x450] sm:$0xff]
        %v8253 = vld [vmem:[%s89 + $0x458] sm:$0xff]
        %v8254 = vld [vmem:[%s89 + $0x460] sm:$0xff]
        %v8255 = vld [vmem:[%s89 + $0x468] sm:$0xff]
        %v8256 = vld [vmem:[%s89 + $0x470] sm:$0xff]
        %v8257 = vld [vmem:[%s89 + $0x478] sm:$0xff]
        %v8258 = vld [vmem:[%s89 + $0x480] sm:$0xff]
        %v8259 = vld [vmem:[%s89 + $0x488] sm:$0xff]
        %v8260 = vld [vmem:[%s89 + $0x490] sm:$0xff]
        %v8261 = vld [vmem:[%s89 + $0x498] sm:$0xff]
        %v8262 = vld [vmem:[%s89 + $0x4a0] sm:$0xff]
        %v8263 = vld [vmem:[%s89 + $0x4a8] sm:$0xff]
        %v8264 = vld [vmem:[%s89 + $0x4b0] sm:$0xff]
        %v8265 = vld [vmem:[%s89 + $0x4b8] sm:$0xff]
        %v8266 = vld [vmem:[%s89 + $0x4c0] sm:$0xff]
        %v8267 = vld [vmem:[%s89 + $0x4c8] sm:$0xff]
        %v8268 = vld [vmem:[%s89 + $0x4d0] sm:$0xff]
        %v8269 = vld [vmem:[%s89 + $0x4d8] sm:$0xff]
        %v8270 = vld [vmem:[%s89 + $0x4e0] sm:$0xff]
        %v8271 = vld [vmem:[%s89 + $0x4e8] sm:$0xff]
        %v8272 = vld [vmem:[%s89 + $0x4f0] sm:$0xff]
        %v8273 = vld [vmem:[%s89 + $0x4f8] sm:$0xff]
        %v8274 = vld [vmem:[%s89 + $0x500] sm:$0xff]
        %v8275 = vld [vmem:[%s89 + $0x508] sm:$0xff]
        %v8276 = vld [vmem:[%s89 + $0x510] sm:$0xff]
        %v8277 = vld [vmem:[%s89 + $0x518] sm:$0xff]
        %v8278 = vld [vmem:[%s89 + $0x520] sm:$0xff]
        %v8279 = vld [vmem:[%s89 + $0x528] sm:$0xff]
        %v8280 = vld [vmem:[%s89 + $0x530] sm:$0xff]
        %v8281 = vld [vmem:[%s89 + $0x538] sm:$0xff]
        %v8282 = vld [vmem:[%s89 + $0x540] sm:$0xff]
        %v8283 = vld [vmem:[%s89 + $0x548] sm:$0xff]
        %v8284 = vld [vmem:[%s89 + $0x550] sm:$0xff]
        %v8285 = vld [vmem:[%s89 + $0x558] sm:$0xff]
        %v8286 = vld [vmem:[%s89 + $0x560] sm:$0xff]
        %v8287 = vld [vmem:[%s89 + $0x568] sm:$0xff]
        %v8288 = vld [vmem:[%s89 + $0x570] sm:$0xff]
        %v8289 = vld [vmem:[%s89 + $0x578] sm:$0xff]
        %v8290 = vld [vmem:[%s89 + $0x580] sm:$0xff]
        %v8291 = vld [vmem:[%s89 + $0x588] sm:$0xff]
        %v8292 = vld [vmem:[%s89 + $0x590] sm:$0xff]
        %v8293 = vld [vmem:[%s89 + $0x598] sm:$0xff]
        %v8294 = vld [vmem:[%s89 + $0x5a0] sm:$0xff]
        %v8295 = vld [vmem:[%s89 + $0x5a8] sm:$0xff]
        %v8296 = vld [vmem:[%s89 + $0x5b0] sm:$0xff]
        %v8297 = vld [vmem:[%s89 + $0x5b8] sm:$0xff]
        %v8298 = vld [vmem:[%s89 + $0x5c0] sm:$0xff]
        %v8299 = vld [vmem:[%s89 + $0x5c8] sm:$0xff]
        %v8300 = vld [vmem:[%s89 + $0x5d0] sm:$0xff]
        %v8301 = vld [vmem:[%s89 + $0x5d8] sm:$0xff]
        %v8302 = vld [vmem:[%s89 + $0x5e0] sm:$0xff]
        %v8303 = vld [vmem:[%s89 + $0x5e8] sm:$0xff]
        %v8304 = vld [vmem:[%s89 + $0x5f0] sm:$0xff]
        %v8305 = vld [vmem:[%s89 + $0x5f8] sm:$0xff]
        %v8306 = vld [vmem:[%s89 + $0x600] sm:$0xff]
        %v8307 = vld [vmem:[%s89 + $0x608] sm:$0xff]
        %v8308 = vld [vmem:[%s89 + $0x610] sm:$0xff]
        %v8309 = vld [vmem:[%s89 + $0x618] sm:$0xff]
        %v8310 = vld [vmem:[%s89 + $0x620] sm:$0xff]
        %v8311 = vld [vmem:[%s89 + $0x628] sm:$0xff]
        %v8312 = vld [vmem:[%s89 + $0x630] sm:$0xff]
        %v8313 = vld [vmem:[%s89 + $0x638] sm:$0xff]
        %v8314 = vld [vmem:[%s89 + $0x640] sm:$0xff]
        %v8315 = vld [vmem:[%s89 + $0x648] sm:$0xff]
        %v8316 = vld [vmem:[%s89 + $0x650] sm:$0xff]
        %v8317 = vld [vmem:[%s89 + $0x658] sm:$0xff]
        %v8318 = vld [vmem:[%s89 + $0x660] sm:$0xff]
        %v8319 = vld [vmem:[%s89 + $0x668] sm:$0xff]
        %v8320 = vld [vmem:[%s89 + $0x670] sm:$0xff]
        %v8321 = vld [vmem:[%s89 + $0x678] sm:$0xff]
        %v8322 = vld [vmem:[%s89 + $0x680] sm:$0xff]
        %v8323 = vld [vmem:[%s89 + $0x688] sm:$0xff]
        %v8324 = vld [vmem:[%s89 + $0x690] sm:$0xff]
        %v8325 = vld [vmem:[%s89 + $0x698] sm:$0xff]
        %v8326 = vld [vmem:[%s89 + $0x6a0] sm:$0xff]
        %v8327 = vld [vmem:[%s89 + $0x6a8] sm:$0xff]
        %v8328 = vld [vmem:[%s89 + $0x6b0] sm:$0xff]
        %v8329 = vld [vmem:[%s89 + $0x6b8] sm:$0xff]
        %v8330 = vld [vmem:[%s89 + $0x6c0] sm:$0xff]
        %v8331 = vld [vmem:[%s89 + $0x6c8] sm:$0xff]
        %v8332 = vld [vmem:[%s89 + $0x6d0] sm:$0xff]
        %v8333 = vld [vmem:[%s89 + $0x6d8] sm:$0xff]
        %v8334 = vld [vmem:[%s89 + $0x6e0] sm:$0xff]
        %v8335 = vld [vmem:[%s89 + $0x6e8] sm:$0xff]
        %v8336 = vld [vmem:[%s89 + $0x6f0] sm:$0xff]
        %v8337 = vld [vmem:[%s89 + $0x6f8] sm:$0xff]
        %v8338 = vld [vmem:[%s89 + $0x700] sm:$0xff]
        %v8339 = vld [vmem:[%s89 + $0x708] sm:$0xff]
        %v8340 = vld [vmem:[%s89 + $0x710] sm:$0xff]
        %v8341 = vld [vmem:[%s89 + $0x718] sm:$0xff]
        %v8342 = vld [vmem:[%s89 + $0x720] sm:$0xff]
        %v8343 = vld [vmem:[%s89 + $0x728] sm:$0xff]
        %v8344 = vld [vmem:[%s89 + $0x730] sm:$0xff]
        %v8345 = vld [vmem:[%s89 + $0x738] sm:$0xff]
        %v8346 = vld [vmem:[%s89 + $0x740] sm:$0xff]
        %v8347 = vld [vmem:[%s89 + $0x748] sm:$0xff]
        %v8348 = vld [vmem:[%s89 + $0x750] sm:$0xff]
        %v8349 = vld [vmem:[%s89 + $0x758] sm:$0xff]
        %v8350 = vld [vmem:[%s89 + $0x760] sm:$0xff]
        %v8351 = vld [vmem:[%s89 + $0x768] sm:$0xff]
        %v8352 = vld [vmem:[%s89 + $0x770] sm:$0xff]
        %v8353 = vld [vmem:[%s89 + $0x778] sm:$0xff]
        %v8354 = vld [vmem:[%s89 + $0x780] sm:$0xff]
        %v8355 = vld [vmem:[%s89 + $0x788] sm:$0xff]
        %v8356 = vld [vmem:[%s89 + $0x790] sm:$0xff]
        %v8357 = vld [vmem:[%s89 + $0x798] sm:$0xff]
        %v8358 = vld [vmem:[%s89 + $0x7a0] sm:$0xff]
        %v8359 = vld [vmem:[%s89 + $0x7a8] sm:$0xff]
        %v8360 = vld [vmem:[%s89 + $0x7b0] sm:$0xff]
        %v8361 = vld [vmem:[%s89 + $0x7b8] sm:$0xff]
        %v8362 = vld [vmem:[%s89 + $0x7c0] sm:$0xff]
        %v8363 = vld [vmem:[%s89 + $0x7c8] sm:$0xff]
        %v8364 = vld [vmem:[%s89 + $0x7d0] sm:$0xff]
        %v8365 = vld [vmem:[%s89 + $0x7d8] sm:$0xff]
        %v8366 = vld [vmem:[%s89 + $0x7e0] sm:$0xff]
        %v8367 = vld [vmem:[%s89 + $0x7e8] sm:$0xff]
        %v8368 = vld [vmem:[%s89 + $0x7f0] sm:$0xff]
        %v8369 = vld [vmem:[%s89 + $0x7f8] sm:$0xff]
        %v8370 = vld [vmem:[#allocation2] sm:$0x1]
        %v8372 = vlaneseq
        %v8373 = vshrl.u32 %v8372, 7
        %v8374 = vsub.s32 0, %v8373
        %v8375 = vrot.slane %v8370, %v8374
        %8377 = vmatprep.subr.mxu0 0.0
        %8378 = vmatpush1.msra.mxu0 %v8129
        %8379 = vmatprep.subr.mxu0 0.0
        %8380 = vmatpush1.msra.mxu0 %v8128
        %8381 = vmatprep.subr.mxu0 0.0
        %8382 = vmatpush1.msra.mxu0 %v8127
        %8383 = vmatprep.subr.mxu0 0.0
        %8384 = vmatpush1.msra.mxu0 %v8126
        %8385 = vmatprep.subr.mxu0 0.0
        %8386 = vmatpush1.msra.mxu0 %v8125
        %8387 = vmatprep.subr.mxu0 0.0
        %8388 = vmatpush1.msra.mxu0 %v8124
        %8389 = vmatprep.subr.mxu0 0.0
        %8390 = vmatpush1.msra.mxu0 %v8123
        %8391 = vmatprep.subr.mxu0 0.0
        %8392 = vmatpush1.msra.mxu0 %v8122
        %8393 = vmatprep.subr.mxu0 0.0
        %8394 = vmatpush1.msra.mxu0 %v8121
        %8395 = vmatprep.subr.mxu0 0.0
        %8396 = vmatpush1.msra.mxu0 %v8120
        %8397 = vmatprep.subr.mxu0 0.0
        %8398 = vmatpush1.msra.mxu0 %v8119
        %8399 = vmatprep.subr.mxu0 0.0
        %8400 = vmatpush1.msra.mxu0 %v8118
        %8401 = vmatprep.subr.mxu0 0.0
        %8402 = vmatpush1.msra.mxu0 %v8117
        %8403 = vmatprep.subr.mxu0 0.0
        %8404 = vmatpush1.msra.mxu0 %v8116
        %8405 = vmatprep.subr.mxu0 0.0
        %8406 = vmatpush1.msra.mxu0 %v8115
        %8407 = vmatprep.subr.mxu0 0.0
        %8408 = vmatpush1.msra.mxu0 %v8114
        %8409 = vmatprep.subr.mxu0 0.0
        %8410 = vmatpush2.msra.mxu0 %v8145
        %8411 = vmatprep.subr.mxu0 0.0
        %8412 = vmatpush2.msra.mxu0 %v8144
        %8413 = vmatprep.subr.mxu0 0.0
        %8414 = vmatpush2.msra.mxu0 %v8143
        %8415 = vmatprep.subr.mxu0 0.0
        %8416 = vmatpush2.msra.mxu0 %v8142
        %8417 = vmatprep.subr.mxu0 0.0
        %8418 = vmatpush2.msra.mxu0 %v8141
        %8419 = vmatprep.subr.mxu0 0.0
        %8420 = vmatpush2.msra.mxu0 %v8140
        %8421 = vmatprep.subr.mxu0 0.0
        %8422 = vmatpush2.msra.mxu0 %v8139
        %8423 = vmatprep.subr.mxu0 0.0
        %8424 = vmatpush2.msra.mxu0 %v8138
        %8425 = vmatprep.subr.mxu0 0.0
        %8426 = vmatpush2.msra.mxu0 %v8137
        %8427 = vmatprep.subr.mxu0 0.0
        %8428 = vmatpush2.msra.mxu0 %v8136
        %8429 = vmatprep.subr.mxu0 0.0
        %8430 = vmatpush2.msra.mxu0 %v8135
        %8431 = vmatprep.subr.mxu0 0.0
        %8432 = vmatpush2.msra.mxu0 %v8134
        %8433 = vmatprep.subr.mxu0 0.0
        %8434 = vmatpush2.msra.mxu0 %v8133
        %8435 = vmatprep.subr.mxu0 0.0
        %8436 = vmatpush2.msra.mxu0 %v8132
        %8437 = vmatprep.subr.mxu0 0.0
        %8438 = vmatpush2.msra.mxu0 %v8131
        %8439 = vmatprep.subr.mxu0 0.0
        %8440 = vmatpush2.msra.mxu0 %v8130
        %8441 = vmatprep.mubr.f32.mxu0 %v8099
        %8442 = vmatmul.mubr.f32.gmra.mxu0 %v8098
        %v8443 = vpop.f32.mrf.mxu0
        %v8444 = vadd.f32 %v8375, %v8443
        %v8445 = vpop.f32.mrf.mxu0
        %8446 = vdwg.mxu0
        %8447 = vmatprep.subr.mxu0 0.0
        %8448 = vmatpush1.msra.mxu0 %v8161
        %8449 = vmatprep.subr.mxu0 0.0
        %8450 = vmatpush1.msra.mxu0 %v8160
        %8451 = vmatprep.subr.mxu0 0.0
        %8452 = vmatpush1.msra.mxu0 %v8159
        %8453 = vmatprep.subr.mxu0 0.0
        %8454 = vmatpush1.msra.mxu0 %v8158
        %8455 = vmatprep.subr.mxu0 0.0
        %8456 = vmatpush1.msra.mxu0 %v8157
        %8457 = vmatprep.subr.mxu0 0.0
        %8458 = vmatpush1.msra.mxu0 %v8156
        %8459 = vmatprep.subr.mxu0 0.0
        %8460 = vmatpush1.msra.mxu0 %v8155
        %8461 = vmatprep.subr.mxu0 0.0
        %8462 = vmatpush1.msra.mxu0 %v8154
        %8463 = vmatprep.subr.mxu0 0.0
        %8464 = vmatpush1.msra.mxu0 %v8153
        %8465 = vmatprep.subr.mxu0 0.0
        %8466 = vmatpush1.msra.mxu0 %v8152
        %8467 = vmatprep.subr.mxu0 0.0
        %8468 = vmatpush1.msra.mxu0 %v8151
        %8469 = vmatprep.subr.mxu0 0.0
        %8470 = vmatpush1.msra.mxu0 %v8150
        %8471 = vmatprep.subr.mxu0 0.0
        %8472 = vmatpush1.msra.mxu0 %v8149
        %8473 = vmatprep.subr.mxu0 0.0
        %8474 = vmatpush1.msra.mxu0 %v8148
        %8475 = vmatprep.subr.mxu0 0.0
        %8476 = vmatpush1.msra.mxu0 %v8147
        %8477 = vmatprep.subr.mxu0 0.0
        %8478 = vmatpush1.msra.mxu0 %v8146
        %8479 = vmatprep.subr.mxu0 0.0
        %8480 = vmatpush2.msra.mxu0 %v8177
        %8481 = vmatprep.subr.mxu0 0.0
        %8482 = vmatpush2.msra.mxu0 %v8176
        %8483 = vmatprep.subr.mxu0 0.0
        %8484 = vmatpush2.msra.mxu0 %v8175
        %8485 = vmatprep.subr.mxu0 0.0
        %8486 = vmatpush2.msra.mxu0 %v8174
        %8487 = vmatprep.subr.mxu0 0.0
        %8488 = vmatpush2.msra.mxu0 %v8173
        %8489 = vmatprep.subr.mxu0 0.0
        %8490 = vmatpush2.msra.mxu0 %v8172
        %8491 = vmatprep.subr.mxu0 0.0
        %8492 = vmatpush2.msra.mxu0 %v8171
        %8493 = vmatprep.subr.mxu0 0.0
        %8494 = vmatpush2.msra.mxu0 %v8170
        %8495 = vmatprep.subr.mxu0 0.0
        %8496 = vmatpush2.msra.mxu0 %v8169
        %8497 = vmatprep.subr.mxu0 0.0
        %8498 = vmatpush2.msra.mxu0 %v8168
        %8499 = vmatprep.subr.mxu0 0.0
        %8500 = vmatpush2.msra.mxu0 %v8167
        %8501 = vmatprep.subr.mxu0 0.0
        %8502 = vmatpush2.msra.mxu0 %v8166
        %8503 = vmatprep.subr.mxu0 0.0
        %8504 = vmatpush2.msra.mxu0 %v8165
        %8505 = vmatprep.subr.mxu0 0.0
        %8506 = vmatpush2.msra.mxu0 %v8164
        %8507 = vmatprep.subr.mxu0 0.0
        %8508 = vmatpush2.msra.mxu0 %v8163
        %8509 = vmatprep.subr.mxu0 0.0
        %8510 = vmatpush2.msra.mxu0 %v8162
        %8511 = vmatprep.mubr.f32.mxu0 %v8101
        %8512 = vmatmul.mubr.f32.gmra.mxu0 %v8100
        %v8513 = vpop.f32.mrf.mxu0
        %v8514 = vadd.f32 %v8444, %v8513
        %v8515 = vpop.f32.mrf.mxu0
        %8516 = vdwg.mxu0
        %8517 = vmatprep.subr.mxu0 0.0
        %8518 = vmatpush1.msra.mxu0 %v8193
        %8519 = vmatprep.subr.mxu0 0.0
        %8520 = vmatpush1.msra.mxu0 %v8192
        %8521 = vmatprep.subr.mxu0 0.0
        %8522 = vmatpush1.msra.mxu0 %v8191
        %8523 = vmatprep.subr.mxu0 0.0
        %8524 = vmatpush1.msra.mxu0 %v8190
        %8525 = vmatprep.subr.mxu0 0.0
        %8526 = vmatpush1.msra.mxu0 %v8189
        %8527 = vmatprep.subr.mxu0 0.0
        %8528 = vmatpush1.msra.mxu0 %v8188
        %8529 = vmatprep.subr.mxu0 0.0
        %8530 = vmatpush1.msra.mxu0 %v8187
        %8531 = vmatprep.subr.mxu0 0.0
        %8532 = vmatpush1.msra.mxu0 %v8186
        %8533 = vmatprep.subr.mxu0 0.0
        %8534 = vmatpush1.msra.mxu0 %v8185
        %8535 = vmatprep.subr.mxu0 0.0
        %8536 = vmatpush1.msra.mxu0 %v8184
        %8537 = vmatprep.subr.mxu0 0.0
        %8538 = vmatpush1.msra.mxu0 %v8183
        %8539 = vmatprep.subr.mxu0 0.0
        %8540 = vmatpush1.msra.mxu0 %v8182
        %8541 = vmatprep.subr.mxu0 0.0
        %8542 = vmatpush1.msra.mxu0 %v8181
        %8543 = vmatprep.subr.mxu0 0.0
        %8544 = vmatpush1.msra.mxu0 %v8180
        %8545 = vmatprep.subr.mxu0 0.0
        %8546 = vmatpush1.msra.mxu0 %v8179
        %8547 = vmatprep.subr.mxu0 0.0
        %8548 = vmatpush1.msra.mxu0 %v8178
        %8549 = vmatprep.subr.mxu0 0.0
        %8550 = vmatpush2.msra.mxu0 %v8209
        %8551 = vmatprep.subr.mxu0 0.0
        %8552 = vmatpush2.msra.mxu0 %v8208
        %8553 = vmatprep.subr.mxu0 0.0
        %8554 = vmatpush2.msra.mxu0 %v8207
        %8555 = vmatprep.subr.mxu0 0.0
        %8556 = vmatpush2.msra.mxu0 %v8206
        %8557 = vmatprep.subr.mxu0 0.0
        %8558 = vmatpush2.msra.mxu0 %v8205
        %8559 = vmatprep.subr.mxu0 0.0
        %8560 = vmatpush2.msra.mxu0 %v8204
        %8561 = vmatprep.subr.mxu0 0.0
        %8562 = vmatpush2.msra.mxu0 %v8203
        %8563 = vmatprep.subr.mxu0 0.0
        %8564 = vmatpush2.msra.mxu0 %v8202
        %8565 = vmatprep.subr.mxu0 0.0
        %8566 = vmatpush2.msra.mxu0 %v8201
        %8567 = vmatprep.subr.mxu0 0.0
        %8568 = vmatpush2.msra.mxu0 %v8200
        %8569 = vmatprep.subr.mxu0 0.0
        %8570 = vmatpush2.msra.mxu0 %v8199
        %8571 = vmatprep.subr.mxu0 0.0
        %8572 = vmatpush2.msra.mxu0 %v8198
        %8573 = vmatprep.subr.mxu0 0.0
        %8574 = vmatpush2.msra.mxu0 %v8197
        %8575 = vmatprep.subr.mxu0 0.0
        %8576 = vmatpush2.msra.mxu0 %v8196
        %8577 = vmatprep.subr.mxu0 0.0
        %8578 = vmatpush2.msra.mxu0 %v8195
        %8579 = vmatprep.subr.mxu0 0.0
        %8580 = vmatpush2.msra.mxu0 %v8194
        %8581 = vmatprep.mubr.f32.mxu0 %v8103
        %8582 = vmatmul.mubr.f32.gmra.mxu0 %v8102
        %v8583 = vpop.f32.mrf.mxu0
        %v8584 = vadd.f32 %v8514, %v8583
        %v8585 = vpop.f32.mrf.mxu0
        %8586 = vdwg.mxu0
        %8587 = vmatprep.subr.mxu0 0.0
        %8588 = vmatpush1.msra.mxu0 %v8225
        %8589 = vmatprep.subr.mxu0 0.0
        %8590 = vmatpush1.msra.mxu0 %v8224
        %8591 = vmatprep.subr.mxu0 0.0
        %8592 = vmatpush1.msra.mxu0 %v8223
        %8593 = vmatprep.subr.mxu0 0.0
        %8594 = vmatpush1.msra.mxu0 %v8222
        %8595 = vmatprep.subr.mxu0 0.0
        %8596 = vmatpush1.msra.mxu0 %v8221
        %8597 = vmatprep.subr.mxu0 0.0
        %8598 = vmatpush1.msra.mxu0 %v8220
        %8599 = vmatprep.subr.mxu0 0.0
        %8600 = vmatpush1.msra.mxu0 %v8219
        %8601 = vmatprep.subr.mxu0 0.0
        %8602 = vmatpush1.msra.mxu0 %v8218
        %8603 = vmatprep.subr.mxu0 0.0
        %8604 = vmatpush1.msra.mxu0 %v8217
        %8605 = vmatprep.subr.mxu0 0.0
        %8606 = vmatpush1.msra.mxu0 %v8216
        %8607 = vmatprep.subr.mxu0 0.0
        %8608 = vmatpush1.msra.mxu0 %v8215
        %8609 = vmatprep.subr.mxu0 0.0
        %8610 = vmatpush1.msra.mxu0 %v8214
        %8611 = vmatprep.subr.mxu0 0.0
        %8612 = vmatpush1.msra.mxu0 %v8213
        %8613 = vmatprep.subr.mxu0 0.0
        %8614 = vmatpush1.msra.mxu0 %v8212
        %8615 = vmatprep.subr.mxu0 0.0
        %8616 = vmatpush1.msra.mxu0 %v8211
        %8617 = vmatprep.subr.mxu0 0.0
        %8618 = vmatpush1.msra.mxu0 %v8210
        %8619 = vmatprep.subr.mxu0 0.0
        %8620 = vmatpush2.msra.mxu0 %v8241
        %8621 = vmatprep.subr.mxu0 0.0
        %8622 = vmatpush2.msra.mxu0 %v8240
        %8623 = vmatprep.subr.mxu0 0.0
        %8624 = vmatpush2.msra.mxu0 %v8239
        %8625 = vmatprep.subr.mxu0 0.0
        %8626 = vmatpush2.msra.mxu0 %v8238
        %8627 = vmatprep.subr.mxu0 0.0
        %8628 = vmatpush2.msra.mxu0 %v8237
        %8629 = vmatprep.subr.mxu0 0.0
        %8630 = vmatpush2.msra.mxu0 %v8236
        %8631 = vmatprep.subr.mxu0 0.0
        %8632 = vmatpush2.msra.mxu0 %v8235
        %8633 = vmatprep.subr.mxu0 0.0
        %8634 = vmatpush2.msra.mxu0 %v8234
        %8635 = vmatprep.subr.mxu0 0.0
        %8636 = vmatpush2.msra.mxu0 %v8233
        %8637 = vmatprep.subr.mxu0 0.0
        %8638 = vmatpush2.msra.mxu0 %v8232
        %8639 = vmatprep.subr.mxu0 0.0
        %8640 = vmatpush2.msra.mxu0 %v8231
        %8641 = vmatprep.subr.mxu0 0.0
        %8642 = vmatpush2.msra.mxu0 %v8230
        %8643 = vmatprep.subr.mxu0 0.0
        %8644 = vmatpush2.msra.mxu0 %v8229
        %8645 = vmatprep.subr.mxu0 0.0
        %8646 = vmatpush2.msra.mxu0 %v8228
        %8647 = vmatprep.subr.mxu0 0.0
        %8648 = vmatpush2.msra.mxu0 %v8227
        %8649 = vmatprep.subr.mxu0 0.0
        %8650 = vmatpush2.msra.mxu0 %v8226
        %8651 = vmatprep.mubr.f32.mxu0 %v8105
        %8652 = vmatmul.mubr.f32.gmra.mxu0 %v8104
        %v8653 = vpop.f32.mrf.mxu0
        %v8654 = vadd.f32 %v8584, %v8653
        %v8655 = vpop.f32.mrf.mxu0
        %8656 = vdwg.mxu0
        %8657 = vmatprep.subr.mxu0 0.0
        %8658 = vmatpush1.msra.mxu0 %v8257
        %8659 = vmatprep.subr.mxu0 0.0
        %8660 = vmatpush1.msra.mxu0 %v8256
        %8661 = vmatprep.subr.mxu0 0.0
        %8662 = vmatpush1.msra.mxu0 %v8255
        %8663 = vmatprep.subr.mxu0 0.0
        %8664 = vmatpush1.msra.mxu0 %v8254
        %8665 = vmatprep.subr.mxu0 0.0
        %8666 = vmatpush1.msra.mxu0 %v8253
        %8667 = vmatprep.subr.mxu0 0.0
        %8668 = vmatpush1.msra.mxu0 %v8252
        %8669 = vmatprep.subr.mxu0 0.0
        %8670 = vmatpush1.msra.mxu0 %v8251
        %8671 = vmatprep.subr.mxu0 0.0
        %8672 = vmatpush1.msra.mxu0 %v8250
        %8673 = vmatprep.subr.mxu0 0.0
        %8674 = vmatpush1.msra.mxu0 %v8249
        %8675 = vmatprep.subr.mxu0 0.0
        %8676 = vmatpush1.msra.mxu0 %v8248
        %8677 = vmatprep.subr.mxu0 0.0
        %8678 = vmatpush1.msra.mxu0 %v8247
        %8679 = vmatprep.subr.mxu0 0.0
        %8680 = vmatpush1.msra.mxu0 %v8246
        %8681 = vmatprep.subr.mxu0 0.0
        %8682 = vmatpush1.msra.mxu0 %v8245
        %8683 = vmatprep.subr.mxu0 0.0
        %8684 = vmatpush1.msra.mxu0 %v8244
        %8685 = vmatprep.subr.mxu0 0.0
        %8686 = vmatpush1.msra.mxu0 %v8243
        %8687 = vmatprep.subr.mxu0 0.0
        %8688 = vmatpush1.msra.mxu0 %v8242
        %8689 = vmatprep.subr.mxu0 0.0
        %8690 = vmatpush2.msra.mxu0 %v8273
        %8691 = vmatprep.subr.mxu0 0.0
        %8692 = vmatpush2.msra.mxu0 %v8272
        %8693 = vmatprep.subr.mxu0 0.0
        %8694 = vmatpush2.msra.mxu0 %v8271
        %8695 = vmatprep.subr.mxu0 0.0
        %8696 = vmatpush2.msra.mxu0 %v8270
        %8697 = vmatprep.subr.mxu0 0.0
        %8698 = vmatpush2.msra.mxu0 %v8269
        %8699 = vmatprep.subr.mxu0 0.0
        %8700 = vmatpush2.msra.mxu0 %v8268
        %8701 = vmatprep.subr.mxu0 0.0
        %8702 = vmatpush2.msra.mxu0 %v8267
        %8703 = vmatprep.subr.mxu0 0.0
        %8704 = vmatpush2.msra.mxu0 %v8266
        %8705 = vmatprep.subr.mxu0 0.0
        %8706 = vmatpush2.msra.mxu0 %v8265
        %8707 = vmatprep.subr.mxu0 0.0
        %8708 = vmatpush2.msra.mxu0 %v8264
        %8709 = vmatprep.subr.mxu0 0.0
        %8710 = vmatpush2.msra.mxu0 %v8263
        %8711 = vmatprep.subr.mxu0 0.0
        %8712 = vmatpush2.msra.mxu0 %v8262
        %8713 = vmatprep.subr.mxu0 0.0
        %8714 = vmatpush2.msra.mxu0 %v8261
        %8715 = vmatprep.subr.mxu0 0.0
        %8716 = vmatpush2.msra.mxu0 %v8260
        %8717 = vmatprep.subr.mxu0 0.0
        %8718 = vmatpush2.msra.mxu0 %v8259
        %8719 = vmatprep.subr.mxu0 0.0
        %8720 = vmatpush2.msra.mxu0 %v8258
        %8721 = vmatprep.mubr.f32.mxu0 %v8107
        %8722 = vmatmul.mubr.f32.gmra.mxu0 %v8106
        %v8723 = vpop.f32.mrf.mxu0
        %v8724 = vadd.f32 %v8654, %v8723
        %v8725 = vpop.f32.mrf.mxu0
        %8726 = vdwg.mxu0
        %8727 = vmatprep.subr.mxu0 0.0
        %8728 = vmatpush1.msra.mxu0 %v8289
        %8729 = vmatprep.subr.mxu0 0.0
        %8730 = vmatpush1.msra.mxu0 %v8288
        %8731 = vmatprep.subr.mxu0 0.0
        %8732 = vmatpush1.msra.mxu0 %v8287
        %8733 = vmatprep.subr.mxu0 0.0
        %8734 = vmatpush1.msra.mxu0 %v8286
        %8735 = vmatprep.subr.mxu0 0.0
        %8736 = vmatpush1.msra.mxu0 %v8285
        %8737 = vmatprep.subr.mxu0 0.0
        %8738 = vmatpush1.msra.mxu0 %v8284
        %8739 = vmatprep.subr.mxu0 0.0
        %8740 = vmatpush1.msra.mxu0 %v8283
        %8741 = vmatprep.subr.mxu0 0.0
        %8742 = vmatpush1.msra.mxu0 %v8282
        %8743 = vmatprep.subr.mxu0 0.0
        %8744 = vmatpush1.msra.mxu0 %v8281
        %8745 = vmatprep.subr.mxu0 0.0
        %8746 = vmatpush1.msra.mxu0 %v8280
        %8747 = vmatprep.subr.mxu0 0.0
        %8748 = vmatpush1.msra.mxu0 %v8279
        %8749 = vmatprep.subr.mxu0 0.0
        %8750 = vmatpush1.msra.mxu0 %v8278
        %8751 = vmatprep.subr.mxu0 0.0
        %8752 = vmatpush1.msra.mxu0 %v8277
        %8753 = vmatprep.subr.mxu0 0.0
        %8754 = vmatpush1.msra.mxu0 %v8276
        %8755 = vmatprep.subr.mxu0 0.0
        %8756 = vmatpush1.msra.mxu0 %v8275
        %8757 = vmatprep.subr.mxu0 0.0
        %8758 = vmatpush1.msra.mxu0 %v8274
        %8759 = vmatprep.subr.mxu0 0.0
        %8760 = vmatpush2.msra.mxu0 %v8305
        %8761 = vmatprep.subr.mxu0 0.0
        %8762 = vmatpush2.msra.mxu0 %v8304
        %8763 = vmatprep.subr.mxu0 0.0
        %8764 = vmatpush2.msra.mxu0 %v8303
        %8765 = vmatprep.subr.mxu0 0.0
        %8766 = vmatpush2.msra.mxu0 %v8302
        %8767 = vmatprep.subr.mxu0 0.0
        %8768 = vmatpush2.msra.mxu0 %v8301
        %8769 = vmatprep.subr.mxu0 0.0
        %8770 = vmatpush2.msra.mxu0 %v8300
        %8771 = vmatprep.subr.mxu0 0.0
        %8772 = vmatpush2.msra.mxu0 %v8299
        %8773 = vmatprep.subr.mxu0 0.0
        %8774 = vmatpush2.msra.mxu0 %v8298
        %8775 = vmatprep.subr.mxu0 0.0
        %8776 = vmatpush2.msra.mxu0 %v8297
        %8777 = vmatprep.subr.mxu0 0.0
        %8778 = vmatpush2.msra.mxu0 %v8296
        %8779 = vmatprep.subr.mxu0 0.0
        %8780 = vmatpush2.msra.mxu0 %v8295
        %8781 = vmatprep.subr.mxu0 0.0
        %8782 = vmatpush2.msra.mxu0 %v8294
        %8783 = vmatprep.subr.mxu0 0.0
        %8784 = vmatpush2.msra.mxu0 %v8293
        %8785 = vmatprep.subr.mxu0 0.0
        %8786 = vmatpush2.msra.mxu0 %v8292
        %8787 = vmatprep.subr.mxu0 0.0
        %8788 = vmatpush2.msra.mxu0 %v8291
        %8789 = vmatprep.subr.mxu0 0.0
        %8790 = vmatpush2.msra.mxu0 %v8290
        %8791 = vmatprep.mubr.f32.mxu0 %v8109
        %8792 = vmatmul.mubr.f32.gmra.mxu0 %v8108
        %v8793 = vpop.f32.mrf.mxu0
        %v8794 = vadd.f32 %v8724, %v8793
        %v8795 = vpop.f32.mrf.mxu0
        %8796 = vdwg.mxu0
        %8797 = vmatprep.subr.mxu0 0.0
        %8798 = vmatpush1.msra.mxu0 %v8321
        %8799 = vmatprep.subr.mxu0 0.0
        %8800 = vmatpush1.msra.mxu0 %v8320
        %8801 = vmatprep.subr.mxu0 0.0
        %8802 = vmatpush1.msra.mxu0 %v8319
        %8803 = vmatprep.subr.mxu0 0.0
        %8804 = vmatpush1.msra.mxu0 %v8318
        %8805 = vmatprep.subr.mxu0 0.0
        %8806 = vmatpush1.msra.mxu0 %v8317
        %8807 = vmatprep.subr.mxu0 0.0
        %8808 = vmatpush1.msra.mxu0 %v8316
        %8809 = vmatprep.subr.mxu0 0.0
        %8810 = vmatpush1.msra.mxu0 %v8315
        %8811 = vmatprep.subr.mxu0 0.0
        %8812 = vmatpush1.msra.mxu0 %v8314
        %8813 = vmatprep.subr.mxu0 0.0
        %8814 = vmatpush1.msra.mxu0 %v8313
        %8815 = vmatprep.subr.mxu0 0.0
        %8816 = vmatpush1.msra.mxu0 %v8312
        %8817 = vmatprep.subr.mxu0 0.0
        %8818 = vmatpush1.msra.mxu0 %v8311
        %8819 = vmatprep.subr.mxu0 0.0
        %8820 = vmatpush1.msra.mxu0 %v8310
        %8821 = vmatprep.subr.mxu0 0.0
        %8822 = vmatpush1.msra.mxu0 %v8309
        %8823 = vmatprep.subr.mxu0 0.0
        %8824 = vmatpush1.msra.mxu0 %v8308
        %8825 = vmatprep.subr.mxu0 0.0
        %8826 = vmatpush1.msra.mxu0 %v8307
        %8827 = vmatprep.subr.mxu0 0.0
        %8828 = vmatpush1.msra.mxu0 %v8306
        %8829 = vmatprep.subr.mxu0 0.0
        %8830 = vmatpush2.msra.mxu0 %v8337
        %8831 = vmatprep.subr.mxu0 0.0
        %8832 = vmatpush2.msra.mxu0 %v8336
        %8833 = vmatprep.subr.mxu0 0.0
        %8834 = vmatpush2.msra.mxu0 %v8335
        %8835 = vmatprep.subr.mxu0 0.0
        %8836 = vmatpush2.msra.mxu0 %v8334
        %8837 = vmatprep.subr.mxu0 0.0
        %8838 = vmatpush2.msra.mxu0 %v8333
        %8839 = vmatprep.subr.mxu0 0.0
        %8840 = vmatpush2.msra.mxu0 %v8332
        %8841 = vmatprep.subr.mxu0 0.0
        %8842 = vmatpush2.msra.mxu0 %v8331
        %8843 = vmatprep.subr.mxu0 0.0
        %8844 = vmatpush2.msra.mxu0 %v8330
        %8845 = vmatprep.subr.mxu0 0.0
        %8846 = vmatpush2.msra.mxu0 %v8329
        %8847 = vmatprep.subr.mxu0 0.0
        %8848 = vmatpush2.msra.mxu0 %v8328
        %8849 = vmatprep.subr.mxu0 0.0
        %8850 = vmatpush2.msra.mxu0 %v8327
        %8851 = vmatprep.subr.mxu0 0.0
        %8852 = vmatpush2.msra.mxu0 %v8326
        %8853 = vmatprep.subr.mxu0 0.0
        %8854 = vmatpush2.msra.mxu0 %v8325
        %8855 = vmatprep.subr.mxu0 0.0
        %8856 = vmatpush2.msra.mxu0 %v8324
        %8857 = vmatprep.subr.mxu0 0.0
        %8858 = vmatpush2.msra.mxu0 %v8323
        %8859 = vmatprep.subr.mxu0 0.0
        %8860 = vmatpush2.msra.mxu0 %v8322
        %8861 = vmatprep.mubr.f32.mxu0 %v8111
        %8862 = vmatmul.mubr.f32.gmra.mxu0 %v8110
        %v8863 = vpop.f32.mrf.mxu0
        %v8864 = vadd.f32 %v8794, %v8863
        %v8865 = vpop.f32.mrf.mxu0
        %8866 = vdwg.mxu0
        %8867 = vmatprep.subr.mxu0 0.0
        %8868 = vmatpush1.msra.mxu0 %v8353
        %8869 = vmatprep.subr.mxu0 0.0
        %8870 = vmatpush1.msra.mxu0 %v8352
        %8871 = vmatprep.subr.mxu0 0.0
        %8872 = vmatpush1.msra.mxu0 %v8351
        %8873 = vmatprep.subr.mxu0 0.0
        %8874 = vmatpush1.msra.mxu0 %v8350
        %8875 = vmatprep.subr.mxu0 0.0
        %8876 = vmatpush1.msra.mxu0 %v8349
        %8877 = vmatprep.subr.mxu0 0.0
        %8878 = vmatpush1.msra.mxu0 %v8348
        %8879 = vmatprep.subr.mxu0 0.0
        %8880 = vmatpush1.msra.mxu0 %v8347
        %8881 = vmatprep.subr.mxu0 0.0
        %8882 = vmatpush1.msra.mxu0 %v8346
        %8883 = vmatprep.subr.mxu0 0.0
        %8884 = vmatpush1.msra.mxu0 %v8345
        %8885 = vmatprep.subr.mxu0 0.0
        %8886 = vmatpush1.msra.mxu0 %v8344
        %8887 = vmatprep.subr.mxu0 0.0
        %8888 = vmatpush1.msra.mxu0 %v8343
        %8889 = vmatprep.subr.mxu0 0.0
        %8890 = vmatpush1.msra.mxu0 %v8342
        %8891 = vmatprep.subr.mxu0 0.0
        %8892 = vmatpush1.msra.mxu0 %v8341
        %8893 = vmatprep.subr.mxu0 0.0
        %8894 = vmatpush1.msra.mxu0 %v8340
        %8895 = vmatprep.subr.mxu0 0.0
        %8896 = vmatpush1.msra.mxu0 %v8339
        %8897 = vmatprep.subr.mxu0 0.0
        %8898 = vmatpush1.msra.mxu0 %v8338
        %8899 = vmatprep.subr.mxu0 0.0
        %8900 = vmatpush2.msra.mxu0 %v8369
        %8901 = vmatprep.subr.mxu0 0.0
        %8902 = vmatpush2.msra.mxu0 %v8368
        %8903 = vmatprep.subr.mxu0 0.0
        %8904 = vmatpush2.msra.mxu0 %v8367
        %8905 = vmatprep.subr.mxu0 0.0
        %8906 = vmatpush2.msra.mxu0 %v8366
        %8907 = vmatprep.subr.mxu0 0.0
        %8908 = vmatpush2.msra.mxu0 %v8365
        %8909 = vmatprep.subr.mxu0 0.0
        %8910 = vmatpush2.msra.mxu0 %v8364
        %8911 = vmatprep.subr.mxu0 0.0
        %8912 = vmatpush2.msra.mxu0 %v8363
        %8913 = vmatprep.subr.mxu0 0.0
        %8914 = vmatpush2.msra.mxu0 %v8362
        %8915 = vmatprep.subr.mxu0 0.0
        %8916 = vmatpush2.msra.mxu0 %v8361
        %8917 = vmatprep.subr.mxu0 0.0
        %8918 = vmatpush2.msra.mxu0 %v8360
        %8919 = vmatprep.subr.mxu0 0.0
        %8920 = vmatpush2.msra.mxu0 %v8359
        %8921 = vmatprep.subr.mxu0 0.0
        %8922 = vmatpush2.msra.mxu0 %v8358
        %8923 = vmatprep.subr.mxu0 0.0
        %8924 = vmatpush2.msra.mxu0 %v8357
        %8925 = vmatprep.subr.mxu0 0.0
        %8926 = vmatpush2.msra.mxu0 %v8356
        %8927 = vmatprep.subr.mxu0 0.0
        %8928 = vmatpush2.msra.mxu0 %v8355
        %8929 = vmatprep.subr.mxu0 0.0
        %8930 = vmatpush2.msra.mxu0 %v8354
        %8931 = vmatprep.mubr.f32.mxu0 %v8113
        %8932 = vmatmul.mubr.f32.gmra.mxu0 %v8112
        %v8933 = vpop.f32.mrf.mxu0
        %v8934 = vadd.f32 %v8864, %v8933
        %v8935 = vpop.f32.mrf.mxu0
        %8936 = vdwg.mxu0
        %v8937 = vadd.f32 %v7378, %v8934
        %v8938 = vld [vmem:[%s81] sm:$0x1]
        %v8939 = vld [vmem:[%s83] sm:$0x1]
        %v8940 = vsel %vm1470, %v8937, 0.0
        %8941 = vadd.xlane.f32.xlu0 %v8940
        %v8942 = vpop.xlane.xlu0 %8941
        %v8943 = vmul.f32 %v8942, %v3413
        %v8944 = vsub.f32 %v8937, %v8943
        %v8945 = vmul.f32 %v8944, %v8944
        %v8946 = vsel %vm1470, %v8945, 0.0
        %8947 = vadd.xlane.f32.xlu0 %v8946
        %v8948 = vpop.xlane.xlu0 %8947
        %v8949 = vmul.f32 %v8948, %v3413
        %v8950 = vadd.f32 %v8949, 1e-05
        %v8951 = vrsqrt.pop %v8950
        %v8952 = vmul.f32 %v8944, %v8951
        %v8954 = vlaneseq
        %v8955 = vshrl.u32 %v8954, 7
        %v8956 = vsub.s32 0, %v8955
        %v8957 = vrot.slane %v8938, %v8956
        %v8959 = vmul.f32 %v8952, %v8957
        %v8961 = vlaneseq
        %v8962 = vshrl.u32 %v8961, 7
        %v8963 = vsub.s32 0, %v8962
        %v8964 = vrot.slane %v8939, %v8963
        %v8966 = vadd.f32 %v8959, %v8964
        %v8967 = vld [vmem:[%s93] sm:$0xff]
        %v8968 = vld [vmem:[%s93 + $0x8] sm:$0xff]
        %v8969 = vld [vmem:[%s93 + $0x10] sm:$0xff]
        %v8970 = vld [vmem:[%s93 + $0x18] sm:$0xff]
        %v8971 = vld [vmem:[%s93 + $0x20] sm:$0xff]
        %v8972 = vld [vmem:[%s93 + $0x28] sm:$0xff]
        %v8973 = vld [vmem:[%s93 + $0x30] sm:$0xff]
        %v8974 = vld [vmem:[%s93 + $0x38] sm:$0xff]
        %v8975 = vld [vmem:[%s95] sm:$0x3]
        %v8977 = vlaneseq
        %v8978 = vshrl.u32 %v8977, 7
        %v8979 = vsub.s32 0, %v8978
        %v8980 = vrot.slane %v8975, %v8979
        %v8981 = vlaneseq
        %v8982 = vshrl.u32 %v8981, 7
        %v8983 = vsub.s32 1, %v8982
        %v8984 = vrot.slane %v8975, %v8983
        %v8988 = vsel %vm1470, %v8966, 0
        %8990 = vmatprep.subr.mxu0 0.0
        %8991 = vmatpush1.msra.mxu0 0.0
        %8992 = vmatprep.subr.mxu0 0.0
        %8993 = vmatpush1.msra.mxu0 0.0
        %8994 = vmatprep.subr.mxu0 0.0
        %8995 = vmatpush1.msra.mxu0 0.0
        %8996 = vmatprep.subr.mxu0 0.0
        %8997 = vmatpush1.msra.mxu0 0.0
        %8998 = vmatprep.subr.mxu0 0.0
        %8999 = vmatpush1.msra.mxu0 0.0
        %9000 = vmatprep.subr.mxu0 0.0
        %9001 = vmatpush1.msra.mxu0 0.0
        %9002 = vmatprep.subr.mxu0 0.0
        %9003 = vmatpush1.msra.mxu0 0.0
        %9004 = vmatprep.subr.mxu0 0.0
        %9005 = vmatpush1.msra.mxu0 0.0
        %9006 = vmatprep.subr.mxu0 0.0
        %9007 = vmatpush1.msra.mxu0 0.0
        %9008 = vmatprep.subr.mxu0 0.0
        %9009 = vmatpush1.msra.mxu0 0.0
        %9010 = vmatprep.subr.mxu0 0.0
        %9011 = vmatpush1.msra.mxu0 0.0
        %9012 = vmatprep.subr.mxu0 0.0
        %9013 = vmatpush1.msra.mxu0 0.0
        %9014 = vmatprep.subr.mxu0 %v8974
        %9015 = vmatpush1.msra.mxu0 %v8973
        %9016 = vmatprep.subr.mxu0 %v8972
        %9017 = vmatpush1.msra.mxu0 %v8971
        %9018 = vmatprep.subr.mxu0 %v8970
        %9019 = vmatpush1.msra.mxu0 %v8969
        %9020 = vmatprep.subr.mxu0 %v8968
        %9021 = vmatpush1.msra.mxu0 %v8967
        %9022 = vmatprep.subr.mxu0 0.0
        %9023 = vmatpush2.msra.mxu0 0.0
        %9024 = vmatprep.subr.mxu0 0.0
        %9025 = vmatpush2.msra.mxu0 0.0
        %9026 = vmatprep.subr.mxu0 0.0
        %9027 = vmatpush2.msra.mxu0 0.0
        %9028 = vmatprep.subr.mxu0 0.0
        %9029 = vmatpush2.msra.mxu0 0.0
        %9030 = vmatprep.subr.mxu0 0.0
        %9031 = vmatpush2.msra.mxu0 0.0
        %9032 = vmatprep.subr.mxu0 0.0
        %9033 = vmatpush2.msra.mxu0 0.0
        %9034 = vmatprep.subr.mxu0 0.0
        %9035 = vmatpush2.msra.mxu0 0.0
        %9036 = vmatprep.subr.mxu0 0.0
        %9037 = vmatpush2.msra.mxu0 0.0
        %9038 = vmatprep.subr.mxu0 0.0
        %9039 = vmatpush2.msra.mxu0 0.0
        %9040 = vmatprep.subr.mxu0 0.0
        %9041 = vmatpush2.msra.mxu0 0.0
        %9042 = vmatprep.subr.mxu0 0.0
        %9043 = vmatpush2.msra.mxu0 0.0
        %9044 = vmatprep.subr.mxu0 0.0
        %9045 = vmatpush2.msra.mxu0 0.0
        %9046 = vmatprep.subr.mxu0 0.0
        %9047 = vmatpush2.msra.mxu0 0.0
        %9048 = vmatprep.subr.mxu0 0.0
        %9049 = vmatpush2.msra.mxu0 0.0
        %9050 = vmatprep.subr.mxu0 0.0
        %9051 = vmatpush2.msra.mxu0 0.0
        %9052 = vmatprep.subr.mxu0 0.0
        %9053 = vmatpush2.msra.mxu0 0.0
        %9054 = vmatprep.mubr.f32.mxu0 0.0
        %9055 = vmatmul.mubr.f32.gmra.mxu0 %v8988
        %v9056 = vpop.f32.mrf.mxu0
        %v9057 = vadd.f32 %v8980, %v9056
        %v9058 = vpop.f32.mrf.mxu0
        %v9059 = vadd.f32 %v8984, %v9058
        %9060 = vdwg.mxu0
        %9061 = vst [vmem:[%s1449] sm:$0xff] %v9057
        %9062 = vst [vmem:[%s1449 + $0x8] sm:$0xff] %v9059
        %s9063 = sand.u32 %s1138, 1
        %s9064 = scalar_lea.sflag [#allocation4], %s9063
        %s9065 = sand.u32 %s1138, 1
        %s9066 = smul.addr %s9065, 16
        %s9067 = scalar_lea.vmem [#allocation5], %s9066
        // Predicated region
        $region217: #{transformer_decoder_forward.1} parent=211 // pred_check
          %p9068 = pneg %p1148
        $region218: #{transformer_decoder_forward.1} parent=211 // pred_check_branch
          %9070 = sbr.rel (%p9068) target = $region220
        $region219: #{transformer_decoder_forward.1} parent=211 // pred_region
          %s9072 = ssub.s32 256, 256
          %9073 = vsyncadd %s9064, %s9072
          %s9074 = smul.addr %s112, 2
          %s9075 = smul.addr %s9074, 128
          %s9076 = scalar_lea.hbm %s97, %s9075
          %s9078 = sshll.u32 %s9067, 4
          %s9079 = int_to_ptr.vmem [resolvable:$true] %s9078
          %9081 = dma.vmem_to_hbm [thread:$0]  %s9079, 256, %s9076, %s9064
        $region220: #{transformer_decoder_forward.1} parent=211 // pred_fallthru
          _
      $region212: #{transformer_decoder_forward.1} parent=5 // pred_fallthru
        _
      %p9082 = scmp.le.s32.totalorder 2, %s107
      // Predicated region
      $region221: #{transformer_decoder_forward.1} parent=5 // pred_check
        %p9083 = pneg %p9082
      $region222: #{transformer_decoder_forward.1} parent=5 // pred_check_branch
        %9085 = sbr.rel (%p9083) target = $region224
      $region223: #{transformer_decoder_forward.1} parent=5 // pred_region
        %s9086 = ssub.s32 %s107, 2
        // Predicated region
        $region225: #{transformer_decoder_forward.1} parent=223 // pred_check
          %p9087 = pneg %p1154
        $region226: #{transformer_decoder_forward.1} parent=223 // pred_check_branch
          %9089 = sbr.rel (%p9087) target = $region228
        $region227: #{transformer_decoder_forward.1} parent=223 // pred_region
          %s9090 = sand.u32 %s1139, 1
          %s9091 = scalar_lea.sflag [#allocation4], %s9090
          %s9092 = sand.u32 %s1139, 1
          %s9093 = smul.addr %s9092, 16
          %s9094 = scalar_lea.vmem [#allocation5], %s9093
          %9095 = dma.done %s9091, 256
        $region228: #{transformer_decoder_forward.1} parent=223 // pred_fallthru
          _
      $region224: #{transformer_decoder_forward.1} parent=5 // pred_fallthru
        _
    $region6: #{transformer_decoder_forward.1} parent=1 // loop_footer
      %s111 = sadd.s32 1, %s107
    $region7: #{transformer_decoder_forward.1} parent=1 // loop_footer_branch
      %106 = sbr.rel target = $region3
    $region8: #{transformer_decoder_forward.1} parent=1 // loop_exit
      _
    %9096 = vsyncpa [#allocation3], 1
    %s9097 = scalar_lea.sflag [#allocation3], 1
    %9098 = vsyncpa %s9097, 1
    %9099 = vsyncpa [#allocation4], 1
    %s9100 = scalar_lea.sflag [#allocation4], 1
    %9101 = vsyncpa %s9100, 1

</llo_original>
